<compile_context>
chip_gen: v5e
topology: v5e:2x2
jax: 0.10.0
libtpu: 0.0.40
codegen_flags: <defaults>
</compile_context>

<pallas_src>
import jax
import jax.numpy as jnp
from jax import lax
from jax.experimental import pallas as pl
from jax.experimental.pallas import tpu as pltpu

# ----------------------------- model dimensions -----------------------------
B = 2
H = W = 4
HW = H * W
FEAT_C = 256        # backbone output channels (stand-in for 2048)
IM_DIM = 256        # LSTM hidden / image channel dim (self.im_dim)
EMB_DIM = 128       # token embedding dim (self.in_dim, 200 in the original)
NUM_CLASSES = 128   # len(vocab) + 4 special tokens
MAX_LEN = 8         # self.max_length
START_ID, END_ID, PAD_ID, UNK_ID = 0, 1, 2, 3
BN_EPS = 1e-5

_F32 = jnp.float32
_BF16 = jnp.bfloat16


# ------------------------------ fused kernel ---------------------------------
def fullmodel_kernel(feats_ref, bias_ref, wconv_ref, wproj_ref,
                     gate_hbm_ref, wout_hbm_ref,          # HBM (pl.ANY) inputs
                     tok_ref,                             # output
                     gate_vmem, wout_vmem, dma_sem):      # scratch
    D = IM_DIM

    # ---- overlap decoder-weight HBM->VMEM DMA with the encoder compute -----
    gate_cp = pltpu.make_async_copy(gate_hbm_ref, gate_vmem, dma_sem.at[0])
    wout_cp = pltpu.make_async_copy(wout_hbm_ref, wout_vmem, dma_sem.at[1])
    gate_cp.start()
    wout_cp.start()

    # packed bias vector: [ b_conv (D) | b_proj_folded (2D) | b_out (V) ]
    b_conv = bias_ref[:, 0:D]
    b_proj = bias_ref[:, D:3 * D]
    b_out = bias_ref[:, 3 * D:3 * D + NUM_CLASSES]

    # ------------------------------- encoder --------------------------------
    x = feats_ref[...]                                               # (B*HW, C)
    # ConvBlock.proj 1x1 conv == per-pixel matmul over channels, + bias (bf16
    # MXU pass, f32 accumulation).
    y = jnp.dot(x.astype(_BF16), wconv_ref[...],
                preferred_element_type=_F32) + b_conv
    # SiLU
    y = y * jax.nn.sigmoid(y)
    # torch.mean(image_encoded, dim=1): per-batch spatial mean via static
    # sublane slices + reduce (XLU/VPU) — no pooling matmul, no pool input.
    rows = [jnp.mean(y[b * HW:(b + 1) * HW, :], axis=0, keepdims=True)
            for b in range(B)]
    m = jnp.concatenate(rows, axis=0)                                # (B, D)
    # proj_hidden / proj_cell fused into one matmul; eval-mode BN (which sits
    # after SiLU and commutes with the mean) was folded into wproj/b_proj.
    hc = jnp.dot(m.astype(_BF16), wproj_ref[...],
                 preferred_element_type=_F32) + b_proj               # (B, 2D)
    h = hc[:, :D]
    c = hc[:, D:]

    # ---------------------------- greedy decode ------------------------------
    gate_cp.wait()
    wout_cp.wait()

    # loop-invariant values hoisted out of the unrolled loop
    lane_v = lax.broadcasted_iota(jnp.int32, (B, NUM_CLASSES), 1)
    lane_t = lax.broadcasted_iota(jnp.int32, (B, MAX_LEN), 1)

    cur = jnp.full((B, 1), START_ID, dtype=jnp.int32)
    fin = jnp.zeros((B, 1), dtype=jnp.int32)
    toks = jnp.zeros((B, MAX_LEN), dtype=jnp.int32)

    for step in range(MAX_LEN):                                      # unrolled
        # embedding lookup + W_ih + both LSTM biases are pre-folded into the
        # top rows of the fused gate matrix; W_hh occupies the bottom rows, so
        # the whole gate computation is ONE matmul with LHS [onehot | h].
        onehot = (lane_v == cur).astype(_BF16)                       # (B, V)
        lhs = jnp.concatenate([onehot, h.astype(_BF16)], axis=-1)    # (B, V+D)
        gates = jnp.dot(lhs, gate_vmem[...], preferred_element_type=_F32)
        # nn.LSTMCell gate order (i, f, g, o)
        i_g = jax.nn.sigmoid(gates[:, 0 * D:1 * D])
        f_g = jax.nn.sigmoid(gates[:, 1 * D:2 * D])
        g_g = jnp.tanh(gates[:, 2 * D:3 * D])
        o_g = jax.nn.sigmoid(gates[:, 3 * D:4 * D])
        c = f_g * c + i_g * g_g
        h = o_g * jnp.tanh(c)

        # output Linear -> argmax on raw logits (softmax removed: argmax-
        # invariant).  First-maximal-index tie-break (== torch.max) via
        # iota+min; lax.argmax is avoided (no guaranteed Mosaic lowering).
        logits = jnp.dot(h.astype(_BF16), wout_vmem[...],
                         preferred_element_type=_F32) + b_out
        maxv = jnp.max(logits, axis=-1, keepdims=True)
        idx = jnp.min(jnp.where(logits == maxv, lane_v, NUM_CLASSES),
                      axis=-1, keepdims=True).astype(jnp.int32)      # (B, 1)

        # finished / current-token bookkeeping (matches the Python loop: once
        # END is produced, or already finished, the fed-back token is frozen;
        # post-END slots hold PAD in the raw token tensor).
        write_tok = jnp.where(fin > 0, PAD_ID, idx)
        toks = jnp.where(lane_t == step, write_tok, toks)
        stop = jnp.logical_or(fin > 0, idx == END_ID)
        cur = jnp.where(stop, cur, idx)
        fin = jnp.maximum(fin, (idx == END_ID).astype(jnp.int32))

    tok_ref[...] = toks                                              # one store


def run_fullmodel(feats_flat, fp):
    vmem = pl.BlockSpec(memory_space=pltpu.MemorySpace.VMEM)
    hbm = pl.BlockSpec(memory_space=pl.ANY)
    return pl.pallas_call(
        fullmodel_kernel,
        out_shape=jax.ShapeDtypeStruct((B, MAX_LEN), jnp.int32),
        in_specs=[vmem, vmem, vmem, vmem, hbm, hbm],
        out_specs=vmem,
        scratch_shapes=[
            pltpu.VMEM((NUM_CLASSES + IM_DIM, 4 * IM_DIM), _BF16),  # fused gate
            pltpu.VMEM((IM_DIM, NUM_CLASSES), _BF16),               # w_out
            pltpu.SemaphoreType.DMA((2,)),
        ],
    )(feats_flat, fp["biases"], fp["w_conv"], fp["w_proj"],
      fp["gate_fused"], fp["w_out"])


# ------------------------------ parameter setup ------------------------------
def init_params(key):
    """Module-style parameters (as PyTorch would hold them, pre-transposed)."""
    ks = jax.random.split(key, 14)
    s = 0.05
    return {
        # ConvBlock proj: conv weight stored pre-transposed as (C_in, C_out)
        "w_conv": jax.random.normal(ks[0], (FEAT_C, IM_DIM), _F32) * s,
        "b_conv": jax.random.normal(ks[1], (1, IM_DIM), _F32) * s,
        "bn_gamma": jnp.ones((1, IM_DIM), _F32),
        "bn_beta": jnp.zeros((1, IM_DIM), _F32),
        "bn_mean": jnp.zeros((1, IM_DIM), _F32),
        "bn_var": jnp.ones((1, IM_DIM), _F32),
        # proj_hidden / proj_cell (Linear W stored as W^T: (in, out))
        "w_ph": jax.random.normal(ks[2], (IM_DIM, IM_DIM), _F32) * s,
        "b_ph": jax.random.normal(ks[3], (1, IM_DIM), _F32) * s,
        "w_pc": jax.random.normal(ks[4], (IM_DIM, IM_DIM), _F32) * s,
        "b_pc": jax.random.normal(ks[5], (1, IM_DIM), _F32) * s,
        # token embedding
        "emb": jax.random.normal(ks[6], (NUM_CLASSES, EMB_DIM), _F32) * s,
        # LSTMCell: W_ih (E, 4D), W_hh (D, 4D) stored transposed; two biases
        "w_ih": jax.random.normal(ks[7], (EMB_DIM, 4 * IM_DIM), _F32) * s,
        "w_hh": jax.random.normal(ks[8], (IM_DIM, 4 * IM_DIM), _F32) * s,
        "b_ih": jax.random.normal(ks[9], (1, 4 * IM_DIM), _F32) * s,
        "b_hh": jax.random.normal(ks[10], (1, 4 * IM_DIM), _F32) * s,
        # output Linear (IM_DIM -> NUM_CLASSES), stored transposed
        "w_out": jax.random.normal(ks[11], (IM_DIM, NUM_CLASSES), _F32) * s,
        "b_out": jax.random.normal(ks[12], (1, NUM_CLASSES), _F32) * s,
    }


def fuse_params(p):
    """Host-side folding: BN into proj, concat projections, emb@W_ih + biases,
    stack [emb_gate; W_hh], pack all bias vectors, cast weights to bf16."""
    # eval-mode BatchNorm2d as per-channel affine (ConvBlock: Conv->SiLU->BN,
    # so the affine sits after the nonlinearity and commutes with the HW mean)
    bn_scale = p["bn_gamma"] * lax.rsqrt(p["bn_var"] + BN_EPS)        # (1, D)
    bn_shift = p["bn_beta"] - p["bn_mean"] * bn_scale                 # (1, D)
    # proj_hidden / proj_cell fused, then BN folded in:
    #   (m*scale + shift) @ W + b == m @ (diag(scale) W) + (shift @ W + b)
    w_proj = jnp.concatenate([p["w_ph"], p["w_pc"]], axis=1)          # (D, 2D)
    b_proj = jnp.concatenate([p["b_ph"], p["b_pc"]], axis=1)          # (1, 2D)
    w_proj_f = bn_scale.T * w_proj                                    # (D, 2D)
    b_proj_f = jnp.dot(bn_shift, w_proj) + b_proj                     # (1, 2D)
    # embedding lookup + input projection + both LSTM biases pre-folded;
    # stacked on top of W_hh so each decode step needs ONE gate matmul.
    emb_gate = jnp.dot(p["emb"], p["w_ih"]) + p["b_ih"] + p["b_hh"]   # (V, 4D)
    gate_fused = jnp.concatenate([emb_gate, p["w_hh"]], axis=0)       # (V+D,4D)
    # all remaining bias vectors packed into one lane-aligned input
    biases = jnp.concatenate([p["b_conv"], b_proj_f, p["b_out"]],
                             axis=1)                                  # (1, 896)
    return {
        "w_conv": p["w_conv"].astype(_BF16),
        "w_proj": w_proj_f.astype(_BF16),
        "gate_fused": gate_fused.astype(_BF16),
        "w_out": p["w_out"].astype(_BF16),
        "biases": biases.astype(_F32),
    }


# ------------------------------ full forward ---------------------------------
def full_model_forward(backbone_feats_nchw, fused_params):
    # layout: NCHW -> (B*HW, C) so channels sit on the TPU lane dimension and
    # the 1x1 conv is a single whole-batch matmul.
    feats = jnp.transpose(backbone_feats_nchw, (0, 2, 3, 1)).reshape(B * HW, FEAT_C)
    return run_fullmodel(feats, fused_params)            # (B, MAX_LEN) int32


def tokens_to_sentences(tokens):
    idx2word = {START_ID: "<START>", END_ID: "<END>", PAD_ID: "<PAD>", UNK_ID: "<UNK>"}
    for i in range(4, NUM_CLASSES):
        idx2word[i] = f"word{i}"
    sentences = ["<START>"] * B
    finished = [False] * B
    for step in range(MAX_LEN):
        for b in range(B):
            if finished[b]:
                continue
            tok = int(tokens[b, step])
            sentences[b] += f" {idx2word[tok]}"
            if tok == END_ID:
                finished[b] = True
    return sentences


# ---------------------------------- main -------------------------------------
if __name__ == "__main__":
    key = jax.random.PRNGKey(0)
    k_feat, k_param = jax.random.split(key)
    # backbone (resnet200d) output features, NCHW — see TODO(synk) above.
    backbone_feats = jax.random.normal(k_feat, (B, FEAT_C, H, W), _F32)
    params = init_params(k_param)
    fused = fuse_params(params)

    tokens = full_model_forward(backbone_feats, fused)
    tokens = jax.block_until_ready(tokens)
    _ = tokens_to_sentences(jax.device_get(tokens))   # string assembly (glue)
    print("KERNEL_OK")
</pallas_src>

<mosaic_0001>
module attributes {stable_mosaic.version = 11 : i64} {
  func.func @fullmodel_kernel(%arg0: memref<32x256xf32, #tpu.memory_space<vmem>>, %arg1: memref<1x896xf32, #tpu.memory_space<vmem>>, %arg2: memref<256x256xbf16, #tpu.memory_space<vmem>>, %arg3: memref<256x512xbf16, #tpu.memory_space<vmem>>, %arg4: memref<384x1024xbf16, #tpu.memory_space<any>>, %arg5: memref<256x128xbf16, #tpu.memory_space<any>>, %arg6: memref<2x8xi32, #tpu.memory_space<vmem>>, %arg7: memref<384x1024xbf16, #tpu.memory_space<vmem>>, %arg8: memref<256x128xbf16, #tpu.memory_space<vmem>>, %arg9: memref<2x!tpu.dma_semaphore, #tpu.memory_space<semaphore_mem>>) attributes {dimension_semantics = [], scalar_prefetch = 0 : i64, scratch_operands = 3 : i64, tpu.core_type = #tpu.core_type<tc>} {
    %c0_i32 = arith.constant 0 : i32
    %0 = tpu.memref_slice %arg9[%c0_i32] : memref<2x!tpu.dma_semaphore, #tpu.memory_space<semaphore_mem>> -> memref<1x!tpu.dma_semaphore, #tpu.memory_space<semaphore_mem>>
    %1 = tpu.memref_squeeze %0 : memref<1x!tpu.dma_semaphore, #tpu.memory_space<semaphore_mem>> -> memref<!tpu.dma_semaphore, #tpu.memory_space<semaphore_mem>>
    tpu.enqueue_dma source(%arg4 : memref<384x1024xbf16, #tpu.memory_space<any>>) target(%arg7 : memref<384x1024xbf16, #tpu.memory_space<vmem>>) target_semaphore(%1 : memref<!tpu.dma_semaphore, #tpu.memory_space<semaphore_mem>>)
    %c1_i32 = arith.constant 1 : i32
    %2 = tpu.memref_slice %arg9[%c1_i32] : memref<2x!tpu.dma_semaphore, #tpu.memory_space<semaphore_mem>> -> memref<1x!tpu.dma_semaphore, #tpu.memory_space<semaphore_mem>>
    %3 = tpu.memref_squeeze %2 : memref<1x!tpu.dma_semaphore, #tpu.memory_space<semaphore_mem>> -> memref<!tpu.dma_semaphore, #tpu.memory_space<semaphore_mem>>
    tpu.enqueue_dma source(%arg5 : memref<256x128xbf16, #tpu.memory_space<any>>) target(%arg8 : memref<256x128xbf16, #tpu.memory_space<vmem>>) target_semaphore(%3 : memref<!tpu.dma_semaphore, #tpu.memory_space<semaphore_mem>>)
    %c0 = arith.constant 0 : index
    %c0_0 = arith.constant 0 : index
    %4 = vector.load %arg1[%c0, %c0_0] : memref<1x896xf32, #tpu.memory_space<vmem>>, vector<1x256xf32>
    %c0_1 = arith.constant 0 : index
    %c256 = arith.constant 256 : index
    %5 = vector.load %arg1[%c0_1, %c256] : memref<1x896xf32, #tpu.memory_space<vmem>>, vector<1x512xf32>
    %c0_2 = arith.constant 0 : index
    %c768 = arith.constant 768 : index
    %6 = vector.load %arg1[%c0_2, %c768] : memref<1x896xf32, #tpu.memory_space<vmem>>, vector<1x128xf32>
    %c0_3 = arith.constant 0 : index
    %c0_4 = arith.constant 0 : index
    %7 = vector.load %arg0[%c0_3, %c0_4] : memref<32x256xf32, #tpu.memory_space<vmem>>, vector<32x256xf32>
    %8 = arith.truncf %7 : vector<32x256xf32> to vector<32x256xbf16>
    %c0_5 = arith.constant 0 : index
    %c0_6 = arith.constant 0 : index
    %9 = vector.load %arg2[%c0_5, %c0_6] : memref<256x256xbf16, #tpu.memory_space<vmem>>, vector<256x256xbf16>
    %cst = arith.constant dense<0.000000e+00> : vector<32x256xf32>
    %10 = tpu.matmul %8, %9, %cst {dimension_numbers = #tpu.dot_dimension_numbers<[1], [0], [0], [1], [0, 0, 1, 1], [], []>} : vector<32x256xbf16>, vector<256x256xbf16>, vector<32x256xf32> -> vector<32x256xf32>
    %11 = vector.broadcast %4 : vector<1x256xf32> to vector<32x256xf32>
    %12 = arith.addf %10, %11 : vector<32x256xf32>
    %13 = arith.negf %12 : vector<32x256xf32>
    %14 = math.exp %13 : vector<32x256xf32>
    %cst_7 = arith.constant 1.000000e+00 : f32
    %15 = vector.broadcast %cst_7 : f32 to vector<32x256xf32>
    %16 = arith.addf %15, %14 : vector<32x256xf32>
    %17 = arith.divf %15, %16 : vector<32x256xf32>
    %18 = arith.mulf %12, %17 : vector<32x256xf32>
    %19 = vector.extract_strided_slice %18 {offsets = [0, 0], sizes = [16, 256], strides = [1, 1]} : vector<32x256xf32> to vector<16x256xf32>
    %cst_8 = arith.constant dense<0.000000e+00> : vector<256xf32>
    %20 = vector.multi_reduction <add>, %19, %cst_8 [0] : vector<16x256xf32> to vector<256xf32>
    %21 = vector.shape_cast %20 : vector<256xf32> to vector<1x256xf32>
    %cst_9 = arith.constant 1.600000e+01 : f32
    %22 = vector.broadcast %cst_9 : f32 to vector<1x256xf32>
    %23 = arith.divf %21, %22 : vector<1x256xf32>
    %24 = vector.extract_strided_slice %18 {offsets = [16, 0], sizes = [16, 256], strides = [1, 1]} : vector<32x256xf32> to vector<16x256xf32>
    %cst_10 = arith.constant dense<0.000000e+00> : vector<256xf32>
    %25 = vector.multi_reduction <add>, %24, %cst_10 [0] : vector<16x256xf32> to vector<256xf32>
    %26 = vector.shape_cast %25 : vector<256xf32> to vector<1x256xf32>
    %cst_11 = arith.constant 1.600000e+01 : f32
    %27 = vector.broadcast %cst_11 : f32 to vector<1x256xf32>
    %28 = arith.divf %26, %27 : vector<1x256xf32>
    %29 = tpu.concatenate %23, %28 in 0 : vector<1x256xf32>, vector<1x256xf32> -> vector<2x256xf32>
    %30 = arith.truncf %29 : vector<2x256xf32> to vector<2x256xbf16>
    %c0_12 = arith.constant 0 : index
    %c0_13 = arith.constant 0 : index
    %31 = vector.load %arg3[%c0_12, %c0_13] : memref<256x512xbf16, #tpu.memory_space<vmem>>, vector<256x512xbf16>
    %cst_14 = arith.constant dense<0.000000e+00> : vector<2x512xf32>
    %32 = tpu.matmul %30, %31, %cst_14 {dimension_numbers = #tpu.dot_dimension_numbers<[1], [0], [0], [1], [0, 0, 1, 1], [], []>} : vector<2x256xbf16>, vector<256x512xbf16>, vector<2x512xf32> -> vector<2x512xf32>
    %33 = vector.broadcast %5 : vector<1x512xf32> to vector<2x512xf32>
    %34 = arith.addf %32, %33 : vector<2x512xf32>
    %35 = vector.extract_strided_slice %34 {offsets = [0, 0], sizes = [2, 256], strides = [1, 1]} : vector<2x512xf32> to vector<2x256xf32>
    %36 = vector.extract_strided_slice %34 {offsets = [0, 256], sizes = [2, 256], strides = [1, 1]} : vector<2x512xf32> to vector<2x256xf32>
    %c0_i32_15 = arith.constant 0 : i32
    %37 = tpu.memref_slice %arg9[%c0_i32_15] : memref<2x!tpu.dma_semaphore, #tpu.memory_space<semaphore_mem>> -> memref<1x!tpu.dma_semaphore, #tpu.memory_space<semaphore_mem>>
    %38 = tpu.memref_squeeze %37 : memref<1x!tpu.dma_semaphore, #tpu.memory_space<semaphore_mem>> -> memref<!tpu.dma_semaphore, #tpu.memory_space<semaphore_mem>>
    tpu.wait_dma2 semaphore(%38 : memref<!tpu.dma_semaphore, #tpu.memory_space<semaphore_mem>>) src(%arg4 : memref<384x1024xbf16, #tpu.memory_space<any>>) dst(%arg7 : memref<384x1024xbf16, #tpu.memory_space<vmem>>)
    %c1_i32_16 = arith.constant 1 : i32
    %39 = tpu.memref_slice %arg9[%c1_i32_16] : memref<2x!tpu.dma_semaphore, #tpu.memory_space<semaphore_mem>> -> memref<1x!tpu.dma_semaphore, #tpu.memory_space<semaphore_mem>>
    %40 = tpu.memref_squeeze %39 : memref<1x!tpu.dma_semaphore, #tpu.memory_space<semaphore_mem>> -> memref<!tpu.dma_semaphore, #tpu.memory_space<semaphore_mem>>
    tpu.wait_dma2 semaphore(%40 : memref<!tpu.dma_semaphore, #tpu.memory_space<semaphore_mem>>) src(%arg5 : memref<256x128xbf16, #tpu.memory_space<any>>) dst(%arg8 : memref<256x128xbf16, #tpu.memory_space<vmem>>)
    %41 = tpu.iota {dimensions = array<i32: 1>} : vector<2x128xi32>
    %42 = tpu.iota {dimensions = array<i32: 1>} : vector<2x8xi32>
    %c0_i32_17 = arith.constant 0 : i32
    %43 = vector.broadcast %c0_i32_17 : i32 to vector<2x1xi32>
    %c0_i32_18 = arith.constant 0 : i32
    %44 = vector.broadcast %c0_i32_18 : i32 to vector<2x1xi32>
    %c0_i32_19 = arith.constant 0 : i32
    %45 = vector.broadcast %c0_i32_19 : i32 to vector<2x8xi32>
    %46 = vector.broadcast %43 : vector<2x1xi32> to vector<2x128xi32>
    %47 = arith.cmpi eq, %41, %46 : vector<2x128xi32>
    %48 = arith.extui %47 : vector<2x128xi1> to vector<2x128xi32>
    %49 = arith.sitofp %48 : vector<2x128xi32> to vector<2x128xf32>
    %50 = arith.truncf %49 : vector<2x128xf32> to vector<2x128xbf16>
    %51 = arith.truncf %35 : vector<2x256xf32> to vector<2x256xbf16>
    %52 = tpu.concatenate %50, %51 in 1 : vector<2x128xbf16>, vector<2x256xbf16> -> vector<2x384xbf16>
    %c0_20 = arith.constant 0 : index
    %c0_21 = arith.constant 0 : index
    %53 = vector.load %arg7[%c0_20, %c0_21] : memref<384x1024xbf16, #tpu.memory_space<vmem>>, vector<384x1024xbf16>
    %cst_22 = arith.constant dense<0.000000e+00> : vector<2x1024xf32>
    %54 = tpu.matmul %52, %53, %cst_22 {dimension_numbers = #tpu.dot_dimension_numbers<[1], [0], [0], [1], [0, 0, 1, 1], [], []>} : vector<2x384xbf16>, vector<384x1024xbf16>, vector<2x1024xf32> -> vector<2x1024xf32>
    %55 = vector.extract_strided_slice %54 {offsets = [0, 0], sizes = [2, 256], strides = [1, 1]} : vector<2x1024xf32> to vector<2x256xf32>
    %56 = arith.negf %55 : vector<2x256xf32>
    %57 = math.exp %56 : vector<2x256xf32>
    %cst_23 = arith.constant 1.000000e+00 : f32
    %58 = vector.broadcast %cst_23 : f32 to vector<2x256xf32>
    %59 = arith.addf %58, %57 : vector<2x256xf32>
    %60 = arith.divf %58, %59 : vector<2x256xf32>
    %61 = vector.extract_strided_slice %54 {offsets = [0, 256], sizes = [2, 256], strides = [1, 1]} : vector<2x1024xf32> to vector<2x256xf32>
    %62 = arith.negf %61 : vector<2x256xf32>
    %63 = math.exp %62 : vector<2x256xf32>
    %cst_24 = arith.constant 1.000000e+00 : f32
    %64 = vector.broadcast %cst_24 : f32 to vector<2x256xf32>
    %65 = arith.addf %64, %63 : vector<2x256xf32>
    %66 = arith.divf %64, %65 : vector<2x256xf32>
    %67 = vector.extract_strided_slice %54 {offsets = [0, 512], sizes = [2, 256], strides = [1, 1]} : vector<2x1024xf32> to vector<2x256xf32>
    %68 = math.tanh %67 : vector<2x256xf32>
    %69 = vector.extract_strided_slice %54 {offsets = [0, 768], sizes = [2, 256], strides = [1, 1]} : vector<2x1024xf32> to vector<2x256xf32>
    %70 = arith.negf %69 : vector<2x256xf32>
    %71 = math.exp %70 : vector<2x256xf32>
    %cst_25 = arith.constant 1.000000e+00 : f32
    %72 = vector.broadcast %cst_25 : f32 to vector<2x256xf32>
    %73 = arith.addf %72, %71 : vector<2x256xf32>
    %74 = arith.divf %72, %73 : vector<2x256xf32>
    %75 = arith.mulf %66, %36 : vector<2x256xf32>
    %76 = arith.mulf %60, %68 : vector<2x256xf32>
    %77 = arith.addf %75, %76 : vector<2x256xf32>
    %78 = math.tanh %77 : vector<2x256xf32>
    %79 = arith.mulf %74, %78 : vector<2x256xf32>
    %80 = arith.truncf %79 : vector<2x256xf32> to vector<2x256xbf16>
    %c0_26 = arith.constant 0 : index
    %c0_27 = arith.constant 0 : index
    %81 = vector.load %arg8[%c0_26, %c0_27] : memref<256x128xbf16, #tpu.memory_space<vmem>>, vector<256x128xbf16>
    %cst_28 = arith.constant dense<0.000000e+00> : vector<2x128xf32>
    %82 = tpu.matmul %80, %81, %cst_28 {dimension_numbers = #tpu.dot_dimension_numbers<[1], [0], [0], [1], [0, 0, 1, 1], [], []>} : vector<2x256xbf16>, vector<256x128xbf16>, vector<2x128xf32> -> vector<2x128xf32>
    %83 = vector.broadcast %6 : vector<1x128xf32> to vector<2x128xf32>
    %84 = arith.addf %82, %83 : vector<2x128xf32>
    %cst_29 = arith.constant dense<0xFF800000> : vector<2xf32>
    %85 = vector.multi_reduction <maximumf>, %84, %cst_29 [1] : vector<2x128xf32> to vector<2xf32>
    %86 = vector.shape_cast %85 : vector<2xf32> to vector<2x1xf32>
    %87 = vector.broadcast %86 : vector<2x1xf32> to vector<2x128xf32>
    %88 = arith.cmpf oeq, %84, %87 : vector<2x128xf32>
    %c128_i32 = arith.constant 128 : i32
    %89 = vector.broadcast %c128_i32 : i32 to vector<2x128xi32>
    %90 = arith.select %88, %41, %89 : vector<2x128xi1>, vector<2x128xi32>
    %cst_30 = arith.constant dense<2147483647> : vector<2xi32>
    %91 = vector.multi_reduction <minsi>, %90, %cst_30 [1] : vector<2x128xi32> to vector<2xi32>
    %92 = vector.shape_cast %91 : vector<2xi32> to vector<2x1xi32>
    %c0_i32_31 = arith.constant 0 : i32
    %93 = vector.broadcast %c0_i32_31 : i32 to vector<2x1xi32>
    %94 = arith.cmpi sgt, %44, %93 : vector<2x1xi32>
    %c2_i32 = arith.constant 2 : i32
    %95 = vector.broadcast %c2_i32 : i32 to vector<2x1xi32>
    %96 = arith.select %94, %95, %92 : vector<2x1xi1>, vector<2x1xi32>
    %c0_i32_32 = arith.constant 0 : i32
    %97 = vector.broadcast %c0_i32_32 : i32 to vector<2x8xi32>
    %98 = arith.cmpi eq, %42, %97 : vector<2x8xi32>
    %99 = vector.shape_cast %96 : vector<2x1xi32> to vector<2x1xi32>
    %100 = vector.broadcast %99 : vector<2x1xi32> to vector<2x8xi32>
    %101 = arith.select %98, %100, %45 : vector<2x8xi1>, vector<2x8xi32>
    %c0_i32_33 = arith.constant 0 : i32
    %102 = vector.broadcast %c0_i32_33 : i32 to vector<2x1xi32>
    %103 = arith.cmpi sgt, %44, %102 : vector<2x1xi32>
    %c1_i32_34 = arith.constant 1 : i32
    %104 = vector.broadcast %c1_i32_34 : i32 to vector<2x1xi32>
    %105 = arith.cmpi eq, %92, %104 : vector<2x1xi32>
    %106 = arith.ori %103, %105 : vector<2x1xi1>
    %107 = arith.select %106, %43, %92 : vector<2x1xi1>, vector<2x1xi32>
    %c1_i32_35 = arith.constant 1 : i32
    %108 = vector.broadcast %c1_i32_35 : i32 to vector<2x1xi32>
    %109 = arith.cmpi eq, %92, %108 : vector<2x1xi32>
    %110 = arith.extui %109 : vector<2x1xi1> to vector<2x1xi32>
    %111 = arith.maxsi %44, %110 : vector<2x1xi32>
    %112 = vector.broadcast %107 : vector<2x1xi32> to vector<2x128xi32>
    %113 = arith.cmpi eq, %41, %112 : vector<2x128xi32>
    %114 = arith.extui %113 : vector<2x128xi1> to vector<2x128xi32>
    %115 = arith.sitofp %114 : vector<2x128xi32> to vector<2x128xf32>
    %116 = arith.truncf %115 : vector<2x128xf32> to vector<2x128xbf16>
    %117 = arith.truncf %79 : vector<2x256xf32> to vector<2x256xbf16>
    %118 = tpu.concatenate %116, %117 in 1 : vector<2x128xbf16>, vector<2x256xbf16> -> vector<2x384xbf16>
    %c0_36 = arith.constant 0 : index
    %c0_37 = arith.constant 0 : index
    %119 = vector.load %arg7[%c0_36, %c0_37] : memref<384x1024xbf16, #tpu.memory_space<vmem>>, vector<384x1024xbf16>
    %cst_38 = arith.constant dense<0.000000e+00> : vector<2x1024xf32>
    %120 = tpu.matmul %118, %119, %cst_38 {dimension_numbers = #tpu.dot_dimension_numbers<[1], [0], [0], [1], [0, 0, 1, 1], [], []>} : vector<2x384xbf16>, vector<384x1024xbf16>, vector<2x1024xf32> -> vector<2x1024xf32>
    %121 = vector.extract_strided_slice %120 {offsets = [0, 0], sizes = [2, 256], strides = [1, 1]} : vector<2x1024xf32> to vector<2x256xf32>
    %122 = arith.negf %121 : vector<2x256xf32>
    %123 = math.exp %122 : vector<2x256xf32>
    %cst_39 = arith.constant 1.000000e+00 : f32
    %124 = vector.broadcast %cst_39 : f32 to vector<2x256xf32>
    %125 = arith.addf %124, %123 : vector<2x256xf32>
    %126 = arith.divf %124, %125 : vector<2x256xf32>
    %127 = vector.extract_strided_slice %120 {offsets = [0, 256], sizes = [2, 256], strides = [1, 1]} : vector<2x1024xf32> to vector<2x256xf32>
    %128 = arith.negf %127 : vector<2x256xf32>
    %129 = math.exp %128 : vector<2x256xf32>
    %cst_40 = arith.constant 1.000000e+00 : f32
    %130 = vector.broadcast %cst_40 : f32 to vector<2x256xf32>
    %131 = arith.addf %130, %129 : vector<2x256xf32>
    %132 = arith.divf %130, %131 : vector<2x256xf32>
    %133 = vector.extract_strided_slice %120 {offsets = [0, 512], sizes = [2, 256], strides = [1, 1]} : vector<2x1024xf32> to vector<2x256xf32>
    %134 = math.tanh %133 : vector<2x256xf32>
    %135 = vector.extract_strided_slice %120 {offsets = [0, 768], sizes = [2, 256], strides = [1, 1]} : vector<2x1024xf32> to vector<2x256xf32>
    %136 = arith.negf %135 : vector<2x256xf32>
    %137 = math.exp %136 : vector<2x256xf32>
    %cst_41 = arith.constant 1.000000e+00 : f32
    %138 = vector.broadcast %cst_41 : f32 to vector<2x256xf32>
    %139 = arith.addf %138, %137 : vector<2x256xf32>
    %140 = arith.divf %138, %139 : vector<2x256xf32>
    %141 = arith.mulf %132, %77 : vector<2x256xf32>
    %142 = arith.mulf %126, %134 : vector<2x256xf32>
    %143 = arith.addf %141, %142 : vector<2x256xf32>
    %144 = math.tanh %143 : vector<2x256xf32>
    %145 = arith.mulf %140, %144 : vector<2x256xf32>
    %146 = arith.truncf %145 : vector<2x256xf32> to vector<2x256xbf16>
    %c0_42 = arith.constant 0 : index
    %c0_43 = arith.constant 0 : index
    %147 = vector.load %arg8[%c0_42, %c0_43] : memref<256x128xbf16, #tpu.memory_space<vmem>>, vector<256x128xbf16>
    %cst_44 = arith.constant dense<0.000000e+00> : vector<2x128xf32>
    %148 = tpu.matmul %146, %147, %cst_44 {dimension_numbers = #tpu.dot_dimension_numbers<[1], [0], [0], [1], [0, 0, 1, 1], [], []>} : vector<2x256xbf16>, vector<256x128xbf16>, vector<2x128xf32> -> vector<2x128xf32>
    %149 = vector.broadcast %6 : vector<1x128xf32> to vector<2x128xf32>
    %150 = arith.addf %148, %149 : vector<2x128xf32>
    %cst_45 = arith.constant dense<0xFF800000> : vector<2xf32>
    %151 = vector.multi_reduction <maximumf>, %150, %cst_45 [1] : vector<2x128xf32> to vector<2xf32>
    %152 = vector.shape_cast %151 : vector<2xf32> to vector<2x1xf32>
    %153 = vector.broadcast %152 : vector<2x1xf32> to vector<2x128xf32>
    %154 = arith.cmpf oeq, %150, %153 : vector<2x128xf32>
    %c128_i32_46 = arith.constant 128 : i32
    %155 = vector.broadcast %c128_i32_46 : i32 to vector<2x128xi32>
    %156 = arith.select %154, %41, %155 : vector<2x128xi1>, vector<2x128xi32>
    %cst_47 = arith.constant dense<2147483647> : vector<2xi32>
    %157 = vector.multi_reduction <minsi>, %156, %cst_47 [1] : vector<2x128xi32> to vector<2xi32>
    %158 = vector.shape_cast %157 : vector<2xi32> to vector<2x1xi32>
    %c0_i32_48 = arith.constant 0 : i32
    %159 = vector.broadcast %c0_i32_48 : i32 to vector<2x1xi32>
    %160 = arith.cmpi sgt, %111, %159 : vector<2x1xi32>
    %c2_i32_49 = arith.constant 2 : i32
    %161 = vector.broadcast %c2_i32_49 : i32 to vector<2x1xi32>
    %162 = arith.select %160, %161, %158 : vector<2x1xi1>, vector<2x1xi32>
    %c1_i32_50 = arith.constant 1 : i32
    %163 = vector.broadcast %c1_i32_50 : i32 to vector<2x8xi32>
    %164 = arith.cmpi eq, %42, %163 : vector<2x8xi32>
    %165 = vector.shape_cast %162 : vector<2x1xi32> to vector<2x1xi32>
    %166 = vector.broadcast %165 : vector<2x1xi32> to vector<2x8xi32>
    %167 = arith.select %164, %166, %101 : vector<2x8xi1>, vector<2x8xi32>
    %c0_i32_51 = arith.constant 0 : i32
    %168 = vector.broadcast %c0_i32_51 : i32 to vector<2x1xi32>
    %169 = arith.cmpi sgt, %111, %168 : vector<2x1xi32>
    %c1_i32_52 = arith.constant 1 : i32
    %170 = vector.broadcast %c1_i32_52 : i32 to vector<2x1xi32>
    %171 = arith.cmpi eq, %158, %170 : vector<2x1xi32>
    %172 = arith.ori %169, %171 : vector<2x1xi1>
    %173 = arith.select %172, %107, %158 : vector<2x1xi1>, vector<2x1xi32>
    %c1_i32_53 = arith.constant 1 : i32
    %174 = vector.broadcast %c1_i32_53 : i32 to vector<2x1xi32>
    %175 = arith.cmpi eq, %158, %174 : vector<2x1xi32>
    %176 = arith.extui %175 : vector<2x1xi1> to vector<2x1xi32>
    %177 = arith.maxsi %111, %176 : vector<2x1xi32>
    %178 = vector.broadcast %173 : vector<2x1xi32> to vector<2x128xi32>
    %179 = arith.cmpi eq, %41, %178 : vector<2x128xi32>
    %180 = arith.extui %179 : vector<2x128xi1> to vector<2x128xi32>
    %181 = arith.sitofp %180 : vector<2x128xi32> to vector<2x128xf32>
    %182 = arith.truncf %181 : vector<2x128xf32> to vector<2x128xbf16>
    %183 = arith.truncf %145 : vector<2x256xf32> to vector<2x256xbf16>
    %184 = tpu.concatenate %182, %183 in 1 : vector<2x128xbf16>, vector<2x256xbf16> -> vector<2x384xbf16>
    %c0_54 = arith.constant 0 : index
    %c0_55 = arith.constant 0 : index
    %185 = vector.load %arg7[%c0_54, %c0_55] : memref<384x1024xbf16, #tpu.memory_space<vmem>>, vector<384x1024xbf16>
    %cst_56 = arith.constant dense<0.000000e+00> : vector<2x1024xf32>
    %186 = tpu.matmul %184, %185, %cst_56 {dimension_numbers = #tpu.dot_dimension_numbers<[1], [0], [0], [1], [0, 0, 1, 1], [], []>} : vector<2x384xbf16>, vector<384x1024xbf16>, vector<2x1024xf32> -> vector<2x1024xf32>
    %187 = vector.extract_strided_slice %186 {offsets = [0, 0], sizes = [2, 256], strides = [1, 1]} : vector<2x1024xf32> to vector<2x256xf32>
    %188 = arith.negf %187 : vector<2x256xf32>
    %189 = math.exp %188 : vector<2x256xf32>
    %cst_57 = arith.constant 1.000000e+00 : f32
    %190 = vector.broadcast %cst_57 : f32 to vector<2x256xf32>
    %191 = arith.addf %190, %189 : vector<2x256xf32>
    %192 = arith.divf %190, %191 : vector<2x256xf32>
    %193 = vector.extract_strided_slice %186 {offsets = [0, 256], sizes = [2, 256], strides = [1, 1]} : vector<2x1024xf32> to vector<2x256xf32>
    %194 = arith.negf %193 : vector<2x256xf32>
    %195 = math.exp %194 : vector<2x256xf32>
    %cst_58 = arith.constant 1.000000e+00 : f32
    %196 = vector.broadcast %cst_58 : f32 to vector<2x256xf32>
    %197 = arith.addf %196, %195 : vector<2x256xf32>
    %198 = arith.divf %196, %197 : vector<2x256xf32>
    %199 = vector.extract_strided_slice %186 {offsets = [0, 512], sizes = [2, 256], strides = [1, 1]} : vector<2x1024xf32> to vector<2x256xf32>
    %200 = math.tanh %199 : vector<2x256xf32>
    %201 = vector.extract_strided_slice %186 {offsets = [0, 768], sizes = [2, 256], strides = [1, 1]} : vector<2x1024xf32> to vector<2x256xf32>
    %202 = arith.negf %201 : vector<2x256xf32>
    %203 = math.exp %202 : vector<2x256xf32>
    %cst_59 = arith.constant 1.000000e+00 : f32
    %204 = vector.broadcast %cst_59 : f32 to vector<2x256xf32>
    %205 = arith.addf %204, %203 : vector<2x256xf32>
    %206 = arith.divf %204, %205 : vector<2x256xf32>
    %207 = arith.mulf %198, %143 : vector<2x256xf32>
    %208 = arith.mulf %192, %200 : vector<2x256xf32>
    %209 = arith.addf %207, %208 : vector<2x256xf32>
    %210 = math.tanh %209 : vector<2x256xf32>
    %211 = arith.mulf %206, %210 : vector<2x256xf32>
    %212 = arith.truncf %211 : vector<2x256xf32> to vector<2x256xbf16>
    %c0_60 = arith.constant 0 : index
    %c0_61 = arith.constant 0 : index
    %213 = vector.load %arg8[%c0_60, %c0_61] : memref<256x128xbf16, #tpu.memory_space<vmem>>, vector<256x128xbf16>
    %cst_62 = arith.constant dense<0.000000e+00> : vector<2x128xf32>
    %214 = tpu.matmul %212, %213, %cst_62 {dimension_numbers = #tpu.dot_dimension_numbers<[1], [0], [0], [1], [0, 0, 1, 1], [], []>} : vector<2x256xbf16>, vector<256x128xbf16>, vector<2x128xf32> -> vector<2x128xf32>
    %215 = vector.broadcast %6 : vector<1x128xf32> to vector<2x128xf32>
    %216 = arith.addf %214, %215 : vector<2x128xf32>
    %cst_63 = arith.constant dense<0xFF800000> : vector<2xf32>
    %217 = vector.multi_reduction <maximumf>, %216, %cst_63 [1] : vector<2x128xf32> to vector<2xf32>
    %218 = vector.shape_cast %217 : vector<2xf32> to vector<2x1xf32>
    %219 = vector.broadcast %218 : vector<2x1xf32> to vector<2x128xf32>
    %220 = arith.cmpf oeq, %216, %219 : vector<2x128xf32>
    %c128_i32_64 = arith.constant 128 : i32
    %221 = vector.broadcast %c128_i32_64 : i32 to vector<2x128xi32>
    %222 = arith.select %220, %41, %221 : vector<2x128xi1>, vector<2x128xi32>
    %cst_65 = arith.constant dense<2147483647> : vector<2xi32>
    %223 = vector.multi_reduction <minsi>, %222, %cst_65 [1] : vector<2x128xi32> to vector<2xi32>
    %224 = vector.shape_cast %223 : vector<2xi32> to vector<2x1xi32>
    %c0_i32_66 = arith.constant 0 : i32
    %225 = vector.broadcast %c0_i32_66 : i32 to vector<2x1xi32>
    %226 = arith.cmpi sgt, %177, %225 : vector<2x1xi32>
    %c2_i32_67 = arith.constant 2 : i32
    %227 = vector.broadcast %c2_i32_67 : i32 to vector<2x1xi32>
    %228 = arith.select %226, %227, %224 : vector<2x1xi1>, vector<2x1xi32>
    %c2_i32_68 = arith.constant 2 : i32
    %229 = vector.broadcast %c2_i32_68 : i32 to vector<2x8xi32>
    %230 = arith.cmpi eq, %42, %229 : vector<2x8xi32>
    %231 = vector.shape_cast %228 : vector<2x1xi32> to vector<2x1xi32>
    %232 = vector.broadcast %231 : vector<2x1xi32> to vector<2x8xi32>
    %233 = arith.select %230, %232, %167 : vector<2x8xi1>, vector<2x8xi32>
    %c0_i32_69 = arith.constant 0 : i32
    %234 = vector.broadcast %c0_i32_69 : i32 to vector<2x1xi32>
    %235 = arith.cmpi sgt, %177, %234 : vector<2x1xi32>
    %c1_i32_70 = arith.constant 1 : i32
    %236 = vector.broadcast %c1_i32_70 : i32 to vector<2x1xi32>
    %237 = arith.cmpi eq, %224, %236 : vector<2x1xi32>
    %238 = arith.ori %235, %237 : vector<2x1xi1>
    %239 = arith.select %238, %173, %224 : vector<2x1xi1>, vector<2x1xi32>
    %c1_i32_71 = arith.constant 1 : i32
    %240 = vector.broadcast %c1_i32_71 : i32 to vector<2x1xi32>
    %241 = arith.cmpi eq, %224, %240 : vector<2x1xi32>
    %242 = arith.extui %241 : vector<2x1xi1> to vector<2x1xi32>
    %243 = arith.maxsi %177, %242 : vector<2x1xi32>
    %244 = vector.broadcast %239 : vector<2x1xi32> to vector<2x128xi32>
    %245 = arith.cmpi eq, %41, %244 : vector<2x128xi32>
    %246 = arith.extui %245 : vector<2x128xi1> to vector<2x128xi32>
    %247 = arith.sitofp %246 : vector<2x128xi32> to vector<2x128xf32>
    %248 = arith.truncf %247 : vector<2x128xf32> to vector<2x128xbf16>
    %249 = arith.truncf %211 : vector<2x256xf32> to vector<2x256xbf16>
    %250 = tpu.concatenate %248, %249 in 1 : vector<2x128xbf16>, vector<2x256xbf16> -> vector<2x384xbf16>
    %c0_72 = arith.constant 0 : index
    %c0_73 = arith.constant 0 : index
    %251 = vector.load %arg7[%c0_72, %c0_73] : memref<384x1024xbf16, #tpu.memory_space<vmem>>, vector<384x1024xbf16>
    %cst_74 = arith.constant dense<0.000000e+00> : vector<2x1024xf32>
    %252 = tpu.matmul %250, %251, %cst_74 {dimension_numbers = #tpu.dot_dimension_numbers<[1], [0], [0], [1], [0, 0, 1, 1], [], []>} : vector<2x384xbf16>, vector<384x1024xbf16>, vector<2x1024xf32> -> vector<2x1024xf32>
    %253 = vector.extract_strided_slice %252 {offsets = [0, 0], sizes = [2, 256], strides = [1, 1]} : vector<2x1024xf32> to vector<2x256xf32>
    %254 = arith.negf %253 : vector<2x256xf32>
    %255 = math.exp %254 : vector<2x256xf32>
    %cst_75 = arith.constant 1.000000e+00 : f32
    %256 = vector.broadcast %cst_75 : f32 to vector<2x256xf32>
    %257 = arith.addf %256, %255 : vector<2x256xf32>
    %258 = arith.divf %256, %257 : vector<2x256xf32>
    %259 = vector.extract_strided_slice %252 {offsets = [0, 256], sizes = [2, 256], strides = [1, 1]} : vector<2x1024xf32> to vector<2x256xf32>
    %260 = arith.negf %259 : vector<2x256xf32>
    %261 = math.exp %260 : vector<2x256xf32>
    %cst_76 = arith.constant 1.000000e+00 : f32
    %262 = vector.broadcast %cst_76 : f32 to vector<2x256xf32>
    %263 = arith.addf %262, %261 : vector<2x256xf32>
    %264 = arith.divf %262, %263 : vector<2x256xf32>
    %265 = vector.extract_strided_slice %252 {offsets = [0, 512], sizes = [2, 256], strides = [1, 1]} : vector<2x1024xf32> to vector<2x256xf32>
    %266 = math.tanh %265 : vector<2x256xf32>
    %267 = vector.extract_strided_slice %252 {offsets = [0, 768], sizes = [2, 256], strides = [1, 1]} : vector<2x1024xf32> to vector<2x256xf32>
    %268 = arith.negf %267 : vector<2x256xf32>
    %269 = math.exp %268 : vector<2x256xf32>
    %cst_77 = arith.constant 1.000000e+00 : f32
    %270 = vector.broadcast %cst_77 : f32 to vector<2x256xf32>
    %271 = arith.addf %270, %269 : vector<2x256xf32>
    %272 = arith.divf %270, %271 : vector<2x256xf32>
    %273 = arith.mulf %264, %209 : vector<2x256xf32>
    %274 = arith.mulf %258, %266 : vector<2x256xf32>
    %275 = arith.addf %273, %274 : vector<2x256xf32>
    %276 = math.tanh %275 : vector<2x256xf32>
    %277 = arith.mulf %272, %276 : vector<2x256xf32>
    %278 = arith.truncf %277 : vector<2x256xf32> to vector<2x256xbf16>
    %c0_78 = arith.constant 0 : index
    %c0_79 = arith.constant 0 : index
    %279 = vector.load %arg8[%c0_78, %c0_79] : memref<256x128xbf16, #tpu.memory_space<vmem>>, vector<256x128xbf16>
    %cst_80 = arith.constant dense<0.000000e+00> : vector<2x128xf32>
    %280 = tpu.matmul %278, %279, %cst_80 {dimension_numbers = #tpu.dot_dimension_numbers<[1], [0], [0], [1], [0, 0, 1, 1], [], []>} : vector<2x256xbf16>, vector<256x128xbf16>, vector<2x128xf32> -> vector<2x128xf32>
    %281 = vector.broadcast %6 : vector<1x128xf32> to vector<2x128xf32>
    %282 = arith.addf %280, %281 : vector<2x128xf32>
    %cst_81 = arith.constant dense<0xFF800000> : vector<2xf32>
    %283 = vector.multi_reduction <maximumf>, %282, %cst_81 [1] : vector<2x128xf32> to vector<2xf32>
    %284 = vector.shape_cast %283 : vector<2xf32> to vector<2x1xf32>
    %285 = vector.broadcast %284 : vector<2x1xf32> to vector<2x128xf32>
    %286 = arith.cmpf oeq, %282, %285 : vector<2x128xf32>
    %c128_i32_82 = arith.constant 128 : i32
    %287 = vector.broadcast %c128_i32_82 : i32 to vector<2x128xi32>
    %288 = arith.select %286, %41, %287 : vector<2x128xi1>, vector<2x128xi32>
    %cst_83 = arith.constant dense<2147483647> : vector<2xi32>
    %289 = vector.multi_reduction <minsi>, %288, %cst_83 [1] : vector<2x128xi32> to vector<2xi32>
    %290 = vector.shape_cast %289 : vector<2xi32> to vector<2x1xi32>
    %c0_i32_84 = arith.constant 0 : i32
    %291 = vector.broadcast %c0_i32_84 : i32 to vector<2x1xi32>
    %292 = arith.cmpi sgt, %243, %291 : vector<2x1xi32>
    %c2_i32_85 = arith.constant 2 : i32
    %293 = vector.broadcast %c2_i32_85 : i32 to vector<2x1xi32>
    %294 = arith.select %292, %293, %290 : vector<2x1xi1>, vector<2x1xi32>
    %c3_i32 = arith.constant 3 : i32
    %295 = vector.broadcast %c3_i32 : i32 to vector<2x8xi32>
    %296 = arith.cmpi eq, %42, %295 : vector<2x8xi32>
    %297 = vector.shape_cast %294 : vector<2x1xi32> to vector<2x1xi32>
    %298 = vector.broadcast %297 : vector<2x1xi32> to vector<2x8xi32>
    %299 = arith.select %296, %298, %233 : vector<2x8xi1>, vector<2x8xi32>
    %c0_i32_86 = arith.constant 0 : i32
    %300 = vector.broadcast %c0_i32_86 : i32 to vector<2x1xi32>
    %301 = arith.cmpi sgt, %243, %300 : vector<2x1xi32>
    %c1_i32_87 = arith.constant 1 : i32
    %302 = vector.broadcast %c1_i32_87 : i32 to vector<2x1xi32>
    %303 = arith.cmpi eq, %290, %302 : vector<2x1xi32>
    %304 = arith.ori %301, %303 : vector<2x1xi1>
    %305 = arith.select %304, %239, %290 : vector<2x1xi1>, vector<2x1xi32>
    %c1_i32_88 = arith.constant 1 : i32
    %306 = vector.broadcast %c1_i32_88 : i32 to vector<2x1xi32>
    %307 = arith.cmpi eq, %290, %306 : vector<2x1xi32>
    %308 = arith.extui %307 : vector<2x1xi1> to vector<2x1xi32>
    %309 = arith.maxsi %243, %308 : vector<2x1xi32>
    %310 = vector.broadcast %305 : vector<2x1xi32> to vector<2x128xi32>
    %311 = arith.cmpi eq, %41, %310 : vector<2x128xi32>
    %312 = arith.extui %311 : vector<2x128xi1> to vector<2x128xi32>
    %313 = arith.sitofp %312 : vector<2x128xi32> to vector<2x128xf32>
    %314 = arith.truncf %313 : vector<2x128xf32> to vector<2x128xbf16>
    %315 = arith.truncf %277 : vector<2x256xf32> to vector<2x256xbf16>
    %316 = tpu.concatenate %314, %315 in 1 : vector<2x128xbf16>, vector<2x256xbf16> -> vector<2x384xbf16>
    %c0_89 = arith.constant 0 : index
    %c0_90 = arith.constant 0 : index
    %317 = vector.load %arg7[%c0_89, %c0_90] : memref<384x1024xbf16, #tpu.memory_space<vmem>>, vector<384x1024xbf16>
    %cst_91 = arith.constant dense<0.000000e+00> : vector<2x1024xf32>
    %318 = tpu.matmul %316, %317, %cst_91 {dimension_numbers = #tpu.dot_dimension_numbers<[1], [0], [0], [1], [0, 0, 1, 1], [], []>} : vector<2x384xbf16>, vector<384x1024xbf16>, vector<2x1024xf32> -> vector<2x1024xf32>
    %319 = vector.extract_strided_slice %318 {offsets = [0, 0], sizes = [2, 256], strides = [1, 1]} : vector<2x1024xf32> to vector<2x256xf32>
    %320 = arith.negf %319 : vector<2x256xf32>
    %321 = math.exp %320 : vector<2x256xf32>
    %cst_92 = arith.constant 1.000000e+00 : f32
    %322 = vector.broadcast %cst_92 : f32 to vector<2x256xf32>
    %323 = arith.addf %322, %321 : vector<2x256xf32>
    %324 = arith.divf %322, %323 : vector<2x256xf32>
    %325 = vector.extract_strided_slice %318 {offsets = [0, 256], sizes = [2, 256], strides = [1, 1]} : vector<2x1024xf32> to vector<2x256xf32>
    %326 = arith.negf %325 : vector<2x256xf32>
    %327 = math.exp %326 : vector<2x256xf32>
    %cst_93 = arith.constant 1.000000e+00 : f32
    %328 = vector.broadcast %cst_93 : f32 to vector<2x256xf32>
    %329 = arith.addf %328, %327 : vector<2x256xf32>
    %330 = arith.divf %328, %329 : vector<2x256xf32>
    %331 = vector.extract_strided_slice %318 {offsets = [0, 512], sizes = [2, 256], strides = [1, 1]} : vector<2x1024xf32> to vector<2x256xf32>
    %332 = math.tanh %331 : vector<2x256xf32>
    %333 = vector.extract_strided_slice %318 {offsets = [0, 768], sizes = [2, 256], strides = [1, 1]} : vector<2x1024xf32> to vector<2x256xf32>
    %334 = arith.negf %333 : vector<2x256xf32>
    %335 = math.exp %334 : vector<2x256xf32>
    %cst_94 = arith.constant 1.000000e+00 : f32
    %336 = vector.broadcast %cst_94 : f32 to vector<2x256xf32>
    %337 = arith.addf %336, %335 : vector<2x256xf32>
    %338 = arith.divf %336, %337 : vector<2x256xf32>
    %339 = arith.mulf %330, %275 : vector<2x256xf32>
    %340 = arith.mulf %324, %332 : vector<2x256xf32>
    %341 = arith.addf %339, %340 : vector<2x256xf32>
    %342 = math.tanh %341 : vector<2x256xf32>
    %343 = arith.mulf %338, %342 : vector<2x256xf32>
    %344 = arith.truncf %343 : vector<2x256xf32> to vector<2x256xbf16>
    %c0_95 = arith.constant 0 : index
    %c0_96 = arith.constant 0 : index
    %345 = vector.load %arg8[%c0_95, %c0_96] : memref<256x128xbf16, #tpu.memory_space<vmem>>, vector<256x128xbf16>
    %cst_97 = arith.constant dense<0.000000e+00> : vector<2x128xf32>
    %346 = tpu.matmul %344, %345, %cst_97 {dimension_numbers = #tpu.dot_dimension_numbers<[1], [0], [0], [1], [0, 0, 1, 1], [], []>} : vector<2x256xbf16>, vector<256x128xbf16>, vector<2x128xf32> -> vector<2x128xf32>
    %347 = vector.broadcast %6 : vector<1x128xf32> to vector<2x128xf32>
    %348 = arith.addf %346, %347 : vector<2x128xf32>
    %cst_98 = arith.constant dense<0xFF800000> : vector<2xf32>
    %349 = vector.multi_reduction <maximumf>, %348, %cst_98 [1] : vector<2x128xf32> to vector<2xf32>
    %350 = vector.shape_cast %349 : vector<2xf32> to vector<2x1xf32>
    %351 = vector.broadcast %350 : vector<2x1xf32> to vector<2x128xf32>
    %352 = arith.cmpf oeq, %348, %351 : vector<2x128xf32>
    %c128_i32_99 = arith.constant 128 : i32
    %353 = vector.broadcast %c128_i32_99 : i32 to vector<2x128xi32>
    %354 = arith.select %352, %41, %353 : vector<2x128xi1>, vector<2x128xi32>
    %cst_100 = arith.constant dense<2147483647> : vector<2xi32>
    %355 = vector.multi_reduction <minsi>, %354, %cst_100 [1] : vector<2x128xi32> to vector<2xi32>
    %356 = vector.shape_cast %355 : vector<2xi32> to vector<2x1xi32>
    %c0_i32_101 = arith.constant 0 : i32
    %357 = vector.broadcast %c0_i32_101 : i32 to vector<2x1xi32>
    %358 = arith.cmpi sgt, %309, %357 : vector<2x1xi32>
    %c2_i32_102 = arith.constant 2 : i32
    %359 = vector.broadcast %c2_i32_102 : i32 to vector<2x1xi32>
    %360 = arith.select %358, %359, %356 : vector<2x1xi1>, vector<2x1xi32>
    %c4_i32 = arith.constant 4 : i32
    %361 = vector.broadcast %c4_i32 : i32 to vector<2x8xi32>
    %362 = arith.cmpi eq, %42, %361 : vector<2x8xi32>
    %363 = vector.shape_cast %360 : vector<2x1xi32> to vector<2x1xi32>
    %364 = vector.broadcast %363 : vector<2x1xi32> to vector<2x8xi32>
    %365 = arith.select %362, %364, %299 : vector<2x8xi1>, vector<2x8xi32>
    %c0_i32_103 = arith.constant 0 : i32
    %366 = vector.broadcast %c0_i32_103 : i32 to vector<2x1xi32>
    %367 = arith.cmpi sgt, %309, %366 : vector<2x1xi32>
    %c1_i32_104 = arith.constant 1 : i32
    %368 = vector.broadcast %c1_i32_104 : i32 to vector<2x1xi32>
    %369 = arith.cmpi eq, %356, %368 : vector<2x1xi32>
    %370 = arith.ori %367, %369 : vector<2x1xi1>
    %371 = arith.select %370, %305, %356 : vector<2x1xi1>, vector<2x1xi32>
    %c1_i32_105 = arith.constant 1 : i32
    %372 = vector.broadcast %c1_i32_105 : i32 to vector<2x1xi32>
    %373 = arith.cmpi eq, %356, %372 : vector<2x1xi32>
    %374 = arith.extui %373 : vector<2x1xi1> to vector<2x1xi32>
    %375 = arith.maxsi %309, %374 : vector<2x1xi32>
    %376 = vector.broadcast %371 : vector<2x1xi32> to vector<2x128xi32>
    %377 = arith.cmpi eq, %41, %376 : vector<2x128xi32>
    %378 = arith.extui %377 : vector<2x128xi1> to vector<2x128xi32>
    %379 = arith.sitofp %378 : vector<2x128xi32> to vector<2x128xf32>
    %380 = arith.truncf %379 : vector<2x128xf32> to vector<2x128xbf16>
    %381 = arith.truncf %343 : vector<2x256xf32> to vector<2x256xbf16>
    %382 = tpu.concatenate %380, %381 in 1 : vector<2x128xbf16>, vector<2x256xbf16> -> vector<2x384xbf16>
    %c0_106 = arith.constant 0 : index
    %c0_107 = arith.constant 0 : index
    %383 = vector.load %arg7[%c0_106, %c0_107] : memref<384x1024xbf16, #tpu.memory_space<vmem>>, vector<384x1024xbf16>
    %cst_108 = arith.constant dense<0.000000e+00> : vector<2x1024xf32>
    %384 = tpu.matmul %382, %383, %cst_108 {dimension_numbers = #tpu.dot_dimension_numbers<[1], [0], [0], [1], [0, 0, 1, 1], [], []>} : vector<2x384xbf16>, vector<384x1024xbf16>, vector<2x1024xf32> -> vector<2x1024xf32>
    %385 = vector.extract_strided_slice %384 {offsets = [0, 0], sizes = [2, 256], strides = [1, 1]} : vector<2x1024xf32> to vector<2x256xf32>
    %386 = arith.negf %385 : vector<2x256xf32>
    %387 = math.exp %386 : vector<2x256xf32>
    %cst_109 = arith.constant 1.000000e+00 : f32
    %388 = vector.broadcast %cst_109 : f32 to vector<2x256xf32>
    %389 = arith.addf %388, %387 : vector<2x256xf32>
    %390 = arith.divf %388, %389 : vector<2x256xf32>
    %391 = vector.extract_strided_slice %384 {offsets = [0, 256], sizes = [2, 256], strides = [1, 1]} : vector<2x1024xf32> to vector<2x256xf32>
    %392 = arith.negf %391 : vector<2x256xf32>
    %393 = math.exp %392 : vector<2x256xf32>
    %cst_110 = arith.constant 1.000000e+00 : f32
    %394 = vector.broadcast %cst_110 : f32 to vector<2x256xf32>
    %395 = arith.addf %394, %393 : vector<2x256xf32>
    %396 = arith.divf %394, %395 : vector<2x256xf32>
    %397 = vector.extract_strided_slice %384 {offsets = [0, 512], sizes = [2, 256], strides = [1, 1]} : vector<2x1024xf32> to vector<2x256xf32>
    %398 = math.tanh %397 : vector<2x256xf32>
    %399 = vector.extract_strided_slice %384 {offsets = [0, 768], sizes = [2, 256], strides = [1, 1]} : vector<2x1024xf32> to vector<2x256xf32>
    %400 = arith.negf %399 : vector<2x256xf32>
    %401 = math.exp %400 : vector<2x256xf32>
    %cst_111 = arith.constant 1.000000e+00 : f32
    %402 = vector.broadcast %cst_111 : f32 to vector<2x256xf32>
    %403 = arith.addf %402, %401 : vector<2x256xf32>
    %404 = arith.divf %402, %403 : vector<2x256xf32>
    %405 = arith.mulf %396, %341 : vector<2x256xf32>
    %406 = arith.mulf %390, %398 : vector<2x256xf32>
    %407 = arith.addf %405, %406 : vector<2x256xf32>
    %408 = math.tanh %407 : vector<2x256xf32>
    %409 = arith.mulf %404, %408 : vector<2x256xf32>
    %410 = arith.truncf %409 : vector<2x256xf32> to vector<2x256xbf16>
    %c0_112 = arith.constant 0 : index
    %c0_113 = arith.constant 0 : index
    %411 = vector.load %arg8[%c0_112, %c0_113] : memref<256x128xbf16, #tpu.memory_space<vmem>>, vector<256x128xbf16>
    %cst_114 = arith.constant dense<0.000000e+00> : vector<2x128xf32>
    %412 = tpu.matmul %410, %411, %cst_114 {dimension_numbers = #tpu.dot_dimension_numbers<[1], [0], [0], [1], [0, 0, 1, 1], [], []>} : vector<2x256xbf16>, vector<256x128xbf16>, vector<2x128xf32> -> vector<2x128xf32>
    %413 = vector.broadcast %6 : vector<1x128xf32> to vector<2x128xf32>
    %414 = arith.addf %412, %413 : vector<2x128xf32>
    %cst_115 = arith.constant dense<0xFF800000> : vector<2xf32>
    %415 = vector.multi_reduction <maximumf>, %414, %cst_115 [1] : vector<2x128xf32> to vector<2xf32>
    %416 = vector.shape_cast %415 : vector<2xf32> to vector<2x1xf32>
    %417 = vector.broadcast %416 : vector<2x1xf32> to vector<2x128xf32>
    %418 = arith.cmpf oeq, %414, %417 : vector<2x128xf32>
    %c128_i32_116 = arith.constant 128 : i32
    %419 = vector.broadcast %c128_i32_116 : i32 to vector<2x128xi32>
    %420 = arith.select %418, %41, %419 : vector<2x128xi1>, vector<2x128xi32>
    %cst_117 = arith.constant dense<2147483647> : vector<2xi32>
    %421 = vector.multi_reduction <minsi>, %420, %cst_117 [1] : vector<2x128xi32> to vector<2xi32>
    %422 = vector.shape_cast %421 : vector<2xi32> to vector<2x1xi32>
    %c0_i32_118 = arith.constant 0 : i32
    %423 = vector.broadcast %c0_i32_118 : i32 to vector<2x1xi32>
    %424 = arith.cmpi sgt, %375, %423 : vector<2x1xi32>
    %c2_i32_119 = arith.constant 2 : i32
    %425 = vector.broadcast %c2_i32_119 : i32 to vector<2x1xi32>
    %426 = arith.select %424, %425, %422 : vector<2x1xi1>, vector<2x1xi32>
    %c5_i32 = arith.constant 5 : i32
    %427 = vector.broadcast %c5_i32 : i32 to vector<2x8xi32>
    %428 = arith.cmpi eq, %42, %427 : vector<2x8xi32>
    %429 = vector.shape_cast %426 : vector<2x1xi32> to vector<2x1xi32>
    %430 = vector.broadcast %429 : vector<2x1xi32> to vector<2x8xi32>
    %431 = arith.select %428, %430, %365 : vector<2x8xi1>, vector<2x8xi32>
    %c0_i32_120 = arith.constant 0 : i32
    %432 = vector.broadcast %c0_i32_120 : i32 to vector<2x1xi32>
    %433 = arith.cmpi sgt, %375, %432 : vector<2x1xi32>
    %c1_i32_121 = arith.constant 1 : i32
    %434 = vector.broadcast %c1_i32_121 : i32 to vector<2x1xi32>
    %435 = arith.cmpi eq, %422, %434 : vector<2x1xi32>
    %436 = arith.ori %433, %435 : vector<2x1xi1>
    %437 = arith.select %436, %371, %422 : vector<2x1xi1>, vector<2x1xi32>
    %c1_i32_122 = arith.constant 1 : i32
    %438 = vector.broadcast %c1_i32_122 : i32 to vector<2x1xi32>
    %439 = arith.cmpi eq, %422, %438 : vector<2x1xi32>
    %440 = arith.extui %439 : vector<2x1xi1> to vector<2x1xi32>
    %441 = arith.maxsi %375, %440 : vector<2x1xi32>
    %442 = vector.broadcast %437 : vector<2x1xi32> to vector<2x128xi32>
    %443 = arith.cmpi eq, %41, %442 : vector<2x128xi32>
    %444 = arith.extui %443 : vector<2x128xi1> to vector<2x128xi32>
    %445 = arith.sitofp %444 : vector<2x128xi32> to vector<2x128xf32>
    %446 = arith.truncf %445 : vector<2x128xf32> to vector<2x128xbf16>
    %447 = arith.truncf %409 : vector<2x256xf32> to vector<2x256xbf16>
    %448 = tpu.concatenate %446, %447 in 1 : vector<2x128xbf16>, vector<2x256xbf16> -> vector<2x384xbf16>
    %c0_123 = arith.constant 0 : index
    %c0_124 = arith.constant 0 : index
    %449 = vector.load %arg7[%c0_123, %c0_124] : memref<384x1024xbf16, #tpu.memory_space<vmem>>, vector<384x1024xbf16>
    %cst_125 = arith.constant dense<0.000000e+00> : vector<2x1024xf32>
    %450 = tpu.matmul %448, %449, %cst_125 {dimension_numbers = #tpu.dot_dimension_numbers<[1], [0], [0], [1], [0, 0, 1, 1], [], []>} : vector<2x384xbf16>, vector<384x1024xbf16>, vector<2x1024xf32> -> vector<2x1024xf32>
    %451 = vector.extract_strided_slice %450 {offsets = [0, 0], sizes = [2, 256], strides = [1, 1]} : vector<2x1024xf32> to vector<2x256xf32>
    %452 = arith.negf %451 : vector<2x256xf32>
    %453 = math.exp %452 : vector<2x256xf32>
    %cst_126 = arith.constant 1.000000e+00 : f32
    %454 = vector.broadcast %cst_126 : f32 to vector<2x256xf32>
    %455 = arith.addf %454, %453 : vector<2x256xf32>
    %456 = arith.divf %454, %455 : vector<2x256xf32>
    %457 = vector.extract_strided_slice %450 {offsets = [0, 256], sizes = [2, 256], strides = [1, 1]} : vector<2x1024xf32> to vector<2x256xf32>
    %458 = arith.negf %457 : vector<2x256xf32>
    %459 = math.exp %458 : vector<2x256xf32>
    %cst_127 = arith.constant 1.000000e+00 : f32
    %460 = vector.broadcast %cst_127 : f32 to vector<2x256xf32>
    %461 = arith.addf %460, %459 : vector<2x256xf32>
    %462 = arith.divf %460, %461 : vector<2x256xf32>
    %463 = vector.extract_strided_slice %450 {offsets = [0, 512], sizes = [2, 256], strides = [1, 1]} : vector<2x1024xf32> to vector<2x256xf32>
    %464 = math.tanh %463 : vector<2x256xf32>
    %465 = vector.extract_strided_slice %450 {offsets = [0, 768], sizes = [2, 256], strides = [1, 1]} : vector<2x1024xf32> to vector<2x256xf32>
    %466 = arith.negf %465 : vector<2x256xf32>
    %467 = math.exp %466 : vector<2x256xf32>
    %cst_128 = arith.constant 1.000000e+00 : f32
    %468 = vector.broadcast %cst_128 : f32 to vector<2x256xf32>
    %469 = arith.addf %468, %467 : vector<2x256xf32>
    %470 = arith.divf %468, %469 : vector<2x256xf32>
    %471 = arith.mulf %462, %407 : vector<2x256xf32>
    %472 = arith.mulf %456, %464 : vector<2x256xf32>
    %473 = arith.addf %471, %472 : vector<2x256xf32>
    %474 = math.tanh %473 : vector<2x256xf32>
    %475 = arith.mulf %470, %474 : vector<2x256xf32>
    %476 = arith.truncf %475 : vector<2x256xf32> to vector<2x256xbf16>
    %c0_129 = arith.constant 0 : index
    %c0_130 = arith.constant 0 : index
    %477 = vector.load %arg8[%c0_129, %c0_130] : memref<256x128xbf16, #tpu.memory_space<vmem>>, vector<256x128xbf16>
    %cst_131 = arith.constant dense<0.000000e+00> : vector<2x128xf32>
    %478 = tpu.matmul %476, %477, %cst_131 {dimension_numbers = #tpu.dot_dimension_numbers<[1], [0], [0], [1], [0, 0, 1, 1], [], []>} : vector<2x256xbf16>, vector<256x128xbf16>, vector<2x128xf32> -> vector<2x128xf32>
    %479 = vector.broadcast %6 : vector<1x128xf32> to vector<2x128xf32>
    %480 = arith.addf %478, %479 : vector<2x128xf32>
    %cst_132 = arith.constant dense<0xFF800000> : vector<2xf32>
    %481 = vector.multi_reduction <maximumf>, %480, %cst_132 [1] : vector<2x128xf32> to vector<2xf32>
    %482 = vector.shape_cast %481 : vector<2xf32> to vector<2x1xf32>
    %483 = vector.broadcast %482 : vector<2x1xf32> to vector<2x128xf32>
    %484 = arith.cmpf oeq, %480, %483 : vector<2x128xf32>
    %c128_i32_133 = arith.constant 128 : i32
    %485 = vector.broadcast %c128_i32_133 : i32 to vector<2x128xi32>
    %486 = arith.select %484, %41, %485 : vector<2x128xi1>, vector<2x128xi32>
    %cst_134 = arith.constant dense<2147483647> : vector<2xi32>
    %487 = vector.multi_reduction <minsi>, %486, %cst_134 [1] : vector<2x128xi32> to vector<2xi32>
    %488 = vector.shape_cast %487 : vector<2xi32> to vector<2x1xi32>
    %c0_i32_135 = arith.constant 0 : i32
    %489 = vector.broadcast %c0_i32_135 : i32 to vector<2x1xi32>
    %490 = arith.cmpi sgt, %441, %489 : vector<2x1xi32>
    %c2_i32_136 = arith.constant 2 : i32
    %491 = vector.broadcast %c2_i32_136 : i32 to vector<2x1xi32>
    %492 = arith.select %490, %491, %488 : vector<2x1xi1>, vector<2x1xi32>
    %c6_i32 = arith.constant 6 : i32
    %493 = vector.broadcast %c6_i32 : i32 to vector<2x8xi32>
    %494 = arith.cmpi eq, %42, %493 : vector<2x8xi32>
    %495 = vector.shape_cast %492 : vector<2x1xi32> to vector<2x1xi32>
    %496 = vector.broadcast %495 : vector<2x1xi32> to vector<2x8xi32>
    %497 = arith.select %494, %496, %431 : vector<2x8xi1>, vector<2x8xi32>
    %c0_i32_137 = arith.constant 0 : i32
    %498 = vector.broadcast %c0_i32_137 : i32 to vector<2x1xi32>
    %499 = arith.cmpi sgt, %441, %498 : vector<2x1xi32>
    %c1_i32_138 = arith.constant 1 : i32
    %500 = vector.broadcast %c1_i32_138 : i32 to vector<2x1xi32>
    %501 = arith.cmpi eq, %488, %500 : vector<2x1xi32>
    %502 = arith.ori %499, %501 : vector<2x1xi1>
    %503 = arith.select %502, %437, %488 : vector<2x1xi1>, vector<2x1xi32>
    %c1_i32_139 = arith.constant 1 : i32
    %504 = vector.broadcast %c1_i32_139 : i32 to vector<2x1xi32>
    %505 = arith.cmpi eq, %488, %504 : vector<2x1xi32>
    %506 = arith.extui %505 : vector<2x1xi1> to vector<2x1xi32>
    %507 = arith.maxsi %441, %506 : vector<2x1xi32>
    %508 = vector.broadcast %503 : vector<2x1xi32> to vector<2x128xi32>
    %509 = arith.cmpi eq, %41, %508 : vector<2x128xi32>
    %510 = arith.extui %509 : vector<2x128xi1> to vector<2x128xi32>
    %511 = arith.sitofp %510 : vector<2x128xi32> to vector<2x128xf32>
    %512 = arith.truncf %511 : vector<2x128xf32> to vector<2x128xbf16>
    %513 = arith.truncf %475 : vector<2x256xf32> to vector<2x256xbf16>
    %514 = tpu.concatenate %512, %513 in 1 : vector<2x128xbf16>, vector<2x256xbf16> -> vector<2x384xbf16>
    %c0_140 = arith.constant 0 : index
    %c0_141 = arith.constant 0 : index
    %515 = vector.load %arg7[%c0_140, %c0_141] : memref<384x1024xbf16, #tpu.memory_space<vmem>>, vector<384x1024xbf16>
    %cst_142 = arith.constant dense<0.000000e+00> : vector<2x1024xf32>
    %516 = tpu.matmul %514, %515, %cst_142 {dimension_numbers = #tpu.dot_dimension_numbers<[1], [0], [0], [1], [0, 0, 1, 1], [], []>} : vector<2x384xbf16>, vector<384x1024xbf16>, vector<2x1024xf32> -> vector<2x1024xf32>
    %517 = vector.extract_strided_slice %516 {offsets = [0, 0], sizes = [2, 256], strides = [1, 1]} : vector<2x1024xf32> to vector<2x256xf32>
    %518 = arith.negf %517 : vector<2x256xf32>
    %519 = math.exp %518 : vector<2x256xf32>
    %cst_143 = arith.constant 1.000000e+00 : f32
    %520 = vector.broadcast %cst_143 : f32 to vector<2x256xf32>
    %521 = arith.addf %520, %519 : vector<2x256xf32>
    %522 = arith.divf %520, %521 : vector<2x256xf32>
    %523 = vector.extract_strided_slice %516 {offsets = [0, 256], sizes = [2, 256], strides = [1, 1]} : vector<2x1024xf32> to vector<2x256xf32>
    %524 = arith.negf %523 : vector<2x256xf32>
    %525 = math.exp %524 : vector<2x256xf32>
    %cst_144 = arith.constant 1.000000e+00 : f32
    %526 = vector.broadcast %cst_144 : f32 to vector<2x256xf32>
    %527 = arith.addf %526, %525 : vector<2x256xf32>
    %528 = arith.divf %526, %527 : vector<2x256xf32>
    %529 = vector.extract_strided_slice %516 {offsets = [0, 512], sizes = [2, 256], strides = [1, 1]} : vector<2x1024xf32> to vector<2x256xf32>
    %530 = math.tanh %529 : vector<2x256xf32>
    %531 = vector.extract_strided_slice %516 {offsets = [0, 768], sizes = [2, 256], strides = [1, 1]} : vector<2x1024xf32> to vector<2x256xf32>
    %532 = arith.negf %531 : vector<2x256xf32>
    %533 = math.exp %532 : vector<2x256xf32>
    %cst_145 = arith.constant 1.000000e+00 : f32
    %534 = vector.broadcast %cst_145 : f32 to vector<2x256xf32>
    %535 = arith.addf %534, %533 : vector<2x256xf32>
    %536 = arith.divf %534, %535 : vector<2x256xf32>
    %537 = arith.mulf %528, %473 : vector<2x256xf32>
    %538 = arith.mulf %522, %530 : vector<2x256xf32>
    %539 = arith.addf %537, %538 : vector<2x256xf32>
    %540 = math.tanh %539 : vector<2x256xf32>
    %541 = arith.mulf %536, %540 : vector<2x256xf32>
    %542 = arith.truncf %541 : vector<2x256xf32> to vector<2x256xbf16>
    %c0_146 = arith.constant 0 : index
    %c0_147 = arith.constant 0 : index
    %543 = vector.load %arg8[%c0_146, %c0_147] : memref<256x128xbf16, #tpu.memory_space<vmem>>, vector<256x128xbf16>
    %cst_148 = arith.constant dense<0.000000e+00> : vector<2x128xf32>
    %544 = tpu.matmul %542, %543, %cst_148 {dimension_numbers = #tpu.dot_dimension_numbers<[1], [0], [0], [1], [0, 0, 1, 1], [], []>} : vector<2x256xbf16>, vector<256x128xbf16>, vector<2x128xf32> -> vector<2x128xf32>
    %545 = vector.broadcast %6 : vector<1x128xf32> to vector<2x128xf32>
    %546 = arith.addf %544, %545 : vector<2x128xf32>
    %cst_149 = arith.constant dense<0xFF800000> : vector<2xf32>
    %547 = vector.multi_reduction <maximumf>, %546, %cst_149 [1] : vector<2x128xf32> to vector<2xf32>
    %548 = vector.shape_cast %547 : vector<2xf32> to vector<2x1xf32>
    %549 = vector.broadcast %548 : vector<2x1xf32> to vector<2x128xf32>
    %550 = arith.cmpf oeq, %546, %549 : vector<2x128xf32>
    %c128_i32_150 = arith.constant 128 : i32
    %551 = vector.broadcast %c128_i32_150 : i32 to vector<2x128xi32>
    %552 = arith.select %550, %41, %551 : vector<2x128xi1>, vector<2x128xi32>
    %cst_151 = arith.constant dense<2147483647> : vector<2xi32>
    %553 = vector.multi_reduction <minsi>, %552, %cst_151 [1] : vector<2x128xi32> to vector<2xi32>
    %554 = vector.shape_cast %553 : vector<2xi32> to vector<2x1xi32>
    %c0_i32_152 = arith.constant 0 : i32
    %555 = vector.broadcast %c0_i32_152 : i32 to vector<2x1xi32>
    %556 = arith.cmpi sgt, %507, %555 : vector<2x1xi32>
    %c2_i32_153 = arith.constant 2 : i32
    %557 = vector.broadcast %c2_i32_153 : i32 to vector<2x1xi32>
    %558 = arith.select %556, %557, %554 : vector<2x1xi1>, vector<2x1xi32>
    %c7_i32 = arith.constant 7 : i32
    %559 = vector.broadcast %c7_i32 : i32 to vector<2x8xi32>
    %560 = arith.cmpi eq, %42, %559 : vector<2x8xi32>
    %561 = vector.shape_cast %558 : vector<2x1xi32> to vector<2x1xi32>
    %562 = vector.broadcast %561 : vector<2x1xi32> to vector<2x8xi32>
    %563 = arith.select %560, %562, %497 : vector<2x8xi1>, vector<2x8xi32>
    %c0_154 = arith.constant 0 : index
    %c0_155 = arith.constant 0 : index
    %564 = vector.load %arg6[%c0_154, %c0_155] : memref<2x8xi32, #tpu.memory_space<vmem>>, vector<2x8xi32>
    tpu.vector_store %arg6[%c0_154, %c0_155], %563 {strides = array<i32>} : memref<2x8xi32, #tpu.memory_space<vmem>>, vector<2x8xi32>,
    return
  }
}

</mosaic_0001>

<llo_original>
// kernel: tpu_custom_call.1
$region0: #{tpu_custom_call.1}
  #allocation0 [shape = 'u32[]', space=smem, size = 0x4, offset = 0x4, fixed_abs, tag = 'smem constant byte address 0x4 - core index']
  #allocation1 [shape = 'u32[72,128]{1,0:T(1,128)}', space=vmem, size = 0x9000, scoped, tag = 'internal scratch']
  #allocation2 [shape = 'bf16[384,1024]{1,0:T(8,128)(2,1)}', space=vmem, size = 0xc0000, scoped, tag = 'scratch operand']
  #allocation3 [shape = 'bf16[256,128]{1,0:T(8,128)(2,1)}', space=vmem, size = 0x10000, scoped, tag = 'scratch operand']
  #allocation4 [shape = 's32[2]{0}', space=sflag, size = 0x8, scoped, tag = 'scratch operand']
  #allocation14 [shape = 's32[]', space=sflag, size = 0x4, offset = 0, fixed_abs, tag = 'sflag constant byte address 0x0 - dummy sync flag']
  #allocation15 [shape = 's32[]', space=sflag, size = 0x4, offset = 0, fixed_abs, tag = 'sflag constant byte address 0x0 - dummy sync flag']
  #allocation16 [shape = 'u32[]', space=smem, size = 0x4, offset = 0x44, fixed_abs, tag = 'smem constant byte address 0x44 - assertion arg 0']
  #allocation17 [shape = 'u32[]', space=smem, size = 0x4, offset = 0x48, fixed_abs, tag = 'smem constant byte address 0x48 - assertion arg 1']
  #allocation18 [shape = 's32[]', space=sflag, size = 0x4, offset = 0, fixed_abs, tag = 'sflag constant byte address 0x0 - dummy sync flag']
  #allocation19 [shape = 's32[]', space=sflag, size = 0x4, offset = 0, fixed_abs, tag = 'sflag constant byte address 0x0 - dummy sync flag']
  %s0 = inlined_call_operand.hbm [shape: f32[32,256], index: 0, kind: input, shape index: {}]
  %s1 = inlined_call_operand.hbm [shape: f32[1,896], index: 1, kind: input, shape index: {}]
  %s2 = inlined_call_operand.hbm [shape: bf16[256,256], index: 2, kind: input, shape index: {}]
  %s3 = inlined_call_operand.hbm [shape: bf16[256,512], index: 3, kind: input, shape index: {}]
  %s4 = inlined_call_operand.hbm [shape: bf16[384,1024], index: 4, kind: input, shape index: {}]
  %s5 = inlined_call_operand.hbm [shape: bf16[256,128], index: 5, kind: input, shape index: {}]
  %s6 = inlined_call_operand.hbm [shape: s32[2,8], index: 6, kind: output, shape index: {}]
  %s7 = sld [smem:[#allocation0]]
  $region50: #{tpu_custom_call.1} parent=0
    _
  %s9 = ssub.s32 1, %s7
  %s10 = scalar_select 0, %s9, %s7
  $region1: #{tpu_custom_call.1} parent=0
    #allocation5 [shape = 'u8[32768]{0}', space=vmem, size = 0x8000, scoped, tag = 'input window, operand 0, single buffered']
    #allocation6 [shape = 's32[1]{0}', space=sflag, size = 0x4, scoped, tag = 'scoped memory for tpu_custom_call.1']
    #allocation7 [shape = 's32[1]{0}', space=sflag, size = 0x4, scoped, tag = 'scoped memory for tpu_custom_call.1']
    #allocation8 [shape = 'u8[3584]{0}', space=vmem, size = 0x1000, scoped, tag = 'input window, operand 1, single buffered']
    #allocation9 [shape = 's32[1]{0}', space=sflag, size = 0x4, scoped, tag = 'scoped memory for tpu_custom_call.1']
    #allocation10 [shape = 'u8[131072]{0}', space=vmem, size = 0x20000, scoped, tag = 'input window, operand 2, single buffered']
    #allocation11 [shape = 'u8[262144]{0}', space=vmem, size = 0x40000, scoped, tag = 'input window, operand 3, single buffered']
    #allocation12 [shape = 's32[1]{0}', space=sflag, size = 0x4, scoped, tag = 'scoped memory for tpu_custom_call.1']
    #allocation13 [shape = 'u8[1024]{0}', space=vmem, size = 0x400, scoped, tag = 'output window, operand 0, single buffered']
    %11 = vsyncpa [#allocation6], 0
    %12 = vsyncpa [#allocation9], 0
    %13 = vsyncpa [#allocation12], 0
    %14 = vsyncpa [#allocation7], 0
    // Predicated region
    $region2: #{tpu_custom_call.1} parent=1 // pred_check
      _
    $region3: #{tpu_custom_call.1} parent=1 // pred_check_branch
      %16 = sbr.rel (0) target = $region5
    $region4: #{tpu_custom_call.1} parent=1 // pred_region
      %18 = vsyncadd [#allocation6], 0
      %s19 = sshll.u32 %s0, 4
      %s20 = int_to_ptr.hbm [resolvable:$true] %s19
      %s21 = sshll.u32 [#allocation5], 4
      %s22 = int_to_ptr.vmem [resolvable:$true] %s21
      %27 = dma.hbm_to_vmem [thread:$0]  %s20, 1024, %s22, [#allocation6], 256, 256, 16
    $region5: #{tpu_custom_call.1} parent=1 // pred_fallthru
      _
    // Predicated region
    $region6: #{tpu_custom_call.1} parent=1 // pred_check
      _
    $region7: #{tpu_custom_call.1} parent=1 // pred_check_branch
      %29 = sbr.rel (0) target = $region9
    $region8: #{tpu_custom_call.1} parent=1 // pred_region
      %31 = vsyncadd [#allocation9], 0
      %s33 = sshll.u32 %s1, 4
      %s34 = int_to_ptr.hbm [resolvable:$true] %s33
      %s35 = sshll.u32 [#allocation8], 4
      %s36 = int_to_ptr.vmem [resolvable:$true] %s35
      %38 = dma.hbm_to_vmem [thread:$0]  %s34, 112, %s36, [#allocation9]
    $region9: #{tpu_custom_call.1} parent=1 // pred_fallthru
      _
    // Predicated region
    $region10: #{tpu_custom_call.1} parent=1 // pred_check
      _
    $region11: #{tpu_custom_call.1} parent=1 // pred_check_branch
      %40 = sbr.rel (0) target = $region13
    $region12: #{tpu_custom_call.1} parent=1 // pred_region
      %42 = vsyncadd [#allocation9], 0
      %s43 = sshll.u32 %s2, 4
      %s44 = int_to_ptr.hbm [resolvable:$true] %s43
      %s45 = sshll.u32 [#allocation10], 4
      %s46 = int_to_ptr.vmem [resolvable:$true] %s45
      %51 = dma.hbm_to_vmem [thread:$0]  %s44, 4096, %s46, [#allocation9], 128, 128, 8
    $region13: #{tpu_custom_call.1} parent=1 // pred_fallthru
      _
    // Predicated region
    $region14: #{tpu_custom_call.1} parent=1 // pred_check
      _
    $region15: #{tpu_custom_call.1} parent=1 // pred_check_branch
      %53 = sbr.rel (0) target = $region17
    $region16: #{tpu_custom_call.1} parent=1 // pred_region
      %55 = vsyncadd [#allocation12], 0
      %s56 = sshll.u32 %s3, 4
      %s57 = int_to_ptr.hbm [resolvable:$true] %s56
      %s58 = sshll.u32 [#allocation11], 4
      %s59 = int_to_ptr.vmem [resolvable:$true] %s58
      %64 = dma.hbm_to_vmem [thread:$0]  %s57, 8192, %s59, [#allocation12], 256, 256, 16
    $region17: #{tpu_custom_call.1} parent=1 // pred_fallthru
      _
    // Predicated region
    $region18: #{tpu_custom_call.1} parent=1 // pred_check
      _
    $region19: #{tpu_custom_call.1} parent=1 // pred_check_branch
      %66 = sbr.rel (0) target = $region21
    $region20: #{tpu_custom_call.1} parent=1 // pred_region
      %68 = dma.done [#allocation6], 1024
    $region21: #{tpu_custom_call.1} parent=1 // pred_fallthru
      _
    // Predicated region
    $region22: #{tpu_custom_call.1} parent=1 // pred_check
      _
    $region23: #{tpu_custom_call.1} parent=1 // pred_check_branch
      %70 = sbr.rel (0) target = $region25
    $region24: #{tpu_custom_call.1} parent=1 // pred_region
      %72 = dma.done [#allocation9], 112
    $region25: #{tpu_custom_call.1} parent=1 // pred_fallthru
      _
    // Predicated region
    $region26: #{tpu_custom_call.1} parent=1 // pred_check
      _
    $region27: #{tpu_custom_call.1} parent=1 // pred_check_branch
      %74 = sbr.rel (0) target = $region29
    $region28: #{tpu_custom_call.1} parent=1 // pred_region
      %76 = dma.done [#allocation9], 4096
    $region29: #{tpu_custom_call.1} parent=1 // pred_fallthru
      _
    // Predicated region
    $region30: #{tpu_custom_call.1} parent=1 // pred_check
      _
    $region31: #{tpu_custom_call.1} parent=1 // pred_check_branch
      %78 = sbr.rel (0) target = $region33
    $region32: #{tpu_custom_call.1} parent=1 // pred_region
      %80 = dma.done [#allocation12], 8192
    $region33: #{tpu_custom_call.1} parent=1 // pred_fallthru
      _
    // Predicated region
    $region34: #{tpu_custom_call.1} parent=1 // pred_check
      _
    $region35: #{tpu_custom_call.1} parent=1 // pred_check_branch
      %82 = sbr.rel target = $region37
    $region36: #{tpu_custom_call.1} parent=1 // pred_region
      %83 = sst [smem:[#allocation16]] [#allocation15]
      %84 = sst [smem:[#allocation17]] [#allocation14]
    $region37: #{tpu_custom_call.1} parent=1 // pred_fallthru
      _
    %86 = shalt.err (0)
    %s88 = sshll.u32 %s4, 4
    %s89 = int_to_ptr.hbm [resolvable:$true] %s88
    %s90 = sshll.u32 [#allocation2], 4
    %s91 = int_to_ptr.vmem [resolvable:$true] %s90
    %93 = dma.hbm_to_vmem [thread:$0]  %s89, 24576, %s91, [#allocation4]
    %s94 = scalar_lea.sflag [#allocation4], 1
    // Predicated region
    $region38: #{tpu_custom_call.1} parent=1 // pred_check
      _
    $region39: #{tpu_custom_call.1} parent=1 // pred_check_branch
      %96 = sbr.rel target = $region41
    $region40: #{tpu_custom_call.1} parent=1 // pred_region
      %97 = sst [smem:[#allocation16]] [#allocation19]
      %98 = sst [smem:[#allocation17]] [#allocation18]
    $region41: #{tpu_custom_call.1} parent=1 // pred_fallthru
      _
    %100 = shalt.err (0)
    %s102 = sshll.u32 %s5, 4
    %s103 = int_to_ptr.hbm [resolvable:$true] %s102
    %s104 = sshll.u32 [#allocation3], 4
    %s105 = int_to_ptr.vmem [resolvable:$true] %s104
    %107 = dma.hbm_to_vmem [thread:$0]  %s103, 2048, %s105, %s94
    %v108 = vld [vmem:[#allocation8] sm:$0x3]
    %v109 = vld [vmem:[#allocation8 + $0x2] sm:$0xf]
    %v110 = vld [vmem:[#allocation8 + $0x6] sm:$0x1]
    %v111 = vld [vmem:[#allocation5] sm:$0xff]
    %v112 = vld [vmem:[#allocation5 + $0x8] sm:$0xff]
    %v113 = vld [vmem:[#allocation5 + $0x10] sm:$0xff]
    %v114 = vld [vmem:[#allocation5 + $0x18] sm:$0xff]
    %v115 = vld [vmem:[#allocation5 + $0x20] sm:$0xff]
    %v116 = vld [vmem:[#allocation5 + $0x28] sm:$0xff]
    %v117 = vld [vmem:[#allocation5 + $0x30] sm:$0xff]
    %v118 = vld [vmem:[#allocation5 + $0x38] sm:$0xff]
    %v119 = vpack.c.bf16 %v113, %v111
    %v120 = vpack.c.bf16 %v114, %v112
    %v121 = vpack.c.bf16 %v117, %v115
    %v122 = vpack.c.bf16 %v118, %v116
    %v123 = vld [vmem:[#allocation10] sm:$0xff]
    %v124 = vld [vmem:[#allocation10 + $0x8] sm:$0xff]
    %v125 = vld [vmem:[#allocation10 + $0x10] sm:$0xff]
    %v126 = vld [vmem:[#allocation10 + $0x18] sm:$0xff]
    %v127 = vld [vmem:[#allocation10 + $0x20] sm:$0xff]
    %v128 = vld [vmem:[#allocation10 + $0x28] sm:$0xff]
    %v129 = vld [vmem:[#allocation10 + $0x30] sm:$0xff]
    %v130 = vld [vmem:[#allocation10 + $0x38] sm:$0xff]
    %v131 = vld [vmem:[#allocation10 + $0x40] sm:$0xff]
    %v132 = vld [vmem:[#allocation10 + $0x48] sm:$0xff]
    %v133 = vld [vmem:[#allocation10 + $0x50] sm:$0xff]
    %v134 = vld [vmem:[#allocation10 + $0x58] sm:$0xff]
    %v135 = vld [vmem:[#allocation10 + $0x60] sm:$0xff]
    %v136 = vld [vmem:[#allocation10 + $0x68] sm:$0xff]
    %v137 = vld [vmem:[#allocation10 + $0x70] sm:$0xff]
    %v138 = vld [vmem:[#allocation10 + $0x78] sm:$0xff]
    %v139 = vld [vmem:[#allocation10 + $0x80] sm:$0xff]
    %v140 = vld [vmem:[#allocation10 + $0x88] sm:$0xff]
    %v141 = vld [vmem:[#allocation10 + $0x90] sm:$0xff]
    %v142 = vld [vmem:[#allocation10 + $0x98] sm:$0xff]
    %v143 = vld [vmem:[#allocation10 + $0xa0] sm:$0xff]
    %v144 = vld [vmem:[#allocation10 + $0xa8] sm:$0xff]
    %v145 = vld [vmem:[#allocation10 + $0xb0] sm:$0xff]
    %v146 = vld [vmem:[#allocation10 + $0xb8] sm:$0xff]
    %v147 = vld [vmem:[#allocation10 + $0xc0] sm:$0xff]
    %v148 = vld [vmem:[#allocation10 + $0xc8] sm:$0xff]
    %v149 = vld [vmem:[#allocation10 + $0xd0] sm:$0xff]
    %v150 = vld [vmem:[#allocation10 + $0xd8] sm:$0xff]
    %v151 = vld [vmem:[#allocation10 + $0xe0] sm:$0xff]
    %v152 = vld [vmem:[#allocation10 + $0xe8] sm:$0xff]
    %v153 = vld [vmem:[#allocation10 + $0xf0] sm:$0xff]
    %v154 = vld [vmem:[#allocation10 + $0xf8] sm:$0xff]
    %v156 = vperm.slane %v108, 0
    %v157 = vperm.slane %v108, 1
    %v192 = vunpack.c.l.b16 %v123
    %v193 = vunpack.c.h.b16 %v123
    %v194 = vunpack.c.l.b16 %v124
    %v195 = vunpack.c.h.b16 %v124
    %v196 = vunpack.c.l.b16 %v125
    %v197 = vunpack.c.h.b16 %v125
    %v198 = vunpack.c.l.b16 %v126
    %v199 = vunpack.c.h.b16 %v126
    %v200 = vunpack.c.l.b16 %v127
    %v201 = vunpack.c.h.b16 %v127
    %v202 = vunpack.c.l.b16 %v128
    %v203 = vunpack.c.h.b16 %v128
    %v204 = vunpack.c.l.b16 %v129
    %v205 = vunpack.c.h.b16 %v129
    %v206 = vunpack.c.l.b16 %v130
    %v207 = vunpack.c.h.b16 %v130
    %v208 = vunpack.c.l.b16 %v131
    %v209 = vunpack.c.h.b16 %v131
    %v210 = vunpack.c.l.b16 %v132
    %v211 = vunpack.c.h.b16 %v132
    %v212 = vunpack.c.l.b16 %v133
    %v213 = vunpack.c.h.b16 %v133
    %v214 = vunpack.c.l.b16 %v134
    %v215 = vunpack.c.h.b16 %v134
    %v216 = vunpack.c.l.b16 %v135
    %v217 = vunpack.c.h.b16 %v135
    %v218 = vunpack.c.l.b16 %v136
    %v219 = vunpack.c.h.b16 %v136
    %v220 = vunpack.c.l.b16 %v137
    %v221 = vunpack.c.h.b16 %v137
    %v222 = vunpack.c.l.b16 %v138
    %v223 = vunpack.c.h.b16 %v138
    %v224 = vunpack.c.l.b16 %v139
    %v225 = vunpack.c.h.b16 %v139
    %v226 = vunpack.c.l.b16 %v140
    %v227 = vunpack.c.h.b16 %v140
    %v228 = vunpack.c.l.b16 %v141
    %v229 = vunpack.c.h.b16 %v141
    %v230 = vunpack.c.l.b16 %v142
    %v231 = vunpack.c.h.b16 %v142
    %v232 = vunpack.c.l.b16 %v143
    %v233 = vunpack.c.h.b16 %v143
    %v234 = vunpack.c.l.b16 %v144
    %v235 = vunpack.c.h.b16 %v144
    %v236 = vunpack.c.l.b16 %v145
    %v237 = vunpack.c.h.b16 %v145
    %v238 = vunpack.c.l.b16 %v146
    %v239 = vunpack.c.h.b16 %v146
    %v240 = vunpack.c.l.b16 %v147
    %v241 = vunpack.c.h.b16 %v147
    %v242 = vunpack.c.l.b16 %v148
    %v243 = vunpack.c.h.b16 %v148
    %v244 = vunpack.c.l.b16 %v149
    %v245 = vunpack.c.h.b16 %v149
    %v246 = vunpack.c.l.b16 %v150
    %v247 = vunpack.c.h.b16 %v150
    %v248 = vunpack.c.l.b16 %v151
    %v249 = vunpack.c.h.b16 %v151
    %v250 = vunpack.c.l.b16 %v152
    %v251 = vunpack.c.h.b16 %v152
    %v252 = vunpack.c.l.b16 %v153
    %v253 = vunpack.c.h.b16 %v153
    %v254 = vunpack.c.l.b16 %v154
    %v255 = vunpack.c.h.b16 %v154
    %v256 = vpack.c.b16 %v194, %v192
    %v257 = vpack.c.b16 %v195, %v193
    %v258 = vpack.c.b16 %v198, %v196
    %v259 = vpack.c.b16 %v199, %v197
    %v260 = vpack.c.b16 %v202, %v200
    %v261 = vpack.c.b16 %v203, %v201
    %v262 = vpack.c.b16 %v206, %v204
    %v263 = vpack.c.b16 %v207, %v205
    %v264 = vpack.c.b16 %v210, %v208
    %v265 = vpack.c.b16 %v211, %v209
    %v266 = vpack.c.b16 %v214, %v212
    %v267 = vpack.c.b16 %v215, %v213
    %v268 = vpack.c.b16 %v218, %v216
    %v269 = vpack.c.b16 %v219, %v217
    %v270 = vpack.c.b16 %v222, %v220
    %v271 = vpack.c.b16 %v223, %v221
    %v272 = vpack.c.b16 %v226, %v224
    %v273 = vpack.c.b16 %v227, %v225
    %v274 = vpack.c.b16 %v230, %v228
    %v275 = vpack.c.b16 %v231, %v229
    %v276 = vpack.c.b16 %v234, %v232
    %v277 = vpack.c.b16 %v235, %v233
    %v278 = vpack.c.b16 %v238, %v236
    %v279 = vpack.c.b16 %v239, %v237
    %v280 = vpack.c.b16 %v242, %v240
    %v281 = vpack.c.b16 %v243, %v241
    %v282 = vpack.c.b16 %v246, %v244
    %v283 = vpack.c.b16 %v247, %v245
    %v284 = vpack.c.b16 %v250, %v248
    %v285 = vpack.c.b16 %v251, %v249
    %v286 = vpack.c.b16 %v254, %v252
    %v287 = vpack.c.b16 %v255, %v253
    %320 = vmatpush.bf16.msra.mxu0 %v270
    %321 = vmatpush.bf16.msra.mxu0 %v268
    %322 = vmatpush.bf16.msra.mxu0 %v266
    %323 = vmatpush.bf16.msra.mxu0 %v264
    %324 = vmatpush.bf16.msra.mxu0 %v262
    %325 = vmatpush.bf16.msra.mxu0 %v260
    %326 = vmatpush.bf16.msra.mxu0 %v258
    %327 = vmatpush.bf16.msra.mxu0 %v256
    %328 = vmatmul.bf16.gmra.mxu0 %v119
    %v329 = vpop.f32.mrf.mxu0
    %v330 = vadd.f32 %v156, %v329
    %v331 = vpop.f32.mrf.mxu0
    %v332 = vadd.f32 %v156, %v331
    %333 = vmatmul.bf16.gmra.mxu0 %v121
    %v334 = vpop.f32.mrf.mxu0
    %v335 = vadd.f32 %v156, %v334
    %v336 = vpop.f32.mrf.mxu0
    %v337 = vadd.f32 %v156, %v336
    %338 = vdwg.mxu0
    %339 = vmatpush.bf16.msra.mxu0 %v286
    %340 = vmatpush.bf16.msra.mxu0 %v284
    %341 = vmatpush.bf16.msra.mxu0 %v282
    %342 = vmatpush.bf16.msra.mxu0 %v280
    %343 = vmatpush.bf16.msra.mxu0 %v278
    %344 = vmatpush.bf16.msra.mxu0 %v276
    %345 = vmatpush.bf16.msra.mxu0 %v274
    %346 = vmatpush.bf16.msra.mxu0 %v272
    %347 = vmatmul.bf16.gmra.mxu0 %v120
    %v348 = vpop.f32.mrf.mxu0
    %v349 = vadd.f32 %v330, %v348
    %v350 = vpop.f32.mrf.mxu0
    %v351 = vadd.f32 %v332, %v350
    %352 = vmatmul.bf16.gmra.mxu0 %v122
    %v353 = vpop.f32.mrf.mxu0
    %v354 = vadd.f32 %v335, %v353
    %v355 = vpop.f32.mrf.mxu0
    %v356 = vadd.f32 %v337, %v355
    %357 = vdwg.mxu0
    %358 = vmatpush.bf16.msra.mxu0 %v271
    %359 = vmatpush.bf16.msra.mxu0 %v269
    %360 = vmatpush.bf16.msra.mxu0 %v267
    %361 = vmatpush.bf16.msra.mxu0 %v265
    %362 = vmatpush.bf16.msra.mxu0 %v263
    %363 = vmatpush.bf16.msra.mxu0 %v261
    %364 = vmatpush.bf16.msra.mxu0 %v259
    %365 = vmatpush.bf16.msra.mxu0 %v257
    %366 = vmatmul.bf16.gmra.mxu0 %v119
    %v367 = vpop.f32.mrf.mxu0
    %v368 = vadd.f32 %v157, %v367
    %v369 = vpop.f32.mrf.mxu0
    %v370 = vadd.f32 %v157, %v369
    %371 = vmatmul.bf16.gmra.mxu0 %v121
    %v372 = vpop.f32.mrf.mxu0
    %v373 = vadd.f32 %v157, %v372
    %v374 = vpop.f32.mrf.mxu0
    %v375 = vadd.f32 %v157, %v374
    %376 = vdwg.mxu0
    %377 = vmatpush.bf16.msra.mxu0 %v287
    %378 = vmatpush.bf16.msra.mxu0 %v285
    %379 = vmatpush.bf16.msra.mxu0 %v283
    %380 = vmatpush.bf16.msra.mxu0 %v281
    %381 = vmatpush.bf16.msra.mxu0 %v279
    %382 = vmatpush.bf16.msra.mxu0 %v277
    %383 = vmatpush.bf16.msra.mxu0 %v275
    %384 = vmatpush.bf16.msra.mxu0 %v273
    %385 = vmatmul.bf16.gmra.mxu0 %v120
    %v386 = vpop.f32.mrf.mxu0
    %v387 = vadd.f32 %v368, %v386
    %v388 = vpop.f32.mrf.mxu0
    %v389 = vadd.f32 %v370, %v388
    %390 = vmatmul.bf16.gmra.mxu0 %v122
    %v391 = vpop.f32.mrf.mxu0
    %v392 = vadd.f32 %v373, %v391
    %v393 = vpop.f32.mrf.mxu0
    %v394 = vadd.f32 %v375, %v393
    %395 = vdwg.mxu0
    %v396 = vxor.u32 %v349, 2147483648
    %v397 = vxor.u32 %v387, 2147483648
    %v398 = vxor.u32 %v351, 2147483648
    %v399 = vxor.u32 %v389, 2147483648
    %v400 = vxor.u32 %v354, 2147483648
    %v401 = vxor.u32 %v392, 2147483648
    %v402 = vxor.u32 %v356, 2147483648
    %v403 = vxor.u32 %v394, 2147483648
    %v404 = vmul.f32 %v396, 1.442695
    %v405 = vpow.pop %v404
    %v406 = vmul.f32 %v397, 1.442695
    %v407 = vpow.pop %v406
    %v408 = vmul.f32 %v398, 1.442695
    %v409 = vpow.pop %v408
    %v410 = vmul.f32 %v399, 1.442695
    %v411 = vpow.pop %v410
    %v412 = vmul.f32 %v400, 1.442695
    %v413 = vpow.pop %v412
    %v414 = vmul.f32 %v401, 1.442695
    %v415 = vpow.pop %v414
    %v416 = vmul.f32 %v402, 1.442695
    %v417 = vpow.pop %v416
    %v418 = vmul.f32 %v403, 1.442695
    %v419 = vpow.pop %v418
    %v420 = vadd.f32 %v405, 1.0
    %v421 = vadd.f32 %v407, 1.0
    %v422 = vadd.f32 %v409, 1.0
    %v423 = vadd.f32 %v411, 1.0
    %v424 = vadd.f32 %v413, 1.0
    %v425 = vadd.f32 %v415, 1.0
    %v426 = vadd.f32 %v417, 1.0
    %v427 = vadd.f32 %v419, 1.0
    %v428 = vrcp.pop %v420
    %v429 = vmul.f32 %v420, %v428
    %v430 = vsub.f32 1.0, %v429
    %v431 = vmul.f32 %v428, %v430
    %v432 = vadd.f32 %v428, %v431
    %vm433 = vweird.f32 %v420
    %vm434 = vweird.f32 %v428
    %vm435 = vmor %vm433, %vm434
    %v436 = vsel %vm435, %v428, %v432
    %v437 = vand.u32 2147483647, %v420
    %vm438 = vcmp.eq.f32.partialorder %v437, 8.507059e+37
    %v439 = vand.u32 %v420, 2147483648
    %v440 = vor.u32 1.1754944e-38, %v439
    %v441 = vsel %vm438, %v440, %v436
    %v442 = vmul.f32 1.0, %v441
    %v443 = vrcp.pop %v421
    %v444 = vmul.f32 %v421, %v443
    %v445 = vsub.f32 1.0, %v444
    %v446 = vmul.f32 %v443, %v445
    %v447 = vadd.f32 %v443, %v446
    %vm448 = vweird.f32 %v421
    %vm449 = vweird.f32 %v443
    %vm450 = vmor %vm448, %vm449
    %v451 = vsel %vm450, %v443, %v447
    %v452 = vand.u32 2147483647, %v421
    %vm453 = vcmp.eq.f32.partialorder %v452, 8.507059e+37
    %v454 = vand.u32 %v421, 2147483648
    %v455 = vor.u32 1.1754944e-38, %v454
    %v456 = vsel %vm453, %v455, %v451
    %v457 = vmul.f32 1.0, %v456
    %v458 = vrcp.pop %v422
    %v459 = vmul.f32 %v422, %v458
    %v460 = vsub.f32 1.0, %v459
    %v461 = vmul.f32 %v458, %v460
    %v462 = vadd.f32 %v458, %v461
    %vm463 = vweird.f32 %v422
    %vm464 = vweird.f32 %v458
    %vm465 = vmor %vm463, %vm464
    %v466 = vsel %vm465, %v458, %v462
    %v467 = vand.u32 2147483647, %v422
    %vm468 = vcmp.eq.f32.partialorder %v467, 8.507059e+37
    %v469 = vand.u32 %v422, 2147483648
    %v470 = vor.u32 1.1754944e-38, %v469
    %v471 = vsel %vm468, %v470, %v466
    %v472 = vmul.f32 1.0, %v471
    %v473 = vrcp.pop %v423
    %v474 = vmul.f32 %v423, %v473
    %v475 = vsub.f32 1.0, %v474
    %v476 = vmul.f32 %v473, %v475
    %v477 = vadd.f32 %v473, %v476
    %vm478 = vweird.f32 %v423
    %vm479 = vweird.f32 %v473
    %vm480 = vmor %vm478, %vm479
    %v481 = vsel %vm480, %v473, %v477
    %v482 = vand.u32 2147483647, %v423
    %vm483 = vcmp.eq.f32.partialorder %v482, 8.507059e+37
    %v484 = vand.u32 %v423, 2147483648
    %v485 = vor.u32 1.1754944e-38, %v484
    %v486 = vsel %vm483, %v485, %v481
    %v487 = vmul.f32 1.0, %v486
    %v488 = vrcp.pop %v424
    %v489 = vmul.f32 %v424, %v488
    %v490 = vsub.f32 1.0, %v489
    %v491 = vmul.f32 %v488, %v490
    %v492 = vadd.f32 %v488, %v491
    %vm493 = vweird.f32 %v424
    %vm494 = vweird.f32 %v488
    %vm495 = vmor %vm493, %vm494
    %v496 = vsel %vm495, %v488, %v492
    %v497 = vand.u32 2147483647, %v424
    %vm498 = vcmp.eq.f32.partialorder %v497, 8.507059e+37
    %v499 = vand.u32 %v424, 2147483648
    %v500 = vor.u32 1.1754944e-38, %v499
    %v501 = vsel %vm498, %v500, %v496
    %v502 = vmul.f32 1.0, %v501
    %v503 = vrcp.pop %v425
    %v504 = vmul.f32 %v425, %v503
    %v505 = vsub.f32 1.0, %v504
    %v506 = vmul.f32 %v503, %v505
    %v507 = vadd.f32 %v503, %v506
    %vm508 = vweird.f32 %v425
    %vm509 = vweird.f32 %v503
    %vm510 = vmor %vm508, %vm509
    %v511 = vsel %vm510, %v503, %v507
    %v512 = vand.u32 2147483647, %v425
    %vm513 = vcmp.eq.f32.partialorder %v512, 8.507059e+37
    %v514 = vand.u32 %v425, 2147483648
    %v515 = vor.u32 1.1754944e-38, %v514
    %v516 = vsel %vm513, %v515, %v511
    %v517 = vmul.f32 1.0, %v516
    %v518 = vrcp.pop %v426
    %v519 = vmul.f32 %v426, %v518
    %v520 = vsub.f32 1.0, %v519
    %v521 = vmul.f32 %v518, %v520
    %v522 = vadd.f32 %v518, %v521
    %vm523 = vweird.f32 %v426
    %vm524 = vweird.f32 %v518
    %vm525 = vmor %vm523, %vm524
    %v526 = vsel %vm525, %v518, %v522
    %v527 = vand.u32 2147483647, %v426
    %vm528 = vcmp.eq.f32.partialorder %v527, 8.507059e+37
    %v529 = vand.u32 %v426, 2147483648
    %v530 = vor.u32 1.1754944e-38, %v529
    %v531 = vsel %vm528, %v530, %v526
    %v532 = vmul.f32 1.0, %v531
    %v533 = vrcp.pop %v427
    %v534 = vmul.f32 %v427, %v533
    %v535 = vsub.f32 1.0, %v534
    %v536 = vmul.f32 %v533, %v535
    %v537 = vadd.f32 %v533, %v536
    %vm538 = vweird.f32 %v427
    %vm539 = vweird.f32 %v533
    %vm540 = vmor %vm538, %vm539
    %v541 = vsel %vm540, %v533, %v537
    %v542 = vand.u32 2147483647, %v427
    %vm543 = vcmp.eq.f32.partialorder %v542, 8.507059e+37
    %v544 = vand.u32 %v427, 2147483648
    %v545 = vor.u32 1.1754944e-38, %v544
    %v546 = vsel %vm543, %v545, %v541
    %v547 = vmul.f32 1.0, %v546
    %v548 = vmul.f32 %v349, %v442
    %v549 = vmul.f32 %v387, %v457
    %v550 = vmul.f32 %v351, %v472
    %v551 = vmul.f32 %v389, %v487
    %v552 = vmul.f32 %v354, %v502
    %v553 = vmul.f32 %v392, %v517
    %v554 = vmul.f32 %v356, %v532
    %v555 = vmul.f32 %v394, %v547
    %v556 = vadd.f32 %v548, %v550
    %v557 = vrot.slane %v556, 4
    %v558 = vadd.f32 %v556, %v557
    %v559 = vrot.slane %v558, 2
    %v560 = vadd.f32 %v558, %v559
    %v561 = vrot.slane %v560, 1
    %v562 = vadd.f32 %v560, %v561
    %v563 = vadd.f32 %v549, %v551
    %v564 = vrot.slane %v563, 4
    %v565 = vadd.f32 %v563, %v564
    %v566 = vrot.slane %v565, 2
    %v567 = vadd.f32 %v565, %v566
    %v568 = vrot.slane %v567, 1
    %v569 = vadd.f32 %v567, %v568
    %v570 = vrcp.pop 16.0
    %v571 = vmul.f32 16.0, %v570
    %v572 = vsub.f32 1.0, %v571
    %v573 = vmul.f32 %v570, %v572
    %v574 = vadd.f32 %v570, %v573
    %vm575 = vweird.f32 %v570
    %v576 = vsel %vm575, %v570, %v574
    %v577 = vmul.f32 %v562, %v576
    %v578 = vmul.f32 %v569, %v576
    %v579 = vadd.f32 %v552, %v554
    %v580 = vrot.slane %v579, 4
    %v581 = vadd.f32 %v579, %v580
    %v582 = vrot.slane %v581, 2
    %v583 = vadd.f32 %v581, %v582
    %v584 = vrot.slane %v583, 1
    %v585 = vadd.f32 %v583, %v584
    %v586 = vadd.f32 %v553, %v555
    %v587 = vrot.slane %v586, 4
    %v588 = vadd.f32 %v586, %v587
    %v589 = vrot.slane %v588, 2
    %v590 = vadd.f32 %v588, %v589
    %v591 = vrot.slane %v590, 1
    %v592 = vadd.f32 %v590, %v591
    %v593 = vmul.f32 %v585, %v576
    %v594 = vmul.f32 %v592, %v576
    %vm595 = vcmask 1040384
    %v596 = vsel %vm595, %v577, %v593
    %v597 = vsel %vm595, %v578, %v594
    %v598 = vpack.c.bf16 %v596, %v596
    %v599 = vpack.c.bf16 %v597, %v597
    %v600 = vld [vmem:[#allocation11] sm:$0xff]
    %v601 = vld [vmem:[#allocation11 + $0x8] sm:$0xff]
    %v602 = vld [vmem:[#allocation11 + $0x10] sm:$0xff]
    %v603 = vld [vmem:[#allocation11 + $0x18] sm:$0xff]
    %v604 = vld [vmem:[#allocation11 + $0x20] sm:$0xff]
    %v605 = vld [vmem:[#allocation11 + $0x28] sm:$0xff]
    %v606 = vld [vmem:[#allocation11 + $0x30] sm:$0xff]
    %v607 = vld [vmem:[#allocation11 + $0x38] sm:$0xff]
    %v608 = vld [vmem:[#allocation11 + $0x40] sm:$0xff]
    %v609 = vld [vmem:[#allocation11 + $0x48] sm:$0xff]
    %v610 = vld [vmem:[#allocation11 + $0x50] sm:$0xff]
    %v611 = vld [vmem:[#allocation11 + $0x58] sm:$0xff]
    %v612 = vld [vmem:[#allocation11 + $0x60] sm:$0xff]
    %v613 = vld [vmem:[#allocation11 + $0x68] sm:$0xff]
    %v614 = vld [vmem:[#allocation11 + $0x70] sm:$0xff]
    %v615 = vld [vmem:[#allocation11 + $0x78] sm:$0xff]
    %v616 = vld [vmem:[#allocation11 + $0x80] sm:$0xff]
    %v617 = vld [vmem:[#allocation11 + $0x88] sm:$0xff]
    %v618 = vld [vmem:[#allocation11 + $0x90] sm:$0xff]
    %v619 = vld [vmem:[#allocation11 + $0x98] sm:$0xff]
    %v620 = vld [vmem:[#allocation11 + $0xa0] sm:$0xff]
    %v621 = vld [vmem:[#allocation11 + $0xa8] sm:$0xff]
    %v622 = vld [vmem:[#allocation11 + $0xb0] sm:$0xff]
    %v623 = vld [vmem:[#allocation11 + $0xb8] sm:$0xff]
    %v624 = vld [vmem:[#allocation11 + $0xc0] sm:$0xff]
    %v625 = vld [vmem:[#allocation11 + $0xc8] sm:$0xff]
    %v626 = vld [vmem:[#allocation11 + $0xd0] sm:$0xff]
    %v627 = vld [vmem:[#allocation11 + $0xd8] sm:$0xff]
    %v628 = vld [vmem:[#allocation11 + $0xe0] sm:$0xff]
    %v629 = vld [vmem:[#allocation11 + $0xe8] sm:$0xff]
    %v630 = vld [vmem:[#allocation11 + $0xf0] sm:$0xff]
    %v631 = vld [vmem:[#allocation11 + $0xf8] sm:$0xff]
    %v632 = vld [vmem:[#allocation11 + $0x100] sm:$0xff]
    %v633 = vld [vmem:[#allocation11 + $0x108] sm:$0xff]
    %v634 = vld [vmem:[#allocation11 + $0x110] sm:$0xff]
    %v635 = vld [vmem:[#allocation11 + $0x118] sm:$0xff]
    %v636 = vld [vmem:[#allocation11 + $0x120] sm:$0xff]
    %v637 = vld [vmem:[#allocation11 + $0x128] sm:$0xff]
    %v638 = vld [vmem:[#allocation11 + $0x130] sm:$0xff]
    %v639 = vld [vmem:[#allocation11 + $0x138] sm:$0xff]
    %v640 = vld [vmem:[#allocation11 + $0x140] sm:$0xff]
    %v641 = vld [vmem:[#allocation11 + $0x148] sm:$0xff]
    %v642 = vld [vmem:[#allocation11 + $0x150] sm:$0xff]
    %v643 = vld [vmem:[#allocation11 + $0x158] sm:$0xff]
    %v644 = vld [vmem:[#allocation11 + $0x160] sm:$0xff]
    %v645 = vld [vmem:[#allocation11 + $0x168] sm:$0xff]
    %v646 = vld [vmem:[#allocation11 + $0x170] sm:$0xff]
    %v647 = vld [vmem:[#allocation11 + $0x178] sm:$0xff]
    %v648 = vld [vmem:[#allocation11 + $0x180] sm:$0xff]
    %v649 = vld [vmem:[#allocation11 + $0x188] sm:$0xff]
    %v650 = vld [vmem:[#allocation11 + $0x190] sm:$0xff]
    %v651 = vld [vmem:[#allocation11 + $0x198] sm:$0xff]
    %v652 = vld [vmem:[#allocation11 + $0x1a0] sm:$0xff]
    %v653 = vld [vmem:[#allocation11 + $0x1a8] sm:$0xff]
    %v654 = vld [vmem:[#allocation11 + $0x1b0] sm:$0xff]
    %v655 = vld [vmem:[#allocation11 + $0x1b8] sm:$0xff]
    %v656 = vld [vmem:[#allocation11 + $0x1c0] sm:$0xff]
    %v657 = vld [vmem:[#allocation11 + $0x1c8] sm:$0xff]
    %v658 = vld [vmem:[#allocation11 + $0x1d0] sm:$0xff]
    %v659 = vld [vmem:[#allocation11 + $0x1d8] sm:$0xff]
    %v660 = vld [vmem:[#allocation11 + $0x1e0] sm:$0xff]
    %v661 = vld [vmem:[#allocation11 + $0x1e8] sm:$0xff]
    %v662 = vld [vmem:[#allocation11 + $0x1f0] sm:$0xff]
    %v663 = vld [vmem:[#allocation11 + $0x1f8] sm:$0xff]
    %v665 = vperm.slane %v109, 0
    %v666 = vperm.slane %v109, 1
    %v667 = vperm.slane %v109, 2
    %v668 = vperm.slane %v109, 3
    %v737 = vunpack.c.l.b16 %v600
    %v738 = vunpack.c.h.b16 %v600
    %v739 = vunpack.c.l.b16 %v601
    %v740 = vunpack.c.h.b16 %v601
    %v741 = vunpack.c.l.b16 %v602
    %v742 = vunpack.c.h.b16 %v602
    %v743 = vunpack.c.l.b16 %v603
    %v744 = vunpack.c.h.b16 %v603
    %v745 = vunpack.c.l.b16 %v604
    %v746 = vunpack.c.h.b16 %v604
    %v747 = vunpack.c.l.b16 %v605
    %v748 = vunpack.c.h.b16 %v605
    %v749 = vunpack.c.l.b16 %v606
    %v750 = vunpack.c.h.b16 %v606
    %v751 = vunpack.c.l.b16 %v607
    %v752 = vunpack.c.h.b16 %v607
    %v753 = vunpack.c.l.b16 %v608
    %v754 = vunpack.c.h.b16 %v608
    %v755 = vunpack.c.l.b16 %v609
    %v756 = vunpack.c.h.b16 %v609
    %v757 = vunpack.c.l.b16 %v610
    %v758 = vunpack.c.h.b16 %v610
    %v759 = vunpack.c.l.b16 %v611
    %v760 = vunpack.c.h.b16 %v611
    %v761 = vunpack.c.l.b16 %v612
    %v762 = vunpack.c.h.b16 %v612
    %v763 = vunpack.c.l.b16 %v613
    %v764 = vunpack.c.h.b16 %v613
    %v765 = vunpack.c.l.b16 %v614
    %v766 = vunpack.c.h.b16 %v614
    %v767 = vunpack.c.l.b16 %v615
    %v768 = vunpack.c.h.b16 %v615
    %v769 = vunpack.c.l.b16 %v616
    %v770 = vunpack.c.h.b16 %v616
    %v771 = vunpack.c.l.b16 %v617
    %v772 = vunpack.c.h.b16 %v617
    %v773 = vunpack.c.l.b16 %v618
    %v774 = vunpack.c.h.b16 %v618
    %v775 = vunpack.c.l.b16 %v619
    %v776 = vunpack.c.h.b16 %v619
    %v777 = vunpack.c.l.b16 %v620
    %v778 = vunpack.c.h.b16 %v620
    %v779 = vunpack.c.l.b16 %v621
    %v780 = vunpack.c.h.b16 %v621
    %v781 = vunpack.c.l.b16 %v622
    %v782 = vunpack.c.h.b16 %v622
    %v783 = vunpack.c.l.b16 %v623
    %v784 = vunpack.c.h.b16 %v623
    %v785 = vunpack.c.l.b16 %v624
    %v786 = vunpack.c.h.b16 %v624
    %v787 = vunpack.c.l.b16 %v625
    %v788 = vunpack.c.h.b16 %v625
    %v789 = vunpack.c.l.b16 %v626
    %v790 = vunpack.c.h.b16 %v626
    %v791 = vunpack.c.l.b16 %v627
    %v792 = vunpack.c.h.b16 %v627
    %v793 = vunpack.c.l.b16 %v628
    %v794 = vunpack.c.h.b16 %v628
    %v795 = vunpack.c.l.b16 %v629
    %v796 = vunpack.c.h.b16 %v629
    %v797 = vunpack.c.l.b16 %v630
    %v798 = vunpack.c.h.b16 %v630
    %v799 = vunpack.c.l.b16 %v631
    %v800 = vunpack.c.h.b16 %v631
    %v801 = vunpack.c.l.b16 %v632
    %v802 = vunpack.c.h.b16 %v632
    %v803 = vunpack.c.l.b16 %v633
    %v804 = vunpack.c.h.b16 %v633
    %v805 = vunpack.c.l.b16 %v634
    %v806 = vunpack.c.h.b16 %v634
    %v807 = vunpack.c.l.b16 %v635
    %v808 = vunpack.c.h.b16 %v635
    %v809 = vunpack.c.l.b16 %v636
    %v810 = vunpack.c.h.b16 %v636
    %v811 = vunpack.c.l.b16 %v637
    %v812 = vunpack.c.h.b16 %v637
    %v813 = vunpack.c.l.b16 %v638
    %v814 = vunpack.c.h.b16 %v638
    %v815 = vunpack.c.l.b16 %v639
    %v816 = vunpack.c.h.b16 %v639
    %v817 = vunpack.c.l.b16 %v640
    %v818 = vunpack.c.h.b16 %v640
    %v819 = vunpack.c.l.b16 %v641
    %v820 = vunpack.c.h.b16 %v641
    %v821 = vunpack.c.l.b16 %v642
    %v822 = vunpack.c.h.b16 %v642
    %v823 = vunpack.c.l.b16 %v643
    %v824 = vunpack.c.h.b16 %v643
    %v825 = vunpack.c.l.b16 %v644
    %v826 = vunpack.c.h.b16 %v644
    %v827 = vunpack.c.l.b16 %v645
    %v828 = vunpack.c.h.b16 %v645
    %v829 = vunpack.c.l.b16 %v646
    %v830 = vunpack.c.h.b16 %v646
    %v831 = vunpack.c.l.b16 %v647
    %v832 = vunpack.c.h.b16 %v647
    %v833 = vunpack.c.l.b16 %v648
    %v834 = vunpack.c.h.b16 %v648
    %v835 = vunpack.c.l.b16 %v649
    %v836 = vunpack.c.h.b16 %v649
    %v837 = vunpack.c.l.b16 %v650
    %v838 = vunpack.c.h.b16 %v650
    %v839 = vunpack.c.l.b16 %v651
    %v840 = vunpack.c.h.b16 %v651
    %v841 = vunpack.c.l.b16 %v652
    %v842 = vunpack.c.h.b16 %v652
    %v843 = vunpack.c.l.b16 %v653
    %v844 = vunpack.c.h.b16 %v653
    %v845 = vunpack.c.l.b16 %v654
    %v846 = vunpack.c.h.b16 %v654
    %v847 = vunpack.c.l.b16 %v655
    %v848 = vunpack.c.h.b16 %v655
    %v849 = vunpack.c.l.b16 %v656
    %v850 = vunpack.c.h.b16 %v656
    %v851 = vunpack.c.l.b16 %v657
    %v852 = vunpack.c.h.b16 %v657
    %v853 = vunpack.c.l.b16 %v658
    %v854 = vunpack.c.h.b16 %v658
    %v855 = vunpack.c.l.b16 %v659
    %v856 = vunpack.c.h.b16 %v659
    %v857 = vunpack.c.l.b16 %v660
    %v858 = vunpack.c.h.b16 %v660
    %v859 = vunpack.c.l.b16 %v661
    %v860 = vunpack.c.h.b16 %v661
    %v861 = vunpack.c.l.b16 %v662
    %v862 = vunpack.c.h.b16 %v662
    %v863 = vunpack.c.l.b16 %v663
    %v864 = vunpack.c.h.b16 %v663
    %v865 = vpack.c.b16 %v741, %v737
    %v866 = vpack.c.b16 %v742, %v738
    %v867 = vpack.c.b16 %v743, %v739
    %v868 = vpack.c.b16 %v744, %v740
    %v869 = vpack.c.b16 %v749, %v745
    %v870 = vpack.c.b16 %v750, %v746
    %v871 = vpack.c.b16 %v751, %v747
    %v872 = vpack.c.b16 %v752, %v748
    %v873 = vpack.c.b16 %v757, %v753
    %v874 = vpack.c.b16 %v758, %v754
    %v875 = vpack.c.b16 %v759, %v755
    %v876 = vpack.c.b16 %v760, %v756
    %v877 = vpack.c.b16 %v765, %v761
    %v878 = vpack.c.b16 %v766, %v762
    %v879 = vpack.c.b16 %v767, %v763
    %v880 = vpack.c.b16 %v768, %v764
    %v881 = vpack.c.b16 %v773, %v769
    %v882 = vpack.c.b16 %v774, %v770
    %v883 = vpack.c.b16 %v775, %v771
    %v884 = vpack.c.b16 %v776, %v772
    %v885 = vpack.c.b16 %v781, %v777
    %v886 = vpack.c.b16 %v782, %v778
    %v887 = vpack.c.b16 %v783, %v779
    %v888 = vpack.c.b16 %v784, %v780
    %v889 = vpack.c.b16 %v789, %v785
    %v890 = vpack.c.b16 %v790, %v786
    %v891 = vpack.c.b16 %v791, %v787
    %v892 = vpack.c.b16 %v792, %v788
    %v893 = vpack.c.b16 %v797, %v793
    %v894 = vpack.c.b16 %v798, %v794
    %v895 = vpack.c.b16 %v799, %v795
    %v896 = vpack.c.b16 %v800, %v796
    %v897 = vpack.c.b16 %v805, %v801
    %v898 = vpack.c.b16 %v806, %v802
    %v899 = vpack.c.b16 %v807, %v803
    %v900 = vpack.c.b16 %v808, %v804
    %v901 = vpack.c.b16 %v813, %v809
    %v902 = vpack.c.b16 %v814, %v810
    %v903 = vpack.c.b16 %v815, %v811
    %v904 = vpack.c.b16 %v816, %v812
    %v905 = vpack.c.b16 %v821, %v817
    %v906 = vpack.c.b16 %v822, %v818
    %v907 = vpack.c.b16 %v823, %v819
    %v908 = vpack.c.b16 %v824, %v820
    %v909 = vpack.c.b16 %v829, %v825
    %v910 = vpack.c.b16 %v830, %v826
    %v911 = vpack.c.b16 %v831, %v827
    %v912 = vpack.c.b16 %v832, %v828
    %v913 = vpack.c.b16 %v837, %v833
    %v914 = vpack.c.b16 %v838, %v834
    %v915 = vpack.c.b16 %v839, %v835
    %v916 = vpack.c.b16 %v840, %v836
    %v917 = vpack.c.b16 %v845, %v841
    %v918 = vpack.c.b16 %v846, %v842
    %v919 = vpack.c.b16 %v847, %v843
    %v920 = vpack.c.b16 %v848, %v844
    %v921 = vpack.c.b16 %v853, %v849
    %v922 = vpack.c.b16 %v854, %v850
    %v923 = vpack.c.b16 %v855, %v851
    %v924 = vpack.c.b16 %v856, %v852
    %v925 = vpack.c.b16 %v861, %v857
    %v926 = vpack.c.b16 %v862, %v858
    %v927 = vpack.c.b16 %v863, %v859
    %v928 = vpack.c.b16 %v864, %v860
    %993 = vmatpush.bf16.msra.mxu0 %v893
    %994 = vmatpush.bf16.msra.mxu0 %v889
    %995 = vmatpush.bf16.msra.mxu0 %v885
    %996 = vmatpush.bf16.msra.mxu0 %v881
    %997 = vmatpush.bf16.msra.mxu0 %v877
    %998 = vmatpush.bf16.msra.mxu0 %v873
    %999 = vmatpush.bf16.msra.mxu0 %v869
    %1000 = vmatpush.bf16.msra.mxu0 %v865
    %1001 = vmatmul.bf16.gmra.mxu0 %v598
    %v1002 = vpop.f32.mrf.mxu0
    %v1003 = vadd.f32 %v665, %v1002
    %v1004 = vpop.f32.mrf.mxu0
    %1005 = vdwg.mxu0
    %1006 = vmatpush.bf16.msra.mxu0 %v925
    %1007 = vmatpush.bf16.msra.mxu0 %v921
    %1008 = vmatpush.bf16.msra.mxu0 %v917
    %1009 = vmatpush.bf16.msra.mxu0 %v913
    %1010 = vmatpush.bf16.msra.mxu0 %v909
    %1011 = vmatpush.bf16.msra.mxu0 %v905
    %1012 = vmatpush.bf16.msra.mxu0 %v901
    %1013 = vmatpush.bf16.msra.mxu0 %v897
    %1014 = vmatmul.bf16.gmra.mxu0 %v599
    %v1015 = vpop.f32.mrf.mxu0
    %v1016 = vadd.f32 %v1003, %v1015
    %v1017 = vpop.f32.mrf.mxu0
    %1018 = vdwg.mxu0
    %1019 = vmatpush.bf16.msra.mxu0 %v894
    %1020 = vmatpush.bf16.msra.mxu0 %v890
    %1021 = vmatpush.bf16.msra.mxu0 %v886
    %1022 = vmatpush.bf16.msra.mxu0 %v882
    %1023 = vmatpush.bf16.msra.mxu0 %v878
    %1024 = vmatpush.bf16.msra.mxu0 %v874
    %1025 = vmatpush.bf16.msra.mxu0 %v870
    %1026 = vmatpush.bf16.msra.mxu0 %v866
    %1027 = vmatmul.bf16.gmra.mxu0 %v598
    %v1028 = vpop.f32.mrf.mxu0
    %v1029 = vadd.f32 %v666, %v1028
    %v1030 = vpop.f32.mrf.mxu0
    %1031 = vdwg.mxu0
    %1032 = vmatpush.bf16.msra.mxu0 %v926
    %1033 = vmatpush.bf16.msra.mxu0 %v922
    %1034 = vmatpush.bf16.msra.mxu0 %v918
    %1035 = vmatpush.bf16.msra.mxu0 %v914
    %1036 = vmatpush.bf16.msra.mxu0 %v910
    %1037 = vmatpush.bf16.msra.mxu0 %v906
    %1038 = vmatpush.bf16.msra.mxu0 %v902
    %1039 = vmatpush.bf16.msra.mxu0 %v898
    %1040 = vmatmul.bf16.gmra.mxu0 %v599
    %v1041 = vpop.f32.mrf.mxu0
    %v1042 = vadd.f32 %v1029, %v1041
    %v1043 = vpop.f32.mrf.mxu0
    %1044 = vdwg.mxu0
    %1045 = vmatpush.bf16.msra.mxu0 %v895
    %1046 = vmatpush.bf16.msra.mxu0 %v891
    %1047 = vmatpush.bf16.msra.mxu0 %v887
    %1048 = vmatpush.bf16.msra.mxu0 %v883
    %1049 = vmatpush.bf16.msra.mxu0 %v879
    %1050 = vmatpush.bf16.msra.mxu0 %v875
    %1051 = vmatpush.bf16.msra.mxu0 %v871
    %1052 = vmatpush.bf16.msra.mxu0 %v867
    %1053 = vmatmul.bf16.gmra.mxu0 %v598
    %v1054 = vpop.f32.mrf.mxu0
    %v1055 = vadd.f32 %v667, %v1054
    %v1056 = vpop.f32.mrf.mxu0
    %1057 = vdwg.mxu0
    %1058 = vmatpush.bf16.msra.mxu0 %v927
    %1059 = vmatpush.bf16.msra.mxu0 %v923
    %1060 = vmatpush.bf16.msra.mxu0 %v919
    %1061 = vmatpush.bf16.msra.mxu0 %v915
    %1062 = vmatpush.bf16.msra.mxu0 %v911
    %1063 = vmatpush.bf16.msra.mxu0 %v907
    %1064 = vmatpush.bf16.msra.mxu0 %v903
    %1065 = vmatpush.bf16.msra.mxu0 %v899
    %1066 = vmatmul.bf16.gmra.mxu0 %v599
    %v1067 = vpop.f32.mrf.mxu0
    %v1068 = vadd.f32 %v1055, %v1067
    %v1069 = vpop.f32.mrf.mxu0
    %1070 = vdwg.mxu0
    %1071 = vmatpush.bf16.msra.mxu0 %v896
    %1072 = vmatpush.bf16.msra.mxu0 %v892
    %1073 = vmatpush.bf16.msra.mxu0 %v888
    %1074 = vmatpush.bf16.msra.mxu0 %v884
    %1075 = vmatpush.bf16.msra.mxu0 %v880
    %1076 = vmatpush.bf16.msra.mxu0 %v876
    %1077 = vmatpush.bf16.msra.mxu0 %v872
    %1078 = vmatpush.bf16.msra.mxu0 %v868
    %1079 = vmatmul.bf16.gmra.mxu0 %v598
    %v1080 = vpop.f32.mrf.mxu0
    %v1081 = vadd.f32 %v668, %v1080
    %v1082 = vpop.f32.mrf.mxu0
    %1083 = vdwg.mxu0
    %1084 = vmatpush.bf16.msra.mxu0 %v928
    %1085 = vmatpush.bf16.msra.mxu0 %v924
    %1086 = vmatpush.bf16.msra.mxu0 %v920
    %1087 = vmatpush.bf16.msra.mxu0 %v916
    %1088 = vmatpush.bf16.msra.mxu0 %v912
    %1089 = vmatpush.bf16.msra.mxu0 %v908
    %1090 = vmatpush.bf16.msra.mxu0 %v904
    %1091 = vmatpush.bf16.msra.mxu0 %v900
    %1092 = vmatmul.bf16.gmra.mxu0 %v599
    %v1093 = vpop.f32.mrf.mxu0
    %v1094 = vadd.f32 %v1081, %v1093
    %v1095 = vpop.f32.mrf.mxu0
    %1096 = vdwg.mxu0
    %s1097 = smul.u32 4, 48
    %s1098 = smul.u32 %s1097, 8
    %s1099 = sshll.u32 %s1098, 4
    %1100 = dma.done [#allocation4], %s1099
    %s1101 = smul.u32 4, 32
    %s1102 = smul.u32 %s1101, 1
    %s1103 = sshll.u32 %s1102, 4
    %1104 = dma.done %s94, %s1103
    %v1105 = vlaneseq
    %v1106 = vand.u32 %v1105, 127
    %vm1107 = vcmp.eq.s32.totalorder %v1106, 0
    %v1108 = vsel %vm1107, 1, 0
    %v1109 = vcvt.s32.f32 %v1108
    %v1110 = vpack.c.bf16 %v1109, %v1109
    %v1111 = vpack.c.bf16 %v1042, %v1016
    %v1113 = vunpack.c.l.b16 %v1111
    %v1114 = vunpack.c.h.b16 %v1111
    %v1115 = vpack.c.b16 %v1113, %v1113
    %v1116 = vpack.c.b16 %v1114, %v1114
    %v1119 = vld [vmem:[#allocation2] sm:$0xff]
    %v1120 = vld [vmem:[#allocation2 + $0x8] sm:$0xff]
    %v1121 = vld [vmem:[#allocation2 + $0x10] sm:$0xff]
    %v1122 = vld [vmem:[#allocation2 + $0x18] sm:$0xff]
    %v1123 = vld [vmem:[#allocation2 + $0x20] sm:$0xff]
    %v1124 = vld [vmem:[#allocation2 + $0x28] sm:$0xff]
    %v1125 = vld [vmem:[#allocation2 + $0x30] sm:$0xff]
    %v1126 = vld [vmem:[#allocation2 + $0x38] sm:$0xff]
    %v1127 = vld [vmem:[#allocation2 + $0x40] sm:$0xff]
    %v1128 = vld [vmem:[#allocation2 + $0x48] sm:$0xff]
    %v1129 = vld [vmem:[#allocation2 + $0x50] sm:$0xff]
    %v1130 = vld [vmem:[#allocation2 + $0x58] sm:$0xff]
    %v1131 = vld [vmem:[#allocation2 + $0x60] sm:$0xff]
    %v1132 = vld [vmem:[#allocation2 + $0x68] sm:$0xff]
    %v1133 = vld [vmem:[#allocation2 + $0x70] sm:$0xff]
    %v1134 = vld [vmem:[#allocation2 + $0x78] sm:$0xff]
    %v1135 = vld [vmem:[#allocation2 + $0x80] sm:$0xff]
    %v1136 = vld [vmem:[#allocation2 + $0x88] sm:$0xff]
    %v1137 = vld [vmem:[#allocation2 + $0x90] sm:$0xff]
    %v1138 = vld [vmem:[#allocation2 + $0x98] sm:$0xff]
    %v1139 = vld [vmem:[#allocation2 + $0xa0] sm:$0xff]
    %v1140 = vld [vmem:[#allocation2 + $0xa8] sm:$0xff]
    %v1141 = vld [vmem:[#allocation2 + $0xb0] sm:$0xff]
    %v1142 = vld [vmem:[#allocation2 + $0xb8] sm:$0xff]
    %v1143 = vld [vmem:[#allocation2 + $0xc0] sm:$0xff]
    %v1144 = vld [vmem:[#allocation2 + $0xc8] sm:$0xff]
    %v1145 = vld [vmem:[#allocation2 + $0xd0] sm:$0xff]
    %v1146 = vld [vmem:[#allocation2 + $0xd8] sm:$0xff]
    %v1147 = vld [vmem:[#allocation2 + $0xe0] sm:$0xff]
    %v1148 = vld [vmem:[#allocation2 + $0xe8] sm:$0xff]
    %v1149 = vld [vmem:[#allocation2 + $0xf0] sm:$0xff]
    %v1150 = vld [vmem:[#allocation2 + $0xf8] sm:$0xff]
    %v1151 = vld [vmem:[#allocation2 + $0x100] sm:$0xff]
    %v1152 = vld [vmem:[#allocation2 + $0x108] sm:$0xff]
    %v1153 = vld [vmem:[#allocation2 + $0x110] sm:$0xff]
    %v1154 = vld [vmem:[#allocation2 + $0x118] sm:$0xff]
    %v1155 = vld [vmem:[#allocation2 + $0x120] sm:$0xff]
    %v1156 = vld [vmem:[#allocation2 + $0x128] sm:$0xff]
    %v1157 = vld [vmem:[#allocation2 + $0x130] sm:$0xff]
    %v1158 = vld [vmem:[#allocation2 + $0x138] sm:$0xff]
    %v1159 = vld [vmem:[#allocation2 + $0x140] sm:$0xff]
    %v1160 = vld [vmem:[#allocation2 + $0x148] sm:$0xff]
    %v1161 = vld [vmem:[#allocation2 + $0x150] sm:$0xff]
    %v1162 = vld [vmem:[#allocation2 + $0x158] sm:$0xff]
    %v1163 = vld [vmem:[#allocation2 + $0x160] sm:$0xff]
    %v1164 = vld [vmem:[#allocation2 + $0x168] sm:$0xff]
    %v1165 = vld [vmem:[#allocation2 + $0x170] sm:$0xff]
    %v1166 = vld [vmem:[#allocation2 + $0x178] sm:$0xff]
    %v1167 = vld [vmem:[#allocation2 + $0x180] sm:$0xff]
    %v1168 = vld [vmem:[#allocation2 + $0x188] sm:$0xff]
    %v1169 = vld [vmem:[#allocation2 + $0x190] sm:$0xff]
    %v1170 = vld [vmem:[#allocation2 + $0x198] sm:$0xff]
    %v1171 = vld [vmem:[#allocation2 + $0x1a0] sm:$0xff]
    %v1172 = vld [vmem:[#allocation2 + $0x1a8] sm:$0xff]
    %v1173 = vld [vmem:[#allocation2 + $0x1b0] sm:$0xff]
    %v1174 = vld [vmem:[#allocation2 + $0x1b8] sm:$0xff]
    %v1175 = vld [vmem:[#allocation2 + $0x1c0] sm:$0xff]
    %v1176 = vld [vmem:[#allocation2 + $0x1c8] sm:$0xff]
    %v1177 = vld [vmem:[#allocation2 + $0x1d0] sm:$0xff]
    %v1178 = vld [vmem:[#allocation2 + $0x1d8] sm:$0xff]
    %v1179 = vld [vmem:[#allocation2 + $0x1e0] sm:$0xff]
    %v1180 = vld [vmem:[#allocation2 + $0x1e8] sm:$0xff]
    %v1181 = vld [vmem:[#allocation2 + $0x1f0] sm:$0xff]
    %v1182 = vld [vmem:[#allocation2 + $0x1f8] sm:$0xff]
    %v1183 = vld [vmem:[#allocation2 + $0x200] sm:$0xff]
    %v1184 = vld [vmem:[#allocation2 + $0x208] sm:$0xff]
    %v1185 = vld [vmem:[#allocation2 + $0x210] sm:$0xff]
    %v1186 = vld [vmem:[#allocation2 + $0x218] sm:$0xff]
    %v1187 = vld [vmem:[#allocation2 + $0x220] sm:$0xff]
    %v1188 = vld [vmem:[#allocation2 + $0x228] sm:$0xff]
    %v1189 = vld [vmem:[#allocation2 + $0x230] sm:$0xff]
    %v1190 = vld [vmem:[#allocation2 + $0x238] sm:$0xff]
    %v1191 = vld [vmem:[#allocation2 + $0x240] sm:$0xff]
    %v1192 = vld [vmem:[#allocation2 + $0x248] sm:$0xff]
    %v1193 = vld [vmem:[#allocation2 + $0x250] sm:$0xff]
    %v1194 = vld [vmem:[#allocation2 + $0x258] sm:$0xff]
    %v1195 = vld [vmem:[#allocation2 + $0x260] sm:$0xff]
    %v1196 = vld [vmem:[#allocation2 + $0x268] sm:$0xff]
    %v1197 = vld [vmem:[#allocation2 + $0x270] sm:$0xff]
    %v1198 = vld [vmem:[#allocation2 + $0x278] sm:$0xff]
    %v1199 = vld [vmem:[#allocation2 + $0x280] sm:$0xff]
    %v1200 = vld [vmem:[#allocation2 + $0x288] sm:$0xff]
    %v1201 = vld [vmem:[#allocation2 + $0x290] sm:$0xff]
    %v1202 = vld [vmem:[#allocation2 + $0x298] sm:$0xff]
    %v1203 = vld [vmem:[#allocation2 + $0x2a0] sm:$0xff]
    %v1204 = vld [vmem:[#allocation2 + $0x2a8] sm:$0xff]
    %v1205 = vld [vmem:[#allocation2 + $0x2b0] sm:$0xff]
    %v1206 = vld [vmem:[#allocation2 + $0x2b8] sm:$0xff]
    %v1207 = vld [vmem:[#allocation2 + $0x2c0] sm:$0xff]
    %v1208 = vld [vmem:[#allocation2 + $0x2c8] sm:$0xff]
    %v1209 = vld [vmem:[#allocation2 + $0x2d0] sm:$0xff]
    %v1210 = vld [vmem:[#allocation2 + $0x2d8] sm:$0xff]
    %v1211 = vld [vmem:[#allocation2 + $0x2e0] sm:$0xff]
    %v1212 = vld [vmem:[#allocation2 + $0x2e8] sm:$0xff]
    %v1213 = vld [vmem:[#allocation2 + $0x2f0] sm:$0xff]
    %v1214 = vld [vmem:[#allocation2 + $0x2f8] sm:$0xff]
    %v1215 = vld [vmem:[#allocation2 + $0x300] sm:$0xff]
    %v1216 = vld [vmem:[#allocation2 + $0x308] sm:$0xff]
    %v1217 = vld [vmem:[#allocation2 + $0x310] sm:$0xff]
    %v1218 = vld [vmem:[#allocation2 + $0x318] sm:$0xff]
    %v1219 = vld [vmem:[#allocation2 + $0x320] sm:$0xff]
    %v1220 = vld [vmem:[#allocation2 + $0x328] sm:$0xff]
    %v1221 = vld [vmem:[#allocation2 + $0x330] sm:$0xff]
    %v1222 = vld [vmem:[#allocation2 + $0x338] sm:$0xff]
    %v1223 = vld [vmem:[#allocation2 + $0x340] sm:$0xff]
    %v1224 = vld [vmem:[#allocation2 + $0x348] sm:$0xff]
    %v1225 = vld [vmem:[#allocation2 + $0x350] sm:$0xff]
    %v1226 = vld [vmem:[#allocation2 + $0x358] sm:$0xff]
    %v1227 = vld [vmem:[#allocation2 + $0x360] sm:$0xff]
    %v1228 = vld [vmem:[#allocation2 + $0x368] sm:$0xff]
    %v1229 = vld [vmem:[#allocation2 + $0x370] sm:$0xff]
    %v1230 = vld [vmem:[#allocation2 + $0x378] sm:$0xff]
    %v1231 = vld [vmem:[#allocation2 + $0x380] sm:$0xff]
    %v1232 = vld [vmem:[#allocation2 + $0x388] sm:$0xff]
    %v1233 = vld [vmem:[#allocation2 + $0x390] sm:$0xff]
    %v1234 = vld [vmem:[#allocation2 + $0x398] sm:$0xff]
    %v1235 = vld [vmem:[#allocation2 + $0x3a0] sm:$0xff]
    %v1236 = vld [vmem:[#allocation2 + $0x3a8] sm:$0xff]
    %v1237 = vld [vmem:[#allocation2 + $0x3b0] sm:$0xff]
    %v1238 = vld [vmem:[#allocation2 + $0x3b8] sm:$0xff]
    %v1239 = vld [vmem:[#allocation2 + $0x3c0] sm:$0xff]
    %v1240 = vld [vmem:[#allocation2 + $0x3c8] sm:$0xff]
    %v1241 = vld [vmem:[#allocation2 + $0x3d0] sm:$0xff]
    %v1242 = vld [vmem:[#allocation2 + $0x3d8] sm:$0xff]
    %v1243 = vld [vmem:[#allocation2 + $0x3e0] sm:$0xff]
    %v1244 = vld [vmem:[#allocation2 + $0x3e8] sm:$0xff]
    %v1245 = vld [vmem:[#allocation2 + $0x3f0] sm:$0xff]
    %v1246 = vld [vmem:[#allocation2 + $0x3f8] sm:$0xff]
    %v1247 = vld [vmem:[#allocation2 + $0x400] sm:$0xff]
    %v1248 = vld [vmem:[#allocation2 + $0x408] sm:$0xff]
    %v1249 = vld [vmem:[#allocation2 + $0x410] sm:$0xff]
    %v1250 = vld [vmem:[#allocation2 + $0x418] sm:$0xff]
    %v1251 = vld [vmem:[#allocation2 + $0x420] sm:$0xff]
    %v1252 = vld [vmem:[#allocation2 + $0x428] sm:$0xff]
    %v1253 = vld [vmem:[#allocation2 + $0x430] sm:$0xff]
    %v1254 = vld [vmem:[#allocation2 + $0x438] sm:$0xff]
    %v1255 = vld [vmem:[#allocation2 + $0x440] sm:$0xff]
    %v1256 = vld [vmem:[#allocation2 + $0x448] sm:$0xff]
    %v1257 = vld [vmem:[#allocation2 + $0x450] sm:$0xff]
    %v1258 = vld [vmem:[#allocation2 + $0x458] sm:$0xff]
    %v1259 = vld [vmem:[#allocation2 + $0x460] sm:$0xff]
    %v1260 = vld [vmem:[#allocation2 + $0x468] sm:$0xff]
    %v1261 = vld [vmem:[#allocation2 + $0x470] sm:$0xff]
    %v1262 = vld [vmem:[#allocation2 + $0x478] sm:$0xff]
    %v1263 = vld [vmem:[#allocation2 + $0x480] sm:$0xff]
    %v1264 = vld [vmem:[#allocation2 + $0x488] sm:$0xff]
    %v1265 = vld [vmem:[#allocation2 + $0x490] sm:$0xff]
    %v1266 = vld [vmem:[#allocation2 + $0x498] sm:$0xff]
    %v1267 = vld [vmem:[#allocation2 + $0x4a0] sm:$0xff]
    %v1268 = vld [vmem:[#allocation2 + $0x4a8] sm:$0xff]
    %v1269 = vld [vmem:[#allocation2 + $0x4b0] sm:$0xff]
    %v1270 = vld [vmem:[#allocation2 + $0x4b8] sm:$0xff]
    %v1271 = vld [vmem:[#allocation2 + $0x4c0] sm:$0xff]
    %v1272 = vld [vmem:[#allocation2 + $0x4c8] sm:$0xff]
    %v1273 = vld [vmem:[#allocation2 + $0x4d0] sm:$0xff]
    %v1274 = vld [vmem:[#allocation2 + $0x4d8] sm:$0xff]
    %v1275 = vld [vmem:[#allocation2 + $0x4e0] sm:$0xff]
    %v1276 = vld [vmem:[#allocation2 + $0x4e8] sm:$0xff]
    %v1277 = vld [vmem:[#allocation2 + $0x4f0] sm:$0xff]
    %v1278 = vld [vmem:[#allocation2 + $0x4f8] sm:$0xff]
    %v1279 = vld [vmem:[#allocation2 + $0x500] sm:$0xff]
    %v1280 = vld [vmem:[#allocation2 + $0x508] sm:$0xff]
    %v1281 = vld [vmem:[#allocation2 + $0x510] sm:$0xff]
    %v1282 = vld [vmem:[#allocation2 + $0x518] sm:$0xff]
    %v1283 = vld [vmem:[#allocation2 + $0x520] sm:$0xff]
    %v1284 = vld [vmem:[#allocation2 + $0x528] sm:$0xff]
    %v1285 = vld [vmem:[#allocation2 + $0x530] sm:$0xff]
    %v1286 = vld [vmem:[#allocation2 + $0x538] sm:$0xff]
    %v1287 = vld [vmem:[#allocation2 + $0x540] sm:$0xff]
    %v1288 = vld [vmem:[#allocation2 + $0x548] sm:$0xff]
    %v1289 = vld [vmem:[#allocation2 + $0x550] sm:$0xff]
    %v1290 = vld [vmem:[#allocation2 + $0x558] sm:$0xff]
    %v1291 = vld [vmem:[#allocation2 + $0x560] sm:$0xff]
    %v1292 = vld [vmem:[#allocation2 + $0x568] sm:$0xff]
    %v1293 = vld [vmem:[#allocation2 + $0x570] sm:$0xff]
    %v1294 = vld [vmem:[#allocation2 + $0x578] sm:$0xff]
    %v1295 = vld [vmem:[#allocation2 + $0x580] sm:$0xff]
    %v1296 = vld [vmem:[#allocation2 + $0x588] sm:$0xff]
    %v1297 = vld [vmem:[#allocation2 + $0x590] sm:$0xff]
    %v1298 = vld [vmem:[#allocation2 + $0x598] sm:$0xff]
    %v1299 = vld [vmem:[#allocation2 + $0x5a0] sm:$0xff]
    %v1300 = vld [vmem:[#allocation2 + $0x5a8] sm:$0xff]
    %v1301 = vld [vmem:[#allocation2 + $0x5b0] sm:$0xff]
    %v1302 = vld [vmem:[#allocation2 + $0x5b8] sm:$0xff]
    %v1303 = vld [vmem:[#allocation2 + $0x5c0] sm:$0xff]
    %v1304 = vld [vmem:[#allocation2 + $0x5c8] sm:$0xff]
    %v1305 = vld [vmem:[#allocation2 + $0x5d0] sm:$0xff]
    %v1306 = vld [vmem:[#allocation2 + $0x5d8] sm:$0xff]
    %v1307 = vld [vmem:[#allocation2 + $0x5e0] sm:$0xff]
    %v1308 = vld [vmem:[#allocation2 + $0x5e8] sm:$0xff]
    %v1309 = vld [vmem:[#allocation2 + $0x5f0] sm:$0xff]
    %v1310 = vld [vmem:[#allocation2 + $0x5f8] sm:$0xff]
    %v1503 = vunpack.c.l.b16 %v1119
    %v1504 = vunpack.c.h.b16 %v1119
    %v1505 = vunpack.c.l.b16 %v1120
    %v1506 = vunpack.c.h.b16 %v1120
    %v1507 = vunpack.c.l.b16 %v1121
    %v1508 = vunpack.c.h.b16 %v1121
    %v1509 = vunpack.c.l.b16 %v1122
    %v1510 = vunpack.c.h.b16 %v1122
    %v1511 = vunpack.c.l.b16 %v1123
    %v1512 = vunpack.c.h.b16 %v1123
    %v1513 = vunpack.c.l.b16 %v1124
    %v1514 = vunpack.c.h.b16 %v1124
    %v1515 = vunpack.c.l.b16 %v1125
    %v1516 = vunpack.c.h.b16 %v1125
    %v1517 = vunpack.c.l.b16 %v1126
    %v1518 = vunpack.c.h.b16 %v1126
    %v1519 = vunpack.c.l.b16 %v1127
    %v1520 = vunpack.c.h.b16 %v1127
    %v1521 = vunpack.c.l.b16 %v1128
    %v1522 = vunpack.c.h.b16 %v1128
    %v1523 = vunpack.c.l.b16 %v1129
    %v1524 = vunpack.c.h.b16 %v1129
    %v1525 = vunpack.c.l.b16 %v1130
    %v1526 = vunpack.c.h.b16 %v1130
    %v1527 = vunpack.c.l.b16 %v1131
    %v1528 = vunpack.c.h.b16 %v1131
    %v1529 = vunpack.c.l.b16 %v1132
    %v1530 = vunpack.c.h.b16 %v1132
    %v1531 = vunpack.c.l.b16 %v1133
    %v1532 = vunpack.c.h.b16 %v1133
    %v1533 = vunpack.c.l.b16 %v1134
    %v1534 = vunpack.c.h.b16 %v1134
    %v1535 = vunpack.c.l.b16 %v1135
    %v1536 = vunpack.c.h.b16 %v1135
    %v1537 = vunpack.c.l.b16 %v1136
    %v1538 = vunpack.c.h.b16 %v1136
    %v1539 = vunpack.c.l.b16 %v1137
    %v1540 = vunpack.c.h.b16 %v1137
    %v1541 = vunpack.c.l.b16 %v1138
    %v1542 = vunpack.c.h.b16 %v1138
    %v1543 = vunpack.c.l.b16 %v1139
    %v1544 = vunpack.c.h.b16 %v1139
    %v1545 = vunpack.c.l.b16 %v1140
    %v1546 = vunpack.c.h.b16 %v1140
    %v1547 = vunpack.c.l.b16 %v1141
    %v1548 = vunpack.c.h.b16 %v1141
    %v1549 = vunpack.c.l.b16 %v1142
    %v1550 = vunpack.c.h.b16 %v1142
    %v1551 = vunpack.c.l.b16 %v1143
    %v1552 = vunpack.c.h.b16 %v1143
    %v1553 = vunpack.c.l.b16 %v1144
    %v1554 = vunpack.c.h.b16 %v1144
    %v1555 = vunpack.c.l.b16 %v1145
    %v1556 = vunpack.c.h.b16 %v1145
    %v1557 = vunpack.c.l.b16 %v1146
    %v1558 = vunpack.c.h.b16 %v1146
    %v1559 = vunpack.c.l.b16 %v1147
    %v1560 = vunpack.c.h.b16 %v1147
    %v1561 = vunpack.c.l.b16 %v1148
    %v1562 = vunpack.c.h.b16 %v1148
    %v1563 = vunpack.c.l.b16 %v1149
    %v1564 = vunpack.c.h.b16 %v1149
    %v1565 = vunpack.c.l.b16 %v1150
    %v1566 = vunpack.c.h.b16 %v1150
    %v1567 = vunpack.c.l.b16 %v1151
    %v1568 = vunpack.c.h.b16 %v1151
    %v1569 = vunpack.c.l.b16 %v1152
    %v1570 = vunpack.c.h.b16 %v1152
    %v1571 = vunpack.c.l.b16 %v1153
    %v1572 = vunpack.c.h.b16 %v1153
    %v1573 = vunpack.c.l.b16 %v1154
    %v1574 = vunpack.c.h.b16 %v1154
    %v1575 = vunpack.c.l.b16 %v1155
    %v1576 = vunpack.c.h.b16 %v1155
    %v1577 = vunpack.c.l.b16 %v1156
    %v1578 = vunpack.c.h.b16 %v1156
    %v1579 = vunpack.c.l.b16 %v1157
    %v1580 = vunpack.c.h.b16 %v1157
    %v1581 = vunpack.c.l.b16 %v1158
    %v1582 = vunpack.c.h.b16 %v1158
    %v1583 = vunpack.c.l.b16 %v1159
    %v1584 = vunpack.c.h.b16 %v1159
    %v1585 = vunpack.c.l.b16 %v1160
    %v1586 = vunpack.c.h.b16 %v1160
    %v1587 = vunpack.c.l.b16 %v1161
    %v1588 = vunpack.c.h.b16 %v1161
    %v1589 = vunpack.c.l.b16 %v1162
    %v1590 = vunpack.c.h.b16 %v1162
    %v1591 = vunpack.c.l.b16 %v1163
    %v1592 = vunpack.c.h.b16 %v1163
    %v1593 = vunpack.c.l.b16 %v1164
    %v1594 = vunpack.c.h.b16 %v1164
    %v1595 = vunpack.c.l.b16 %v1165
    %v1596 = vunpack.c.h.b16 %v1165
    %v1597 = vunpack.c.l.b16 %v1166
    %v1598 = vunpack.c.h.b16 %v1166
    %v1599 = vunpack.c.l.b16 %v1167
    %v1600 = vunpack.c.h.b16 %v1167
    %v1601 = vunpack.c.l.b16 %v1168
    %v1602 = vunpack.c.h.b16 %v1168
    %v1603 = vunpack.c.l.b16 %v1169
    %v1604 = vunpack.c.h.b16 %v1169
    %v1605 = vunpack.c.l.b16 %v1170
    %v1606 = vunpack.c.h.b16 %v1170
    %v1607 = vunpack.c.l.b16 %v1171
    %v1608 = vunpack.c.h.b16 %v1171
    %v1609 = vunpack.c.l.b16 %v1172
    %v1610 = vunpack.c.h.b16 %v1172
    %v1611 = vunpack.c.l.b16 %v1173
    %v1612 = vunpack.c.h.b16 %v1173
    %v1613 = vunpack.c.l.b16 %v1174
    %v1614 = vunpack.c.h.b16 %v1174
    %v1615 = vunpack.c.l.b16 %v1175
    %v1616 = vunpack.c.h.b16 %v1175
    %v1617 = vunpack.c.l.b16 %v1176
    %v1618 = vunpack.c.h.b16 %v1176
    %v1619 = vunpack.c.l.b16 %v1177
    %v1620 = vunpack.c.h.b16 %v1177
    %v1621 = vunpack.c.l.b16 %v1178
    %v1622 = vunpack.c.h.b16 %v1178
    %v1623 = vunpack.c.l.b16 %v1179
    %v1624 = vunpack.c.h.b16 %v1179
    %v1625 = vunpack.c.l.b16 %v1180
    %v1626 = vunpack.c.h.b16 %v1180
    %v1627 = vunpack.c.l.b16 %v1181
    %v1628 = vunpack.c.h.b16 %v1181
    %v1629 = vunpack.c.l.b16 %v1182
    %v1630 = vunpack.c.h.b16 %v1182
    %v1631 = vunpack.c.l.b16 %v1183
    %v1632 = vunpack.c.h.b16 %v1183
    %v1633 = vunpack.c.l.b16 %v1184
    %v1634 = vunpack.c.h.b16 %v1184
    %v1635 = vunpack.c.l.b16 %v1185
    %v1636 = vunpack.c.h.b16 %v1185
    %v1637 = vunpack.c.l.b16 %v1186
    %v1638 = vunpack.c.h.b16 %v1186
    %v1639 = vunpack.c.l.b16 %v1187
    %v1640 = vunpack.c.h.b16 %v1187
    %v1641 = vunpack.c.l.b16 %v1188
    %v1642 = vunpack.c.h.b16 %v1188
    %v1643 = vunpack.c.l.b16 %v1189
    %v1644 = vunpack.c.h.b16 %v1189
    %v1645 = vunpack.c.l.b16 %v1190
    %v1646 = vunpack.c.h.b16 %v1190
    %v1647 = vunpack.c.l.b16 %v1191
    %v1648 = vunpack.c.h.b16 %v1191
    %v1649 = vunpack.c.l.b16 %v1192
    %v1650 = vunpack.c.h.b16 %v1192
    %v1651 = vunpack.c.l.b16 %v1193
    %v1652 = vunpack.c.h.b16 %v1193
    %v1653 = vunpack.c.l.b16 %v1194
    %v1654 = vunpack.c.h.b16 %v1194
    %v1655 = vunpack.c.l.b16 %v1195
    %v1656 = vunpack.c.h.b16 %v1195
    %v1657 = vunpack.c.l.b16 %v1196
    %v1658 = vunpack.c.h.b16 %v1196
    %v1659 = vunpack.c.l.b16 %v1197
    %v1660 = vunpack.c.h.b16 %v1197
    %v1661 = vunpack.c.l.b16 %v1198
    %v1662 = vunpack.c.h.b16 %v1198
    %v1663 = vunpack.c.l.b16 %v1199
    %v1664 = vunpack.c.h.b16 %v1199
    %v1665 = vunpack.c.l.b16 %v1200
    %v1666 = vunpack.c.h.b16 %v1200
    %v1667 = vunpack.c.l.b16 %v1201
    %v1668 = vunpack.c.h.b16 %v1201
    %v1669 = vunpack.c.l.b16 %v1202
    %v1670 = vunpack.c.h.b16 %v1202
    %v1671 = vunpack.c.l.b16 %v1203
    %v1672 = vunpack.c.h.b16 %v1203
    %v1673 = vunpack.c.l.b16 %v1204
    %v1674 = vunpack.c.h.b16 %v1204
    %v1675 = vunpack.c.l.b16 %v1205
    %v1676 = vunpack.c.h.b16 %v1205
    %v1677 = vunpack.c.l.b16 %v1206
    %v1678 = vunpack.c.h.b16 %v1206
    %v1679 = vunpack.c.l.b16 %v1207
    %v1680 = vunpack.c.h.b16 %v1207
    %v1681 = vunpack.c.l.b16 %v1208
    %v1682 = vunpack.c.h.b16 %v1208
    %v1683 = vunpack.c.l.b16 %v1209
    %v1684 = vunpack.c.h.b16 %v1209
    %v1685 = vunpack.c.l.b16 %v1210
    %v1686 = vunpack.c.h.b16 %v1210
    %v1687 = vunpack.c.l.b16 %v1211
    %v1688 = vunpack.c.h.b16 %v1211
    %v1689 = vunpack.c.l.b16 %v1212
    %v1690 = vunpack.c.h.b16 %v1212
    %v1691 = vunpack.c.l.b16 %v1213
    %v1692 = vunpack.c.h.b16 %v1213
    %v1693 = vunpack.c.l.b16 %v1214
    %v1694 = vunpack.c.h.b16 %v1214
    %v1695 = vunpack.c.l.b16 %v1215
    %v1696 = vunpack.c.h.b16 %v1215
    %v1697 = vunpack.c.l.b16 %v1216
    %v1698 = vunpack.c.h.b16 %v1216
    %v1699 = vunpack.c.l.b16 %v1217
    %v1700 = vunpack.c.h.b16 %v1217
    %v1701 = vunpack.c.l.b16 %v1218
    %v1702 = vunpack.c.h.b16 %v1218
    %v1703 = vunpack.c.l.b16 %v1219
    %v1704 = vunpack.c.h.b16 %v1219
    %v1705 = vunpack.c.l.b16 %v1220
    %v1706 = vunpack.c.h.b16 %v1220
    %v1707 = vunpack.c.l.b16 %v1221
    %v1708 = vunpack.c.h.b16 %v1221
    %v1709 = vunpack.c.l.b16 %v1222
    %v1710 = vunpack.c.h.b16 %v1222
    %v1711 = vunpack.c.l.b16 %v1223
    %v1712 = vunpack.c.h.b16 %v1223
    %v1713 = vunpack.c.l.b16 %v1224
    %v1714 = vunpack.c.h.b16 %v1224
    %v1715 = vunpack.c.l.b16 %v1225
    %v1716 = vunpack.c.h.b16 %v1225
    %v1717 = vunpack.c.l.b16 %v1226
    %v1718 = vunpack.c.h.b16 %v1226
    %v1719 = vunpack.c.l.b16 %v1227
    %v1720 = vunpack.c.h.b16 %v1227
    %v1721 = vunpack.c.l.b16 %v1228
    %v1722 = vunpack.c.h.b16 %v1228
    %v1723 = vunpack.c.l.b16 %v1229
    %v1724 = vunpack.c.h.b16 %v1229
    %v1725 = vunpack.c.l.b16 %v1230
    %v1726 = vunpack.c.h.b16 %v1230
    %v1727 = vunpack.c.l.b16 %v1231
    %v1728 = vunpack.c.h.b16 %v1231
    %v1729 = vunpack.c.l.b16 %v1232
    %v1730 = vunpack.c.h.b16 %v1232
    %v1731 = vunpack.c.l.b16 %v1233
    %v1732 = vunpack.c.h.b16 %v1233
    %v1733 = vunpack.c.l.b16 %v1234
    %v1734 = vunpack.c.h.b16 %v1234
    %v1735 = vunpack.c.l.b16 %v1235
    %v1736 = vunpack.c.h.b16 %v1235
    %v1737 = vunpack.c.l.b16 %v1236
    %v1738 = vunpack.c.h.b16 %v1236
    %v1739 = vunpack.c.l.b16 %v1237
    %v1740 = vunpack.c.h.b16 %v1237
    %v1741 = vunpack.c.l.b16 %v1238
    %v1742 = vunpack.c.h.b16 %v1238
    %v1743 = vunpack.c.l.b16 %v1239
    %v1744 = vunpack.c.h.b16 %v1239
    %v1745 = vunpack.c.l.b16 %v1240
    %v1746 = vunpack.c.h.b16 %v1240
    %v1747 = vunpack.c.l.b16 %v1241
    %v1748 = vunpack.c.h.b16 %v1241
    %v1749 = vunpack.c.l.b16 %v1242
    %v1750 = vunpack.c.h.b16 %v1242
    %v1751 = vunpack.c.l.b16 %v1243
    %v1752 = vunpack.c.h.b16 %v1243
    %v1753 = vunpack.c.l.b16 %v1244
    %v1754 = vunpack.c.h.b16 %v1244
    %v1755 = vunpack.c.l.b16 %v1245
    %v1756 = vunpack.c.h.b16 %v1245
    %v1757 = vunpack.c.l.b16 %v1246
    %v1758 = vunpack.c.h.b16 %v1246
    %v1759 = vunpack.c.l.b16 %v1247
    %v1760 = vunpack.c.h.b16 %v1247
    %v1761 = vunpack.c.l.b16 %v1248
    %v1762 = vunpack.c.h.b16 %v1248
    %v1763 = vunpack.c.l.b16 %v1249
    %v1764 = vunpack.c.h.b16 %v1249
    %v1765 = vunpack.c.l.b16 %v1250
    %v1766 = vunpack.c.h.b16 %v1250
    %v1767 = vunpack.c.l.b16 %v1251
    %v1768 = vunpack.c.h.b16 %v1251
    %v1769 = vunpack.c.l.b16 %v1252
    %v1770 = vunpack.c.h.b16 %v1252
    %v1771 = vunpack.c.l.b16 %v1253
    %v1772 = vunpack.c.h.b16 %v1253
    %v1773 = vunpack.c.l.b16 %v1254
    %v1774 = vunpack.c.h.b16 %v1254
    %v1775 = vunpack.c.l.b16 %v1255
    %v1776 = vunpack.c.h.b16 %v1255
    %v1777 = vunpack.c.l.b16 %v1256
    %v1778 = vunpack.c.h.b16 %v1256
    %v1779 = vunpack.c.l.b16 %v1257
    %v1780 = vunpack.c.h.b16 %v1257
    %v1781 = vunpack.c.l.b16 %v1258
    %v1782 = vunpack.c.h.b16 %v1258
    %v1783 = vunpack.c.l.b16 %v1259
    %v1784 = vunpack.c.h.b16 %v1259
    %v1785 = vunpack.c.l.b16 %v1260
    %v1786 = vunpack.c.h.b16 %v1260
    %v1787 = vunpack.c.l.b16 %v1261
    %v1788 = vunpack.c.h.b16 %v1261
    %v1789 = vunpack.c.l.b16 %v1262
    %v1790 = vunpack.c.h.b16 %v1262
    %v1791 = vunpack.c.l.b16 %v1263
    %v1792 = vunpack.c.h.b16 %v1263
    %v1793 = vunpack.c.l.b16 %v1264
    %v1794 = vunpack.c.h.b16 %v1264
    %v1795 = vunpack.c.l.b16 %v1265
    %v1796 = vunpack.c.h.b16 %v1265
    %v1797 = vunpack.c.l.b16 %v1266
    %v1798 = vunpack.c.h.b16 %v1266
    %v1799 = vunpack.c.l.b16 %v1267
    %v1800 = vunpack.c.h.b16 %v1267
    %v1801 = vunpack.c.l.b16 %v1268
    %v1802 = vunpack.c.h.b16 %v1268
    %v1803 = vunpack.c.l.b16 %v1269
    %v1804 = vunpack.c.h.b16 %v1269
    %v1805 = vunpack.c.l.b16 %v1270
    %v1806 = vunpack.c.h.b16 %v1270
    %v1807 = vunpack.c.l.b16 %v1271
    %v1808 = vunpack.c.h.b16 %v1271
    %v1809 = vunpack.c.l.b16 %v1272
    %v1810 = vunpack.c.h.b16 %v1272
    %v1811 = vunpack.c.l.b16 %v1273
    %v1812 = vunpack.c.h.b16 %v1273
    %v1813 = vunpack.c.l.b16 %v1274
    %v1814 = vunpack.c.h.b16 %v1274
    %v1815 = vunpack.c.l.b16 %v1275
    %v1816 = vunpack.c.h.b16 %v1275
    %v1817 = vunpack.c.l.b16 %v1276
    %v1818 = vunpack.c.h.b16 %v1276
    %v1819 = vunpack.c.l.b16 %v1277
    %v1820 = vunpack.c.h.b16 %v1277
    %v1821 = vunpack.c.l.b16 %v1278
    %v1822 = vunpack.c.h.b16 %v1278
    %v1823 = vunpack.c.l.b16 %v1279
    %v1824 = vunpack.c.h.b16 %v1279
    %v1825 = vunpack.c.l.b16 %v1280
    %v1826 = vunpack.c.h.b16 %v1280
    %v1827 = vunpack.c.l.b16 %v1281
    %v1828 = vunpack.c.h.b16 %v1281
    %v1829 = vunpack.c.l.b16 %v1282
    %v1830 = vunpack.c.h.b16 %v1282
    %v1831 = vunpack.c.l.b16 %v1283
    %v1832 = vunpack.c.h.b16 %v1283
    %v1833 = vunpack.c.l.b16 %v1284
    %v1834 = vunpack.c.h.b16 %v1284
    %v1835 = vunpack.c.l.b16 %v1285
    %v1836 = vunpack.c.h.b16 %v1285
    %v1837 = vunpack.c.l.b16 %v1286
    %v1838 = vunpack.c.h.b16 %v1286
    %v1839 = vunpack.c.l.b16 %v1287
    %v1840 = vunpack.c.h.b16 %v1287
    %v1841 = vunpack.c.l.b16 %v1288
    %v1842 = vunpack.c.h.b16 %v1288
    %v1843 = vunpack.c.l.b16 %v1289
    %v1844 = vunpack.c.h.b16 %v1289
    %v1845 = vunpack.c.l.b16 %v1290
    %v1846 = vunpack.c.h.b16 %v1290
    %v1847 = vunpack.c.l.b16 %v1291
    %v1848 = vunpack.c.h.b16 %v1291
    %v1849 = vunpack.c.l.b16 %v1292
    %v1850 = vunpack.c.h.b16 %v1292
    %v1851 = vunpack.c.l.b16 %v1293
    %v1852 = vunpack.c.h.b16 %v1293
    %v1853 = vunpack.c.l.b16 %v1294
    %v1854 = vunpack.c.h.b16 %v1294
    %v1855 = vunpack.c.l.b16 %v1295
    %v1856 = vunpack.c.h.b16 %v1295
    %v1857 = vunpack.c.l.b16 %v1296
    %v1858 = vunpack.c.h.b16 %v1296
    %v1859 = vunpack.c.l.b16 %v1297
    %v1860 = vunpack.c.h.b16 %v1297
    %v1861 = vunpack.c.l.b16 %v1298
    %v1862 = vunpack.c.h.b16 %v1298
    %v1863 = vunpack.c.l.b16 %v1299
    %v1864 = vunpack.c.h.b16 %v1299
    %v1865 = vunpack.c.l.b16 %v1300
    %v1866 = vunpack.c.h.b16 %v1300
    %v1867 = vunpack.c.l.b16 %v1301
    %v1868 = vunpack.c.h.b16 %v1301
    %v1869 = vunpack.c.l.b16 %v1302
    %v1870 = vunpack.c.h.b16 %v1302
    %v1871 = vunpack.c.l.b16 %v1303
    %v1872 = vunpack.c.h.b16 %v1303
    %v1873 = vunpack.c.l.b16 %v1304
    %v1874 = vunpack.c.h.b16 %v1304
    %v1875 = vunpack.c.l.b16 %v1305
    %v1876 = vunpack.c.h.b16 %v1305
    %v1877 = vunpack.c.l.b16 %v1306
    %v1878 = vunpack.c.h.b16 %v1306
    %v1879 = vunpack.c.l.b16 %v1307
    %v1880 = vunpack.c.h.b16 %v1307
    %v1881 = vunpack.c.l.b16 %v1308
    %v1882 = vunpack.c.h.b16 %v1308
    %v1883 = vunpack.c.l.b16 %v1309
    %v1884 = vunpack.c.h.b16 %v1309
    %v1885 = vunpack.c.l.b16 %v1310
    %v1886 = vunpack.c.h.b16 %v1310
    %v1887 = vpack.c.b16 %v1511, %v1503
    %v1888 = vpack.c.b16 %v1512, %v1504
    %v1889 = vpack.c.b16 %v1513, %v1505
    %v1890 = vpack.c.b16 %v1514, %v1506
    %v1891 = vpack.c.b16 %v1515, %v1507
    %v1892 = vpack.c.b16 %v1516, %v1508
    %v1893 = vpack.c.b16 %v1517, %v1509
    %v1894 = vpack.c.b16 %v1518, %v1510
    %v1895 = vpack.c.b16 %v1527, %v1519
    %v1896 = vpack.c.b16 %v1528, %v1520
    %v1897 = vpack.c.b16 %v1529, %v1521
    %v1898 = vpack.c.b16 %v1530, %v1522
    %v1899 = vpack.c.b16 %v1531, %v1523
    %v1900 = vpack.c.b16 %v1532, %v1524
    %v1901 = vpack.c.b16 %v1533, %v1525
    %v1902 = vpack.c.b16 %v1534, %v1526
    %v1903 = vpack.c.b16 %v1543, %v1535
    %v1904 = vpack.c.b16 %v1544, %v1536
    %v1905 = vpack.c.b16 %v1545, %v1537
    %v1906 = vpack.c.b16 %v1546, %v1538
    %v1907 = vpack.c.b16 %v1547, %v1539
    %v1908 = vpack.c.b16 %v1548, %v1540
    %v1909 = vpack.c.b16 %v1549, %v1541
    %v1910 = vpack.c.b16 %v1550, %v1542
    %v1911 = vpack.c.b16 %v1559, %v1551
    %v1912 = vpack.c.b16 %v1560, %v1552
    %v1913 = vpack.c.b16 %v1561, %v1553
    %v1914 = vpack.c.b16 %v1562, %v1554
    %v1915 = vpack.c.b16 %v1563, %v1555
    %v1916 = vpack.c.b16 %v1564, %v1556
    %v1917 = vpack.c.b16 %v1565, %v1557
    %v1918 = vpack.c.b16 %v1566, %v1558
    %v1919 = vpack.c.b16 %v1575, %v1567
    %v1920 = vpack.c.b16 %v1576, %v1568
    %v1921 = vpack.c.b16 %v1577, %v1569
    %v1922 = vpack.c.b16 %v1578, %v1570
    %v1923 = vpack.c.b16 %v1579, %v1571
    %v1924 = vpack.c.b16 %v1580, %v1572
    %v1925 = vpack.c.b16 %v1581, %v1573
    %v1926 = vpack.c.b16 %v1582, %v1574
    %v1927 = vpack.c.b16 %v1591, %v1583
    %v1928 = vpack.c.b16 %v1592, %v1584
    %v1929 = vpack.c.b16 %v1593, %v1585
    %v1930 = vpack.c.b16 %v1594, %v1586
    %v1931 = vpack.c.b16 %v1595, %v1587
    %v1932 = vpack.c.b16 %v1596, %v1588
    %v1933 = vpack.c.b16 %v1597, %v1589
    %v1934 = vpack.c.b16 %v1598, %v1590
    %v1935 = vpack.c.b16 %v1607, %v1599
    %v1936 = vpack.c.b16 %v1608, %v1600
    %v1937 = vpack.c.b16 %v1609, %v1601
    %v1938 = vpack.c.b16 %v1610, %v1602
    %v1939 = vpack.c.b16 %v1611, %v1603
    %v1940 = vpack.c.b16 %v1612, %v1604
    %v1941 = vpack.c.b16 %v1613, %v1605
    %v1942 = vpack.c.b16 %v1614, %v1606
    %v1943 = vpack.c.b16 %v1623, %v1615
    %v1944 = vpack.c.b16 %v1624, %v1616
    %v1945 = vpack.c.b16 %v1625, %v1617
    %v1946 = vpack.c.b16 %v1626, %v1618
    %v1947 = vpack.c.b16 %v1627, %v1619
    %v1948 = vpack.c.b16 %v1628, %v1620
    %v1949 = vpack.c.b16 %v1629, %v1621
    %v1950 = vpack.c.b16 %v1630, %v1622
    %v1951 = vpack.c.b16 %v1639, %v1631
    %v1952 = vpack.c.b16 %v1640, %v1632
    %v1953 = vpack.c.b16 %v1641, %v1633
    %v1954 = vpack.c.b16 %v1642, %v1634
    %v1955 = vpack.c.b16 %v1643, %v1635
    %v1956 = vpack.c.b16 %v1644, %v1636
    %v1957 = vpack.c.b16 %v1645, %v1637
    %v1958 = vpack.c.b16 %v1646, %v1638
    %v1959 = vpack.c.b16 %v1655, %v1647
    %v1960 = vpack.c.b16 %v1656, %v1648
    %v1961 = vpack.c.b16 %v1657, %v1649
    %v1962 = vpack.c.b16 %v1658, %v1650
    %v1963 = vpack.c.b16 %v1659, %v1651
    %v1964 = vpack.c.b16 %v1660, %v1652
    %v1965 = vpack.c.b16 %v1661, %v1653
    %v1966 = vpack.c.b16 %v1662, %v1654
    %v1967 = vpack.c.b16 %v1671, %v1663
    %v1968 = vpack.c.b16 %v1672, %v1664
    %v1969 = vpack.c.b16 %v1673, %v1665
    %v1970 = vpack.c.b16 %v1674, %v1666
    %v1971 = vpack.c.b16 %v1675, %v1667
    %v1972 = vpack.c.b16 %v1676, %v1668
    %v1973 = vpack.c.b16 %v1677, %v1669
    %v1974 = vpack.c.b16 %v1678, %v1670
    %v1975 = vpack.c.b16 %v1687, %v1679
    %v1976 = vpack.c.b16 %v1688, %v1680
    %v1977 = vpack.c.b16 %v1689, %v1681
    %v1978 = vpack.c.b16 %v1690, %v1682
    %v1979 = vpack.c.b16 %v1691, %v1683
    %v1980 = vpack.c.b16 %v1692, %v1684
    %v1981 = vpack.c.b16 %v1693, %v1685
    %v1982 = vpack.c.b16 %v1694, %v1686
    %v1983 = vpack.c.b16 %v1703, %v1695
    %v1984 = vpack.c.b16 %v1704, %v1696
    %v1985 = vpack.c.b16 %v1705, %v1697
    %v1986 = vpack.c.b16 %v1706, %v1698
    %v1987 = vpack.c.b16 %v1707, %v1699
    %v1988 = vpack.c.b16 %v1708, %v1700
    %v1989 = vpack.c.b16 %v1709, %v1701
    %v1990 = vpack.c.b16 %v1710, %v1702
    %v1991 = vpack.c.b16 %v1719, %v1711
    %v1992 = vpack.c.b16 %v1720, %v1712
    %v1993 = vpack.c.b16 %v1721, %v1713
    %v1994 = vpack.c.b16 %v1722, %v1714
    %v1995 = vpack.c.b16 %v1723, %v1715
    %v1996 = vpack.c.b16 %v1724, %v1716
    %v1997 = vpack.c.b16 %v1725, %v1717
    %v1998 = vpack.c.b16 %v1726, %v1718
    %v1999 = vpack.c.b16 %v1735, %v1727
    %v2000 = vpack.c.b16 %v1736, %v1728
    %v2001 = vpack.c.b16 %v1737, %v1729
    %v2002 = vpack.c.b16 %v1738, %v1730
    %v2003 = vpack.c.b16 %v1739, %v1731
    %v2004 = vpack.c.b16 %v1740, %v1732
    %v2005 = vpack.c.b16 %v1741, %v1733
    %v2006 = vpack.c.b16 %v1742, %v1734
    %v2007 = vpack.c.b16 %v1751, %v1743
    %v2008 = vpack.c.b16 %v1752, %v1744
    %v2009 = vpack.c.b16 %v1753, %v1745
    %v2010 = vpack.c.b16 %v1754, %v1746
    %v2011 = vpack.c.b16 %v1755, %v1747
    %v2012 = vpack.c.b16 %v1756, %v1748
    %v2013 = vpack.c.b16 %v1757, %v1749
    %v2014 = vpack.c.b16 %v1758, %v1750
    %v2015 = vpack.c.b16 %v1767, %v1759
    %v2016 = vpack.c.b16 %v1768, %v1760
    %v2017 = vpack.c.b16 %v1769, %v1761
    %v2018 = vpack.c.b16 %v1770, %v1762
    %v2019 = vpack.c.b16 %v1771, %v1763
    %v2020 = vpack.c.b16 %v1772, %v1764
    %v2021 = vpack.c.b16 %v1773, %v1765
    %v2022 = vpack.c.b16 %v1774, %v1766
    %v2023 = vpack.c.b16 %v1783, %v1775
    %v2024 = vpack.c.b16 %v1784, %v1776
    %v2025 = vpack.c.b16 %v1785, %v1777
    %v2026 = vpack.c.b16 %v1786, %v1778
    %v2027 = vpack.c.b16 %v1787, %v1779
    %v2028 = vpack.c.b16 %v1788, %v1780
    %v2029 = vpack.c.b16 %v1789, %v1781
    %v2030 = vpack.c.b16 %v1790, %v1782
    %v2031 = vpack.c.b16 %v1799, %v1791
    %v2032 = vpack.c.b16 %v1800, %v1792
    %v2033 = vpack.c.b16 %v1801, %v1793
    %v2034 = vpack.c.b16 %v1802, %v1794
    %v2035 = vpack.c.b16 %v1803, %v1795
    %v2036 = vpack.c.b16 %v1804, %v1796
    %v2037 = vpack.c.b16 %v1805, %v1797
    %v2038 = vpack.c.b16 %v1806, %v1798
    %v2039 = vpack.c.b16 %v1815, %v1807
    %v2040 = vpack.c.b16 %v1816, %v1808
    %v2041 = vpack.c.b16 %v1817, %v1809
    %v2042 = vpack.c.b16 %v1818, %v1810
    %v2043 = vpack.c.b16 %v1819, %v1811
    %v2044 = vpack.c.b16 %v1820, %v1812
    %v2045 = vpack.c.b16 %v1821, %v1813
    %v2046 = vpack.c.b16 %v1822, %v1814
    %v2047 = vpack.c.b16 %v1831, %v1823
    %v2048 = vpack.c.b16 %v1832, %v1824
    %v2049 = vpack.c.b16 %v1833, %v1825
    %v2050 = vpack.c.b16 %v1834, %v1826
    %v2051 = vpack.c.b16 %v1835, %v1827
    %v2052 = vpack.c.b16 %v1836, %v1828
    %v2053 = vpack.c.b16 %v1837, %v1829
    %v2054 = vpack.c.b16 %v1838, %v1830
    %v2055 = vpack.c.b16 %v1847, %v1839
    %v2056 = vpack.c.b16 %v1848, %v1840
    %v2057 = vpack.c.b16 %v1849, %v1841
    %v2058 = vpack.c.b16 %v1850, %v1842
    %v2059 = vpack.c.b16 %v1851, %v1843
    %v2060 = vpack.c.b16 %v1852, %v1844
    %v2061 = vpack.c.b16 %v1853, %v1845
    %v2062 = vpack.c.b16 %v1854, %v1846
    %v2063 = vpack.c.b16 %v1863, %v1855
    %v2064 = vpack.c.b16 %v1864, %v1856
    %v2065 = vpack.c.b16 %v1865, %v1857
    %v2066 = vpack.c.b16 %v1866, %v1858
    %v2067 = vpack.c.b16 %v1867, %v1859
    %v2068 = vpack.c.b16 %v1868, %v1860
    %v2069 = vpack.c.b16 %v1869, %v1861
    %v2070 = vpack.c.b16 %v1870, %v1862
    %v2071 = vpack.c.b16 %v1879, %v1871
    %v2072 = vpack.c.b16 %v1880, %v1872
    %v2073 = vpack.c.b16 %v1881, %v1873
    %v2074 = vpack.c.b16 %v1882, %v1874
    %v2075 = vpack.c.b16 %v1883, %v1875
    %v2076 = vpack.c.b16 %v1884, %v1876
    %v2077 = vpack.c.b16 %v1885, %v1877
    %v2078 = vpack.c.b16 %v1886, %v1878
    %2271 = vmatpush.bf16.msra.mxu0 %v1943
    %2272 = vmatpush.bf16.msra.mxu0 %v1935
    %2273 = vmatpush.bf16.msra.mxu0 %v1927
    %2274 = vmatpush.bf16.msra.mxu0 %v1919
    %2275 = vmatpush.bf16.msra.mxu0 %v1911
    %2276 = vmatpush.bf16.msra.mxu0 %v1903
    %2277 = vmatpush.bf16.msra.mxu0 %v1895
    %2278 = vmatpush.bf16.msra.mxu0 %v1887
    %2279 = vmatmul.bf16.gmra.mxu0 %v1110
    %v2280 = vpop.f32.mrf.mxu0
    %v2281 = vadd.f32 0.0, %v2280
    %v2282 = vpop.f32.mrf.mxu0
    %2283 = vdwg.mxu0
    %2284 = vmatpush.bf16.msra.mxu0 %v2007
    %2285 = vmatpush.bf16.msra.mxu0 %v1999
    %2286 = vmatpush.bf16.msra.mxu0 %v1991
    %2287 = vmatpush.bf16.msra.mxu0 %v1983
    %2288 = vmatpush.bf16.msra.mxu0 %v1975
    %2289 = vmatpush.bf16.msra.mxu0 %v1967
    %2290 = vmatpush.bf16.msra.mxu0 %v1959
    %2291 = vmatpush.bf16.msra.mxu0 %v1951
    %2292 = vmatmul.bf16.gmra.mxu0 %v1115
    %v2293 = vpop.f32.mrf.mxu0
    %v2294 = vadd.f32 %v2281, %v2293
    %v2295 = vpop.f32.mrf.mxu0
    %2296 = vdwg.mxu0
    %2297 = vmatpush.bf16.msra.mxu0 %v2071
    %2298 = vmatpush.bf16.msra.mxu0 %v2063
    %2299 = vmatpush.bf16.msra.mxu0 %v2055
    %2300 = vmatpush.bf16.msra.mxu0 %v2047
    %2301 = vmatpush.bf16.msra.mxu0 %v2039
    %2302 = vmatpush.bf16.msra.mxu0 %v2031
    %2303 = vmatpush.bf16.msra.mxu0 %v2023
    %2304 = vmatpush.bf16.msra.mxu0 %v2015
    %2305 = vmatmul.bf16.gmra.mxu0 %v1116
    %v2306 = vpop.f32.mrf.mxu0
    %v2307 = vadd.f32 %v2294, %v2306
    %v2308 = vpop.f32.mrf.mxu0
    %2309 = vdwg.mxu0
    %2310 = vmatpush.bf16.msra.mxu0 %v1944
    %2311 = vmatpush.bf16.msra.mxu0 %v1936
    %2312 = vmatpush.bf16.msra.mxu0 %v1928
    %2313 = vmatpush.bf16.msra.mxu0 %v1920
    %2314 = vmatpush.bf16.msra.mxu0 %v1912
    %2315 = vmatpush.bf16.msra.mxu0 %v1904
    %2316 = vmatpush.bf16.msra.mxu0 %v1896
    %2317 = vmatpush.bf16.msra.mxu0 %v1888
    %2318 = vmatmul.bf16.gmra.mxu0 %v1110
    %v2319 = vpop.f32.mrf.mxu0
    %v2320 = vadd.f32 0.0, %v2319
    %v2321 = vpop.f32.mrf.mxu0
    %2322 = vdwg.mxu0
    %2323 = vmatpush.bf16.msra.mxu0 %v2008
    %2324 = vmatpush.bf16.msra.mxu0 %v2000
    %2325 = vmatpush.bf16.msra.mxu0 %v1992
    %2326 = vmatpush.bf16.msra.mxu0 %v1984
    %2327 = vmatpush.bf16.msra.mxu0 %v1976
    %2328 = vmatpush.bf16.msra.mxu0 %v1968
    %2329 = vmatpush.bf16.msra.mxu0 %v1960
    %2330 = vmatpush.bf16.msra.mxu0 %v1952
    %2331 = vmatmul.bf16.gmra.mxu0 %v1115
    %v2332 = vpop.f32.mrf.mxu0
    %v2333 = vadd.f32 %v2320, %v2332
    %v2334 = vpop.f32.mrf.mxu0
    %2335 = vdwg.mxu0
    %2336 = vmatpush.bf16.msra.mxu0 %v2072
    %2337 = vmatpush.bf16.msra.mxu0 %v2064
    %2338 = vmatpush.bf16.msra.mxu0 %v2056
    %2339 = vmatpush.bf16.msra.mxu0 %v2048
    %2340 = vmatpush.bf16.msra.mxu0 %v2040
    %2341 = vmatpush.bf16.msra.mxu0 %v2032
    %2342 = vmatpush.bf16.msra.mxu0 %v2024
    %2343 = vmatpush.bf16.msra.mxu0 %v2016
    %2344 = vmatmul.bf16.gmra.mxu0 %v1116
    %v2345 = vpop.f32.mrf.mxu0
    %v2346 = vadd.f32 %v2333, %v2345
    %v2347 = vpop.f32.mrf.mxu0
    %2348 = vdwg.mxu0
    %2349 = vmatpush.bf16.msra.mxu0 %v1945
    %2350 = vmatpush.bf16.msra.mxu0 %v1937
    %2351 = vmatpush.bf16.msra.mxu0 %v1929
    %2352 = vmatpush.bf16.msra.mxu0 %v1921
    %2353 = vmatpush.bf16.msra.mxu0 %v1913
    %2354 = vmatpush.bf16.msra.mxu0 %v1905
    %2355 = vmatpush.bf16.msra.mxu0 %v1897
    %2356 = vmatpush.bf16.msra.mxu0 %v1889
    %2357 = vmatmul.bf16.gmra.mxu0 %v1110
    %v2358 = vpop.f32.mrf.mxu0
    %v2359 = vadd.f32 0.0, %v2358
    %v2360 = vpop.f32.mrf.mxu0
    %2361 = vdwg.mxu0
    %2362 = vmatpush.bf16.msra.mxu0 %v2009
    %2363 = vmatpush.bf16.msra.mxu0 %v2001
    %2364 = vmatpush.bf16.msra.mxu0 %v1993
    %2365 = vmatpush.bf16.msra.mxu0 %v1985
    %2366 = vmatpush.bf16.msra.mxu0 %v1977
    %2367 = vmatpush.bf16.msra.mxu0 %v1969
    %2368 = vmatpush.bf16.msra.mxu0 %v1961
    %2369 = vmatpush.bf16.msra.mxu0 %v1953
    %2370 = vmatmul.bf16.gmra.mxu0 %v1115
    %v2371 = vpop.f32.mrf.mxu0
    %v2372 = vadd.f32 %v2359, %v2371
    %v2373 = vpop.f32.mrf.mxu0
    %2374 = vdwg.mxu0
    %2375 = vmatpush.bf16.msra.mxu0 %v2073
    %2376 = vmatpush.bf16.msra.mxu0 %v2065
    %2377 = vmatpush.bf16.msra.mxu0 %v2057
    %2378 = vmatpush.bf16.msra.mxu0 %v2049
    %2379 = vmatpush.bf16.msra.mxu0 %v2041
    %2380 = vmatpush.bf16.msra.mxu0 %v2033
    %2381 = vmatpush.bf16.msra.mxu0 %v2025
    %2382 = vmatpush.bf16.msra.mxu0 %v2017
    %2383 = vmatmul.bf16.gmra.mxu0 %v1116
    %v2384 = vpop.f32.mrf.mxu0
    %v2385 = vadd.f32 %v2372, %v2384
    %v2386 = vpop.f32.mrf.mxu0
    %2387 = vdwg.mxu0
    %2388 = vmatpush.bf16.msra.mxu0 %v1946
    %2389 = vmatpush.bf16.msra.mxu0 %v1938
    %2390 = vmatpush.bf16.msra.mxu0 %v1930
    %2391 = vmatpush.bf16.msra.mxu0 %v1922
    %2392 = vmatpush.bf16.msra.mxu0 %v1914
    %2393 = vmatpush.bf16.msra.mxu0 %v1906
    %2394 = vmatpush.bf16.msra.mxu0 %v1898
    %2395 = vmatpush.bf16.msra.mxu0 %v1890
    %2396 = vmatmul.bf16.gmra.mxu0 %v1110
    %v2397 = vpop.f32.mrf.mxu0
    %v2398 = vadd.f32 0.0, %v2397
    %v2399 = vpop.f32.mrf.mxu0
    %2400 = vdwg.mxu0
    %2401 = vmatpush.bf16.msra.mxu0 %v2010
    %2402 = vmatpush.bf16.msra.mxu0 %v2002
    %2403 = vmatpush.bf16.msra.mxu0 %v1994
    %2404 = vmatpush.bf16.msra.mxu0 %v1986
    %2405 = vmatpush.bf16.msra.mxu0 %v1978
    %2406 = vmatpush.bf16.msra.mxu0 %v1970
    %2407 = vmatpush.bf16.msra.mxu0 %v1962
    %2408 = vmatpush.bf16.msra.mxu0 %v1954
    %2409 = vmatmul.bf16.gmra.mxu0 %v1115
    %v2410 = vpop.f32.mrf.mxu0
    %v2411 = vadd.f32 %v2398, %v2410
    %v2412 = vpop.f32.mrf.mxu0
    %2413 = vdwg.mxu0
    %2414 = vmatpush.bf16.msra.mxu0 %v2074
    %2415 = vmatpush.bf16.msra.mxu0 %v2066
    %2416 = vmatpush.bf16.msra.mxu0 %v2058
    %2417 = vmatpush.bf16.msra.mxu0 %v2050
    %2418 = vmatpush.bf16.msra.mxu0 %v2042
    %2419 = vmatpush.bf16.msra.mxu0 %v2034
    %2420 = vmatpush.bf16.msra.mxu0 %v2026
    %2421 = vmatpush.bf16.msra.mxu0 %v2018
    %2422 = vmatmul.bf16.gmra.mxu0 %v1116
    %v2423 = vpop.f32.mrf.mxu0
    %v2424 = vadd.f32 %v2411, %v2423
    %v2425 = vpop.f32.mrf.mxu0
    %2426 = vdwg.mxu0
    %2427 = vmatpush.bf16.msra.mxu0 %v1947
    %2428 = vmatpush.bf16.msra.mxu0 %v1939
    %2429 = vmatpush.bf16.msra.mxu0 %v1931
    %2430 = vmatpush.bf16.msra.mxu0 %v1923
    %2431 = vmatpush.bf16.msra.mxu0 %v1915
    %2432 = vmatpush.bf16.msra.mxu0 %v1907
    %2433 = vmatpush.bf16.msra.mxu0 %v1899
    %2434 = vmatpush.bf16.msra.mxu0 %v1891
    %2435 = vmatmul.bf16.gmra.mxu0 %v1110
    %v2436 = vpop.f32.mrf.mxu0
    %v2437 = vadd.f32 0.0, %v2436
    %v2438 = vpop.f32.mrf.mxu0
    %2439 = vdwg.mxu0
    %2440 = vmatpush.bf16.msra.mxu0 %v2011
    %2441 = vmatpush.bf16.msra.mxu0 %v2003
    %2442 = vmatpush.bf16.msra.mxu0 %v1995
    %2443 = vmatpush.bf16.msra.mxu0 %v1987
    %2444 = vmatpush.bf16.msra.mxu0 %v1979
    %2445 = vmatpush.bf16.msra.mxu0 %v1971
    %2446 = vmatpush.bf16.msra.mxu0 %v1963
    %2447 = vmatpush.bf16.msra.mxu0 %v1955
    %2448 = vmatmul.bf16.gmra.mxu0 %v1115
    %v2449 = vpop.f32.mrf.mxu0
    %v2450 = vadd.f32 %v2437, %v2449
    %v2451 = vpop.f32.mrf.mxu0
    %2452 = vdwg.mxu0
    %2453 = vmatpush.bf16.msra.mxu0 %v2075
    %2454 = vmatpush.bf16.msra.mxu0 %v2067
    %2455 = vmatpush.bf16.msra.mxu0 %v2059
    %2456 = vmatpush.bf16.msra.mxu0 %v2051
    %2457 = vmatpush.bf16.msra.mxu0 %v2043
    %2458 = vmatpush.bf16.msra.mxu0 %v2035
    %2459 = vmatpush.bf16.msra.mxu0 %v2027
    %2460 = vmatpush.bf16.msra.mxu0 %v2019
    %2461 = vmatmul.bf16.gmra.mxu0 %v1116
    %v2462 = vpop.f32.mrf.mxu0
    %v2463 = vadd.f32 %v2450, %v2462
    %v2464 = vpop.f32.mrf.mxu0
    %2465 = vdwg.mxu0
    %2466 = vmatpush.bf16.msra.mxu0 %v1948
    %2467 = vmatpush.bf16.msra.mxu0 %v1940
    %2468 = vmatpush.bf16.msra.mxu0 %v1932
    %2469 = vmatpush.bf16.msra.mxu0 %v1924
    %2470 = vmatpush.bf16.msra.mxu0 %v1916
    %2471 = vmatpush.bf16.msra.mxu0 %v1908
    %2472 = vmatpush.bf16.msra.mxu0 %v1900
    %2473 = vmatpush.bf16.msra.mxu0 %v1892
    %2474 = vmatmul.bf16.gmra.mxu0 %v1110
    %v2475 = vpop.f32.mrf.mxu0
    %v2476 = vadd.f32 0.0, %v2475
    %v2477 = vpop.f32.mrf.mxu0
    %2478 = vdwg.mxu0
    %2479 = vmatpush.bf16.msra.mxu0 %v2012
    %2480 = vmatpush.bf16.msra.mxu0 %v2004
    %2481 = vmatpush.bf16.msra.mxu0 %v1996
    %2482 = vmatpush.bf16.msra.mxu0 %v1988
    %2483 = vmatpush.bf16.msra.mxu0 %v1980
    %2484 = vmatpush.bf16.msra.mxu0 %v1972
    %2485 = vmatpush.bf16.msra.mxu0 %v1964
    %2486 = vmatpush.bf16.msra.mxu0 %v1956
    %2487 = vmatmul.bf16.gmra.mxu0 %v1115
    %v2488 = vpop.f32.mrf.mxu0
    %v2489 = vadd.f32 %v2476, %v2488
    %v2490 = vpop.f32.mrf.mxu0
    %2491 = vdwg.mxu0
    %2492 = vmatpush.bf16.msra.mxu0 %v2076
    %2493 = vmatpush.bf16.msra.mxu0 %v2068
    %2494 = vmatpush.bf16.msra.mxu0 %v2060
    %2495 = vmatpush.bf16.msra.mxu0 %v2052
    %2496 = vmatpush.bf16.msra.mxu0 %v2044
    %2497 = vmatpush.bf16.msra.mxu0 %v2036
    %2498 = vmatpush.bf16.msra.mxu0 %v2028
    %2499 = vmatpush.bf16.msra.mxu0 %v2020
    %2500 = vmatmul.bf16.gmra.mxu0 %v1116
    %v2501 = vpop.f32.mrf.mxu0
    %v2502 = vadd.f32 %v2489, %v2501
    %v2503 = vpop.f32.mrf.mxu0
    %2504 = vdwg.mxu0
    %2505 = vmatpush.bf16.msra.mxu0 %v1949
    %2506 = vmatpush.bf16.msra.mxu0 %v1941
    %2507 = vmatpush.bf16.msra.mxu0 %v1933
    %2508 = vmatpush.bf16.msra.mxu0 %v1925
    %2509 = vmatpush.bf16.msra.mxu0 %v1917
    %2510 = vmatpush.bf16.msra.mxu0 %v1909
    %2511 = vmatpush.bf16.msra.mxu0 %v1901
    %2512 = vmatpush.bf16.msra.mxu0 %v1893
    %2513 = vmatmul.bf16.gmra.mxu0 %v1110
    %v2514 = vpop.f32.mrf.mxu0
    %v2515 = vadd.f32 0.0, %v2514
    %v2516 = vpop.f32.mrf.mxu0
    %2517 = vdwg.mxu0
    %2518 = vmatpush.bf16.msra.mxu0 %v2013
    %2519 = vmatpush.bf16.msra.mxu0 %v2005
    %2520 = vmatpush.bf16.msra.mxu0 %v1997
    %2521 = vmatpush.bf16.msra.mxu0 %v1989
    %2522 = vmatpush.bf16.msra.mxu0 %v1981
    %2523 = vmatpush.bf16.msra.mxu0 %v1973
    %2524 = vmatpush.bf16.msra.mxu0 %v1965
    %2525 = vmatpush.bf16.msra.mxu0 %v1957
    %2526 = vmatmul.bf16.gmra.mxu0 %v1115
    %v2527 = vpop.f32.mrf.mxu0
    %v2528 = vadd.f32 %v2515, %v2527
    %v2529 = vpop.f32.mrf.mxu0
    %2530 = vdwg.mxu0
    %2531 = vmatpush.bf16.msra.mxu0 %v2077
    %2532 = vmatpush.bf16.msra.mxu0 %v2069
    %2533 = vmatpush.bf16.msra.mxu0 %v2061
    %2534 = vmatpush.bf16.msra.mxu0 %v2053
    %2535 = vmatpush.bf16.msra.mxu0 %v2045
    %2536 = vmatpush.bf16.msra.mxu0 %v2037
    %2537 = vmatpush.bf16.msra.mxu0 %v2029
    %2538 = vmatpush.bf16.msra.mxu0 %v2021
    %2539 = vmatmul.bf16.gmra.mxu0 %v1116
    %v2540 = vpop.f32.mrf.mxu0
    %v2541 = vadd.f32 %v2528, %v2540
    %v2542 = vpop.f32.mrf.mxu0
    %2543 = vdwg.mxu0
    %2544 = vmatpush.bf16.msra.mxu0 %v1950
    %2545 = vmatpush.bf16.msra.mxu0 %v1942
    %2546 = vmatpush.bf16.msra.mxu0 %v1934
    %2547 = vmatpush.bf16.msra.mxu0 %v1926
    %2548 = vmatpush.bf16.msra.mxu0 %v1918
    %2549 = vmatpush.bf16.msra.mxu0 %v1910
    %2550 = vmatpush.bf16.msra.mxu0 %v1902
    %2551 = vmatpush.bf16.msra.mxu0 %v1894
    %2552 = vmatmul.bf16.gmra.mxu0 %v1110
    %v2553 = vpop.f32.mrf.mxu0
    %v2554 = vadd.f32 0.0, %v2553
    %v2555 = vpop.f32.mrf.mxu0
    %2556 = vdwg.mxu0
    %2557 = vmatpush.bf16.msra.mxu0 %v2014
    %2558 = vmatpush.bf16.msra.mxu0 %v2006
    %2559 = vmatpush.bf16.msra.mxu0 %v1998
    %2560 = vmatpush.bf16.msra.mxu0 %v1990
    %2561 = vmatpush.bf16.msra.mxu0 %v1982
    %2562 = vmatpush.bf16.msra.mxu0 %v1974
    %2563 = vmatpush.bf16.msra.mxu0 %v1966
    %2564 = vmatpush.bf16.msra.mxu0 %v1958
    %2565 = vmatmul.bf16.gmra.mxu0 %v1115
    %v2566 = vpop.f32.mrf.mxu0
    %v2567 = vadd.f32 %v2554, %v2566
    %v2568 = vpop.f32.mrf.mxu0
    %2569 = vdwg.mxu0
    %2570 = vmatpush.bf16.msra.mxu0 %v2078
    %2571 = vmatpush.bf16.msra.mxu0 %v2070
    %2572 = vmatpush.bf16.msra.mxu0 %v2062
    %2573 = vmatpush.bf16.msra.mxu0 %v2054
    %2574 = vmatpush.bf16.msra.mxu0 %v2046
    %2575 = vmatpush.bf16.msra.mxu0 %v2038
    %2576 = vmatpush.bf16.msra.mxu0 %v2030
    %2577 = vmatpush.bf16.msra.mxu0 %v2022
    %2578 = vmatmul.bf16.gmra.mxu0 %v1116
    %v2579 = vpop.f32.mrf.mxu0
    %v2580 = vadd.f32 %v2567, %v2579
    %v2581 = vpop.f32.mrf.mxu0
    %2582 = vdwg.mxu0
    %v2583 = vxor.u32 %v2307, 2147483648
    %v2584 = vxor.u32 %v2346, 2147483648
    %v2585 = vmul.f32 %v2583, 1.442695
    %v2586 = vpow.pop %v2585
    %v2587 = vmul.f32 %v2584, 1.442695
    %v2588 = vpow.pop %v2587
    %v2589 = vadd.f32 %v2586, 1.0
    %v2590 = vadd.f32 %v2588, 1.0
    %v2591 = vrcp.pop %v2589
    %v2592 = vmul.f32 %v2589, %v2591
    %v2593 = vsub.f32 1.0, %v2592
    %v2594 = vmul.f32 %v2591, %v2593
    %v2595 = vadd.f32 %v2591, %v2594
    %vm2596 = vweird.f32 %v2589
    %vm2597 = vweird.f32 %v2591
    %vm2598 = vmor %vm2596, %vm2597
    %v2599 = vsel %vm2598, %v2591, %v2595
    %v2600 = vand.u32 2147483647, %v2589
    %vm2601 = vcmp.eq.f32.partialorder %v2600, 8.507059e+37
    %v2602 = vand.u32 %v2589, 2147483648
    %v2603 = vor.u32 1.1754944e-38, %v2602
    %v2604 = vsel %vm2601, %v2603, %v2599
    %v2605 = vmul.f32 1.0, %v2604
    %v2606 = vrcp.pop %v2590
    %v2607 = vmul.f32 %v2590, %v2606
    %v2608 = vsub.f32 1.0, %v2607
    %v2609 = vmul.f32 %v2606, %v2608
    %v2610 = vadd.f32 %v2606, %v2609
    %vm2611 = vweird.f32 %v2590
    %vm2612 = vweird.f32 %v2606
    %vm2613 = vmor %vm2611, %vm2612
    %v2614 = vsel %vm2613, %v2606, %v2610
    %v2615 = vand.u32 2147483647, %v2590
    %vm2616 = vcmp.eq.f32.partialorder %v2615, 8.507059e+37
    %v2617 = vand.u32 %v2590, 2147483648
    %v2618 = vor.u32 1.1754944e-38, %v2617
    %v2619 = vsel %vm2616, %v2618, %v2614
    %v2620 = vmul.f32 1.0, %v2619
    %v2621 = vxor.u32 %v2385, 2147483648
    %v2622 = vxor.u32 %v2424, 2147483648
    %v2623 = vmul.f32 %v2621, 1.442695
    %v2624 = vpow.pop %v2623
    %v2625 = vmul.f32 %v2622, 1.442695
    %v2626 = vpow.pop %v2625
    %v2627 = vadd.f32 %v2624, 1.0
    %v2628 = vadd.f32 %v2626, 1.0
    %v2629 = vrcp.pop %v2627
    %v2630 = vmul.f32 %v2627, %v2629
    %v2631 = vsub.f32 1.0, %v2630
    %v2632 = vmul.f32 %v2629, %v2631
    %v2633 = vadd.f32 %v2629, %v2632
    %vm2634 = vweird.f32 %v2627
    %vm2635 = vweird.f32 %v2629
    %vm2636 = vmor %vm2634, %vm2635
    %v2637 = vsel %vm2636, %v2629, %v2633
    %v2638 = vand.u32 2147483647, %v2627
    %vm2639 = vcmp.eq.f32.partialorder %v2638, 8.507059e+37
    %v2640 = vand.u32 %v2627, 2147483648
    %v2641 = vor.u32 1.1754944e-38, %v2640
    %v2642 = vsel %vm2639, %v2641, %v2637
    %v2643 = vmul.f32 1.0, %v2642
    %v2644 = vrcp.pop %v2628
    %v2645 = vmul.f32 %v2628, %v2644
    %v2646 = vsub.f32 1.0, %v2645
    %v2647 = vmul.f32 %v2644, %v2646
    %v2648 = vadd.f32 %v2644, %v2647
    %vm2649 = vweird.f32 %v2628
    %vm2650 = vweird.f32 %v2644
    %vm2651 = vmor %vm2649, %vm2650
    %v2652 = vsel %vm2651, %v2644, %v2648
    %v2653 = vand.u32 2147483647, %v2628
    %vm2654 = vcmp.eq.f32.partialorder %v2653, 8.507059e+37
    %v2655 = vand.u32 %v2628, 2147483648
    %v2656 = vor.u32 1.1754944e-38, %v2655
    %v2657 = vsel %vm2654, %v2656, %v2652
    %v2658 = vmul.f32 1.0, %v2657
    %v2659 = vtanh.pop %v2463
    %v2660 = vtanh.pop %v2502
    %v2661 = vxor.u32 %v2541, 2147483648
    %v2662 = vxor.u32 %v2580, 2147483648
    %v2663 = vmul.f32 %v2661, 1.442695
    %v2664 = vpow.pop %v2663
    %v2665 = vmul.f32 %v2662, 1.442695
    %v2666 = vpow.pop %v2665
    %v2667 = vadd.f32 %v2664, 1.0
    %v2668 = vadd.f32 %v2666, 1.0
    %v2669 = vrcp.pop %v2667
    %v2670 = vmul.f32 %v2667, %v2669
    %v2671 = vsub.f32 1.0, %v2670
    %v2672 = vmul.f32 %v2669, %v2671
    %v2673 = vadd.f32 %v2669, %v2672
    %vm2674 = vweird.f32 %v2667
    %vm2675 = vweird.f32 %v2669
    %vm2676 = vmor %vm2674, %vm2675
    %v2677 = vsel %vm2676, %v2669, %v2673
    %v2678 = vand.u32 2147483647, %v2667
    %vm2679 = vcmp.eq.f32.partialorder %v2678, 8.507059e+37
    %v2680 = vand.u32 %v2667, 2147483648
    %v2681 = vor.u32 1.1754944e-38, %v2680
    %v2682 = vsel %vm2679, %v2681, %v2677
    %v2683 = vmul.f32 1.0, %v2682
    %v2684 = vrcp.pop %v2668
    %v2685 = vmul.f32 %v2668, %v2684
    %v2686 = vsub.f32 1.0, %v2685
    %v2687 = vmul.f32 %v2684, %v2686
    %v2688 = vadd.f32 %v2684, %v2687
    %vm2689 = vweird.f32 %v2668
    %vm2690 = vweird.f32 %v2684
    %vm2691 = vmor %vm2689, %vm2690
    %v2692 = vsel %vm2691, %v2684, %v2688
    %v2693 = vand.u32 2147483647, %v2668
    %vm2694 = vcmp.eq.f32.partialorder %v2693, 8.507059e+37
    %v2695 = vand.u32 %v2668, 2147483648
    %v2696 = vor.u32 1.1754944e-38, %v2695
    %v2697 = vsel %vm2694, %v2696, %v2692
    %v2698 = vmul.f32 1.0, %v2697
    %v2699 = vmul.f32 %v2643, %v1068
    %v2700 = vmul.f32 %v2658, %v1094
    %v2701 = vmul.f32 %v2605, %v2659
    %v2702 = vmul.f32 %v2620, %v2660
    %v2703 = vadd.f32 %v2699, %v2701
    %v2704 = vadd.f32 %v2700, %v2702
    %v2705 = vtanh.pop %v2703
    %v2706 = vtanh.pop %v2704
    %v2707 = vmul.f32 %v2683, %v2705
    %v2708 = vmul.f32 %v2698, %v2706
    %v2709 = vpack.c.bf16 %v2708, %v2707
    %v2710 = vld [vmem:[#allocation3] sm:$0xf]
    %v2711 = vld [vmem:[#allocation3 + $0x4] sm:$0xf]
    %v2712 = vld [vmem:[#allocation3 + $0x8] sm:$0xf]
    %v2713 = vld [vmem:[#allocation3 + $0xc] sm:$0xf]
    %v2714 = vld [vmem:[#allocation3 + $0x10] sm:$0xf]
    %v2715 = vld [vmem:[#allocation3 + $0x14] sm:$0xf]
    %v2716 = vld [vmem:[#allocation3 + $0x18] sm:$0xf]
    %v2717 = vld [vmem:[#allocation3 + $0x1c] sm:$0xf]
    %v2718 = vld [vmem:[#allocation3 + $0x20] sm:$0xf]
    %v2719 = vld [vmem:[#allocation3 + $0x24] sm:$0xf]
    %v2720 = vld [vmem:[#allocation3 + $0x28] sm:$0xf]
    %v2721 = vld [vmem:[#allocation3 + $0x2c] sm:$0xf]
    %v2722 = vld [vmem:[#allocation3 + $0x30] sm:$0xf]
    %v2723 = vld [vmem:[#allocation3 + $0x34] sm:$0xf]
    %v2724 = vld [vmem:[#allocation3 + $0x38] sm:$0xf]
    %v2725 = vld [vmem:[#allocation3 + $0x3c] sm:$0xf]
    %v2726 = vld [vmem:[#allocation3 + $0x40] sm:$0xf]
    %v2727 = vld [vmem:[#allocation3 + $0x44] sm:$0xf]
    %v2728 = vld [vmem:[#allocation3 + $0x48] sm:$0xf]
    %v2729 = vld [vmem:[#allocation3 + $0x4c] sm:$0xf]
    %v2730 = vld [vmem:[#allocation3 + $0x50] sm:$0xf]
    %v2731 = vld [vmem:[#allocation3 + $0x54] sm:$0xf]
    %v2732 = vld [vmem:[#allocation3 + $0x58] sm:$0xf]
    %v2733 = vld [vmem:[#allocation3 + $0x5c] sm:$0xf]
    %v2734 = vld [vmem:[#allocation3 + $0x60] sm:$0xf]
    %v2735 = vld [vmem:[#allocation3 + $0x64] sm:$0xf]
    %v2736 = vld [vmem:[#allocation3 + $0x68] sm:$0xf]
    %v2737 = vld [vmem:[#allocation3 + $0x6c] sm:$0xf]
    %v2738 = vld [vmem:[#allocation3 + $0x70] sm:$0xf]
    %v2739 = vld [vmem:[#allocation3 + $0x74] sm:$0xf]
    %v2740 = vld [vmem:[#allocation3 + $0x78] sm:$0xf]
    %v2741 = vld [vmem:[#allocation3 + $0x7c] sm:$0xf]
    %v2743 = vperm.slane %v110, 0
    %v2746 = vunpack.c.l.b16 %v2709
    %v2747 = vunpack.c.h.b16 %v2709
    %v2748 = vpack.c.b16 %v2746, %v2746
    %v2749 = vpack.c.b16 %v2747, %v2747
    %v2784 = vunpack.c.l.b16 %v2710
    %v2785 = vunpack.c.l.b16 %v2711
    %v2786 = vunpack.c.l.b16 %v2712
    %v2787 = vunpack.c.l.b16 %v2713
    %v2788 = vunpack.c.l.b16 %v2714
    %v2789 = vunpack.c.l.b16 %v2715
    %v2790 = vunpack.c.l.b16 %v2716
    %v2791 = vunpack.c.l.b16 %v2717
    %v2792 = vunpack.c.l.b16 %v2718
    %v2793 = vunpack.c.l.b16 %v2719
    %v2794 = vunpack.c.l.b16 %v2720
    %v2795 = vunpack.c.l.b16 %v2721
    %v2796 = vunpack.c.l.b16 %v2722
    %v2797 = vunpack.c.l.b16 %v2723
    %v2798 = vunpack.c.l.b16 %v2724
    %v2799 = vunpack.c.l.b16 %v2725
    %v2800 = vunpack.c.l.b16 %v2726
    %v2801 = vunpack.c.l.b16 %v2727
    %v2802 = vunpack.c.l.b16 %v2728
    %v2803 = vunpack.c.l.b16 %v2729
    %v2804 = vunpack.c.l.b16 %v2730
    %v2805 = vunpack.c.l.b16 %v2731
    %v2806 = vunpack.c.l.b16 %v2732
    %v2807 = vunpack.c.l.b16 %v2733
    %v2808 = vunpack.c.l.b16 %v2734
    %v2809 = vunpack.c.l.b16 %v2735
    %v2810 = vunpack.c.l.b16 %v2736
    %v2811 = vunpack.c.l.b16 %v2737
    %v2812 = vunpack.c.l.b16 %v2738
    %v2813 = vunpack.c.l.b16 %v2739
    %v2814 = vunpack.c.l.b16 %v2740
    %v2815 = vunpack.c.l.b16 %v2741
    %v2816 = vpack.c.b16 %v2785, %v2784
    %v2817 = vpack.c.b16 %v2787, %v2786
    %v2818 = vpack.c.b16 %v2789, %v2788
    %v2819 = vpack.c.b16 %v2791, %v2790
    %v2820 = vpack.c.b16 %v2793, %v2792
    %v2821 = vpack.c.b16 %v2795, %v2794
    %v2822 = vpack.c.b16 %v2797, %v2796
    %v2823 = vpack.c.b16 %v2799, %v2798
    %v2824 = vpack.c.b16 %v2801, %v2800
    %v2825 = vpack.c.b16 %v2803, %v2802
    %v2826 = vpack.c.b16 %v2805, %v2804
    %v2827 = vpack.c.b16 %v2807, %v2806
    %v2828 = vpack.c.b16 %v2809, %v2808
    %v2829 = vpack.c.b16 %v2811, %v2810
    %v2830 = vpack.c.b16 %v2813, %v2812
    %v2831 = vpack.c.b16 %v2815, %v2814
    %2848 = vmatpush.bf16.msra.mxu0 %v2823
    %2849 = vmatpush.bf16.msra.mxu0 %v2822
    %2850 = vmatpush.bf16.msra.mxu0 %v2821
    %2851 = vmatpush.bf16.msra.mxu0 %v2820
    %2852 = vmatpush.bf16.msra.mxu0 %v2819
    %2853 = vmatpush.bf16.msra.mxu0 %v2818
    %2854 = vmatpush.bf16.msra.mxu0 %v2817
    %2855 = vmatpush.bf16.msra.mxu0 %v2816
    %2856 = vmatmul.bf16.gmra.mxu0 %v2748
    %v2857 = vpop.f32.mrf.mxu0
    %v2858 = vadd.f32 %v2743, %v2857
    %v2859 = vpop.f32.mrf.mxu0
    %2860 = vdwg.mxu0
    %2861 = vmatpush.bf16.msra.mxu0 %v2831
    %2862 = vmatpush.bf16.msra.mxu0 %v2830
    %2863 = vmatpush.bf16.msra.mxu0 %v2829
    %2864 = vmatpush.bf16.msra.mxu0 %v2828
    %2865 = vmatpush.bf16.msra.mxu0 %v2827
    %2866 = vmatpush.bf16.msra.mxu0 %v2826
    %2867 = vmatpush.bf16.msra.mxu0 %v2825
    %2868 = vmatpush.bf16.msra.mxu0 %v2824
    %2869 = vmatmul.bf16.gmra.mxu0 %v2749
    %v2870 = vpop.f32.mrf.mxu0
    %v2871 = vadd.f32 %v2858, %v2870
    %v2872 = vpop.f32.mrf.mxu0
    %2873 = vdwg.mxu0
    %vm2874 = vcmask 1041408
    %v2875 = vsel %vm2874, %v2871, -inf
    %2876 = vmax.xlane.f32.xlu0 %v2875
    %v2877 = vpop.xlane.xlu0 %2876
    %vm2878 = vcmp.eq.f32.partialorder %v2871, %v2877
    %v2879 = vsel %vm2878, %v1106, 128
    %v2880 = vsel %vm2874, %v2879, 2147483647
    %v2881 = vand.u32 %v2880, 65535
    %v2882 = vshra.s32 %v2880, 16
    %v2883 = vcvt.s32.f32 %v2881
    %v2884 = vcvt.s32.f32 %v2882
    %2885 = vmin.xlane.f32.xlu0 %v2884
    %v2886 = vpop.xlane.xlu0 %2885
    %vm2887 = vcmp.eq.f32.partialorder %v2884, %v2886
    %v2888 = vsel %vm2887, %v2883, inf
    %2889 = vmin.xlane.f32.xlu0 %v2888
    %v2890 = vpop.xlane.xlu0 %2889
    %v2891 = vcvt.f32.s32 %v2890
    %v2892 = vcvt.f32.s32 %v2886
    %v2893 = vshll.u32 %v2892, 16
    %v2894 = vadd.s32 %v2893, %v2891
    %v2895 = vsel %vm1107, %v2894, 0
    %vm2896 = vcmp.eq.s32.totalorder %v2894, 1
    %v2897 = vsel %vm2896, 0, %v2894
    %v2898 = vsel %vm2896, 1, 0
    %v2899 = vsel %vm2896, %v2898, 0
    %vm2900 = vcmp.eq.s32.totalorder %v1106, %v2897
    %v2901 = vsel %vm2900, 1, 0
    %v2902 = vcvt.s32.f32 %v2901
    %v2903 = vpack.c.bf16 %v2902, %v2902
    %2904 = vmatpush.bf16.msra.mxu0 %v1943
    %2905 = vmatpush.bf16.msra.mxu0 %v1935
    %2906 = vmatpush.bf16.msra.mxu0 %v1927
    %2907 = vmatpush.bf16.msra.mxu0 %v1919
    %2908 = vmatpush.bf16.msra.mxu0 %v1911
    %2909 = vmatpush.bf16.msra.mxu0 %v1903
    %2910 = vmatpush.bf16.msra.mxu0 %v1895
    %2911 = vmatpush.bf16.msra.mxu0 %v1887
    %2912 = vmatmul.bf16.gmra.mxu0 %v2903
    %v2913 = vpop.f32.mrf.mxu0
    %v2914 = vadd.f32 0.0, %v2913
    %v2915 = vpop.f32.mrf.mxu0
    %2916 = vdwg.mxu0
    %2917 = vmatpush.bf16.msra.mxu0 %v2007
    %2918 = vmatpush.bf16.msra.mxu0 %v1999
    %2919 = vmatpush.bf16.msra.mxu0 %v1991
    %2920 = vmatpush.bf16.msra.mxu0 %v1983
    %2921 = vmatpush.bf16.msra.mxu0 %v1975
    %2922 = vmatpush.bf16.msra.mxu0 %v1967
    %2923 = vmatpush.bf16.msra.mxu0 %v1959
    %2924 = vmatpush.bf16.msra.mxu0 %v1951
    %2925 = vmatmul.bf16.gmra.mxu0 %v2748
    %v2926 = vpop.f32.mrf.mxu0
    %v2927 = vadd.f32 %v2914, %v2926
    %v2928 = vpop.f32.mrf.mxu0
    %2929 = vdwg.mxu0
    %2930 = vmatpush.bf16.msra.mxu0 %v2071
    %2931 = vmatpush.bf16.msra.mxu0 %v2063
    %2932 = vmatpush.bf16.msra.mxu0 %v2055
    %2933 = vmatpush.bf16.msra.mxu0 %v2047
    %2934 = vmatpush.bf16.msra.mxu0 %v2039
    %2935 = vmatpush.bf16.msra.mxu0 %v2031
    %2936 = vmatpush.bf16.msra.mxu0 %v2023
    %2937 = vmatpush.bf16.msra.mxu0 %v2015
    %2938 = vmatmul.bf16.gmra.mxu0 %v2749
    %v2939 = vpop.f32.mrf.mxu0
    %v2940 = vadd.f32 %v2927, %v2939
    %v2941 = vpop.f32.mrf.mxu0
    %2942 = vdwg.mxu0
    %2943 = vmatpush.bf16.msra.mxu0 %v1944
    %2944 = vmatpush.bf16.msra.mxu0 %v1936
    %2945 = vmatpush.bf16.msra.mxu0 %v1928
    %2946 = vmatpush.bf16.msra.mxu0 %v1920
    %2947 = vmatpush.bf16.msra.mxu0 %v1912
    %2948 = vmatpush.bf16.msra.mxu0 %v1904
    %2949 = vmatpush.bf16.msra.mxu0 %v1896
    %2950 = vmatpush.bf16.msra.mxu0 %v1888
    %2951 = vmatmul.bf16.gmra.mxu0 %v2903
    %v2952 = vpop.f32.mrf.mxu0
    %v2953 = vadd.f32 0.0, %v2952
    %v2954 = vpop.f32.mrf.mxu0
    %2955 = vdwg.mxu0
    %2956 = vmatpush.bf16.msra.mxu0 %v2008
    %2957 = vmatpush.bf16.msra.mxu0 %v2000
    %2958 = vmatpush.bf16.msra.mxu0 %v1992
    %2959 = vmatpush.bf16.msra.mxu0 %v1984
    %2960 = vmatpush.bf16.msra.mxu0 %v1976
    %2961 = vmatpush.bf16.msra.mxu0 %v1968
    %2962 = vmatpush.bf16.msra.mxu0 %v1960
    %2963 = vmatpush.bf16.msra.mxu0 %v1952
    %2964 = vmatmul.bf16.gmra.mxu0 %v2748
    %v2965 = vpop.f32.mrf.mxu0
    %v2966 = vadd.f32 %v2953, %v2965
    %v2967 = vpop.f32.mrf.mxu0
    %2968 = vdwg.mxu0
    %2969 = vmatpush.bf16.msra.mxu0 %v2072
    %2970 = vmatpush.bf16.msra.mxu0 %v2064
    %2971 = vmatpush.bf16.msra.mxu0 %v2056
    %2972 = vmatpush.bf16.msra.mxu0 %v2048
    %2973 = vmatpush.bf16.msra.mxu0 %v2040
    %2974 = vmatpush.bf16.msra.mxu0 %v2032
    %2975 = vmatpush.bf16.msra.mxu0 %v2024
    %2976 = vmatpush.bf16.msra.mxu0 %v2016
    %2977 = vmatmul.bf16.gmra.mxu0 %v2749
    %v2978 = vpop.f32.mrf.mxu0
    %v2979 = vadd.f32 %v2966, %v2978
    %v2980 = vpop.f32.mrf.mxu0
    %2981 = vdwg.mxu0
    %2982 = vmatpush.bf16.msra.mxu0 %v1945
    %2983 = vmatpush.bf16.msra.mxu0 %v1937
    %2984 = vmatpush.bf16.msra.mxu0 %v1929
    %2985 = vmatpush.bf16.msra.mxu0 %v1921
    %2986 = vmatpush.bf16.msra.mxu0 %v1913
    %2987 = vmatpush.bf16.msra.mxu0 %v1905
    %2988 = vmatpush.bf16.msra.mxu0 %v1897
    %2989 = vmatpush.bf16.msra.mxu0 %v1889
    %2990 = vmatmul.bf16.gmra.mxu0 %v2903
    %v2991 = vpop.f32.mrf.mxu0
    %v2992 = vadd.f32 0.0, %v2991
    %v2993 = vpop.f32.mrf.mxu0
    %2994 = vdwg.mxu0
    %2995 = vmatpush.bf16.msra.mxu0 %v2009
    %2996 = vmatpush.bf16.msra.mxu0 %v2001
    %2997 = vmatpush.bf16.msra.mxu0 %v1993
    %2998 = vmatpush.bf16.msra.mxu0 %v1985
    %2999 = vmatpush.bf16.msra.mxu0 %v1977
    %3000 = vmatpush.bf16.msra.mxu0 %v1969
    %3001 = vmatpush.bf16.msra.mxu0 %v1961
    %3002 = vmatpush.bf16.msra.mxu0 %v1953
    %3003 = vmatmul.bf16.gmra.mxu0 %v2748
    %v3004 = vpop.f32.mrf.mxu0
    %v3005 = vadd.f32 %v2992, %v3004
    %v3006 = vpop.f32.mrf.mxu0
    %3007 = vdwg.mxu0
    %3008 = vmatpush.bf16.msra.mxu0 %v2073
    %3009 = vmatpush.bf16.msra.mxu0 %v2065
    %3010 = vmatpush.bf16.msra.mxu0 %v2057
    %3011 = vmatpush.bf16.msra.mxu0 %v2049
    %3012 = vmatpush.bf16.msra.mxu0 %v2041
    %3013 = vmatpush.bf16.msra.mxu0 %v2033
    %3014 = vmatpush.bf16.msra.mxu0 %v2025
    %3015 = vmatpush.bf16.msra.mxu0 %v2017
    %3016 = vmatmul.bf16.gmra.mxu0 %v2749
    %v3017 = vpop.f32.mrf.mxu0
    %v3018 = vadd.f32 %v3005, %v3017
    %v3019 = vpop.f32.mrf.mxu0
    %3020 = vdwg.mxu0
    %3021 = vmatpush.bf16.msra.mxu0 %v1946
    %3022 = vmatpush.bf16.msra.mxu0 %v1938
    %3023 = vmatpush.bf16.msra.mxu0 %v1930
    %3024 = vmatpush.bf16.msra.mxu0 %v1922
    %3025 = vmatpush.bf16.msra.mxu0 %v1914
    %3026 = vmatpush.bf16.msra.mxu0 %v1906
    %3027 = vmatpush.bf16.msra.mxu0 %v1898
    %3028 = vmatpush.bf16.msra.mxu0 %v1890
    %3029 = vmatmul.bf16.gmra.mxu0 %v2903
    %v3030 = vpop.f32.mrf.mxu0
    %v3031 = vadd.f32 0.0, %v3030
    %v3032 = vpop.f32.mrf.mxu0
    %3033 = vdwg.mxu0
    %3034 = vmatpush.bf16.msra.mxu0 %v2010
    %3035 = vmatpush.bf16.msra.mxu0 %v2002
    %3036 = vmatpush.bf16.msra.mxu0 %v1994
    %3037 = vmatpush.bf16.msra.mxu0 %v1986
    %3038 = vmatpush.bf16.msra.mxu0 %v1978
    %3039 = vmatpush.bf16.msra.mxu0 %v1970
    %3040 = vmatpush.bf16.msra.mxu0 %v1962
    %3041 = vmatpush.bf16.msra.mxu0 %v1954
    %3042 = vmatmul.bf16.gmra.mxu0 %v2748
    %v3043 = vpop.f32.mrf.mxu0
    %v3044 = vadd.f32 %v3031, %v3043
    %v3045 = vpop.f32.mrf.mxu0
    %3046 = vdwg.mxu0
    %3047 = vmatpush.bf16.msra.mxu0 %v2074
    %3048 = vmatpush.bf16.msra.mxu0 %v2066
    %3049 = vmatpush.bf16.msra.mxu0 %v2058
    %3050 = vmatpush.bf16.msra.mxu0 %v2050
    %3051 = vmatpush.bf16.msra.mxu0 %v2042
    %3052 = vmatpush.bf16.msra.mxu0 %v2034
    %3053 = vmatpush.bf16.msra.mxu0 %v2026
    %3054 = vmatpush.bf16.msra.mxu0 %v2018
    %3055 = vmatmul.bf16.gmra.mxu0 %v2749
    %v3056 = vpop.f32.mrf.mxu0
    %v3057 = vadd.f32 %v3044, %v3056
    %v3058 = vpop.f32.mrf.mxu0
    %3059 = vdwg.mxu0
    %3060 = vmatpush.bf16.msra.mxu0 %v1947
    %3061 = vmatpush.bf16.msra.mxu0 %v1939
    %3062 = vmatpush.bf16.msra.mxu0 %v1931
    %3063 = vmatpush.bf16.msra.mxu0 %v1923
    %3064 = vmatpush.bf16.msra.mxu0 %v1915
    %3065 = vmatpush.bf16.msra.mxu0 %v1907
    %3066 = vmatpush.bf16.msra.mxu0 %v1899
    %3067 = vmatpush.bf16.msra.mxu0 %v1891
    %3068 = vmatmul.bf16.gmra.mxu0 %v2903
    %v3069 = vpop.f32.mrf.mxu0
    %v3070 = vadd.f32 0.0, %v3069
    %v3071 = vpop.f32.mrf.mxu0
    %3072 = vdwg.mxu0
    %3073 = vmatpush.bf16.msra.mxu0 %v2011
    %3074 = vmatpush.bf16.msra.mxu0 %v2003
    %3075 = vmatpush.bf16.msra.mxu0 %v1995
    %3076 = vmatpush.bf16.msra.mxu0 %v1987
    %3077 = vmatpush.bf16.msra.mxu0 %v1979
    %3078 = vmatpush.bf16.msra.mxu0 %v1971
    %3079 = vmatpush.bf16.msra.mxu0 %v1963
    %3080 = vmatpush.bf16.msra.mxu0 %v1955
    %3081 = vmatmul.bf16.gmra.mxu0 %v2748
    %v3082 = vpop.f32.mrf.mxu0
    %v3083 = vadd.f32 %v3070, %v3082
    %v3084 = vpop.f32.mrf.mxu0
    %3085 = vdwg.mxu0
    %3086 = vmatpush.bf16.msra.mxu0 %v2075
    %3087 = vmatpush.bf16.msra.mxu0 %v2067
    %3088 = vmatpush.bf16.msra.mxu0 %v2059
    %3089 = vmatpush.bf16.msra.mxu0 %v2051
    %3090 = vmatpush.bf16.msra.mxu0 %v2043
    %3091 = vmatpush.bf16.msra.mxu0 %v2035
    %3092 = vmatpush.bf16.msra.mxu0 %v2027
    %3093 = vmatpush.bf16.msra.mxu0 %v2019
    %3094 = vmatmul.bf16.gmra.mxu0 %v2749
    %v3095 = vpop.f32.mrf.mxu0
    %v3096 = vadd.f32 %v3083, %v3095
    %v3097 = vpop.f32.mrf.mxu0
    %3098 = vdwg.mxu0
    %3099 = vmatpush.bf16.msra.mxu0 %v1948
    %3100 = vmatpush.bf16.msra.mxu0 %v1940
    %3101 = vmatpush.bf16.msra.mxu0 %v1932
    %3102 = vmatpush.bf16.msra.mxu0 %v1924
    %3103 = vmatpush.bf16.msra.mxu0 %v1916
    %3104 = vmatpush.bf16.msra.mxu0 %v1908
    %3105 = vmatpush.bf16.msra.mxu0 %v1900
    %3106 = vmatpush.bf16.msra.mxu0 %v1892
    %3107 = vmatmul.bf16.gmra.mxu0 %v2903
    %v3108 = vpop.f32.mrf.mxu0
    %v3109 = vadd.f32 0.0, %v3108
    %v3110 = vpop.f32.mrf.mxu0
    %3111 = vdwg.mxu0
    %3112 = vmatpush.bf16.msra.mxu0 %v2012
    %3113 = vmatpush.bf16.msra.mxu0 %v2004
    %3114 = vmatpush.bf16.msra.mxu0 %v1996
    %3115 = vmatpush.bf16.msra.mxu0 %v1988
    %3116 = vmatpush.bf16.msra.mxu0 %v1980
    %3117 = vmatpush.bf16.msra.mxu0 %v1972
    %3118 = vmatpush.bf16.msra.mxu0 %v1964
    %3119 = vmatpush.bf16.msra.mxu0 %v1956
    %3120 = vmatmul.bf16.gmra.mxu0 %v2748
    %v3121 = vpop.f32.mrf.mxu0
    %v3122 = vadd.f32 %v3109, %v3121
    %v3123 = vpop.f32.mrf.mxu0
    %3124 = vdwg.mxu0
    %3125 = vmatpush.bf16.msra.mxu0 %v2076
    %3126 = vmatpush.bf16.msra.mxu0 %v2068
    %3127 = vmatpush.bf16.msra.mxu0 %v2060
    %3128 = vmatpush.bf16.msra.mxu0 %v2052
    %3129 = vmatpush.bf16.msra.mxu0 %v2044
    %3130 = vmatpush.bf16.msra.mxu0 %v2036
    %3131 = vmatpush.bf16.msra.mxu0 %v2028
    %3132 = vmatpush.bf16.msra.mxu0 %v2020
    %3133 = vmatmul.bf16.gmra.mxu0 %v2749
    %v3134 = vpop.f32.mrf.mxu0
    %v3135 = vadd.f32 %v3122, %v3134
    %v3136 = vpop.f32.mrf.mxu0
    %3137 = vdwg.mxu0
    %3138 = vmatpush.bf16.msra.mxu0 %v1949
    %3139 = vmatpush.bf16.msra.mxu0 %v1941
    %3140 = vmatpush.bf16.msra.mxu0 %v1933
    %3141 = vmatpush.bf16.msra.mxu0 %v1925
    %3142 = vmatpush.bf16.msra.mxu0 %v1917
    %3143 = vmatpush.bf16.msra.mxu0 %v1909
    %3144 = vmatpush.bf16.msra.mxu0 %v1901
    %3145 = vmatpush.bf16.msra.mxu0 %v1893
    %3146 = vmatmul.bf16.gmra.mxu0 %v2903
    %v3147 = vpop.f32.mrf.mxu0
    %v3148 = vadd.f32 0.0, %v3147
    %v3149 = vpop.f32.mrf.mxu0
    %3150 = vdwg.mxu0
    %3151 = vmatpush.bf16.msra.mxu0 %v2013
    %3152 = vmatpush.bf16.msra.mxu0 %v2005
    %3153 = vmatpush.bf16.msra.mxu0 %v1997
    %3154 = vmatpush.bf16.msra.mxu0 %v1989
    %3155 = vmatpush.bf16.msra.mxu0 %v1981
    %3156 = vmatpush.bf16.msra.mxu0 %v1973
    %3157 = vmatpush.bf16.msra.mxu0 %v1965
    %3158 = vmatpush.bf16.msra.mxu0 %v1957
    %3159 = vmatmul.bf16.gmra.mxu0 %v2748
    %v3160 = vpop.f32.mrf.mxu0
    %v3161 = vadd.f32 %v3148, %v3160
    %v3162 = vpop.f32.mrf.mxu0
    %3163 = vdwg.mxu0
    %3164 = vmatpush.bf16.msra.mxu0 %v2077
    %3165 = vmatpush.bf16.msra.mxu0 %v2069
    %3166 = vmatpush.bf16.msra.mxu0 %v2061
    %3167 = vmatpush.bf16.msra.mxu0 %v2053
    %3168 = vmatpush.bf16.msra.mxu0 %v2045
    %3169 = vmatpush.bf16.msra.mxu0 %v2037
    %3170 = vmatpush.bf16.msra.mxu0 %v2029
    %3171 = vmatpush.bf16.msra.mxu0 %v2021
    %3172 = vmatmul.bf16.gmra.mxu0 %v2749
    %v3173 = vpop.f32.mrf.mxu0
    %v3174 = vadd.f32 %v3161, %v3173
    %v3175 = vpop.f32.mrf.mxu0
    %3176 = vdwg.mxu0
    %3177 = vmatpush.bf16.msra.mxu0 %v1950
    %3178 = vmatpush.bf16.msra.mxu0 %v1942
    %3179 = vmatpush.bf16.msra.mxu0 %v1934
    %3180 = vmatpush.bf16.msra.mxu0 %v1926
    %3181 = vmatpush.bf16.msra.mxu0 %v1918
    %3182 = vmatpush.bf16.msra.mxu0 %v1910
    %3183 = vmatpush.bf16.msra.mxu0 %v1902
    %3184 = vmatpush.bf16.msra.mxu0 %v1894
    %3185 = vmatmul.bf16.gmra.mxu0 %v2903
    %v3186 = vpop.f32.mrf.mxu0
    %v3187 = vadd.f32 0.0, %v3186
    %v3188 = vpop.f32.mrf.mxu0
    %3189 = vdwg.mxu0
    %3190 = vmatpush.bf16.msra.mxu0 %v2014
    %3191 = vmatpush.bf16.msra.mxu0 %v2006
    %3192 = vmatpush.bf16.msra.mxu0 %v1998
    %3193 = vmatpush.bf16.msra.mxu0 %v1990
    %3194 = vmatpush.bf16.msra.mxu0 %v1982
    %3195 = vmatpush.bf16.msra.mxu0 %v1974
    %3196 = vmatpush.bf16.msra.mxu0 %v1966
    %3197 = vmatpush.bf16.msra.mxu0 %v1958
    %3198 = vmatmul.bf16.gmra.mxu0 %v2748
    %v3199 = vpop.f32.mrf.mxu0
    %v3200 = vadd.f32 %v3187, %v3199
    %v3201 = vpop.f32.mrf.mxu0
    %3202 = vdwg.mxu0
    %3203 = vmatpush.bf16.msra.mxu0 %v2078
    %3204 = vmatpush.bf16.msra.mxu0 %v2070
    %3205 = vmatpush.bf16.msra.mxu0 %v2062
    %3206 = vmatpush.bf16.msra.mxu0 %v2054
    %3207 = vmatpush.bf16.msra.mxu0 %v2046
    %3208 = vmatpush.bf16.msra.mxu0 %v2038
    %3209 = vmatpush.bf16.msra.mxu0 %v2030
    %3210 = vmatpush.bf16.msra.mxu0 %v2022
    %3211 = vmatmul.bf16.gmra.mxu0 %v2749
    %v3212 = vpop.f32.mrf.mxu0
    %v3213 = vadd.f32 %v3200, %v3212
    %v3214 = vpop.f32.mrf.mxu0
    %3215 = vdwg.mxu0
    %v3216 = vxor.u32 %v2940, 2147483648
    %v3217 = vxor.u32 %v2979, 2147483648
    %v3218 = vmul.f32 %v3216, 1.442695
    %v3219 = vpow.pop %v3218
    %v3220 = vmul.f32 %v3217, 1.442695
    %v3221 = vpow.pop %v3220
    %v3222 = vadd.f32 %v3219, 1.0
    %v3223 = vadd.f32 %v3221, 1.0
    %v3224 = vrcp.pop %v3222
    %v3225 = vmul.f32 %v3222, %v3224
    %v3226 = vsub.f32 1.0, %v3225
    %v3227 = vmul.f32 %v3224, %v3226
    %v3228 = vadd.f32 %v3224, %v3227
    %vm3229 = vweird.f32 %v3222
    %vm3230 = vweird.f32 %v3224
    %vm3231 = vmor %vm3229, %vm3230
    %v3232 = vsel %vm3231, %v3224, %v3228
    %v3233 = vand.u32 2147483647, %v3222
    %vm3234 = vcmp.eq.f32.partialorder %v3233, 8.507059e+37
    %v3235 = vand.u32 %v3222, 2147483648
    %v3236 = vor.u32 1.1754944e-38, %v3235
    %v3237 = vsel %vm3234, %v3236, %v3232
    %v3238 = vmul.f32 1.0, %v3237
    %v3239 = vrcp.pop %v3223
    %v3240 = vmul.f32 %v3223, %v3239
    %v3241 = vsub.f32 1.0, %v3240
    %v3242 = vmul.f32 %v3239, %v3241
    %v3243 = vadd.f32 %v3239, %v3242
    %vm3244 = vweird.f32 %v3223
    %vm3245 = vweird.f32 %v3239
    %vm3246 = vmor %vm3244, %vm3245
    %v3247 = vsel %vm3246, %v3239, %v3243
    %v3248 = vand.u32 2147483647, %v3223
    %vm3249 = vcmp.eq.f32.partialorder %v3248, 8.507059e+37
    %v3250 = vand.u32 %v3223, 2147483648
    %v3251 = vor.u32 1.1754944e-38, %v3250
    %v3252 = vsel %vm3249, %v3251, %v3247
    %v3253 = vmul.f32 1.0, %v3252
    %v3254 = vxor.u32 %v3018, 2147483648
    %v3255 = vxor.u32 %v3057, 2147483648
    %v3256 = vmul.f32 %v3254, 1.442695
    %v3257 = vpow.pop %v3256
    %v3258 = vmul.f32 %v3255, 1.442695
    %v3259 = vpow.pop %v3258
    %v3260 = vadd.f32 %v3257, 1.0
    %v3261 = vadd.f32 %v3259, 1.0
    %v3262 = vrcp.pop %v3260
    %v3263 = vmul.f32 %v3260, %v3262
    %v3264 = vsub.f32 1.0, %v3263
    %v3265 = vmul.f32 %v3262, %v3264
    %v3266 = vadd.f32 %v3262, %v3265
    %vm3267 = vweird.f32 %v3260
    %vm3268 = vweird.f32 %v3262
    %vm3269 = vmor %vm3267, %vm3268
    %v3270 = vsel %vm3269, %v3262, %v3266
    %v3271 = vand.u32 2147483647, %v3260
    %vm3272 = vcmp.eq.f32.partialorder %v3271, 8.507059e+37
    %v3273 = vand.u32 %v3260, 2147483648
    %v3274 = vor.u32 1.1754944e-38, %v3273
    %v3275 = vsel %vm3272, %v3274, %v3270
    %v3276 = vmul.f32 1.0, %v3275
    %v3277 = vrcp.pop %v3261
    %v3278 = vmul.f32 %v3261, %v3277
    %v3279 = vsub.f32 1.0, %v3278
    %v3280 = vmul.f32 %v3277, %v3279
    %v3281 = vadd.f32 %v3277, %v3280
    %vm3282 = vweird.f32 %v3261
    %vm3283 = vweird.f32 %v3277
    %vm3284 = vmor %vm3282, %vm3283
    %v3285 = vsel %vm3284, %v3277, %v3281
    %v3286 = vand.u32 2147483647, %v3261
    %vm3287 = vcmp.eq.f32.partialorder %v3286, 8.507059e+37
    %v3288 = vand.u32 %v3261, 2147483648
    %v3289 = vor.u32 1.1754944e-38, %v3288
    %v3290 = vsel %vm3287, %v3289, %v3285
    %v3291 = vmul.f32 1.0, %v3290
    %v3292 = vtanh.pop %v3096
    %v3293 = vtanh.pop %v3135
    %v3294 = vxor.u32 %v3174, 2147483648
    %v3295 = vxor.u32 %v3213, 2147483648
    %v3296 = vmul.f32 %v3294, 1.442695
    %v3297 = vpow.pop %v3296
    %v3298 = vmul.f32 %v3295, 1.442695
    %v3299 = vpow.pop %v3298
    %v3300 = vadd.f32 %v3297, 1.0
    %v3301 = vadd.f32 %v3299, 1.0
    %v3302 = vrcp.pop %v3300
    %v3303 = vmul.f32 %v3300, %v3302
    %v3304 = vsub.f32 1.0, %v3303
    %v3305 = vmul.f32 %v3302, %v3304
    %v3306 = vadd.f32 %v3302, %v3305
    %vm3307 = vweird.f32 %v3300
    %vm3308 = vweird.f32 %v3302
    %vm3309 = vmor %vm3307, %vm3308
    %v3310 = vsel %vm3309, %v3302, %v3306
    %v3311 = vand.u32 2147483647, %v3300
    %vm3312 = vcmp.eq.f32.partialorder %v3311, 8.507059e+37
    %v3313 = vand.u32 %v3300, 2147483648
    %v3314 = vor.u32 1.1754944e-38, %v3313
    %v3315 = vsel %vm3312, %v3314, %v3310
    %v3316 = vmul.f32 1.0, %v3315
    %v3317 = vrcp.pop %v3301
    %v3318 = vmul.f32 %v3301, %v3317
    %v3319 = vsub.f32 1.0, %v3318
    %v3320 = vmul.f32 %v3317, %v3319
    %v3321 = vadd.f32 %v3317, %v3320
    %vm3322 = vweird.f32 %v3301
    %vm3323 = vweird.f32 %v3317
    %vm3324 = vmor %vm3322, %vm3323
    %v3325 = vsel %vm3324, %v3317, %v3321
    %v3326 = vand.u32 2147483647, %v3301
    %vm3327 = vcmp.eq.f32.partialorder %v3326, 8.507059e+37
    %v3328 = vand.u32 %v3301, 2147483648
    %v3329 = vor.u32 1.1754944e-38, %v3328
    %v3330 = vsel %vm3327, %v3329, %v3325
    %v3331 = vmul.f32 1.0, %v3330
    %v3332 = vmul.f32 %v3276, %v2703
    %v3333 = vmul.f32 %v3291, %v2704
    %v3334 = vmul.f32 %v3238, %v3292
    %v3335 = vmul.f32 %v3253, %v3293
    %v3336 = vadd.f32 %v3332, %v3334
    %v3337 = vadd.f32 %v3333, %v3335
    %v3338 = vtanh.pop %v3336
    %v3339 = vtanh.pop %v3337
    %v3340 = vmul.f32 %v3316, %v3338
    %v3341 = vmul.f32 %v3331, %v3339
    %v3342 = vpack.c.bf16 %v3341, %v3340
    %v3344 = vunpack.c.l.b16 %v3342
    %v3345 = vunpack.c.h.b16 %v3342
    %v3346 = vpack.c.b16 %v3344, %v3344
    %v3347 = vpack.c.b16 %v3345, %v3345
    %3350 = vmatpush.bf16.msra.mxu0 %v2823
    %3351 = vmatpush.bf16.msra.mxu0 %v2822
    %3352 = vmatpush.bf16.msra.mxu0 %v2821
    %3353 = vmatpush.bf16.msra.mxu0 %v2820
    %3354 = vmatpush.bf16.msra.mxu0 %v2819
    %3355 = vmatpush.bf16.msra.mxu0 %v2818
    %3356 = vmatpush.bf16.msra.mxu0 %v2817
    %3357 = vmatpush.bf16.msra.mxu0 %v2816
    %3358 = vmatmul.bf16.gmra.mxu0 %v3346
    %v3359 = vpop.f32.mrf.mxu0
    %v3360 = vadd.f32 %v2743, %v3359
    %v3361 = vpop.f32.mrf.mxu0
    %3362 = vdwg.mxu0
    %3363 = vmatpush.bf16.msra.mxu0 %v2831
    %3364 = vmatpush.bf16.msra.mxu0 %v2830
    %3365 = vmatpush.bf16.msra.mxu0 %v2829
    %3366 = vmatpush.bf16.msra.mxu0 %v2828
    %3367 = vmatpush.bf16.msra.mxu0 %v2827
    %3368 = vmatpush.bf16.msra.mxu0 %v2826
    %3369 = vmatpush.bf16.msra.mxu0 %v2825
    %3370 = vmatpush.bf16.msra.mxu0 %v2824
    %3371 = vmatmul.bf16.gmra.mxu0 %v3347
    %v3372 = vpop.f32.mrf.mxu0
    %v3373 = vadd.f32 %v3360, %v3372
    %v3374 = vpop.f32.mrf.mxu0
    %3375 = vdwg.mxu0
    %v3376 = vsel %vm2874, %v3373, -inf
    %3377 = vmax.xlane.f32.xlu0 %v3376
    %v3378 = vpop.xlane.xlu0 %3377
    %vm3379 = vcmp.eq.f32.partialorder %v3373, %v3378
    %v3380 = vsel %vm3379, %v1106, 128
    %v3381 = vsel %vm2874, %v3380, 2147483647
    %v3382 = vand.u32 %v3381, 65535
    %v3383 = vshra.s32 %v3381, 16
    %v3384 = vcvt.s32.f32 %v3382
    %v3385 = vcvt.s32.f32 %v3383
    %3386 = vmin.xlane.f32.xlu0 %v3385
    %v3387 = vpop.xlane.xlu0 %3386
    %vm3388 = vcmp.eq.f32.partialorder %v3385, %v3387
    %v3389 = vsel %vm3388, %v3384, inf
    %3390 = vmin.xlane.f32.xlu0 %v3389
    %v3391 = vpop.xlane.xlu0 %3390
    %v3392 = vcvt.f32.s32 %v3391
    %v3393 = vcvt.f32.s32 %v3387
    %v3394 = vshll.u32 %v3393, 16
    %v3395 = vadd.s32 %v3394, %v3392
    %vm3396 = vcmp.gt.s32.totalorder %v2899, 0
    %v3397 = vsel %vm3396, 2, %v3395
    %vm3398 = vcmp.eq.s32.totalorder %v1106, 1
    %v3399 = vsel %vm3398, %v3397, %v2895
    %vm3400 = vcmp.eq.s32.totalorder %v3395, 1
    %vm3401 = vmor %vm3396, %vm3400
    %v3402 = vsel %vm3401, %v2897, %v3395
    %v3403 = vsel %vm3400, 1, 0
    %vm3404 = vcmp.gt.s32.totalorder %v2899, %v3403
    %v3405 = vsel %vm3404, %v2899, %v3403
    %vm3406 = vcmp.eq.s32.totalorder %v1106, %v3402
    %v3407 = vsel %vm3406, 1, 0
    %v3408 = vcvt.s32.f32 %v3407
    %v3409 = vpack.c.bf16 %v3408, %v3408
    %3410 = vmatpush.bf16.msra.mxu0 %v1943
    %3411 = vmatpush.bf16.msra.mxu0 %v1935
    %3412 = vmatpush.bf16.msra.mxu0 %v1927
    %3413 = vmatpush.bf16.msra.mxu0 %v1919
    %3414 = vmatpush.bf16.msra.mxu0 %v1911
    %3415 = vmatpush.bf16.msra.mxu0 %v1903
    %3416 = vmatpush.bf16.msra.mxu0 %v1895
    %3417 = vmatpush.bf16.msra.mxu0 %v1887
    %3418 = vmatmul.bf16.gmra.mxu0 %v3409
    %v3419 = vpop.f32.mrf.mxu0
    %v3420 = vadd.f32 0.0, %v3419
    %v3421 = vpop.f32.mrf.mxu0
    %3422 = vdwg.mxu0
    %3423 = vmatpush.bf16.msra.mxu0 %v2007
    %3424 = vmatpush.bf16.msra.mxu0 %v1999
    %3425 = vmatpush.bf16.msra.mxu0 %v1991
    %3426 = vmatpush.bf16.msra.mxu0 %v1983
    %3427 = vmatpush.bf16.msra.mxu0 %v1975
    %3428 = vmatpush.bf16.msra.mxu0 %v1967
    %3429 = vmatpush.bf16.msra.mxu0 %v1959
    %3430 = vmatpush.bf16.msra.mxu0 %v1951
    %3431 = vmatmul.bf16.gmra.mxu0 %v3346
    %v3432 = vpop.f32.mrf.mxu0
    %v3433 = vadd.f32 %v3420, %v3432
    %v3434 = vpop.f32.mrf.mxu0
    %3435 = vdwg.mxu0
    %3436 = vmatpush.bf16.msra.mxu0 %v2071
    %3437 = vmatpush.bf16.msra.mxu0 %v2063
    %3438 = vmatpush.bf16.msra.mxu0 %v2055
    %3439 = vmatpush.bf16.msra.mxu0 %v2047
    %3440 = vmatpush.bf16.msra.mxu0 %v2039
    %3441 = vmatpush.bf16.msra.mxu0 %v2031
    %3442 = vmatpush.bf16.msra.mxu0 %v2023
    %3443 = vmatpush.bf16.msra.mxu0 %v2015
    %3444 = vmatmul.bf16.gmra.mxu0 %v3347
    %v3445 = vpop.f32.mrf.mxu0
    %v3446 = vadd.f32 %v3433, %v3445
    %v3447 = vpop.f32.mrf.mxu0
    %3448 = vdwg.mxu0
    %3449 = vmatpush.bf16.msra.mxu0 %v1944
    %3450 = vmatpush.bf16.msra.mxu0 %v1936
    %3451 = vmatpush.bf16.msra.mxu0 %v1928
    %3452 = vmatpush.bf16.msra.mxu0 %v1920
    %3453 = vmatpush.bf16.msra.mxu0 %v1912
    %3454 = vmatpush.bf16.msra.mxu0 %v1904
    %3455 = vmatpush.bf16.msra.mxu0 %v1896
    %3456 = vmatpush.bf16.msra.mxu0 %v1888
    %3457 = vmatmul.bf16.gmra.mxu0 %v3409
    %v3458 = vpop.f32.mrf.mxu0
    %v3459 = vadd.f32 0.0, %v3458
    %v3460 = vpop.f32.mrf.mxu0
    %3461 = vdwg.mxu0
    %3462 = vmatpush.bf16.msra.mxu0 %v2008
    %3463 = vmatpush.bf16.msra.mxu0 %v2000
    %3464 = vmatpush.bf16.msra.mxu0 %v1992
    %3465 = vmatpush.bf16.msra.mxu0 %v1984
    %3466 = vmatpush.bf16.msra.mxu0 %v1976
    %3467 = vmatpush.bf16.msra.mxu0 %v1968
    %3468 = vmatpush.bf16.msra.mxu0 %v1960
    %3469 = vmatpush.bf16.msra.mxu0 %v1952
    %3470 = vmatmul.bf16.gmra.mxu0 %v3346
    %v3471 = vpop.f32.mrf.mxu0
    %v3472 = vadd.f32 %v3459, %v3471
    %v3473 = vpop.f32.mrf.mxu0
    %3474 = vdwg.mxu0
    %3475 = vmatpush.bf16.msra.mxu0 %v2072
    %3476 = vmatpush.bf16.msra.mxu0 %v2064
    %3477 = vmatpush.bf16.msra.mxu0 %v2056
    %3478 = vmatpush.bf16.msra.mxu0 %v2048
    %3479 = vmatpush.bf16.msra.mxu0 %v2040
    %3480 = vmatpush.bf16.msra.mxu0 %v2032
    %3481 = vmatpush.bf16.msra.mxu0 %v2024
    %3482 = vmatpush.bf16.msra.mxu0 %v2016
    %3483 = vmatmul.bf16.gmra.mxu0 %v3347
    %v3484 = vpop.f32.mrf.mxu0
    %v3485 = vadd.f32 %v3472, %v3484
    %v3486 = vpop.f32.mrf.mxu0
    %3487 = vdwg.mxu0
    %3488 = vmatpush.bf16.msra.mxu0 %v1945
    %3489 = vmatpush.bf16.msra.mxu0 %v1937
    %3490 = vmatpush.bf16.msra.mxu0 %v1929
    %3491 = vmatpush.bf16.msra.mxu0 %v1921
    %3492 = vmatpush.bf16.msra.mxu0 %v1913
    %3493 = vmatpush.bf16.msra.mxu0 %v1905
    %3494 = vmatpush.bf16.msra.mxu0 %v1897
    %3495 = vmatpush.bf16.msra.mxu0 %v1889
    %3496 = vmatmul.bf16.gmra.mxu0 %v3409
    %v3497 = vpop.f32.mrf.mxu0
    %v3498 = vadd.f32 0.0, %v3497
    %v3499 = vpop.f32.mrf.mxu0
    %3500 = vdwg.mxu0
    %3501 = vmatpush.bf16.msra.mxu0 %v2009
    %3502 = vmatpush.bf16.msra.mxu0 %v2001
    %3503 = vmatpush.bf16.msra.mxu0 %v1993
    %3504 = vmatpush.bf16.msra.mxu0 %v1985
    %3505 = vmatpush.bf16.msra.mxu0 %v1977
    %3506 = vmatpush.bf16.msra.mxu0 %v1969
    %3507 = vmatpush.bf16.msra.mxu0 %v1961
    %3508 = vmatpush.bf16.msra.mxu0 %v1953
    %3509 = vmatmul.bf16.gmra.mxu0 %v3346
    %v3510 = vpop.f32.mrf.mxu0
    %v3511 = vadd.f32 %v3498, %v3510
    %v3512 = vpop.f32.mrf.mxu0
    %3513 = vdwg.mxu0
    %3514 = vmatpush.bf16.msra.mxu0 %v2073
    %3515 = vmatpush.bf16.msra.mxu0 %v2065
    %3516 = vmatpush.bf16.msra.mxu0 %v2057
    %3517 = vmatpush.bf16.msra.mxu0 %v2049
    %3518 = vmatpush.bf16.msra.mxu0 %v2041
    %3519 = vmatpush.bf16.msra.mxu0 %v2033
    %3520 = vmatpush.bf16.msra.mxu0 %v2025
    %3521 = vmatpush.bf16.msra.mxu0 %v2017
    %3522 = vmatmul.bf16.gmra.mxu0 %v3347
    %v3523 = vpop.f32.mrf.mxu0
    %v3524 = vadd.f32 %v3511, %v3523
    %v3525 = vpop.f32.mrf.mxu0
    %3526 = vdwg.mxu0
    %3527 = vmatpush.bf16.msra.mxu0 %v1946
    %3528 = vmatpush.bf16.msra.mxu0 %v1938
    %3529 = vmatpush.bf16.msra.mxu0 %v1930
    %3530 = vmatpush.bf16.msra.mxu0 %v1922
    %3531 = vmatpush.bf16.msra.mxu0 %v1914
    %3532 = vmatpush.bf16.msra.mxu0 %v1906
    %3533 = vmatpush.bf16.msra.mxu0 %v1898
    %3534 = vmatpush.bf16.msra.mxu0 %v1890
    %3535 = vmatmul.bf16.gmra.mxu0 %v3409
    %v3536 = vpop.f32.mrf.mxu0
    %v3537 = vadd.f32 0.0, %v3536
    %v3538 = vpop.f32.mrf.mxu0
    %3539 = vdwg.mxu0
    %3540 = vmatpush.bf16.msra.mxu0 %v2010
    %3541 = vmatpush.bf16.msra.mxu0 %v2002
    %3542 = vmatpush.bf16.msra.mxu0 %v1994
    %3543 = vmatpush.bf16.msra.mxu0 %v1986
    %3544 = vmatpush.bf16.msra.mxu0 %v1978
    %3545 = vmatpush.bf16.msra.mxu0 %v1970
    %3546 = vmatpush.bf16.msra.mxu0 %v1962
    %3547 = vmatpush.bf16.msra.mxu0 %v1954
    %3548 = vmatmul.bf16.gmra.mxu0 %v3346
    %v3549 = vpop.f32.mrf.mxu0
    %v3550 = vadd.f32 %v3537, %v3549
    %v3551 = vpop.f32.mrf.mxu0
    %3552 = vdwg.mxu0
    %3553 = vmatpush.bf16.msra.mxu0 %v2074
    %3554 = vmatpush.bf16.msra.mxu0 %v2066
    %3555 = vmatpush.bf16.msra.mxu0 %v2058
    %3556 = vmatpush.bf16.msra.mxu0 %v2050
    %3557 = vmatpush.bf16.msra.mxu0 %v2042
    %3558 = vmatpush.bf16.msra.mxu0 %v2034
    %3559 = vmatpush.bf16.msra.mxu0 %v2026
    %3560 = vmatpush.bf16.msra.mxu0 %v2018
    %3561 = vmatmul.bf16.gmra.mxu0 %v3347
    %v3562 = vpop.f32.mrf.mxu0
    %v3563 = vadd.f32 %v3550, %v3562
    %v3564 = vpop.f32.mrf.mxu0
    %3565 = vdwg.mxu0
    %3566 = vmatpush.bf16.msra.mxu0 %v1947
    %3567 = vmatpush.bf16.msra.mxu0 %v1939
    %3568 = vmatpush.bf16.msra.mxu0 %v1931
    %3569 = vmatpush.bf16.msra.mxu0 %v1923
    %3570 = vmatpush.bf16.msra.mxu0 %v1915
    %3571 = vmatpush.bf16.msra.mxu0 %v1907
    %3572 = vmatpush.bf16.msra.mxu0 %v1899
    %3573 = vmatpush.bf16.msra.mxu0 %v1891
    %3574 = vmatmul.bf16.gmra.mxu0 %v3409
    %v3575 = vpop.f32.mrf.mxu0
    %v3576 = vadd.f32 0.0, %v3575
    %v3577 = vpop.f32.mrf.mxu0
    %3578 = vdwg.mxu0
    %3579 = vmatpush.bf16.msra.mxu0 %v2011
    %3580 = vmatpush.bf16.msra.mxu0 %v2003
    %3581 = vmatpush.bf16.msra.mxu0 %v1995
    %3582 = vmatpush.bf16.msra.mxu0 %v1987
    %3583 = vmatpush.bf16.msra.mxu0 %v1979
    %3584 = vmatpush.bf16.msra.mxu0 %v1971
    %3585 = vmatpush.bf16.msra.mxu0 %v1963
    %3586 = vmatpush.bf16.msra.mxu0 %v1955
    %3587 = vmatmul.bf16.gmra.mxu0 %v3346
    %v3588 = vpop.f32.mrf.mxu0
    %v3589 = vadd.f32 %v3576, %v3588
    %v3590 = vpop.f32.mrf.mxu0
    %3591 = vdwg.mxu0
    %3592 = vmatpush.bf16.msra.mxu0 %v2075
    %3593 = vmatpush.bf16.msra.mxu0 %v2067
    %3594 = vmatpush.bf16.msra.mxu0 %v2059
    %3595 = vmatpush.bf16.msra.mxu0 %v2051
    %3596 = vmatpush.bf16.msra.mxu0 %v2043
    %3597 = vmatpush.bf16.msra.mxu0 %v2035
    %3598 = vmatpush.bf16.msra.mxu0 %v2027
    %3599 = vmatpush.bf16.msra.mxu0 %v2019
    %3600 = vmatmul.bf16.gmra.mxu0 %v3347
    %v3601 = vpop.f32.mrf.mxu0
    %v3602 = vadd.f32 %v3589, %v3601
    %v3603 = vpop.f32.mrf.mxu0
    %3604 = vdwg.mxu0
    %3605 = vmatpush.bf16.msra.mxu0 %v1948
    %3606 = vmatpush.bf16.msra.mxu0 %v1940
    %3607 = vmatpush.bf16.msra.mxu0 %v1932
    %3608 = vmatpush.bf16.msra.mxu0 %v1924
    %3609 = vmatpush.bf16.msra.mxu0 %v1916
    %3610 = vmatpush.bf16.msra.mxu0 %v1908
    %3611 = vmatpush.bf16.msra.mxu0 %v1900
    %3612 = vmatpush.bf16.msra.mxu0 %v1892
    %3613 = vmatmul.bf16.gmra.mxu0 %v3409
    %v3614 = vpop.f32.mrf.mxu0
    %v3615 = vadd.f32 0.0, %v3614
    %v3616 = vpop.f32.mrf.mxu0
    %3617 = vdwg.mxu0
    %3618 = vmatpush.bf16.msra.mxu0 %v2012
    %3619 = vmatpush.bf16.msra.mxu0 %v2004
    %3620 = vmatpush.bf16.msra.mxu0 %v1996
    %3621 = vmatpush.bf16.msra.mxu0 %v1988
    %3622 = vmatpush.bf16.msra.mxu0 %v1980
    %3623 = vmatpush.bf16.msra.mxu0 %v1972
    %3624 = vmatpush.bf16.msra.mxu0 %v1964
    %3625 = vmatpush.bf16.msra.mxu0 %v1956
    %3626 = vmatmul.bf16.gmra.mxu0 %v3346
    %v3627 = vpop.f32.mrf.mxu0
    %v3628 = vadd.f32 %v3615, %v3627
    %v3629 = vpop.f32.mrf.mxu0
    %3630 = vdwg.mxu0
    %3631 = vmatpush.bf16.msra.mxu0 %v2076
    %3632 = vmatpush.bf16.msra.mxu0 %v2068
    %3633 = vmatpush.bf16.msra.mxu0 %v2060
    %3634 = vmatpush.bf16.msra.mxu0 %v2052
    %3635 = vmatpush.bf16.msra.mxu0 %v2044
    %3636 = vmatpush.bf16.msra.mxu0 %v2036
    %3637 = vmatpush.bf16.msra.mxu0 %v2028
    %3638 = vmatpush.bf16.msra.mxu0 %v2020
    %3639 = vmatmul.bf16.gmra.mxu0 %v3347
    %v3640 = vpop.f32.mrf.mxu0
    %v3641 = vadd.f32 %v3628, %v3640
    %v3642 = vpop.f32.mrf.mxu0
    %3643 = vdwg.mxu0
    %3644 = vmatpush.bf16.msra.mxu0 %v1949
    %3645 = vmatpush.bf16.msra.mxu0 %v1941
    %3646 = vmatpush.bf16.msra.mxu0 %v1933
    %3647 = vmatpush.bf16.msra.mxu0 %v1925
    %3648 = vmatpush.bf16.msra.mxu0 %v1917
    %3649 = vmatpush.bf16.msra.mxu0 %v1909
    %3650 = vmatpush.bf16.msra.mxu0 %v1901
    %3651 = vmatpush.bf16.msra.mxu0 %v1893
    %3652 = vmatmul.bf16.gmra.mxu0 %v3409
    %v3653 = vpop.f32.mrf.mxu0
    %v3654 = vadd.f32 0.0, %v3653
    %v3655 = vpop.f32.mrf.mxu0
    %3656 = vdwg.mxu0
    %3657 = vmatpush.bf16.msra.mxu0 %v2013
    %3658 = vmatpush.bf16.msra.mxu0 %v2005
    %3659 = vmatpush.bf16.msra.mxu0 %v1997
    %3660 = vmatpush.bf16.msra.mxu0 %v1989
    %3661 = vmatpush.bf16.msra.mxu0 %v1981
    %3662 = vmatpush.bf16.msra.mxu0 %v1973
    %3663 = vmatpush.bf16.msra.mxu0 %v1965
    %3664 = vmatpush.bf16.msra.mxu0 %v1957
    %3665 = vmatmul.bf16.gmra.mxu0 %v3346
    %v3666 = vpop.f32.mrf.mxu0
    %v3667 = vadd.f32 %v3654, %v3666
    %v3668 = vpop.f32.mrf.mxu0
    %3669 = vdwg.mxu0
    %3670 = vmatpush.bf16.msra.mxu0 %v2077
    %3671 = vmatpush.bf16.msra.mxu0 %v2069
    %3672 = vmatpush.bf16.msra.mxu0 %v2061
    %3673 = vmatpush.bf16.msra.mxu0 %v2053
    %3674 = vmatpush.bf16.msra.mxu0 %v2045
    %3675 = vmatpush.bf16.msra.mxu0 %v2037
    %3676 = vmatpush.bf16.msra.mxu0 %v2029
    %3677 = vmatpush.bf16.msra.mxu0 %v2021
    %3678 = vmatmul.bf16.gmra.mxu0 %v3347
    %v3679 = vpop.f32.mrf.mxu0
    %v3680 = vadd.f32 %v3667, %v3679
    %v3681 = vpop.f32.mrf.mxu0
    %3682 = vdwg.mxu0
    %3683 = vmatpush.bf16.msra.mxu0 %v1950
    %3684 = vmatpush.bf16.msra.mxu0 %v1942
    %3685 = vmatpush.bf16.msra.mxu0 %v1934
    %3686 = vmatpush.bf16.msra.mxu0 %v1926
    %3687 = vmatpush.bf16.msra.mxu0 %v1918
    %3688 = vmatpush.bf16.msra.mxu0 %v1910
    %3689 = vmatpush.bf16.msra.mxu0 %v1902
    %3690 = vmatpush.bf16.msra.mxu0 %v1894
    %3691 = vmatmul.bf16.gmra.mxu0 %v3409
    %v3692 = vpop.f32.mrf.mxu0
    %v3693 = vadd.f32 0.0, %v3692
    %v3694 = vpop.f32.mrf.mxu0
    %3695 = vdwg.mxu0
    %3696 = vmatpush.bf16.msra.mxu0 %v2014
    %3697 = vmatpush.bf16.msra.mxu0 %v2006
    %3698 = vmatpush.bf16.msra.mxu0 %v1998
    %3699 = vmatpush.bf16.msra.mxu0 %v1990
    %3700 = vmatpush.bf16.msra.mxu0 %v1982
    %3701 = vmatpush.bf16.msra.mxu0 %v1974
    %3702 = vmatpush.bf16.msra.mxu0 %v1966
    %3703 = vmatpush.bf16.msra.mxu0 %v1958
    %3704 = vmatmul.bf16.gmra.mxu0 %v3346
    %v3705 = vpop.f32.mrf.mxu0
    %v3706 = vadd.f32 %v3693, %v3705
    %v3707 = vpop.f32.mrf.mxu0
    %3708 = vdwg.mxu0
    %3709 = vmatpush.bf16.msra.mxu0 %v2078
    %3710 = vmatpush.bf16.msra.mxu0 %v2070
    %3711 = vmatpush.bf16.msra.mxu0 %v2062
    %3712 = vmatpush.bf16.msra.mxu0 %v2054
    %3713 = vmatpush.bf16.msra.mxu0 %v2046
    %3714 = vmatpush.bf16.msra.mxu0 %v2038
    %3715 = vmatpush.bf16.msra.mxu0 %v2030
    %3716 = vmatpush.bf16.msra.mxu0 %v2022
    %3717 = vmatmul.bf16.gmra.mxu0 %v3347
    %v3718 = vpop.f32.mrf.mxu0
    %v3719 = vadd.f32 %v3706, %v3718
    %v3720 = vpop.f32.mrf.mxu0
    %3721 = vdwg.mxu0
    %v3722 = vxor.u32 %v3446, 2147483648
    %v3723 = vxor.u32 %v3485, 2147483648
    %v3724 = vmul.f32 %v3722, 1.442695
    %v3725 = vpow.pop %v3724
    %v3726 = vmul.f32 %v3723, 1.442695
    %v3727 = vpow.pop %v3726
    %v3728 = vadd.f32 %v3725, 1.0
    %v3729 = vadd.f32 %v3727, 1.0
    %v3730 = vrcp.pop %v3728
    %v3731 = vmul.f32 %v3728, %v3730
    %v3732 = vsub.f32 1.0, %v3731
    %v3733 = vmul.f32 %v3730, %v3732
    %v3734 = vadd.f32 %v3730, %v3733
    %vm3735 = vweird.f32 %v3728
    %vm3736 = vweird.f32 %v3730
    %vm3737 = vmor %vm3735, %vm3736
    %v3738 = vsel %vm3737, %v3730, %v3734
    %v3739 = vand.u32 2147483647, %v3728
    %vm3740 = vcmp.eq.f32.partialorder %v3739, 8.507059e+37
    %v3741 = vand.u32 %v3728, 2147483648
    %v3742 = vor.u32 1.1754944e-38, %v3741
    %v3743 = vsel %vm3740, %v3742, %v3738
    %v3744 = vmul.f32 1.0, %v3743
    %v3745 = vrcp.pop %v3729
    %v3746 = vmul.f32 %v3729, %v3745
    %v3747 = vsub.f32 1.0, %v3746
    %v3748 = vmul.f32 %v3745, %v3747
    %v3749 = vadd.f32 %v3745, %v3748
    %vm3750 = vweird.f32 %v3729
    %vm3751 = vweird.f32 %v3745
    %vm3752 = vmor %vm3750, %vm3751
    %v3753 = vsel %vm3752, %v3745, %v3749
    %v3754 = vand.u32 2147483647, %v3729
    %vm3755 = vcmp.eq.f32.partialorder %v3754, 8.507059e+37
    %v3756 = vand.u32 %v3729, 2147483648
    %v3757 = vor.u32 1.1754944e-38, %v3756
    %v3758 = vsel %vm3755, %v3757, %v3753
    %v3759 = vmul.f32 1.0, %v3758
    %v3760 = vxor.u32 %v3524, 2147483648
    %v3761 = vxor.u32 %v3563, 2147483648
    %v3762 = vmul.f32 %v3760, 1.442695
    %v3763 = vpow.pop %v3762
    %v3764 = vmul.f32 %v3761, 1.442695
    %v3765 = vpow.pop %v3764
    %v3766 = vadd.f32 %v3763, 1.0
    %v3767 = vadd.f32 %v3765, 1.0
    %v3768 = vrcp.pop %v3766
    %v3769 = vmul.f32 %v3766, %v3768
    %v3770 = vsub.f32 1.0, %v3769
    %v3771 = vmul.f32 %v3768, %v3770
    %v3772 = vadd.f32 %v3768, %v3771
    %vm3773 = vweird.f32 %v3766
    %vm3774 = vweird.f32 %v3768
    %vm3775 = vmor %vm3773, %vm3774
    %v3776 = vsel %vm3775, %v3768, %v3772
    %v3777 = vand.u32 2147483647, %v3766
    %vm3778 = vcmp.eq.f32.partialorder %v3777, 8.507059e+37
    %v3779 = vand.u32 %v3766, 2147483648
    %v3780 = vor.u32 1.1754944e-38, %v3779
    %v3781 = vsel %vm3778, %v3780, %v3776
    %v3782 = vmul.f32 1.0, %v3781
    %v3783 = vrcp.pop %v3767
    %v3784 = vmul.f32 %v3767, %v3783
    %v3785 = vsub.f32 1.0, %v3784
    %v3786 = vmul.f32 %v3783, %v3785
    %v3787 = vadd.f32 %v3783, %v3786
    %vm3788 = vweird.f32 %v3767
    %vm3789 = vweird.f32 %v3783
    %vm3790 = vmor %vm3788, %vm3789
    %v3791 = vsel %vm3790, %v3783, %v3787
    %v3792 = vand.u32 2147483647, %v3767
    %vm3793 = vcmp.eq.f32.partialorder %v3792, 8.507059e+37
    %v3794 = vand.u32 %v3767, 2147483648
    %v3795 = vor.u32 1.1754944e-38, %v3794
    %v3796 = vsel %vm3793, %v3795, %v3791
    %v3797 = vmul.f32 1.0, %v3796
    %v3798 = vtanh.pop %v3602
    %v3799 = vtanh.pop %v3641
    %v3800 = vxor.u32 %v3680, 2147483648
    %v3801 = vxor.u32 %v3719, 2147483648
    %v3802 = vmul.f32 %v3800, 1.442695
    %v3803 = vpow.pop %v3802
    %v3804 = vmul.f32 %v3801, 1.442695
    %v3805 = vpow.pop %v3804
    %v3806 = vadd.f32 %v3803, 1.0
    %v3807 = vadd.f32 %v3805, 1.0
    %v3808 = vrcp.pop %v3806
    %v3809 = vmul.f32 %v3806, %v3808
    %v3810 = vsub.f32 1.0, %v3809
    %v3811 = vmul.f32 %v3808, %v3810
    %v3812 = vadd.f32 %v3808, %v3811
    %vm3813 = vweird.f32 %v3806
    %vm3814 = vweird.f32 %v3808
    %vm3815 = vmor %vm3813, %vm3814
    %v3816 = vsel %vm3815, %v3808, %v3812
    %v3817 = vand.u32 2147483647, %v3806
    %vm3818 = vcmp.eq.f32.partialorder %v3817, 8.507059e+37
    %v3819 = vand.u32 %v3806, 2147483648
    %v3820 = vor.u32 1.1754944e-38, %v3819
    %v3821 = vsel %vm3818, %v3820, %v3816
    %v3822 = vmul.f32 1.0, %v3821
    %v3823 = vrcp.pop %v3807
    %v3824 = vmul.f32 %v3807, %v3823
    %v3825 = vsub.f32 1.0, %v3824
    %v3826 = vmul.f32 %v3823, %v3825
    %v3827 = vadd.f32 %v3823, %v3826
    %vm3828 = vweird.f32 %v3807
    %vm3829 = vweird.f32 %v3823
    %vm3830 = vmor %vm3828, %vm3829
    %v3831 = vsel %vm3830, %v3823, %v3827
    %v3832 = vand.u32 2147483647, %v3807
    %vm3833 = vcmp.eq.f32.partialorder %v3832, 8.507059e+37
    %v3834 = vand.u32 %v3807, 2147483648
    %v3835 = vor.u32 1.1754944e-38, %v3834
    %v3836 = vsel %vm3833, %v3835, %v3831
    %v3837 = vmul.f32 1.0, %v3836
    %v3838 = vmul.f32 %v3782, %v3336
    %v3839 = vmul.f32 %v3797, %v3337
    %v3840 = vmul.f32 %v3744, %v3798
    %v3841 = vmul.f32 %v3759, %v3799
    %v3842 = vadd.f32 %v3838, %v3840
    %v3843 = vadd.f32 %v3839, %v3841
    %v3844 = vtanh.pop %v3842
    %v3845 = vtanh.pop %v3843
    %v3846 = vmul.f32 %v3822, %v3844
    %v3847 = vmul.f32 %v3837, %v3845
    %v3848 = vpack.c.bf16 %v3847, %v3846
    %v3850 = vunpack.c.l.b16 %v3848
    %v3851 = vunpack.c.h.b16 %v3848
    %v3852 = vpack.c.b16 %v3850, %v3850
    %v3853 = vpack.c.b16 %v3851, %v3851
    %3856 = vmatpush.bf16.msra.mxu0 %v2823
    %3857 = vmatpush.bf16.msra.mxu0 %v2822
    %3858 = vmatpush.bf16.msra.mxu0 %v2821
    %3859 = vmatpush.bf16.msra.mxu0 %v2820
    %3860 = vmatpush.bf16.msra.mxu0 %v2819
    %3861 = vmatpush.bf16.msra.mxu0 %v2818
    %3862 = vmatpush.bf16.msra.mxu0 %v2817
    %3863 = vmatpush.bf16.msra.mxu0 %v2816
    %3864 = vmatmul.bf16.gmra.mxu0 %v3852
    %v3865 = vpop.f32.mrf.mxu0
    %v3866 = vadd.f32 %v2743, %v3865
    %v3867 = vpop.f32.mrf.mxu0
    %3868 = vdwg.mxu0
    %3869 = vmatpush.bf16.msra.mxu0 %v2831
    %3870 = vmatpush.bf16.msra.mxu0 %v2830
    %3871 = vmatpush.bf16.msra.mxu0 %v2829
    %3872 = vmatpush.bf16.msra.mxu0 %v2828
    %3873 = vmatpush.bf16.msra.mxu0 %v2827
    %3874 = vmatpush.bf16.msra.mxu0 %v2826
    %3875 = vmatpush.bf16.msra.mxu0 %v2825
    %3876 = vmatpush.bf16.msra.mxu0 %v2824
    %3877 = vmatmul.bf16.gmra.mxu0 %v3853
    %v3878 = vpop.f32.mrf.mxu0
    %v3879 = vadd.f32 %v3866, %v3878
    %v3880 = vpop.f32.mrf.mxu0
    %3881 = vdwg.mxu0
    %v3882 = vsel %vm2874, %v3879, -inf
    %3883 = vmax.xlane.f32.xlu0 %v3882
    %v3884 = vpop.xlane.xlu0 %3883
    %vm3885 = vcmp.eq.f32.partialorder %v3879, %v3884
    %v3886 = vsel %vm3885, %v1106, 128
    %v3887 = vsel %vm2874, %v3886, 2147483647
    %v3888 = vand.u32 %v3887, 65535
    %v3889 = vshra.s32 %v3887, 16
    %v3890 = vcvt.s32.f32 %v3888
    %v3891 = vcvt.s32.f32 %v3889
    %3892 = vmin.xlane.f32.xlu0 %v3891
    %v3893 = vpop.xlane.xlu0 %3892
    %vm3894 = vcmp.eq.f32.partialorder %v3891, %v3893
    %v3895 = vsel %vm3894, %v3890, inf
    %3896 = vmin.xlane.f32.xlu0 %v3895
    %v3897 = vpop.xlane.xlu0 %3896
    %v3898 = vcvt.f32.s32 %v3897
    %v3899 = vcvt.f32.s32 %v3893
    %v3900 = vshll.u32 %v3899, 16
    %v3901 = vadd.s32 %v3900, %v3898
    %vm3902 = vcmp.gt.s32.totalorder %v3405, 0
    %v3903 = vsel %vm3902, 2, %v3901
    %vm3904 = vcmp.eq.s32.totalorder %v1106, 2
    %v3905 = vsel %vm3904, %v3903, %v3399
    %vm3906 = vcmp.eq.s32.totalorder %v3901, 1
    %vm3907 = vmor %vm3902, %vm3906
    %v3908 = vsel %vm3907, %v3402, %v3901
    %v3909 = vsel %vm3906, 1, 0
    %vm3910 = vcmp.gt.s32.totalorder %v3405, %v3909
    %v3911 = vsel %vm3910, %v3405, %v3909
    %vm3912 = vcmp.eq.s32.totalorder %v1106, %v3908
    %v3913 = vsel %vm3912, 1, 0
    %v3914 = vcvt.s32.f32 %v3913
    %v3915 = vpack.c.bf16 %v3914, %v3914
    %3916 = vmatpush.bf16.msra.mxu0 %v1943
    %3917 = vmatpush.bf16.msra.mxu0 %v1935
    %3918 = vmatpush.bf16.msra.mxu0 %v1927
    %3919 = vmatpush.bf16.msra.mxu0 %v1919
    %3920 = vmatpush.bf16.msra.mxu0 %v1911
    %3921 = vmatpush.bf16.msra.mxu0 %v1903
    %3922 = vmatpush.bf16.msra.mxu0 %v1895
    %3923 = vmatpush.bf16.msra.mxu0 %v1887
    %3924 = vmatmul.bf16.gmra.mxu0 %v3915
    %v3925 = vpop.f32.mrf.mxu0
    %v3926 = vadd.f32 0.0, %v3925
    %v3927 = vpop.f32.mrf.mxu0
    %3928 = vdwg.mxu0
    %3929 = vmatpush.bf16.msra.mxu0 %v2007
    %3930 = vmatpush.bf16.msra.mxu0 %v1999
    %3931 = vmatpush.bf16.msra.mxu0 %v1991
    %3932 = vmatpush.bf16.msra.mxu0 %v1983
    %3933 = vmatpush.bf16.msra.mxu0 %v1975
    %3934 = vmatpush.bf16.msra.mxu0 %v1967
    %3935 = vmatpush.bf16.msra.mxu0 %v1959
    %3936 = vmatpush.bf16.msra.mxu0 %v1951
    %3937 = vmatmul.bf16.gmra.mxu0 %v3852
    %v3938 = vpop.f32.mrf.mxu0
    %v3939 = vadd.f32 %v3926, %v3938
    %v3940 = vpop.f32.mrf.mxu0
    %3941 = vdwg.mxu0
    %3942 = vmatpush.bf16.msra.mxu0 %v2071
    %3943 = vmatpush.bf16.msra.mxu0 %v2063
    %3944 = vmatpush.bf16.msra.mxu0 %v2055
    %3945 = vmatpush.bf16.msra.mxu0 %v2047
    %3946 = vmatpush.bf16.msra.mxu0 %v2039
    %3947 = vmatpush.bf16.msra.mxu0 %v2031
    %3948 = vmatpush.bf16.msra.mxu0 %v2023
    %3949 = vmatpush.bf16.msra.mxu0 %v2015
    %3950 = vmatmul.bf16.gmra.mxu0 %v3853
    %v3951 = vpop.f32.mrf.mxu0
    %v3952 = vadd.f32 %v3939, %v3951
    %v3953 = vpop.f32.mrf.mxu0
    %3954 = vdwg.mxu0
    %3955 = vmatpush.bf16.msra.mxu0 %v1944
    %3956 = vmatpush.bf16.msra.mxu0 %v1936
    %3957 = vmatpush.bf16.msra.mxu0 %v1928
    %3958 = vmatpush.bf16.msra.mxu0 %v1920
    %3959 = vmatpush.bf16.msra.mxu0 %v1912
    %3960 = vmatpush.bf16.msra.mxu0 %v1904
    %3961 = vmatpush.bf16.msra.mxu0 %v1896
    %3962 = vmatpush.bf16.msra.mxu0 %v1888
    %3963 = vmatmul.bf16.gmra.mxu0 %v3915
    %v3964 = vpop.f32.mrf.mxu0
    %v3965 = vadd.f32 0.0, %v3964
    %v3966 = vpop.f32.mrf.mxu0
    %3967 = vdwg.mxu0
    %3968 = vmatpush.bf16.msra.mxu0 %v2008
    %3969 = vmatpush.bf16.msra.mxu0 %v2000
    %3970 = vmatpush.bf16.msra.mxu0 %v1992
    %3971 = vmatpush.bf16.msra.mxu0 %v1984
    %3972 = vmatpush.bf16.msra.mxu0 %v1976
    %3973 = vmatpush.bf16.msra.mxu0 %v1968
    %3974 = vmatpush.bf16.msra.mxu0 %v1960
    %3975 = vmatpush.bf16.msra.mxu0 %v1952
    %3976 = vmatmul.bf16.gmra.mxu0 %v3852
    %v3977 = vpop.f32.mrf.mxu0
    %v3978 = vadd.f32 %v3965, %v3977
    %v3979 = vpop.f32.mrf.mxu0
    %3980 = vdwg.mxu0
    %3981 = vmatpush.bf16.msra.mxu0 %v2072
    %3982 = vmatpush.bf16.msra.mxu0 %v2064
    %3983 = vmatpush.bf16.msra.mxu0 %v2056
    %3984 = vmatpush.bf16.msra.mxu0 %v2048
    %3985 = vmatpush.bf16.msra.mxu0 %v2040
    %3986 = vmatpush.bf16.msra.mxu0 %v2032
    %3987 = vmatpush.bf16.msra.mxu0 %v2024
    %3988 = vmatpush.bf16.msra.mxu0 %v2016
    %3989 = vmatmul.bf16.gmra.mxu0 %v3853
    %v3990 = vpop.f32.mrf.mxu0
    %v3991 = vadd.f32 %v3978, %v3990
    %v3992 = vpop.f32.mrf.mxu0
    %3993 = vdwg.mxu0
    %3994 = vmatpush.bf16.msra.mxu0 %v1945
    %3995 = vmatpush.bf16.msra.mxu0 %v1937
    %3996 = vmatpush.bf16.msra.mxu0 %v1929
    %3997 = vmatpush.bf16.msra.mxu0 %v1921
    %3998 = vmatpush.bf16.msra.mxu0 %v1913
    %3999 = vmatpush.bf16.msra.mxu0 %v1905
    %4000 = vmatpush.bf16.msra.mxu0 %v1897
    %4001 = vmatpush.bf16.msra.mxu0 %v1889
    %4002 = vmatmul.bf16.gmra.mxu0 %v3915
    %v4003 = vpop.f32.mrf.mxu0
    %v4004 = vadd.f32 0.0, %v4003
    %v4005 = vpop.f32.mrf.mxu0
    %4006 = vdwg.mxu0
    %4007 = vmatpush.bf16.msra.mxu0 %v2009
    %4008 = vmatpush.bf16.msra.mxu0 %v2001
    %4009 = vmatpush.bf16.msra.mxu0 %v1993
    %4010 = vmatpush.bf16.msra.mxu0 %v1985
    %4011 = vmatpush.bf16.msra.mxu0 %v1977
    %4012 = vmatpush.bf16.msra.mxu0 %v1969
    %4013 = vmatpush.bf16.msra.mxu0 %v1961
    %4014 = vmatpush.bf16.msra.mxu0 %v1953
    %4015 = vmatmul.bf16.gmra.mxu0 %v3852
    %v4016 = vpop.f32.mrf.mxu0
    %v4017 = vadd.f32 %v4004, %v4016
    %v4018 = vpop.f32.mrf.mxu0
    %4019 = vdwg.mxu0
    %4020 = vmatpush.bf16.msra.mxu0 %v2073
    %4021 = vmatpush.bf16.msra.mxu0 %v2065
    %4022 = vmatpush.bf16.msra.mxu0 %v2057
    %4023 = vmatpush.bf16.msra.mxu0 %v2049
    %4024 = vmatpush.bf16.msra.mxu0 %v2041
    %4025 = vmatpush.bf16.msra.mxu0 %v2033
    %4026 = vmatpush.bf16.msra.mxu0 %v2025
    %4027 = vmatpush.bf16.msra.mxu0 %v2017
    %4028 = vmatmul.bf16.gmra.mxu0 %v3853
    %v4029 = vpop.f32.mrf.mxu0
    %v4030 = vadd.f32 %v4017, %v4029
    %v4031 = vpop.f32.mrf.mxu0
    %4032 = vdwg.mxu0
    %4033 = vmatpush.bf16.msra.mxu0 %v1946
    %4034 = vmatpush.bf16.msra.mxu0 %v1938
    %4035 = vmatpush.bf16.msra.mxu0 %v1930
    %4036 = vmatpush.bf16.msra.mxu0 %v1922
    %4037 = vmatpush.bf16.msra.mxu0 %v1914
    %4038 = vmatpush.bf16.msra.mxu0 %v1906
    %4039 = vmatpush.bf16.msra.mxu0 %v1898
    %4040 = vmatpush.bf16.msra.mxu0 %v1890
    %4041 = vmatmul.bf16.gmra.mxu0 %v3915
    %v4042 = vpop.f32.mrf.mxu0
    %v4043 = vadd.f32 0.0, %v4042
    %v4044 = vpop.f32.mrf.mxu0
    %4045 = vdwg.mxu0
    %4046 = vmatpush.bf16.msra.mxu0 %v2010
    %4047 = vmatpush.bf16.msra.mxu0 %v2002
    %4048 = vmatpush.bf16.msra.mxu0 %v1994
    %4049 = vmatpush.bf16.msra.mxu0 %v1986
    %4050 = vmatpush.bf16.msra.mxu0 %v1978
    %4051 = vmatpush.bf16.msra.mxu0 %v1970
    %4052 = vmatpush.bf16.msra.mxu0 %v1962
    %4053 = vmatpush.bf16.msra.mxu0 %v1954
    %4054 = vmatmul.bf16.gmra.mxu0 %v3852
    %v4055 = vpop.f32.mrf.mxu0
    %v4056 = vadd.f32 %v4043, %v4055
    %v4057 = vpop.f32.mrf.mxu0
    %4058 = vdwg.mxu0
    %4059 = vmatpush.bf16.msra.mxu0 %v2074
    %4060 = vmatpush.bf16.msra.mxu0 %v2066
    %4061 = vmatpush.bf16.msra.mxu0 %v2058
    %4062 = vmatpush.bf16.msra.mxu0 %v2050
    %4063 = vmatpush.bf16.msra.mxu0 %v2042
    %4064 = vmatpush.bf16.msra.mxu0 %v2034
    %4065 = vmatpush.bf16.msra.mxu0 %v2026
    %4066 = vmatpush.bf16.msra.mxu0 %v2018
    %4067 = vmatmul.bf16.gmra.mxu0 %v3853
    %v4068 = vpop.f32.mrf.mxu0
    %v4069 = vadd.f32 %v4056, %v4068
    %v4070 = vpop.f32.mrf.mxu0
    %4071 = vdwg.mxu0
    %4072 = vmatpush.bf16.msra.mxu0 %v1947
    %4073 = vmatpush.bf16.msra.mxu0 %v1939
    %4074 = vmatpush.bf16.msra.mxu0 %v1931
    %4075 = vmatpush.bf16.msra.mxu0 %v1923
    %4076 = vmatpush.bf16.msra.mxu0 %v1915
    %4077 = vmatpush.bf16.msra.mxu0 %v1907
    %4078 = vmatpush.bf16.msra.mxu0 %v1899
    %4079 = vmatpush.bf16.msra.mxu0 %v1891
    %4080 = vmatmul.bf16.gmra.mxu0 %v3915
    %v4081 = vpop.f32.mrf.mxu0
    %v4082 = vadd.f32 0.0, %v4081
    %v4083 = vpop.f32.mrf.mxu0
    %4084 = vdwg.mxu0
    %4085 = vmatpush.bf16.msra.mxu0 %v2011
    %4086 = vmatpush.bf16.msra.mxu0 %v2003
    %4087 = vmatpush.bf16.msra.mxu0 %v1995
    %4088 = vmatpush.bf16.msra.mxu0 %v1987
    %4089 = vmatpush.bf16.msra.mxu0 %v1979
    %4090 = vmatpush.bf16.msra.mxu0 %v1971
    %4091 = vmatpush.bf16.msra.mxu0 %v1963
    %4092 = vmatpush.bf16.msra.mxu0 %v1955
    %4093 = vmatmul.bf16.gmra.mxu0 %v3852
    %v4094 = vpop.f32.mrf.mxu0
    %v4095 = vadd.f32 %v4082, %v4094
    %v4096 = vpop.f32.mrf.mxu0
    %4097 = vdwg.mxu0
    %4098 = vmatpush.bf16.msra.mxu0 %v2075
    %4099 = vmatpush.bf16.msra.mxu0 %v2067
    %4100 = vmatpush.bf16.msra.mxu0 %v2059
    %4101 = vmatpush.bf16.msra.mxu0 %v2051
    %4102 = vmatpush.bf16.msra.mxu0 %v2043
    %4103 = vmatpush.bf16.msra.mxu0 %v2035
    %4104 = vmatpush.bf16.msra.mxu0 %v2027
    %4105 = vmatpush.bf16.msra.mxu0 %v2019
    %4106 = vmatmul.bf16.gmra.mxu0 %v3853
    %v4107 = vpop.f32.mrf.mxu0
    %v4108 = vadd.f32 %v4095, %v4107
    %v4109 = vpop.f32.mrf.mxu0
    %4110 = vdwg.mxu0
    %4111 = vmatpush.bf16.msra.mxu0 %v1948
    %4112 = vmatpush.bf16.msra.mxu0 %v1940
    %4113 = vmatpush.bf16.msra.mxu0 %v1932
    %4114 = vmatpush.bf16.msra.mxu0 %v1924
    %4115 = vmatpush.bf16.msra.mxu0 %v1916
    %4116 = vmatpush.bf16.msra.mxu0 %v1908
    %4117 = vmatpush.bf16.msra.mxu0 %v1900
    %4118 = vmatpush.bf16.msra.mxu0 %v1892
    %4119 = vmatmul.bf16.gmra.mxu0 %v3915
    %v4120 = vpop.f32.mrf.mxu0
    %v4121 = vadd.f32 0.0, %v4120
    %v4122 = vpop.f32.mrf.mxu0
    %4123 = vdwg.mxu0
    %4124 = vmatpush.bf16.msra.mxu0 %v2012
    %4125 = vmatpush.bf16.msra.mxu0 %v2004
    %4126 = vmatpush.bf16.msra.mxu0 %v1996
    %4127 = vmatpush.bf16.msra.mxu0 %v1988
    %4128 = vmatpush.bf16.msra.mxu0 %v1980
    %4129 = vmatpush.bf16.msra.mxu0 %v1972
    %4130 = vmatpush.bf16.msra.mxu0 %v1964
    %4131 = vmatpush.bf16.msra.mxu0 %v1956
    %4132 = vmatmul.bf16.gmra.mxu0 %v3852
    %v4133 = vpop.f32.mrf.mxu0
    %v4134 = vadd.f32 %v4121, %v4133
    %v4135 = vpop.f32.mrf.mxu0
    %4136 = vdwg.mxu0
    %4137 = vmatpush.bf16.msra.mxu0 %v2076
    %4138 = vmatpush.bf16.msra.mxu0 %v2068
    %4139 = vmatpush.bf16.msra.mxu0 %v2060
    %4140 = vmatpush.bf16.msra.mxu0 %v2052
    %4141 = vmatpush.bf16.msra.mxu0 %v2044
    %4142 = vmatpush.bf16.msra.mxu0 %v2036
    %4143 = vmatpush.bf16.msra.mxu0 %v2028
    %4144 = vmatpush.bf16.msra.mxu0 %v2020
    %4145 = vmatmul.bf16.gmra.mxu0 %v3853
    %v4146 = vpop.f32.mrf.mxu0
    %v4147 = vadd.f32 %v4134, %v4146
    %v4148 = vpop.f32.mrf.mxu0
    %4149 = vdwg.mxu0
    %4150 = vmatpush.bf16.msra.mxu0 %v1949
    %4151 = vmatpush.bf16.msra.mxu0 %v1941
    %4152 = vmatpush.bf16.msra.mxu0 %v1933
    %4153 = vmatpush.bf16.msra.mxu0 %v1925
    %4154 = vmatpush.bf16.msra.mxu0 %v1917
    %4155 = vmatpush.bf16.msra.mxu0 %v1909
    %4156 = vmatpush.bf16.msra.mxu0 %v1901
    %4157 = vmatpush.bf16.msra.mxu0 %v1893
    %4158 = vmatmul.bf16.gmra.mxu0 %v3915
    %v4159 = vpop.f32.mrf.mxu0
    %v4160 = vadd.f32 0.0, %v4159
    %v4161 = vpop.f32.mrf.mxu0
    %4162 = vdwg.mxu0
    %4163 = vmatpush.bf16.msra.mxu0 %v2013
    %4164 = vmatpush.bf16.msra.mxu0 %v2005
    %4165 = vmatpush.bf16.msra.mxu0 %v1997
    %4166 = vmatpush.bf16.msra.mxu0 %v1989
    %4167 = vmatpush.bf16.msra.mxu0 %v1981
    %4168 = vmatpush.bf16.msra.mxu0 %v1973
    %4169 = vmatpush.bf16.msra.mxu0 %v1965
    %4170 = vmatpush.bf16.msra.mxu0 %v1957
    %4171 = vmatmul.bf16.gmra.mxu0 %v3852
    %v4172 = vpop.f32.mrf.mxu0
    %v4173 = vadd.f32 %v4160, %v4172
    %v4174 = vpop.f32.mrf.mxu0
    %4175 = vdwg.mxu0
    %4176 = vmatpush.bf16.msra.mxu0 %v2077
    %4177 = vmatpush.bf16.msra.mxu0 %v2069
    %4178 = vmatpush.bf16.msra.mxu0 %v2061
    %4179 = vmatpush.bf16.msra.mxu0 %v2053
    %4180 = vmatpush.bf16.msra.mxu0 %v2045
    %4181 = vmatpush.bf16.msra.mxu0 %v2037
    %4182 = vmatpush.bf16.msra.mxu0 %v2029
    %4183 = vmatpush.bf16.msra.mxu0 %v2021
    %4184 = vmatmul.bf16.gmra.mxu0 %v3853
    %v4185 = vpop.f32.mrf.mxu0
    %v4186 = vadd.f32 %v4173, %v4185
    %v4187 = vpop.f32.mrf.mxu0
    %4188 = vdwg.mxu0
    %4189 = vmatpush.bf16.msra.mxu0 %v1950
    %4190 = vmatpush.bf16.msra.mxu0 %v1942
    %4191 = vmatpush.bf16.msra.mxu0 %v1934
    %4192 = vmatpush.bf16.msra.mxu0 %v1926
    %4193 = vmatpush.bf16.msra.mxu0 %v1918
    %4194 = vmatpush.bf16.msra.mxu0 %v1910
    %4195 = vmatpush.bf16.msra.mxu0 %v1902
    %4196 = vmatpush.bf16.msra.mxu0 %v1894
    %4197 = vmatmul.bf16.gmra.mxu0 %v3915
    %v4198 = vpop.f32.mrf.mxu0
    %v4199 = vadd.f32 0.0, %v4198
    %v4200 = vpop.f32.mrf.mxu0
    %4201 = vdwg.mxu0
    %4202 = vmatpush.bf16.msra.mxu0 %v2014
    %4203 = vmatpush.bf16.msra.mxu0 %v2006
    %4204 = vmatpush.bf16.msra.mxu0 %v1998
    %4205 = vmatpush.bf16.msra.mxu0 %v1990
    %4206 = vmatpush.bf16.msra.mxu0 %v1982
    %4207 = vmatpush.bf16.msra.mxu0 %v1974
    %4208 = vmatpush.bf16.msra.mxu0 %v1966
    %4209 = vmatpush.bf16.msra.mxu0 %v1958
    %4210 = vmatmul.bf16.gmra.mxu0 %v3852
    %v4211 = vpop.f32.mrf.mxu0
    %v4212 = vadd.f32 %v4199, %v4211
    %v4213 = vpop.f32.mrf.mxu0
    %4214 = vdwg.mxu0
    %4215 = vmatpush.bf16.msra.mxu0 %v2078
    %4216 = vmatpush.bf16.msra.mxu0 %v2070
    %4217 = vmatpush.bf16.msra.mxu0 %v2062
    %4218 = vmatpush.bf16.msra.mxu0 %v2054
    %4219 = vmatpush.bf16.msra.mxu0 %v2046
    %4220 = vmatpush.bf16.msra.mxu0 %v2038
    %4221 = vmatpush.bf16.msra.mxu0 %v2030
    %4222 = vmatpush.bf16.msra.mxu0 %v2022
    %4223 = vmatmul.bf16.gmra.mxu0 %v3853
    %v4224 = vpop.f32.mrf.mxu0
    %v4225 = vadd.f32 %v4212, %v4224
    %v4226 = vpop.f32.mrf.mxu0
    %4227 = vdwg.mxu0
    %v4228 = vxor.u32 %v3952, 2147483648
    %v4229 = vxor.u32 %v3991, 2147483648
    %v4230 = vmul.f32 %v4228, 1.442695
    %v4231 = vpow.pop %v4230
    %v4232 = vmul.f32 %v4229, 1.442695
    %v4233 = vpow.pop %v4232
    %v4234 = vadd.f32 %v4231, 1.0
    %v4235 = vadd.f32 %v4233, 1.0
    %v4236 = vrcp.pop %v4234
    %v4237 = vmul.f32 %v4234, %v4236
    %v4238 = vsub.f32 1.0, %v4237
    %v4239 = vmul.f32 %v4236, %v4238
    %v4240 = vadd.f32 %v4236, %v4239
    %vm4241 = vweird.f32 %v4234
    %vm4242 = vweird.f32 %v4236
    %vm4243 = vmor %vm4241, %vm4242
    %v4244 = vsel %vm4243, %v4236, %v4240
    %v4245 = vand.u32 2147483647, %v4234
    %vm4246 = vcmp.eq.f32.partialorder %v4245, 8.507059e+37
    %v4247 = vand.u32 %v4234, 2147483648
    %v4248 = vor.u32 1.1754944e-38, %v4247
    %v4249 = vsel %vm4246, %v4248, %v4244
    %v4250 = vmul.f32 1.0, %v4249
    %v4251 = vrcp.pop %v4235
    %v4252 = vmul.f32 %v4235, %v4251
    %v4253 = vsub.f32 1.0, %v4252
    %v4254 = vmul.f32 %v4251, %v4253
    %v4255 = vadd.f32 %v4251, %v4254
    %vm4256 = vweird.f32 %v4235
    %vm4257 = vweird.f32 %v4251
    %vm4258 = vmor %vm4256, %vm4257
    %v4259 = vsel %vm4258, %v4251, %v4255
    %v4260 = vand.u32 2147483647, %v4235
    %vm4261 = vcmp.eq.f32.partialorder %v4260, 8.507059e+37
    %v4262 = vand.u32 %v4235, 2147483648
    %v4263 = vor.u32 1.1754944e-38, %v4262
    %v4264 = vsel %vm4261, %v4263, %v4259
    %v4265 = vmul.f32 1.0, %v4264
    %v4266 = vxor.u32 %v4030, 2147483648
    %v4267 = vxor.u32 %v4069, 2147483648
    %v4268 = vmul.f32 %v4266, 1.442695
    %v4269 = vpow.pop %v4268
    %v4270 = vmul.f32 %v4267, 1.442695
    %v4271 = vpow.pop %v4270
    %v4272 = vadd.f32 %v4269, 1.0
    %v4273 = vadd.f32 %v4271, 1.0
    %v4274 = vrcp.pop %v4272
    %v4275 = vmul.f32 %v4272, %v4274
    %v4276 = vsub.f32 1.0, %v4275
    %v4277 = vmul.f32 %v4274, %v4276
    %v4278 = vadd.f32 %v4274, %v4277
    %vm4279 = vweird.f32 %v4272
    %vm4280 = vweird.f32 %v4274
    %vm4281 = vmor %vm4279, %vm4280
    %v4282 = vsel %vm4281, %v4274, %v4278
    %v4283 = vand.u32 2147483647, %v4272
    %vm4284 = vcmp.eq.f32.partialorder %v4283, 8.507059e+37
    %v4285 = vand.u32 %v4272, 2147483648
    %v4286 = vor.u32 1.1754944e-38, %v4285
    %v4287 = vsel %vm4284, %v4286, %v4282
    %v4288 = vmul.f32 1.0, %v4287
    %v4289 = vrcp.pop %v4273
    %v4290 = vmul.f32 %v4273, %v4289
    %v4291 = vsub.f32 1.0, %v4290
    %v4292 = vmul.f32 %v4289, %v4291
    %v4293 = vadd.f32 %v4289, %v4292
    %vm4294 = vweird.f32 %v4273
    %vm4295 = vweird.f32 %v4289
    %vm4296 = vmor %vm4294, %vm4295
    %v4297 = vsel %vm4296, %v4289, %v4293
    %v4298 = vand.u32 2147483647, %v4273
    %vm4299 = vcmp.eq.f32.partialorder %v4298, 8.507059e+37
    %v4300 = vand.u32 %v4273, 2147483648
    %v4301 = vor.u32 1.1754944e-38, %v4300
    %v4302 = vsel %vm4299, %v4301, %v4297
    %v4303 = vmul.f32 1.0, %v4302
    %v4304 = vtanh.pop %v4108
    %v4305 = vtanh.pop %v4147
    %v4306 = vxor.u32 %v4186, 2147483648
    %v4307 = vxor.u32 %v4225, 2147483648
    %v4308 = vmul.f32 %v4306, 1.442695
    %v4309 = vpow.pop %v4308
    %v4310 = vmul.f32 %v4307, 1.442695
    %v4311 = vpow.pop %v4310
    %v4312 = vadd.f32 %v4309, 1.0
    %v4313 = vadd.f32 %v4311, 1.0
    %v4314 = vrcp.pop %v4312
    %v4315 = vmul.f32 %v4312, %v4314
    %v4316 = vsub.f32 1.0, %v4315
    %v4317 = vmul.f32 %v4314, %v4316
    %v4318 = vadd.f32 %v4314, %v4317
    %vm4319 = vweird.f32 %v4312
    %vm4320 = vweird.f32 %v4314
    %vm4321 = vmor %vm4319, %vm4320
    %v4322 = vsel %vm4321, %v4314, %v4318
    %v4323 = vand.u32 2147483647, %v4312
    %vm4324 = vcmp.eq.f32.partialorder %v4323, 8.507059e+37
    %v4325 = vand.u32 %v4312, 2147483648
    %v4326 = vor.u32 1.1754944e-38, %v4325
    %v4327 = vsel %vm4324, %v4326, %v4322
    %v4328 = vmul.f32 1.0, %v4327
    %v4329 = vrcp.pop %v4313
    %v4330 = vmul.f32 %v4313, %v4329
    %v4331 = vsub.f32 1.0, %v4330
    %v4332 = vmul.f32 %v4329, %v4331
    %v4333 = vadd.f32 %v4329, %v4332
    %vm4334 = vweird.f32 %v4313
    %vm4335 = vweird.f32 %v4329
    %vm4336 = vmor %vm4334, %vm4335
    %v4337 = vsel %vm4336, %v4329, %v4333
    %v4338 = vand.u32 2147483647, %v4313
    %vm4339 = vcmp.eq.f32.partialorder %v4338, 8.507059e+37
    %v4340 = vand.u32 %v4313, 2147483648
    %v4341 = vor.u32 1.1754944e-38, %v4340
    %v4342 = vsel %vm4339, %v4341, %v4337
    %v4343 = vmul.f32 1.0, %v4342
    %v4344 = vmul.f32 %v4288, %v3842
    %v4345 = vmul.f32 %v4303, %v3843
    %v4346 = vmul.f32 %v4250, %v4304
    %v4347 = vmul.f32 %v4265, %v4305
    %v4348 = vadd.f32 %v4344, %v4346
    %v4349 = vadd.f32 %v4345, %v4347
    %v4350 = vtanh.pop %v4348
    %v4351 = vtanh.pop %v4349
    %v4352 = vmul.f32 %v4328, %v4350
    %v4353 = vmul.f32 %v4343, %v4351
    %v4354 = vpack.c.bf16 %v4353, %v4352
    %v4356 = vunpack.c.l.b16 %v4354
    %v4357 = vunpack.c.h.b16 %v4354
    %v4358 = vpack.c.b16 %v4356, %v4356
    %v4359 = vpack.c.b16 %v4357, %v4357
    %4362 = vmatpush.bf16.msra.mxu0 %v2823
    %4363 = vmatpush.bf16.msra.mxu0 %v2822
    %4364 = vmatpush.bf16.msra.mxu0 %v2821
    %4365 = vmatpush.bf16.msra.mxu0 %v2820
    %4366 = vmatpush.bf16.msra.mxu0 %v2819
    %4367 = vmatpush.bf16.msra.mxu0 %v2818
    %4368 = vmatpush.bf16.msra.mxu0 %v2817
    %4369 = vmatpush.bf16.msra.mxu0 %v2816
    %4370 = vmatmul.bf16.gmra.mxu0 %v4358
    %v4371 = vpop.f32.mrf.mxu0
    %v4372 = vadd.f32 %v2743, %v4371
    %v4373 = vpop.f32.mrf.mxu0
    %4374 = vdwg.mxu0
    %4375 = vmatpush.bf16.msra.mxu0 %v2831
    %4376 = vmatpush.bf16.msra.mxu0 %v2830
    %4377 = vmatpush.bf16.msra.mxu0 %v2829
    %4378 = vmatpush.bf16.msra.mxu0 %v2828
    %4379 = vmatpush.bf16.msra.mxu0 %v2827
    %4380 = vmatpush.bf16.msra.mxu0 %v2826
    %4381 = vmatpush.bf16.msra.mxu0 %v2825
    %4382 = vmatpush.bf16.msra.mxu0 %v2824
    %4383 = vmatmul.bf16.gmra.mxu0 %v4359
    %v4384 = vpop.f32.mrf.mxu0
    %v4385 = vadd.f32 %v4372, %v4384
    %v4386 = vpop.f32.mrf.mxu0
    %4387 = vdwg.mxu0
    %v4388 = vsel %vm2874, %v4385, -inf
    %4389 = vmax.xlane.f32.xlu0 %v4388
    %v4390 = vpop.xlane.xlu0 %4389
    %vm4391 = vcmp.eq.f32.partialorder %v4385, %v4390
    %v4392 = vsel %vm4391, %v1106, 128
    %v4393 = vsel %vm2874, %v4392, 2147483647
    %v4394 = vand.u32 %v4393, 65535
    %v4395 = vshra.s32 %v4393, 16
    %v4396 = vcvt.s32.f32 %v4394
    %v4397 = vcvt.s32.f32 %v4395
    %4398 = vmin.xlane.f32.xlu0 %v4397
    %v4399 = vpop.xlane.xlu0 %4398
    %vm4400 = vcmp.eq.f32.partialorder %v4397, %v4399
    %v4401 = vsel %vm4400, %v4396, inf
    %4402 = vmin.xlane.f32.xlu0 %v4401
    %v4403 = vpop.xlane.xlu0 %4402
    %v4404 = vcvt.f32.s32 %v4403
    %v4405 = vcvt.f32.s32 %v4399
    %v4406 = vshll.u32 %v4405, 16
    %v4407 = vadd.s32 %v4406, %v4404
    %vm4408 = vcmp.gt.s32.totalorder %v3911, 0
    %v4409 = vsel %vm4408, 2, %v4407
    %vm4410 = vcmp.eq.s32.totalorder %v1106, 3
    %v4411 = vsel %vm4410, %v4409, %v3905
    %vm4412 = vcmp.eq.s32.totalorder %v4407, 1
    %vm4413 = vmor %vm4408, %vm4412
    %v4414 = vsel %vm4413, %v3908, %v4407
    %v4415 = vsel %vm4412, 1, 0
    %vm4416 = vcmp.gt.s32.totalorder %v3911, %v4415
    %v4417 = vsel %vm4416, %v3911, %v4415
    %vm4418 = vcmp.eq.s32.totalorder %v1106, %v4414
    %v4419 = vsel %vm4418, 1, 0
    %v4420 = vcvt.s32.f32 %v4419
    %v4421 = vpack.c.bf16 %v4420, %v4420
    %4422 = vmatpush.bf16.msra.mxu0 %v1943
    %4423 = vmatpush.bf16.msra.mxu0 %v1935
    %4424 = vmatpush.bf16.msra.mxu0 %v1927
    %4425 = vmatpush.bf16.msra.mxu0 %v1919
    %4426 = vmatpush.bf16.msra.mxu0 %v1911
    %4427 = vmatpush.bf16.msra.mxu0 %v1903
    %4428 = vmatpush.bf16.msra.mxu0 %v1895
    %4429 = vmatpush.bf16.msra.mxu0 %v1887
    %4430 = vmatmul.bf16.gmra.mxu0 %v4421
    %v4431 = vpop.f32.mrf.mxu0
    %v4432 = vadd.f32 0.0, %v4431
    %v4433 = vpop.f32.mrf.mxu0
    %4434 = vdwg.mxu0
    %4435 = vmatpush.bf16.msra.mxu0 %v2007
    %4436 = vmatpush.bf16.msra.mxu0 %v1999
    %4437 = vmatpush.bf16.msra.mxu0 %v1991
    %4438 = vmatpush.bf16.msra.mxu0 %v1983
    %4439 = vmatpush.bf16.msra.mxu0 %v1975
    %4440 = vmatpush.bf16.msra.mxu0 %v1967
    %4441 = vmatpush.bf16.msra.mxu0 %v1959
    %4442 = vmatpush.bf16.msra.mxu0 %v1951
    %4443 = vmatmul.bf16.gmra.mxu0 %v4358
    %v4444 = vpop.f32.mrf.mxu0
    %v4445 = vadd.f32 %v4432, %v4444
    %v4446 = vpop.f32.mrf.mxu0
    %4447 = vdwg.mxu0
    %4448 = vmatpush.bf16.msra.mxu0 %v2071
    %4449 = vmatpush.bf16.msra.mxu0 %v2063
    %4450 = vmatpush.bf16.msra.mxu0 %v2055
    %4451 = vmatpush.bf16.msra.mxu0 %v2047
    %4452 = vmatpush.bf16.msra.mxu0 %v2039
    %4453 = vmatpush.bf16.msra.mxu0 %v2031
    %4454 = vmatpush.bf16.msra.mxu0 %v2023
    %4455 = vmatpush.bf16.msra.mxu0 %v2015
    %4456 = vmatmul.bf16.gmra.mxu0 %v4359
    %v4457 = vpop.f32.mrf.mxu0
    %v4458 = vadd.f32 %v4445, %v4457
    %v4459 = vpop.f32.mrf.mxu0
    %4460 = vdwg.mxu0
    %4461 = vmatpush.bf16.msra.mxu0 %v1944
    %4462 = vmatpush.bf16.msra.mxu0 %v1936
    %4463 = vmatpush.bf16.msra.mxu0 %v1928
    %4464 = vmatpush.bf16.msra.mxu0 %v1920
    %4465 = vmatpush.bf16.msra.mxu0 %v1912
    %4466 = vmatpush.bf16.msra.mxu0 %v1904
    %4467 = vmatpush.bf16.msra.mxu0 %v1896
    %4468 = vmatpush.bf16.msra.mxu0 %v1888
    %4469 = vmatmul.bf16.gmra.mxu0 %v4421
    %v4470 = vpop.f32.mrf.mxu0
    %v4471 = vadd.f32 0.0, %v4470
    %v4472 = vpop.f32.mrf.mxu0
    %4473 = vdwg.mxu0
    %4474 = vmatpush.bf16.msra.mxu0 %v2008
    %4475 = vmatpush.bf16.msra.mxu0 %v2000
    %4476 = vmatpush.bf16.msra.mxu0 %v1992
    %4477 = vmatpush.bf16.msra.mxu0 %v1984
    %4478 = vmatpush.bf16.msra.mxu0 %v1976
    %4479 = vmatpush.bf16.msra.mxu0 %v1968
    %4480 = vmatpush.bf16.msra.mxu0 %v1960
    %4481 = vmatpush.bf16.msra.mxu0 %v1952
    %4482 = vmatmul.bf16.gmra.mxu0 %v4358
    %v4483 = vpop.f32.mrf.mxu0
    %v4484 = vadd.f32 %v4471, %v4483
    %v4485 = vpop.f32.mrf.mxu0
    %4486 = vdwg.mxu0
    %4487 = vmatpush.bf16.msra.mxu0 %v2072
    %4488 = vmatpush.bf16.msra.mxu0 %v2064
    %4489 = vmatpush.bf16.msra.mxu0 %v2056
    %4490 = vmatpush.bf16.msra.mxu0 %v2048
    %4491 = vmatpush.bf16.msra.mxu0 %v2040
    %4492 = vmatpush.bf16.msra.mxu0 %v2032
    %4493 = vmatpush.bf16.msra.mxu0 %v2024
    %4494 = vmatpush.bf16.msra.mxu0 %v2016
    %4495 = vmatmul.bf16.gmra.mxu0 %v4359
    %v4496 = vpop.f32.mrf.mxu0
    %v4497 = vadd.f32 %v4484, %v4496
    %v4498 = vpop.f32.mrf.mxu0
    %4499 = vdwg.mxu0
    %4500 = vmatpush.bf16.msra.mxu0 %v1945
    %4501 = vmatpush.bf16.msra.mxu0 %v1937
    %4502 = vmatpush.bf16.msra.mxu0 %v1929
    %4503 = vmatpush.bf16.msra.mxu0 %v1921
    %4504 = vmatpush.bf16.msra.mxu0 %v1913
    %4505 = vmatpush.bf16.msra.mxu0 %v1905
    %4506 = vmatpush.bf16.msra.mxu0 %v1897
    %4507 = vmatpush.bf16.msra.mxu0 %v1889
    %4508 = vmatmul.bf16.gmra.mxu0 %v4421
    %v4509 = vpop.f32.mrf.mxu0
    %v4510 = vadd.f32 0.0, %v4509
    %v4511 = vpop.f32.mrf.mxu0
    %4512 = vdwg.mxu0
    %4513 = vmatpush.bf16.msra.mxu0 %v2009
    %4514 = vmatpush.bf16.msra.mxu0 %v2001
    %4515 = vmatpush.bf16.msra.mxu0 %v1993
    %4516 = vmatpush.bf16.msra.mxu0 %v1985
    %4517 = vmatpush.bf16.msra.mxu0 %v1977
    %4518 = vmatpush.bf16.msra.mxu0 %v1969
    %4519 = vmatpush.bf16.msra.mxu0 %v1961
    %4520 = vmatpush.bf16.msra.mxu0 %v1953
    %4521 = vmatmul.bf16.gmra.mxu0 %v4358
    %v4522 = vpop.f32.mrf.mxu0
    %v4523 = vadd.f32 %v4510, %v4522
    %v4524 = vpop.f32.mrf.mxu0
    %4525 = vdwg.mxu0
    %4526 = vmatpush.bf16.msra.mxu0 %v2073
    %4527 = vmatpush.bf16.msra.mxu0 %v2065
    %4528 = vmatpush.bf16.msra.mxu0 %v2057
    %4529 = vmatpush.bf16.msra.mxu0 %v2049
    %4530 = vmatpush.bf16.msra.mxu0 %v2041
    %4531 = vmatpush.bf16.msra.mxu0 %v2033
    %4532 = vmatpush.bf16.msra.mxu0 %v2025
    %4533 = vmatpush.bf16.msra.mxu0 %v2017
    %4534 = vmatmul.bf16.gmra.mxu0 %v4359
    %v4535 = vpop.f32.mrf.mxu0
    %v4536 = vadd.f32 %v4523, %v4535
    %v4537 = vpop.f32.mrf.mxu0
    %4538 = vdwg.mxu0
    %4539 = vmatpush.bf16.msra.mxu0 %v1946
    %4540 = vmatpush.bf16.msra.mxu0 %v1938
    %4541 = vmatpush.bf16.msra.mxu0 %v1930
    %4542 = vmatpush.bf16.msra.mxu0 %v1922
    %4543 = vmatpush.bf16.msra.mxu0 %v1914
    %4544 = vmatpush.bf16.msra.mxu0 %v1906
    %4545 = vmatpush.bf16.msra.mxu0 %v1898
    %4546 = vmatpush.bf16.msra.mxu0 %v1890
    %4547 = vmatmul.bf16.gmra.mxu0 %v4421
    %v4548 = vpop.f32.mrf.mxu0
    %v4549 = vadd.f32 0.0, %v4548
    %v4550 = vpop.f32.mrf.mxu0
    %4551 = vdwg.mxu0
    %4552 = vmatpush.bf16.msra.mxu0 %v2010
    %4553 = vmatpush.bf16.msra.mxu0 %v2002
    %4554 = vmatpush.bf16.msra.mxu0 %v1994
    %4555 = vmatpush.bf16.msra.mxu0 %v1986
    %4556 = vmatpush.bf16.msra.mxu0 %v1978
    %4557 = vmatpush.bf16.msra.mxu0 %v1970
    %4558 = vmatpush.bf16.msra.mxu0 %v1962
    %4559 = vmatpush.bf16.msra.mxu0 %v1954
    %4560 = vmatmul.bf16.gmra.mxu0 %v4358
    %v4561 = vpop.f32.mrf.mxu0
    %v4562 = vadd.f32 %v4549, %v4561
    %v4563 = vpop.f32.mrf.mxu0
    %4564 = vdwg.mxu0
    %4565 = vmatpush.bf16.msra.mxu0 %v2074
    %4566 = vmatpush.bf16.msra.mxu0 %v2066
    %4567 = vmatpush.bf16.msra.mxu0 %v2058
    %4568 = vmatpush.bf16.msra.mxu0 %v2050
    %4569 = vmatpush.bf16.msra.mxu0 %v2042
    %4570 = vmatpush.bf16.msra.mxu0 %v2034
    %4571 = vmatpush.bf16.msra.mxu0 %v2026
    %4572 = vmatpush.bf16.msra.mxu0 %v2018
    %4573 = vmatmul.bf16.gmra.mxu0 %v4359
    %v4574 = vpop.f32.mrf.mxu0
    %v4575 = vadd.f32 %v4562, %v4574
    %v4576 = vpop.f32.mrf.mxu0
    %4577 = vdwg.mxu0
    %4578 = vmatpush.bf16.msra.mxu0 %v1947
    %4579 = vmatpush.bf16.msra.mxu0 %v1939
    %4580 = vmatpush.bf16.msra.mxu0 %v1931
    %4581 = vmatpush.bf16.msra.mxu0 %v1923
    %4582 = vmatpush.bf16.msra.mxu0 %v1915
    %4583 = vmatpush.bf16.msra.mxu0 %v1907
    %4584 = vmatpush.bf16.msra.mxu0 %v1899
    %4585 = vmatpush.bf16.msra.mxu0 %v1891
    %4586 = vmatmul.bf16.gmra.mxu0 %v4421
    %v4587 = vpop.f32.mrf.mxu0
    %v4588 = vadd.f32 0.0, %v4587
    %v4589 = vpop.f32.mrf.mxu0
    %4590 = vdwg.mxu0
    %4591 = vmatpush.bf16.msra.mxu0 %v2011
    %4592 = vmatpush.bf16.msra.mxu0 %v2003
    %4593 = vmatpush.bf16.msra.mxu0 %v1995
    %4594 = vmatpush.bf16.msra.mxu0 %v1987
    %4595 = vmatpush.bf16.msra.mxu0 %v1979
    %4596 = vmatpush.bf16.msra.mxu0 %v1971
    %4597 = vmatpush.bf16.msra.mxu0 %v1963
    %4598 = vmatpush.bf16.msra.mxu0 %v1955
    %4599 = vmatmul.bf16.gmra.mxu0 %v4358
    %v4600 = vpop.f32.mrf.mxu0
    %v4601 = vadd.f32 %v4588, %v4600
    %v4602 = vpop.f32.mrf.mxu0
    %4603 = vdwg.mxu0
    %4604 = vmatpush.bf16.msra.mxu0 %v2075
    %4605 = vmatpush.bf16.msra.mxu0 %v2067
    %4606 = vmatpush.bf16.msra.mxu0 %v2059
    %4607 = vmatpush.bf16.msra.mxu0 %v2051
    %4608 = vmatpush.bf16.msra.mxu0 %v2043
    %4609 = vmatpush.bf16.msra.mxu0 %v2035
    %4610 = vmatpush.bf16.msra.mxu0 %v2027
    %4611 = vmatpush.bf16.msra.mxu0 %v2019
    %4612 = vmatmul.bf16.gmra.mxu0 %v4359
    %v4613 = vpop.f32.mrf.mxu0
    %v4614 = vadd.f32 %v4601, %v4613
    %v4615 = vpop.f32.mrf.mxu0
    %4616 = vdwg.mxu0
    %4617 = vmatpush.bf16.msra.mxu0 %v1948
    %4618 = vmatpush.bf16.msra.mxu0 %v1940
    %4619 = vmatpush.bf16.msra.mxu0 %v1932
    %4620 = vmatpush.bf16.msra.mxu0 %v1924
    %4621 = vmatpush.bf16.msra.mxu0 %v1916
    %4622 = vmatpush.bf16.msra.mxu0 %v1908
    %4623 = vmatpush.bf16.msra.mxu0 %v1900
    %4624 = vmatpush.bf16.msra.mxu0 %v1892
    %4625 = vmatmul.bf16.gmra.mxu0 %v4421
    %v4626 = vpop.f32.mrf.mxu0
    %v4627 = vadd.f32 0.0, %v4626
    %v4628 = vpop.f32.mrf.mxu0
    %4629 = vdwg.mxu0
    %4630 = vmatpush.bf16.msra.mxu0 %v2012
    %4631 = vmatpush.bf16.msra.mxu0 %v2004
    %4632 = vmatpush.bf16.msra.mxu0 %v1996
    %4633 = vmatpush.bf16.msra.mxu0 %v1988
    %4634 = vmatpush.bf16.msra.mxu0 %v1980
    %4635 = vmatpush.bf16.msra.mxu0 %v1972
    %4636 = vmatpush.bf16.msra.mxu0 %v1964
    %4637 = vmatpush.bf16.msra.mxu0 %v1956
    %4638 = vmatmul.bf16.gmra.mxu0 %v4358
    %v4639 = vpop.f32.mrf.mxu0
    %v4640 = vadd.f32 %v4627, %v4639
    %v4641 = vpop.f32.mrf.mxu0
    %4642 = vdwg.mxu0
    %4643 = vmatpush.bf16.msra.mxu0 %v2076
    %4644 = vmatpush.bf16.msra.mxu0 %v2068
    %4645 = vmatpush.bf16.msra.mxu0 %v2060
    %4646 = vmatpush.bf16.msra.mxu0 %v2052
    %4647 = vmatpush.bf16.msra.mxu0 %v2044
    %4648 = vmatpush.bf16.msra.mxu0 %v2036
    %4649 = vmatpush.bf16.msra.mxu0 %v2028
    %4650 = vmatpush.bf16.msra.mxu0 %v2020
    %4651 = vmatmul.bf16.gmra.mxu0 %v4359
    %v4652 = vpop.f32.mrf.mxu0
    %v4653 = vadd.f32 %v4640, %v4652
    %v4654 = vpop.f32.mrf.mxu0
    %4655 = vdwg.mxu0
    %4656 = vmatpush.bf16.msra.mxu0 %v1949
    %4657 = vmatpush.bf16.msra.mxu0 %v1941
    %4658 = vmatpush.bf16.msra.mxu0 %v1933
    %4659 = vmatpush.bf16.msra.mxu0 %v1925
    %4660 = vmatpush.bf16.msra.mxu0 %v1917
    %4661 = vmatpush.bf16.msra.mxu0 %v1909
    %4662 = vmatpush.bf16.msra.mxu0 %v1901
    %4663 = vmatpush.bf16.msra.mxu0 %v1893
    %4664 = vmatmul.bf16.gmra.mxu0 %v4421
    %v4665 = vpop.f32.mrf.mxu0
    %v4666 = vadd.f32 0.0, %v4665
    %v4667 = vpop.f32.mrf.mxu0
    %4668 = vdwg.mxu0
    %4669 = vmatpush.bf16.msra.mxu0 %v2013
    %4670 = vmatpush.bf16.msra.mxu0 %v2005
    %4671 = vmatpush.bf16.msra.mxu0 %v1997
    %4672 = vmatpush.bf16.msra.mxu0 %v1989
    %4673 = vmatpush.bf16.msra.mxu0 %v1981
    %4674 = vmatpush.bf16.msra.mxu0 %v1973
    %4675 = vmatpush.bf16.msra.mxu0 %v1965
    %4676 = vmatpush.bf16.msra.mxu0 %v1957
    %4677 = vmatmul.bf16.gmra.mxu0 %v4358
    %v4678 = vpop.f32.mrf.mxu0
    %v4679 = vadd.f32 %v4666, %v4678
    %v4680 = vpop.f32.mrf.mxu0
    %4681 = vdwg.mxu0
    %4682 = vmatpush.bf16.msra.mxu0 %v2077
    %4683 = vmatpush.bf16.msra.mxu0 %v2069
    %4684 = vmatpush.bf16.msra.mxu0 %v2061
    %4685 = vmatpush.bf16.msra.mxu0 %v2053
    %4686 = vmatpush.bf16.msra.mxu0 %v2045
    %4687 = vmatpush.bf16.msra.mxu0 %v2037
    %4688 = vmatpush.bf16.msra.mxu0 %v2029
    %4689 = vmatpush.bf16.msra.mxu0 %v2021
    %4690 = vmatmul.bf16.gmra.mxu0 %v4359
    %v4691 = vpop.f32.mrf.mxu0
    %v4692 = vadd.f32 %v4679, %v4691
    %v4693 = vpop.f32.mrf.mxu0
    %4694 = vdwg.mxu0
    %4695 = vmatpush.bf16.msra.mxu0 %v1950
    %4696 = vmatpush.bf16.msra.mxu0 %v1942
    %4697 = vmatpush.bf16.msra.mxu0 %v1934
    %4698 = vmatpush.bf16.msra.mxu0 %v1926
    %4699 = vmatpush.bf16.msra.mxu0 %v1918
    %4700 = vmatpush.bf16.msra.mxu0 %v1910
    %4701 = vmatpush.bf16.msra.mxu0 %v1902
    %4702 = vmatpush.bf16.msra.mxu0 %v1894
    %4703 = vmatmul.bf16.gmra.mxu0 %v4421
    %v4704 = vpop.f32.mrf.mxu0
    %v4705 = vadd.f32 0.0, %v4704
    %v4706 = vpop.f32.mrf.mxu0
    %4707 = vdwg.mxu0
    %4708 = vmatpush.bf16.msra.mxu0 %v2014
    %4709 = vmatpush.bf16.msra.mxu0 %v2006
    %4710 = vmatpush.bf16.msra.mxu0 %v1998
    %4711 = vmatpush.bf16.msra.mxu0 %v1990
    %4712 = vmatpush.bf16.msra.mxu0 %v1982
    %4713 = vmatpush.bf16.msra.mxu0 %v1974
    %4714 = vmatpush.bf16.msra.mxu0 %v1966
    %4715 = vmatpush.bf16.msra.mxu0 %v1958
    %4716 = vmatmul.bf16.gmra.mxu0 %v4358
    %v4717 = vpop.f32.mrf.mxu0
    %v4718 = vadd.f32 %v4705, %v4717
    %v4719 = vpop.f32.mrf.mxu0
    %4720 = vdwg.mxu0
    %4721 = vmatpush.bf16.msra.mxu0 %v2078
    %4722 = vmatpush.bf16.msra.mxu0 %v2070
    %4723 = vmatpush.bf16.msra.mxu0 %v2062
    %4724 = vmatpush.bf16.msra.mxu0 %v2054
    %4725 = vmatpush.bf16.msra.mxu0 %v2046
    %4726 = vmatpush.bf16.msra.mxu0 %v2038
    %4727 = vmatpush.bf16.msra.mxu0 %v2030
    %4728 = vmatpush.bf16.msra.mxu0 %v2022
    %4729 = vmatmul.bf16.gmra.mxu0 %v4359
    %v4730 = vpop.f32.mrf.mxu0
    %v4731 = vadd.f32 %v4718, %v4730
    %v4732 = vpop.f32.mrf.mxu0
    %4733 = vdwg.mxu0
    %v4734 = vxor.u32 %v4458, 2147483648
    %v4735 = vxor.u32 %v4497, 2147483648
    %v4736 = vmul.f32 %v4734, 1.442695
    %v4737 = vpow.pop %v4736
    %v4738 = vmul.f32 %v4735, 1.442695
    %v4739 = vpow.pop %v4738
    %v4740 = vadd.f32 %v4737, 1.0
    %v4741 = vadd.f32 %v4739, 1.0
    %v4742 = vrcp.pop %v4740
    %v4743 = vmul.f32 %v4740, %v4742
    %v4744 = vsub.f32 1.0, %v4743
    %v4745 = vmul.f32 %v4742, %v4744
    %v4746 = vadd.f32 %v4742, %v4745
    %vm4747 = vweird.f32 %v4740
    %vm4748 = vweird.f32 %v4742
    %vm4749 = vmor %vm4747, %vm4748
    %v4750 = vsel %vm4749, %v4742, %v4746
    %v4751 = vand.u32 2147483647, %v4740
    %vm4752 = vcmp.eq.f32.partialorder %v4751, 8.507059e+37
    %v4753 = vand.u32 %v4740, 2147483648
    %v4754 = vor.u32 1.1754944e-38, %v4753
    %v4755 = vsel %vm4752, %v4754, %v4750
    %v4756 = vmul.f32 1.0, %v4755
    %v4757 = vrcp.pop %v4741
    %v4758 = vmul.f32 %v4741, %v4757
    %v4759 = vsub.f32 1.0, %v4758
    %v4760 = vmul.f32 %v4757, %v4759
    %v4761 = vadd.f32 %v4757, %v4760
    %vm4762 = vweird.f32 %v4741
    %vm4763 = vweird.f32 %v4757
    %vm4764 = vmor %vm4762, %vm4763
    %v4765 = vsel %vm4764, %v4757, %v4761
    %v4766 = vand.u32 2147483647, %v4741
    %vm4767 = vcmp.eq.f32.partialorder %v4766, 8.507059e+37
    %v4768 = vand.u32 %v4741, 2147483648
    %v4769 = vor.u32 1.1754944e-38, %v4768
    %v4770 = vsel %vm4767, %v4769, %v4765
    %v4771 = vmul.f32 1.0, %v4770
    %v4772 = vxor.u32 %v4536, 2147483648
    %v4773 = vxor.u32 %v4575, 2147483648
    %v4774 = vmul.f32 %v4772, 1.442695
    %v4775 = vpow.pop %v4774
    %v4776 = vmul.f32 %v4773, 1.442695
    %v4777 = vpow.pop %v4776
    %v4778 = vadd.f32 %v4775, 1.0
    %v4779 = vadd.f32 %v4777, 1.0
    %v4780 = vrcp.pop %v4778
    %v4781 = vmul.f32 %v4778, %v4780
    %v4782 = vsub.f32 1.0, %v4781
    %v4783 = vmul.f32 %v4780, %v4782
    %v4784 = vadd.f32 %v4780, %v4783
    %vm4785 = vweird.f32 %v4778
    %vm4786 = vweird.f32 %v4780
    %vm4787 = vmor %vm4785, %vm4786
    %v4788 = vsel %vm4787, %v4780, %v4784
    %v4789 = vand.u32 2147483647, %v4778
    %vm4790 = vcmp.eq.f32.partialorder %v4789, 8.507059e+37
    %v4791 = vand.u32 %v4778, 2147483648
    %v4792 = vor.u32 1.1754944e-38, %v4791
    %v4793 = vsel %vm4790, %v4792, %v4788
    %v4794 = vmul.f32 1.0, %v4793
    %v4795 = vrcp.pop %v4779
    %v4796 = vmul.f32 %v4779, %v4795
    %v4797 = vsub.f32 1.0, %v4796
    %v4798 = vmul.f32 %v4795, %v4797
    %v4799 = vadd.f32 %v4795, %v4798
    %vm4800 = vweird.f32 %v4779
    %vm4801 = vweird.f32 %v4795
    %vm4802 = vmor %vm4800, %vm4801
    %v4803 = vsel %vm4802, %v4795, %v4799
    %v4804 = vand.u32 2147483647, %v4779
    %vm4805 = vcmp.eq.f32.partialorder %v4804, 8.507059e+37
    %v4806 = vand.u32 %v4779, 2147483648
    %v4807 = vor.u32 1.1754944e-38, %v4806
    %v4808 = vsel %vm4805, %v4807, %v4803
    %v4809 = vmul.f32 1.0, %v4808
    %v4810 = vtanh.pop %v4614
    %v4811 = vtanh.pop %v4653
    %v4812 = vxor.u32 %v4692, 2147483648
    %v4813 = vxor.u32 %v4731, 2147483648
    %v4814 = vmul.f32 %v4812, 1.442695
    %v4815 = vpow.pop %v4814
    %v4816 = vmul.f32 %v4813, 1.442695
    %v4817 = vpow.pop %v4816
    %v4818 = vadd.f32 %v4815, 1.0
    %v4819 = vadd.f32 %v4817, 1.0
    %v4820 = vrcp.pop %v4818
    %v4821 = vmul.f32 %v4818, %v4820
    %v4822 = vsub.f32 1.0, %v4821
    %v4823 = vmul.f32 %v4820, %v4822
    %v4824 = vadd.f32 %v4820, %v4823
    %vm4825 = vweird.f32 %v4818
    %vm4826 = vweird.f32 %v4820
    %vm4827 = vmor %vm4825, %vm4826
    %v4828 = vsel %vm4827, %v4820, %v4824
    %v4829 = vand.u32 2147483647, %v4818
    %vm4830 = vcmp.eq.f32.partialorder %v4829, 8.507059e+37
    %v4831 = vand.u32 %v4818, 2147483648
    %v4832 = vor.u32 1.1754944e-38, %v4831
    %v4833 = vsel %vm4830, %v4832, %v4828
    %v4834 = vmul.f32 1.0, %v4833
    %v4835 = vrcp.pop %v4819
    %v4836 = vmul.f32 %v4819, %v4835
    %v4837 = vsub.f32 1.0, %v4836
    %v4838 = vmul.f32 %v4835, %v4837
    %v4839 = vadd.f32 %v4835, %v4838
    %vm4840 = vweird.f32 %v4819
    %vm4841 = vweird.f32 %v4835
    %vm4842 = vmor %vm4840, %vm4841
    %v4843 = vsel %vm4842, %v4835, %v4839
    %v4844 = vand.u32 2147483647, %v4819
    %vm4845 = vcmp.eq.f32.partialorder %v4844, 8.507059e+37
    %v4846 = vand.u32 %v4819, 2147483648
    %v4847 = vor.u32 1.1754944e-38, %v4846
    %v4848 = vsel %vm4845, %v4847, %v4843
    %v4849 = vmul.f32 1.0, %v4848
    %v4850 = vmul.f32 %v4794, %v4348
    %v4851 = vmul.f32 %v4809, %v4349
    %v4852 = vmul.f32 %v4756, %v4810
    %v4853 = vmul.f32 %v4771, %v4811
    %v4854 = vadd.f32 %v4850, %v4852
    %v4855 = vadd.f32 %v4851, %v4853
    %v4856 = vtanh.pop %v4854
    %v4857 = vtanh.pop %v4855
    %v4858 = vmul.f32 %v4834, %v4856
    %v4859 = vmul.f32 %v4849, %v4857
    %v4860 = vpack.c.bf16 %v4859, %v4858
    %v4862 = vunpack.c.l.b16 %v4860
    %v4863 = vunpack.c.h.b16 %v4860
    %v4864 = vpack.c.b16 %v4862, %v4862
    %v4865 = vpack.c.b16 %v4863, %v4863
    %4868 = vmatpush.bf16.msra.mxu0 %v2823
    %4869 = vmatpush.bf16.msra.mxu0 %v2822
    %4870 = vmatpush.bf16.msra.mxu0 %v2821
    %4871 = vmatpush.bf16.msra.mxu0 %v2820
    %4872 = vmatpush.bf16.msra.mxu0 %v2819
    %4873 = vmatpush.bf16.msra.mxu0 %v2818
    %4874 = vmatpush.bf16.msra.mxu0 %v2817
    %4875 = vmatpush.bf16.msra.mxu0 %v2816
    %4876 = vmatmul.bf16.gmra.mxu0 %v4864
    %v4877 = vpop.f32.mrf.mxu0
    %v4878 = vadd.f32 %v2743, %v4877
    %v4879 = vpop.f32.mrf.mxu0
    %4880 = vdwg.mxu0
    %4881 = vmatpush.bf16.msra.mxu0 %v2831
    %4882 = vmatpush.bf16.msra.mxu0 %v2830
    %4883 = vmatpush.bf16.msra.mxu0 %v2829
    %4884 = vmatpush.bf16.msra.mxu0 %v2828
    %4885 = vmatpush.bf16.msra.mxu0 %v2827
    %4886 = vmatpush.bf16.msra.mxu0 %v2826
    %4887 = vmatpush.bf16.msra.mxu0 %v2825
    %4888 = vmatpush.bf16.msra.mxu0 %v2824
    %4889 = vmatmul.bf16.gmra.mxu0 %v4865
    %v4890 = vpop.f32.mrf.mxu0
    %v4891 = vadd.f32 %v4878, %v4890
    %v4892 = vpop.f32.mrf.mxu0
    %4893 = vdwg.mxu0
    %v4894 = vsel %vm2874, %v4891, -inf
    %4895 = vmax.xlane.f32.xlu0 %v4894
    %v4896 = vpop.xlane.xlu0 %4895
    %vm4897 = vcmp.eq.f32.partialorder %v4891, %v4896
    %v4898 = vsel %vm4897, %v1106, 128
    %v4899 = vsel %vm2874, %v4898, 2147483647
    %v4900 = vand.u32 %v4899, 65535
    %v4901 = vshra.s32 %v4899, 16
    %v4902 = vcvt.s32.f32 %v4900
    %v4903 = vcvt.s32.f32 %v4901
    %4904 = vmin.xlane.f32.xlu0 %v4903
    %v4905 = vpop.xlane.xlu0 %4904
    %vm4906 = vcmp.eq.f32.partialorder %v4903, %v4905
    %v4907 = vsel %vm4906, %v4902, inf
    %4908 = vmin.xlane.f32.xlu0 %v4907
    %v4909 = vpop.xlane.xlu0 %4908
    %v4910 = vcvt.f32.s32 %v4909
    %v4911 = vcvt.f32.s32 %v4905
    %v4912 = vshll.u32 %v4911, 16
    %v4913 = vadd.s32 %v4912, %v4910
    %vm4914 = vcmp.gt.s32.totalorder %v4417, 0
    %v4915 = vsel %vm4914, 2, %v4913
    %vm4916 = vcmp.eq.s32.totalorder %v1106, 4
    %v4917 = vsel %vm4916, %v4915, %v4411
    %vm4918 = vcmp.eq.s32.totalorder %v4913, 1
    %vm4919 = vmor %vm4914, %vm4918
    %v4920 = vsel %vm4919, %v4414, %v4913
    %v4921 = vsel %vm4918, 1, 0
    %vm4922 = vcmp.gt.s32.totalorder %v4417, %v4921
    %v4923 = vsel %vm4922, %v4417, %v4921
    %vm4924 = vcmp.eq.s32.totalorder %v1106, %v4920
    %v4925 = vsel %vm4924, 1, 0
    %v4926 = vcvt.s32.f32 %v4925
    %v4927 = vpack.c.bf16 %v4926, %v4926
    %4928 = vmatpush.bf16.msra.mxu0 %v1943
    %4929 = vmatpush.bf16.msra.mxu0 %v1935
    %4930 = vmatpush.bf16.msra.mxu0 %v1927
    %4931 = vmatpush.bf16.msra.mxu0 %v1919
    %4932 = vmatpush.bf16.msra.mxu0 %v1911
    %4933 = vmatpush.bf16.msra.mxu0 %v1903
    %4934 = vmatpush.bf16.msra.mxu0 %v1895
    %4935 = vmatpush.bf16.msra.mxu0 %v1887
    %4936 = vmatmul.bf16.gmra.mxu0 %v4927
    %v4937 = vpop.f32.mrf.mxu0
    %v4938 = vadd.f32 0.0, %v4937
    %v4939 = vpop.f32.mrf.mxu0
    %4940 = vdwg.mxu0
    %4941 = vmatpush.bf16.msra.mxu0 %v2007
    %4942 = vmatpush.bf16.msra.mxu0 %v1999
    %4943 = vmatpush.bf16.msra.mxu0 %v1991
    %4944 = vmatpush.bf16.msra.mxu0 %v1983
    %4945 = vmatpush.bf16.msra.mxu0 %v1975
    %4946 = vmatpush.bf16.msra.mxu0 %v1967
    %4947 = vmatpush.bf16.msra.mxu0 %v1959
    %4948 = vmatpush.bf16.msra.mxu0 %v1951
    %4949 = vmatmul.bf16.gmra.mxu0 %v4864
    %v4950 = vpop.f32.mrf.mxu0
    %v4951 = vadd.f32 %v4938, %v4950
    %v4952 = vpop.f32.mrf.mxu0
    %4953 = vdwg.mxu0
    %4954 = vmatpush.bf16.msra.mxu0 %v2071
    %4955 = vmatpush.bf16.msra.mxu0 %v2063
    %4956 = vmatpush.bf16.msra.mxu0 %v2055
    %4957 = vmatpush.bf16.msra.mxu0 %v2047
    %4958 = vmatpush.bf16.msra.mxu0 %v2039
    %4959 = vmatpush.bf16.msra.mxu0 %v2031
    %4960 = vmatpush.bf16.msra.mxu0 %v2023
    %4961 = vmatpush.bf16.msra.mxu0 %v2015
    %4962 = vmatmul.bf16.gmra.mxu0 %v4865
    %v4963 = vpop.f32.mrf.mxu0
    %v4964 = vadd.f32 %v4951, %v4963
    %v4965 = vpop.f32.mrf.mxu0
    %4966 = vdwg.mxu0
    %4967 = vmatpush.bf16.msra.mxu0 %v1944
    %4968 = vmatpush.bf16.msra.mxu0 %v1936
    %4969 = vmatpush.bf16.msra.mxu0 %v1928
    %4970 = vmatpush.bf16.msra.mxu0 %v1920
    %4971 = vmatpush.bf16.msra.mxu0 %v1912
    %4972 = vmatpush.bf16.msra.mxu0 %v1904
    %4973 = vmatpush.bf16.msra.mxu0 %v1896
    %4974 = vmatpush.bf16.msra.mxu0 %v1888
    %4975 = vmatmul.bf16.gmra.mxu0 %v4927
    %v4976 = vpop.f32.mrf.mxu0
    %v4977 = vadd.f32 0.0, %v4976
    %v4978 = vpop.f32.mrf.mxu0
    %4979 = vdwg.mxu0
    %4980 = vmatpush.bf16.msra.mxu0 %v2008
    %4981 = vmatpush.bf16.msra.mxu0 %v2000
    %4982 = vmatpush.bf16.msra.mxu0 %v1992
    %4983 = vmatpush.bf16.msra.mxu0 %v1984
    %4984 = vmatpush.bf16.msra.mxu0 %v1976
    %4985 = vmatpush.bf16.msra.mxu0 %v1968
    %4986 = vmatpush.bf16.msra.mxu0 %v1960
    %4987 = vmatpush.bf16.msra.mxu0 %v1952
    %4988 = vmatmul.bf16.gmra.mxu0 %v4864
    %v4989 = vpop.f32.mrf.mxu0
    %v4990 = vadd.f32 %v4977, %v4989
    %v4991 = vpop.f32.mrf.mxu0
    %4992 = vdwg.mxu0
    %4993 = vmatpush.bf16.msra.mxu0 %v2072
    %4994 = vmatpush.bf16.msra.mxu0 %v2064
    %4995 = vmatpush.bf16.msra.mxu0 %v2056
    %4996 = vmatpush.bf16.msra.mxu0 %v2048
    %4997 = vmatpush.bf16.msra.mxu0 %v2040
    %4998 = vmatpush.bf16.msra.mxu0 %v2032
    %4999 = vmatpush.bf16.msra.mxu0 %v2024
    %5000 = vmatpush.bf16.msra.mxu0 %v2016
    %5001 = vmatmul.bf16.gmra.mxu0 %v4865
    %v5002 = vpop.f32.mrf.mxu0
    %v5003 = vadd.f32 %v4990, %v5002
    %v5004 = vpop.f32.mrf.mxu0
    %5005 = vdwg.mxu0
    %5006 = vmatpush.bf16.msra.mxu0 %v1945
    %5007 = vmatpush.bf16.msra.mxu0 %v1937
    %5008 = vmatpush.bf16.msra.mxu0 %v1929
    %5009 = vmatpush.bf16.msra.mxu0 %v1921
    %5010 = vmatpush.bf16.msra.mxu0 %v1913
    %5011 = vmatpush.bf16.msra.mxu0 %v1905
    %5012 = vmatpush.bf16.msra.mxu0 %v1897
    %5013 = vmatpush.bf16.msra.mxu0 %v1889
    %5014 = vmatmul.bf16.gmra.mxu0 %v4927
    %v5015 = vpop.f32.mrf.mxu0
    %v5016 = vadd.f32 0.0, %v5015
    %v5017 = vpop.f32.mrf.mxu0
    %5018 = vdwg.mxu0
    %5019 = vmatpush.bf16.msra.mxu0 %v2009
    %5020 = vmatpush.bf16.msra.mxu0 %v2001
    %5021 = vmatpush.bf16.msra.mxu0 %v1993
    %5022 = vmatpush.bf16.msra.mxu0 %v1985
    %5023 = vmatpush.bf16.msra.mxu0 %v1977
    %5024 = vmatpush.bf16.msra.mxu0 %v1969
    %5025 = vmatpush.bf16.msra.mxu0 %v1961
    %5026 = vmatpush.bf16.msra.mxu0 %v1953
    %5027 = vmatmul.bf16.gmra.mxu0 %v4864
    %v5028 = vpop.f32.mrf.mxu0
    %v5029 = vadd.f32 %v5016, %v5028
    %v5030 = vpop.f32.mrf.mxu0
    %5031 = vdwg.mxu0
    %5032 = vmatpush.bf16.msra.mxu0 %v2073
    %5033 = vmatpush.bf16.msra.mxu0 %v2065
    %5034 = vmatpush.bf16.msra.mxu0 %v2057
    %5035 = vmatpush.bf16.msra.mxu0 %v2049
    %5036 = vmatpush.bf16.msra.mxu0 %v2041
    %5037 = vmatpush.bf16.msra.mxu0 %v2033
    %5038 = vmatpush.bf16.msra.mxu0 %v2025
    %5039 = vmatpush.bf16.msra.mxu0 %v2017
    %5040 = vmatmul.bf16.gmra.mxu0 %v4865
    %v5041 = vpop.f32.mrf.mxu0
    %v5042 = vadd.f32 %v5029, %v5041
    %v5043 = vpop.f32.mrf.mxu0
    %5044 = vdwg.mxu0
    %5045 = vmatpush.bf16.msra.mxu0 %v1946
    %5046 = vmatpush.bf16.msra.mxu0 %v1938
    %5047 = vmatpush.bf16.msra.mxu0 %v1930
    %5048 = vmatpush.bf16.msra.mxu0 %v1922
    %5049 = vmatpush.bf16.msra.mxu0 %v1914
    %5050 = vmatpush.bf16.msra.mxu0 %v1906
    %5051 = vmatpush.bf16.msra.mxu0 %v1898
    %5052 = vmatpush.bf16.msra.mxu0 %v1890
    %5053 = vmatmul.bf16.gmra.mxu0 %v4927
    %v5054 = vpop.f32.mrf.mxu0
    %v5055 = vadd.f32 0.0, %v5054
    %v5056 = vpop.f32.mrf.mxu0
    %5057 = vdwg.mxu0
    %5058 = vmatpush.bf16.msra.mxu0 %v2010
    %5059 = vmatpush.bf16.msra.mxu0 %v2002
    %5060 = vmatpush.bf16.msra.mxu0 %v1994
    %5061 = vmatpush.bf16.msra.mxu0 %v1986
    %5062 = vmatpush.bf16.msra.mxu0 %v1978
    %5063 = vmatpush.bf16.msra.mxu0 %v1970
    %5064 = vmatpush.bf16.msra.mxu0 %v1962
    %5065 = vmatpush.bf16.msra.mxu0 %v1954
    %5066 = vmatmul.bf16.gmra.mxu0 %v4864
    %v5067 = vpop.f32.mrf.mxu0
    %v5068 = vadd.f32 %v5055, %v5067
    %v5069 = vpop.f32.mrf.mxu0
    %5070 = vdwg.mxu0
    %5071 = vmatpush.bf16.msra.mxu0 %v2074
    %5072 = vmatpush.bf16.msra.mxu0 %v2066
    %5073 = vmatpush.bf16.msra.mxu0 %v2058
    %5074 = vmatpush.bf16.msra.mxu0 %v2050
    %5075 = vmatpush.bf16.msra.mxu0 %v2042
    %5076 = vmatpush.bf16.msra.mxu0 %v2034
    %5077 = vmatpush.bf16.msra.mxu0 %v2026
    %5078 = vmatpush.bf16.msra.mxu0 %v2018
    %5079 = vmatmul.bf16.gmra.mxu0 %v4865
    %v5080 = vpop.f32.mrf.mxu0
    %v5081 = vadd.f32 %v5068, %v5080
    %v5082 = vpop.f32.mrf.mxu0
    %5083 = vdwg.mxu0
    %5084 = vmatpush.bf16.msra.mxu0 %v1947
    %5085 = vmatpush.bf16.msra.mxu0 %v1939
    %5086 = vmatpush.bf16.msra.mxu0 %v1931
    %5087 = vmatpush.bf16.msra.mxu0 %v1923
    %5088 = vmatpush.bf16.msra.mxu0 %v1915
    %5089 = vmatpush.bf16.msra.mxu0 %v1907
    %5090 = vmatpush.bf16.msra.mxu0 %v1899
    %5091 = vmatpush.bf16.msra.mxu0 %v1891
    %5092 = vmatmul.bf16.gmra.mxu0 %v4927
    %v5093 = vpop.f32.mrf.mxu0
    %v5094 = vadd.f32 0.0, %v5093
    %v5095 = vpop.f32.mrf.mxu0
    %5096 = vdwg.mxu0
    %5097 = vmatpush.bf16.msra.mxu0 %v2011
    %5098 = vmatpush.bf16.msra.mxu0 %v2003
    %5099 = vmatpush.bf16.msra.mxu0 %v1995
    %5100 = vmatpush.bf16.msra.mxu0 %v1987
    %5101 = vmatpush.bf16.msra.mxu0 %v1979
    %5102 = vmatpush.bf16.msra.mxu0 %v1971
    %5103 = vmatpush.bf16.msra.mxu0 %v1963
    %5104 = vmatpush.bf16.msra.mxu0 %v1955
    %5105 = vmatmul.bf16.gmra.mxu0 %v4864
    %v5106 = vpop.f32.mrf.mxu0
    %v5107 = vadd.f32 %v5094, %v5106
    %v5108 = vpop.f32.mrf.mxu0
    %5109 = vdwg.mxu0
    %5110 = vmatpush.bf16.msra.mxu0 %v2075
    %5111 = vmatpush.bf16.msra.mxu0 %v2067
    %5112 = vmatpush.bf16.msra.mxu0 %v2059
    %5113 = vmatpush.bf16.msra.mxu0 %v2051
    %5114 = vmatpush.bf16.msra.mxu0 %v2043
    %5115 = vmatpush.bf16.msra.mxu0 %v2035
    %5116 = vmatpush.bf16.msra.mxu0 %v2027
    %5117 = vmatpush.bf16.msra.mxu0 %v2019
    %5118 = vmatmul.bf16.gmra.mxu0 %v4865
    %v5119 = vpop.f32.mrf.mxu0
    %v5120 = vadd.f32 %v5107, %v5119
    %v5121 = vpop.f32.mrf.mxu0
    %5122 = vdwg.mxu0
    %5123 = vmatpush.bf16.msra.mxu0 %v1948
    %5124 = vmatpush.bf16.msra.mxu0 %v1940
    %5125 = vmatpush.bf16.msra.mxu0 %v1932
    %5126 = vmatpush.bf16.msra.mxu0 %v1924
    %5127 = vmatpush.bf16.msra.mxu0 %v1916
    %5128 = vmatpush.bf16.msra.mxu0 %v1908
    %5129 = vmatpush.bf16.msra.mxu0 %v1900
    %5130 = vmatpush.bf16.msra.mxu0 %v1892
    %5131 = vmatmul.bf16.gmra.mxu0 %v4927
    %v5132 = vpop.f32.mrf.mxu0
    %v5133 = vadd.f32 0.0, %v5132
    %v5134 = vpop.f32.mrf.mxu0
    %5135 = vdwg.mxu0
    %5136 = vmatpush.bf16.msra.mxu0 %v2012
    %5137 = vmatpush.bf16.msra.mxu0 %v2004
    %5138 = vmatpush.bf16.msra.mxu0 %v1996
    %5139 = vmatpush.bf16.msra.mxu0 %v1988
    %5140 = vmatpush.bf16.msra.mxu0 %v1980
    %5141 = vmatpush.bf16.msra.mxu0 %v1972
    %5142 = vmatpush.bf16.msra.mxu0 %v1964
    %5143 = vmatpush.bf16.msra.mxu0 %v1956
    %5144 = vmatmul.bf16.gmra.mxu0 %v4864
    %v5145 = vpop.f32.mrf.mxu0
    %v5146 = vadd.f32 %v5133, %v5145
    %v5147 = vpop.f32.mrf.mxu0
    %5148 = vdwg.mxu0
    %5149 = vmatpush.bf16.msra.mxu0 %v2076
    %5150 = vmatpush.bf16.msra.mxu0 %v2068
    %5151 = vmatpush.bf16.msra.mxu0 %v2060
    %5152 = vmatpush.bf16.msra.mxu0 %v2052
    %5153 = vmatpush.bf16.msra.mxu0 %v2044
    %5154 = vmatpush.bf16.msra.mxu0 %v2036
    %5155 = vmatpush.bf16.msra.mxu0 %v2028
    %5156 = vmatpush.bf16.msra.mxu0 %v2020
    %5157 = vmatmul.bf16.gmra.mxu0 %v4865
    %v5158 = vpop.f32.mrf.mxu0
    %v5159 = vadd.f32 %v5146, %v5158
    %v5160 = vpop.f32.mrf.mxu0
    %5161 = vdwg.mxu0
    %5162 = vmatpush.bf16.msra.mxu0 %v1949
    %5163 = vmatpush.bf16.msra.mxu0 %v1941
    %5164 = vmatpush.bf16.msra.mxu0 %v1933
    %5165 = vmatpush.bf16.msra.mxu0 %v1925
    %5166 = vmatpush.bf16.msra.mxu0 %v1917
    %5167 = vmatpush.bf16.msra.mxu0 %v1909
    %5168 = vmatpush.bf16.msra.mxu0 %v1901
    %5169 = vmatpush.bf16.msra.mxu0 %v1893
    %5170 = vmatmul.bf16.gmra.mxu0 %v4927
    %v5171 = vpop.f32.mrf.mxu0
    %v5172 = vadd.f32 0.0, %v5171
    %v5173 = vpop.f32.mrf.mxu0
    %5174 = vdwg.mxu0
    %5175 = vmatpush.bf16.msra.mxu0 %v2013
    %5176 = vmatpush.bf16.msra.mxu0 %v2005
    %5177 = vmatpush.bf16.msra.mxu0 %v1997
    %5178 = vmatpush.bf16.msra.mxu0 %v1989
    %5179 = vmatpush.bf16.msra.mxu0 %v1981
    %5180 = vmatpush.bf16.msra.mxu0 %v1973
    %5181 = vmatpush.bf16.msra.mxu0 %v1965
    %5182 = vmatpush.bf16.msra.mxu0 %v1957
    %5183 = vmatmul.bf16.gmra.mxu0 %v4864
    %v5184 = vpop.f32.mrf.mxu0
    %v5185 = vadd.f32 %v5172, %v5184
    %v5186 = vpop.f32.mrf.mxu0
    %5187 = vdwg.mxu0
    %5188 = vmatpush.bf16.msra.mxu0 %v2077
    %5189 = vmatpush.bf16.msra.mxu0 %v2069
    %5190 = vmatpush.bf16.msra.mxu0 %v2061
    %5191 = vmatpush.bf16.msra.mxu0 %v2053
    %5192 = vmatpush.bf16.msra.mxu0 %v2045
    %5193 = vmatpush.bf16.msra.mxu0 %v2037
    %5194 = vmatpush.bf16.msra.mxu0 %v2029
    %5195 = vmatpush.bf16.msra.mxu0 %v2021
    %5196 = vmatmul.bf16.gmra.mxu0 %v4865
    %v5197 = vpop.f32.mrf.mxu0
    %v5198 = vadd.f32 %v5185, %v5197
    %v5199 = vpop.f32.mrf.mxu0
    %5200 = vdwg.mxu0
    %5201 = vmatpush.bf16.msra.mxu0 %v1950
    %5202 = vmatpush.bf16.msra.mxu0 %v1942
    %5203 = vmatpush.bf16.msra.mxu0 %v1934
    %5204 = vmatpush.bf16.msra.mxu0 %v1926
    %5205 = vmatpush.bf16.msra.mxu0 %v1918
    %5206 = vmatpush.bf16.msra.mxu0 %v1910
    %5207 = vmatpush.bf16.msra.mxu0 %v1902
    %5208 = vmatpush.bf16.msra.mxu0 %v1894
    %5209 = vmatmul.bf16.gmra.mxu0 %v4927
    %v5210 = vpop.f32.mrf.mxu0
    %v5211 = vadd.f32 0.0, %v5210
    %v5212 = vpop.f32.mrf.mxu0
    %5213 = vdwg.mxu0
    %5214 = vmatpush.bf16.msra.mxu0 %v2014
    %5215 = vmatpush.bf16.msra.mxu0 %v2006
    %5216 = vmatpush.bf16.msra.mxu0 %v1998
    %5217 = vmatpush.bf16.msra.mxu0 %v1990
    %5218 = vmatpush.bf16.msra.mxu0 %v1982
    %5219 = vmatpush.bf16.msra.mxu0 %v1974
    %5220 = vmatpush.bf16.msra.mxu0 %v1966
    %5221 = vmatpush.bf16.msra.mxu0 %v1958
    %5222 = vmatmul.bf16.gmra.mxu0 %v4864
    %v5223 = vpop.f32.mrf.mxu0
    %v5224 = vadd.f32 %v5211, %v5223
    %v5225 = vpop.f32.mrf.mxu0
    %5226 = vdwg.mxu0
    %5227 = vmatpush.bf16.msra.mxu0 %v2078
    %5228 = vmatpush.bf16.msra.mxu0 %v2070
    %5229 = vmatpush.bf16.msra.mxu0 %v2062
    %5230 = vmatpush.bf16.msra.mxu0 %v2054
    %5231 = vmatpush.bf16.msra.mxu0 %v2046
    %5232 = vmatpush.bf16.msra.mxu0 %v2038
    %5233 = vmatpush.bf16.msra.mxu0 %v2030
    %5234 = vmatpush.bf16.msra.mxu0 %v2022
    %5235 = vmatmul.bf16.gmra.mxu0 %v4865
    %v5236 = vpop.f32.mrf.mxu0
    %v5237 = vadd.f32 %v5224, %v5236
    %v5238 = vpop.f32.mrf.mxu0
    %5239 = vdwg.mxu0
    %v5240 = vxor.u32 %v4964, 2147483648
    %v5241 = vxor.u32 %v5003, 2147483648
    %v5242 = vmul.f32 %v5240, 1.442695
    %v5243 = vpow.pop %v5242
    %v5244 = vmul.f32 %v5241, 1.442695
    %v5245 = vpow.pop %v5244
    %v5246 = vadd.f32 %v5243, 1.0
    %v5247 = vadd.f32 %v5245, 1.0
    %v5248 = vrcp.pop %v5246
    %v5249 = vmul.f32 %v5246, %v5248
    %v5250 = vsub.f32 1.0, %v5249
    %v5251 = vmul.f32 %v5248, %v5250
    %v5252 = vadd.f32 %v5248, %v5251
    %vm5253 = vweird.f32 %v5246
    %vm5254 = vweird.f32 %v5248
    %vm5255 = vmor %vm5253, %vm5254
    %v5256 = vsel %vm5255, %v5248, %v5252
    %v5257 = vand.u32 2147483647, %v5246
    %vm5258 = vcmp.eq.f32.partialorder %v5257, 8.507059e+37
    %v5259 = vand.u32 %v5246, 2147483648
    %v5260 = vor.u32 1.1754944e-38, %v5259
    %v5261 = vsel %vm5258, %v5260, %v5256
    %v5262 = vmul.f32 1.0, %v5261
    %v5263 = vrcp.pop %v5247
    %v5264 = vmul.f32 %v5247, %v5263
    %v5265 = vsub.f32 1.0, %v5264
    %v5266 = vmul.f32 %v5263, %v5265
    %v5267 = vadd.f32 %v5263, %v5266
    %vm5268 = vweird.f32 %v5247
    %vm5269 = vweird.f32 %v5263
    %vm5270 = vmor %vm5268, %vm5269
    %v5271 = vsel %vm5270, %v5263, %v5267
    %v5272 = vand.u32 2147483647, %v5247
    %vm5273 = vcmp.eq.f32.partialorder %v5272, 8.507059e+37
    %v5274 = vand.u32 %v5247, 2147483648
    %v5275 = vor.u32 1.1754944e-38, %v5274
    %v5276 = vsel %vm5273, %v5275, %v5271
    %v5277 = vmul.f32 1.0, %v5276
    %v5278 = vxor.u32 %v5042, 2147483648
    %v5279 = vxor.u32 %v5081, 2147483648
    %v5280 = vmul.f32 %v5278, 1.442695
    %v5281 = vpow.pop %v5280
    %v5282 = vmul.f32 %v5279, 1.442695
    %v5283 = vpow.pop %v5282
    %v5284 = vadd.f32 %v5281, 1.0
    %v5285 = vadd.f32 %v5283, 1.0
    %v5286 = vrcp.pop %v5284
    %v5287 = vmul.f32 %v5284, %v5286
    %v5288 = vsub.f32 1.0, %v5287
    %v5289 = vmul.f32 %v5286, %v5288
    %v5290 = vadd.f32 %v5286, %v5289
    %vm5291 = vweird.f32 %v5284
    %vm5292 = vweird.f32 %v5286
    %vm5293 = vmor %vm5291, %vm5292
    %v5294 = vsel %vm5293, %v5286, %v5290
    %v5295 = vand.u32 2147483647, %v5284
    %vm5296 = vcmp.eq.f32.partialorder %v5295, 8.507059e+37
    %v5297 = vand.u32 %v5284, 2147483648
    %v5298 = vor.u32 1.1754944e-38, %v5297
    %v5299 = vsel %vm5296, %v5298, %v5294
    %v5300 = vmul.f32 1.0, %v5299
    %v5301 = vrcp.pop %v5285
    %v5302 = vmul.f32 %v5285, %v5301
    %v5303 = vsub.f32 1.0, %v5302
    %v5304 = vmul.f32 %v5301, %v5303
    %v5305 = vadd.f32 %v5301, %v5304
    %vm5306 = vweird.f32 %v5285
    %vm5307 = vweird.f32 %v5301
    %vm5308 = vmor %vm5306, %vm5307
    %v5309 = vsel %vm5308, %v5301, %v5305
    %v5310 = vand.u32 2147483647, %v5285
    %vm5311 = vcmp.eq.f32.partialorder %v5310, 8.507059e+37
    %v5312 = vand.u32 %v5285, 2147483648
    %v5313 = vor.u32 1.1754944e-38, %v5312
    %v5314 = vsel %vm5311, %v5313, %v5309
    %v5315 = vmul.f32 1.0, %v5314
    %v5316 = vtanh.pop %v5120
    %v5317 = vtanh.pop %v5159
    %v5318 = vxor.u32 %v5198, 2147483648
    %v5319 = vxor.u32 %v5237, 2147483648
    %v5320 = vmul.f32 %v5318, 1.442695
    %v5321 = vpow.pop %v5320
    %v5322 = vmul.f32 %v5319, 1.442695
    %v5323 = vpow.pop %v5322
    %v5324 = vadd.f32 %v5321, 1.0
    %v5325 = vadd.f32 %v5323, 1.0
    %v5326 = vrcp.pop %v5324
    %v5327 = vmul.f32 %v5324, %v5326
    %v5328 = vsub.f32 1.0, %v5327
    %v5329 = vmul.f32 %v5326, %v5328
    %v5330 = vadd.f32 %v5326, %v5329
    %vm5331 = vweird.f32 %v5324
    %vm5332 = vweird.f32 %v5326
    %vm5333 = vmor %vm5331, %vm5332
    %v5334 = vsel %vm5333, %v5326, %v5330
    %v5335 = vand.u32 2147483647, %v5324
    %vm5336 = vcmp.eq.f32.partialorder %v5335, 8.507059e+37
    %v5337 = vand.u32 %v5324, 2147483648
    %v5338 = vor.u32 1.1754944e-38, %v5337
    %v5339 = vsel %vm5336, %v5338, %v5334
    %v5340 = vmul.f32 1.0, %v5339
    %v5341 = vrcp.pop %v5325
    %v5342 = vmul.f32 %v5325, %v5341
    %v5343 = vsub.f32 1.0, %v5342
    %v5344 = vmul.f32 %v5341, %v5343
    %v5345 = vadd.f32 %v5341, %v5344
    %vm5346 = vweird.f32 %v5325
    %vm5347 = vweird.f32 %v5341
    %vm5348 = vmor %vm5346, %vm5347
    %v5349 = vsel %vm5348, %v5341, %v5345
    %v5350 = vand.u32 2147483647, %v5325
    %vm5351 = vcmp.eq.f32.partialorder %v5350, 8.507059e+37
    %v5352 = vand.u32 %v5325, 2147483648
    %v5353 = vor.u32 1.1754944e-38, %v5352
    %v5354 = vsel %vm5351, %v5353, %v5349
    %v5355 = vmul.f32 1.0, %v5354
    %v5356 = vmul.f32 %v5300, %v4854
    %v5357 = vmul.f32 %v5315, %v4855
    %v5358 = vmul.f32 %v5262, %v5316
    %v5359 = vmul.f32 %v5277, %v5317
    %v5360 = vadd.f32 %v5356, %v5358
    %v5361 = vadd.f32 %v5357, %v5359
    %v5362 = vtanh.pop %v5360
    %v5363 = vtanh.pop %v5361
    %v5364 = vmul.f32 %v5340, %v5362
    %v5365 = vmul.f32 %v5355, %v5363
    %v5366 = vpack.c.bf16 %v5365, %v5364
    %v5368 = vunpack.c.l.b16 %v5366
    %v5369 = vunpack.c.h.b16 %v5366
    %v5370 = vpack.c.b16 %v5368, %v5368
    %v5371 = vpack.c.b16 %v5369, %v5369
    %5374 = vmatpush.bf16.msra.mxu0 %v2823
    %5375 = vmatpush.bf16.msra.mxu0 %v2822
    %5376 = vmatpush.bf16.msra.mxu0 %v2821
    %5377 = vmatpush.bf16.msra.mxu0 %v2820
    %5378 = vmatpush.bf16.msra.mxu0 %v2819
    %5379 = vmatpush.bf16.msra.mxu0 %v2818
    %5380 = vmatpush.bf16.msra.mxu0 %v2817
    %5381 = vmatpush.bf16.msra.mxu0 %v2816
    %5382 = vmatmul.bf16.gmra.mxu0 %v5370
    %v5383 = vpop.f32.mrf.mxu0
    %v5384 = vadd.f32 %v2743, %v5383
    %v5385 = vpop.f32.mrf.mxu0
    %5386 = vdwg.mxu0
    %5387 = vmatpush.bf16.msra.mxu0 %v2831
    %5388 = vmatpush.bf16.msra.mxu0 %v2830
    %5389 = vmatpush.bf16.msra.mxu0 %v2829
    %5390 = vmatpush.bf16.msra.mxu0 %v2828
    %5391 = vmatpush.bf16.msra.mxu0 %v2827
    %5392 = vmatpush.bf16.msra.mxu0 %v2826
    %5393 = vmatpush.bf16.msra.mxu0 %v2825
    %5394 = vmatpush.bf16.msra.mxu0 %v2824
    %5395 = vmatmul.bf16.gmra.mxu0 %v5371
    %v5396 = vpop.f32.mrf.mxu0
    %v5397 = vadd.f32 %v5384, %v5396
    %v5398 = vpop.f32.mrf.mxu0
    %5399 = vdwg.mxu0
    %v5400 = vsel %vm2874, %v5397, -inf
    %5401 = vmax.xlane.f32.xlu0 %v5400
    %v5402 = vpop.xlane.xlu0 %5401
    %vm5403 = vcmp.eq.f32.partialorder %v5397, %v5402
    %v5404 = vsel %vm5403, %v1106, 128
    %v5405 = vsel %vm2874, %v5404, 2147483647
    %v5406 = vand.u32 %v5405, 65535
    %v5407 = vshra.s32 %v5405, 16
    %v5408 = vcvt.s32.f32 %v5406
    %v5409 = vcvt.s32.f32 %v5407
    %5410 = vmin.xlane.f32.xlu0 %v5409
    %v5411 = vpop.xlane.xlu0 %5410
    %vm5412 = vcmp.eq.f32.partialorder %v5409, %v5411
    %v5413 = vsel %vm5412, %v5408, inf
    %5414 = vmin.xlane.f32.xlu0 %v5413
    %v5415 = vpop.xlane.xlu0 %5414
    %v5416 = vcvt.f32.s32 %v5415
    %v5417 = vcvt.f32.s32 %v5411
    %v5418 = vshll.u32 %v5417, 16
    %v5419 = vadd.s32 %v5418, %v5416
    %vm5420 = vcmp.gt.s32.totalorder %v4923, 0
    %v5421 = vsel %vm5420, 2, %v5419
    %vm5422 = vcmp.eq.s32.totalorder %v1106, 5
    %v5423 = vsel %vm5422, %v5421, %v4917
    %vm5424 = vcmp.eq.s32.totalorder %v5419, 1
    %vm5425 = vmor %vm5420, %vm5424
    %v5426 = vsel %vm5425, %v4920, %v5419
    %v5427 = vsel %vm5424, 1, 0
    %vm5428 = vcmp.gt.s32.totalorder %v4923, %v5427
    %v5429 = vsel %vm5428, %v4923, %v5427
    %vm5430 = vcmp.eq.s32.totalorder %v1106, %v5426
    %v5431 = vsel %vm5430, 1, 0
    %v5432 = vcvt.s32.f32 %v5431
    %v5433 = vpack.c.bf16 %v5432, %v5432
    %5434 = vmatpush.bf16.msra.mxu0 %v1943
    %5435 = vmatpush.bf16.msra.mxu0 %v1935
    %5436 = vmatpush.bf16.msra.mxu0 %v1927
    %5437 = vmatpush.bf16.msra.mxu0 %v1919
    %5438 = vmatpush.bf16.msra.mxu0 %v1911
    %5439 = vmatpush.bf16.msra.mxu0 %v1903
    %5440 = vmatpush.bf16.msra.mxu0 %v1895
    %5441 = vmatpush.bf16.msra.mxu0 %v1887
    %5442 = vmatmul.bf16.gmra.mxu0 %v5433
    %v5443 = vpop.f32.mrf.mxu0
    %v5444 = vadd.f32 0.0, %v5443
    %v5445 = vpop.f32.mrf.mxu0
    %5446 = vdwg.mxu0
    %5447 = vmatpush.bf16.msra.mxu0 %v2007
    %5448 = vmatpush.bf16.msra.mxu0 %v1999
    %5449 = vmatpush.bf16.msra.mxu0 %v1991
    %5450 = vmatpush.bf16.msra.mxu0 %v1983
    %5451 = vmatpush.bf16.msra.mxu0 %v1975
    %5452 = vmatpush.bf16.msra.mxu0 %v1967
    %5453 = vmatpush.bf16.msra.mxu0 %v1959
    %5454 = vmatpush.bf16.msra.mxu0 %v1951
    %5455 = vmatmul.bf16.gmra.mxu0 %v5370
    %v5456 = vpop.f32.mrf.mxu0
    %v5457 = vadd.f32 %v5444, %v5456
    %v5458 = vpop.f32.mrf.mxu0
    %5459 = vdwg.mxu0
    %5460 = vmatpush.bf16.msra.mxu0 %v2071
    %5461 = vmatpush.bf16.msra.mxu0 %v2063
    %5462 = vmatpush.bf16.msra.mxu0 %v2055
    %5463 = vmatpush.bf16.msra.mxu0 %v2047
    %5464 = vmatpush.bf16.msra.mxu0 %v2039
    %5465 = vmatpush.bf16.msra.mxu0 %v2031
    %5466 = vmatpush.bf16.msra.mxu0 %v2023
    %5467 = vmatpush.bf16.msra.mxu0 %v2015
    %5468 = vmatmul.bf16.gmra.mxu0 %v5371
    %v5469 = vpop.f32.mrf.mxu0
    %v5470 = vadd.f32 %v5457, %v5469
    %v5471 = vpop.f32.mrf.mxu0
    %5472 = vdwg.mxu0
    %5473 = vmatpush.bf16.msra.mxu0 %v1944
    %5474 = vmatpush.bf16.msra.mxu0 %v1936
    %5475 = vmatpush.bf16.msra.mxu0 %v1928
    %5476 = vmatpush.bf16.msra.mxu0 %v1920
    %5477 = vmatpush.bf16.msra.mxu0 %v1912
    %5478 = vmatpush.bf16.msra.mxu0 %v1904
    %5479 = vmatpush.bf16.msra.mxu0 %v1896
    %5480 = vmatpush.bf16.msra.mxu0 %v1888
    %5481 = vmatmul.bf16.gmra.mxu0 %v5433
    %v5482 = vpop.f32.mrf.mxu0
    %v5483 = vadd.f32 0.0, %v5482
    %v5484 = vpop.f32.mrf.mxu0
    %5485 = vdwg.mxu0
    %5486 = vmatpush.bf16.msra.mxu0 %v2008
    %5487 = vmatpush.bf16.msra.mxu0 %v2000
    %5488 = vmatpush.bf16.msra.mxu0 %v1992
    %5489 = vmatpush.bf16.msra.mxu0 %v1984
    %5490 = vmatpush.bf16.msra.mxu0 %v1976
    %5491 = vmatpush.bf16.msra.mxu0 %v1968
    %5492 = vmatpush.bf16.msra.mxu0 %v1960
    %5493 = vmatpush.bf16.msra.mxu0 %v1952
    %5494 = vmatmul.bf16.gmra.mxu0 %v5370
    %v5495 = vpop.f32.mrf.mxu0
    %v5496 = vadd.f32 %v5483, %v5495
    %v5497 = vpop.f32.mrf.mxu0
    %5498 = vdwg.mxu0
    %5499 = vmatpush.bf16.msra.mxu0 %v2072
    %5500 = vmatpush.bf16.msra.mxu0 %v2064
    %5501 = vmatpush.bf16.msra.mxu0 %v2056
    %5502 = vmatpush.bf16.msra.mxu0 %v2048
    %5503 = vmatpush.bf16.msra.mxu0 %v2040
    %5504 = vmatpush.bf16.msra.mxu0 %v2032
    %5505 = vmatpush.bf16.msra.mxu0 %v2024
    %5506 = vmatpush.bf16.msra.mxu0 %v2016
    %5507 = vmatmul.bf16.gmra.mxu0 %v5371
    %v5508 = vpop.f32.mrf.mxu0
    %v5509 = vadd.f32 %v5496, %v5508
    %v5510 = vpop.f32.mrf.mxu0
    %5511 = vdwg.mxu0
    %5512 = vmatpush.bf16.msra.mxu0 %v1945
    %5513 = vmatpush.bf16.msra.mxu0 %v1937
    %5514 = vmatpush.bf16.msra.mxu0 %v1929
    %5515 = vmatpush.bf16.msra.mxu0 %v1921
    %5516 = vmatpush.bf16.msra.mxu0 %v1913
    %5517 = vmatpush.bf16.msra.mxu0 %v1905
    %5518 = vmatpush.bf16.msra.mxu0 %v1897
    %5519 = vmatpush.bf16.msra.mxu0 %v1889
    %5520 = vmatmul.bf16.gmra.mxu0 %v5433
    %v5521 = vpop.f32.mrf.mxu0
    %v5522 = vadd.f32 0.0, %v5521
    %v5523 = vpop.f32.mrf.mxu0
    %5524 = vdwg.mxu0
    %5525 = vmatpush.bf16.msra.mxu0 %v2009
    %5526 = vmatpush.bf16.msra.mxu0 %v2001
    %5527 = vmatpush.bf16.msra.mxu0 %v1993
    %5528 = vmatpush.bf16.msra.mxu0 %v1985
    %5529 = vmatpush.bf16.msra.mxu0 %v1977
    %5530 = vmatpush.bf16.msra.mxu0 %v1969
    %5531 = vmatpush.bf16.msra.mxu0 %v1961
    %5532 = vmatpush.bf16.msra.mxu0 %v1953
    %5533 = vmatmul.bf16.gmra.mxu0 %v5370
    %v5534 = vpop.f32.mrf.mxu0
    %v5535 = vadd.f32 %v5522, %v5534
    %v5536 = vpop.f32.mrf.mxu0
    %5537 = vdwg.mxu0
    %5538 = vmatpush.bf16.msra.mxu0 %v2073
    %5539 = vmatpush.bf16.msra.mxu0 %v2065
    %5540 = vmatpush.bf16.msra.mxu0 %v2057
    %5541 = vmatpush.bf16.msra.mxu0 %v2049
    %5542 = vmatpush.bf16.msra.mxu0 %v2041
    %5543 = vmatpush.bf16.msra.mxu0 %v2033
    %5544 = vmatpush.bf16.msra.mxu0 %v2025
    %5545 = vmatpush.bf16.msra.mxu0 %v2017
    %5546 = vmatmul.bf16.gmra.mxu0 %v5371
    %v5547 = vpop.f32.mrf.mxu0
    %v5548 = vadd.f32 %v5535, %v5547
    %v5549 = vpop.f32.mrf.mxu0
    %5550 = vdwg.mxu0
    %5551 = vmatpush.bf16.msra.mxu0 %v1946
    %5552 = vmatpush.bf16.msra.mxu0 %v1938
    %5553 = vmatpush.bf16.msra.mxu0 %v1930
    %5554 = vmatpush.bf16.msra.mxu0 %v1922
    %5555 = vmatpush.bf16.msra.mxu0 %v1914
    %5556 = vmatpush.bf16.msra.mxu0 %v1906
    %5557 = vmatpush.bf16.msra.mxu0 %v1898
    %5558 = vmatpush.bf16.msra.mxu0 %v1890
    %5559 = vmatmul.bf16.gmra.mxu0 %v5433
    %v5560 = vpop.f32.mrf.mxu0
    %v5561 = vadd.f32 0.0, %v5560
    %v5562 = vpop.f32.mrf.mxu0
    %5563 = vdwg.mxu0
    %5564 = vmatpush.bf16.msra.mxu0 %v2010
    %5565 = vmatpush.bf16.msra.mxu0 %v2002
    %5566 = vmatpush.bf16.msra.mxu0 %v1994
    %5567 = vmatpush.bf16.msra.mxu0 %v1986
    %5568 = vmatpush.bf16.msra.mxu0 %v1978
    %5569 = vmatpush.bf16.msra.mxu0 %v1970
    %5570 = vmatpush.bf16.msra.mxu0 %v1962
    %5571 = vmatpush.bf16.msra.mxu0 %v1954
    %5572 = vmatmul.bf16.gmra.mxu0 %v5370
    %v5573 = vpop.f32.mrf.mxu0
    %v5574 = vadd.f32 %v5561, %v5573
    %v5575 = vpop.f32.mrf.mxu0
    %5576 = vdwg.mxu0
    %5577 = vmatpush.bf16.msra.mxu0 %v2074
    %5578 = vmatpush.bf16.msra.mxu0 %v2066
    %5579 = vmatpush.bf16.msra.mxu0 %v2058
    %5580 = vmatpush.bf16.msra.mxu0 %v2050
    %5581 = vmatpush.bf16.msra.mxu0 %v2042
    %5582 = vmatpush.bf16.msra.mxu0 %v2034
    %5583 = vmatpush.bf16.msra.mxu0 %v2026
    %5584 = vmatpush.bf16.msra.mxu0 %v2018
    %5585 = vmatmul.bf16.gmra.mxu0 %v5371
    %v5586 = vpop.f32.mrf.mxu0
    %v5587 = vadd.f32 %v5574, %v5586
    %v5588 = vpop.f32.mrf.mxu0
    %5589 = vdwg.mxu0
    %5590 = vmatpush.bf16.msra.mxu0 %v1947
    %5591 = vmatpush.bf16.msra.mxu0 %v1939
    %5592 = vmatpush.bf16.msra.mxu0 %v1931
    %5593 = vmatpush.bf16.msra.mxu0 %v1923
    %5594 = vmatpush.bf16.msra.mxu0 %v1915
    %5595 = vmatpush.bf16.msra.mxu0 %v1907
    %5596 = vmatpush.bf16.msra.mxu0 %v1899
    %5597 = vmatpush.bf16.msra.mxu0 %v1891
    %5598 = vmatmul.bf16.gmra.mxu0 %v5433
    %v5599 = vpop.f32.mrf.mxu0
    %v5600 = vadd.f32 0.0, %v5599
    %v5601 = vpop.f32.mrf.mxu0
    %5602 = vdwg.mxu0
    %5603 = vmatpush.bf16.msra.mxu0 %v2011
    %5604 = vmatpush.bf16.msra.mxu0 %v2003
    %5605 = vmatpush.bf16.msra.mxu0 %v1995
    %5606 = vmatpush.bf16.msra.mxu0 %v1987
    %5607 = vmatpush.bf16.msra.mxu0 %v1979
    %5608 = vmatpush.bf16.msra.mxu0 %v1971
    %5609 = vmatpush.bf16.msra.mxu0 %v1963
    %5610 = vmatpush.bf16.msra.mxu0 %v1955
    %5611 = vmatmul.bf16.gmra.mxu0 %v5370
    %v5612 = vpop.f32.mrf.mxu0
    %v5613 = vadd.f32 %v5600, %v5612
    %v5614 = vpop.f32.mrf.mxu0
    %5615 = vdwg.mxu0
    %5616 = vmatpush.bf16.msra.mxu0 %v2075
    %5617 = vmatpush.bf16.msra.mxu0 %v2067
    %5618 = vmatpush.bf16.msra.mxu0 %v2059
    %5619 = vmatpush.bf16.msra.mxu0 %v2051
    %5620 = vmatpush.bf16.msra.mxu0 %v2043
    %5621 = vmatpush.bf16.msra.mxu0 %v2035
    %5622 = vmatpush.bf16.msra.mxu0 %v2027
    %5623 = vmatpush.bf16.msra.mxu0 %v2019
    %5624 = vmatmul.bf16.gmra.mxu0 %v5371
    %v5625 = vpop.f32.mrf.mxu0
    %v5626 = vadd.f32 %v5613, %v5625
    %v5627 = vpop.f32.mrf.mxu0
    %5628 = vdwg.mxu0
    %5629 = vmatpush.bf16.msra.mxu0 %v1948
    %5630 = vmatpush.bf16.msra.mxu0 %v1940
    %5631 = vmatpush.bf16.msra.mxu0 %v1932
    %5632 = vmatpush.bf16.msra.mxu0 %v1924
    %5633 = vmatpush.bf16.msra.mxu0 %v1916
    %5634 = vmatpush.bf16.msra.mxu0 %v1908
    %5635 = vmatpush.bf16.msra.mxu0 %v1900
    %5636 = vmatpush.bf16.msra.mxu0 %v1892
    %5637 = vmatmul.bf16.gmra.mxu0 %v5433
    %v5638 = vpop.f32.mrf.mxu0
    %v5639 = vadd.f32 0.0, %v5638
    %v5640 = vpop.f32.mrf.mxu0
    %5641 = vdwg.mxu0
    %5642 = vmatpush.bf16.msra.mxu0 %v2012
    %5643 = vmatpush.bf16.msra.mxu0 %v2004
    %5644 = vmatpush.bf16.msra.mxu0 %v1996
    %5645 = vmatpush.bf16.msra.mxu0 %v1988
    %5646 = vmatpush.bf16.msra.mxu0 %v1980
    %5647 = vmatpush.bf16.msra.mxu0 %v1972
    %5648 = vmatpush.bf16.msra.mxu0 %v1964
    %5649 = vmatpush.bf16.msra.mxu0 %v1956
    %5650 = vmatmul.bf16.gmra.mxu0 %v5370
    %v5651 = vpop.f32.mrf.mxu0
    %v5652 = vadd.f32 %v5639, %v5651
    %v5653 = vpop.f32.mrf.mxu0
    %5654 = vdwg.mxu0
    %5655 = vmatpush.bf16.msra.mxu0 %v2076
    %5656 = vmatpush.bf16.msra.mxu0 %v2068
    %5657 = vmatpush.bf16.msra.mxu0 %v2060
    %5658 = vmatpush.bf16.msra.mxu0 %v2052
    %5659 = vmatpush.bf16.msra.mxu0 %v2044
    %5660 = vmatpush.bf16.msra.mxu0 %v2036
    %5661 = vmatpush.bf16.msra.mxu0 %v2028
    %5662 = vmatpush.bf16.msra.mxu0 %v2020
    %5663 = vmatmul.bf16.gmra.mxu0 %v5371
    %v5664 = vpop.f32.mrf.mxu0
    %v5665 = vadd.f32 %v5652, %v5664
    %v5666 = vpop.f32.mrf.mxu0
    %5667 = vdwg.mxu0
    %5668 = vmatpush.bf16.msra.mxu0 %v1949
    %5669 = vmatpush.bf16.msra.mxu0 %v1941
    %5670 = vmatpush.bf16.msra.mxu0 %v1933
    %5671 = vmatpush.bf16.msra.mxu0 %v1925
    %5672 = vmatpush.bf16.msra.mxu0 %v1917
    %5673 = vmatpush.bf16.msra.mxu0 %v1909
    %5674 = vmatpush.bf16.msra.mxu0 %v1901
    %5675 = vmatpush.bf16.msra.mxu0 %v1893
    %5676 = vmatmul.bf16.gmra.mxu0 %v5433
    %v5677 = vpop.f32.mrf.mxu0
    %v5678 = vadd.f32 0.0, %v5677
    %v5679 = vpop.f32.mrf.mxu0
    %5680 = vdwg.mxu0
    %5681 = vmatpush.bf16.msra.mxu0 %v2013
    %5682 = vmatpush.bf16.msra.mxu0 %v2005
    %5683 = vmatpush.bf16.msra.mxu0 %v1997
    %5684 = vmatpush.bf16.msra.mxu0 %v1989
    %5685 = vmatpush.bf16.msra.mxu0 %v1981
    %5686 = vmatpush.bf16.msra.mxu0 %v1973
    %5687 = vmatpush.bf16.msra.mxu0 %v1965
    %5688 = vmatpush.bf16.msra.mxu0 %v1957
    %5689 = vmatmul.bf16.gmra.mxu0 %v5370
    %v5690 = vpop.f32.mrf.mxu0
    %v5691 = vadd.f32 %v5678, %v5690
    %v5692 = vpop.f32.mrf.mxu0
    %5693 = vdwg.mxu0
    %5694 = vmatpush.bf16.msra.mxu0 %v2077
    %5695 = vmatpush.bf16.msra.mxu0 %v2069
    %5696 = vmatpush.bf16.msra.mxu0 %v2061
    %5697 = vmatpush.bf16.msra.mxu0 %v2053
    %5698 = vmatpush.bf16.msra.mxu0 %v2045
    %5699 = vmatpush.bf16.msra.mxu0 %v2037
    %5700 = vmatpush.bf16.msra.mxu0 %v2029
    %5701 = vmatpush.bf16.msra.mxu0 %v2021
    %5702 = vmatmul.bf16.gmra.mxu0 %v5371
    %v5703 = vpop.f32.mrf.mxu0
    %v5704 = vadd.f32 %v5691, %v5703
    %v5705 = vpop.f32.mrf.mxu0
    %5706 = vdwg.mxu0
    %5707 = vmatpush.bf16.msra.mxu0 %v1950
    %5708 = vmatpush.bf16.msra.mxu0 %v1942
    %5709 = vmatpush.bf16.msra.mxu0 %v1934
    %5710 = vmatpush.bf16.msra.mxu0 %v1926
    %5711 = vmatpush.bf16.msra.mxu0 %v1918
    %5712 = vmatpush.bf16.msra.mxu0 %v1910
    %5713 = vmatpush.bf16.msra.mxu0 %v1902
    %5714 = vmatpush.bf16.msra.mxu0 %v1894
    %5715 = vmatmul.bf16.gmra.mxu0 %v5433
    %v5716 = vpop.f32.mrf.mxu0
    %v5717 = vadd.f32 0.0, %v5716
    %v5718 = vpop.f32.mrf.mxu0
    %5719 = vdwg.mxu0
    %5720 = vmatpush.bf16.msra.mxu0 %v2014
    %5721 = vmatpush.bf16.msra.mxu0 %v2006
    %5722 = vmatpush.bf16.msra.mxu0 %v1998
    %5723 = vmatpush.bf16.msra.mxu0 %v1990
    %5724 = vmatpush.bf16.msra.mxu0 %v1982
    %5725 = vmatpush.bf16.msra.mxu0 %v1974
    %5726 = vmatpush.bf16.msra.mxu0 %v1966
    %5727 = vmatpush.bf16.msra.mxu0 %v1958
    %5728 = vmatmul.bf16.gmra.mxu0 %v5370
    %v5729 = vpop.f32.mrf.mxu0
    %v5730 = vadd.f32 %v5717, %v5729
    %v5731 = vpop.f32.mrf.mxu0
    %5732 = vdwg.mxu0
    %5733 = vmatpush.bf16.msra.mxu0 %v2078
    %5734 = vmatpush.bf16.msra.mxu0 %v2070
    %5735 = vmatpush.bf16.msra.mxu0 %v2062
    %5736 = vmatpush.bf16.msra.mxu0 %v2054
    %5737 = vmatpush.bf16.msra.mxu0 %v2046
    %5738 = vmatpush.bf16.msra.mxu0 %v2038
    %5739 = vmatpush.bf16.msra.mxu0 %v2030
    %5740 = vmatpush.bf16.msra.mxu0 %v2022
    %5741 = vmatmul.bf16.gmra.mxu0 %v5371
    %v5742 = vpop.f32.mrf.mxu0
    %v5743 = vadd.f32 %v5730, %v5742
    %v5744 = vpop.f32.mrf.mxu0
    %5745 = vdwg.mxu0
    %v5746 = vxor.u32 %v5470, 2147483648
    %v5747 = vxor.u32 %v5509, 2147483648
    %v5748 = vmul.f32 %v5746, 1.442695
    %v5749 = vpow.pop %v5748
    %v5750 = vmul.f32 %v5747, 1.442695
    %v5751 = vpow.pop %v5750
    %v5752 = vadd.f32 %v5749, 1.0
    %v5753 = vadd.f32 %v5751, 1.0
    %v5754 = vrcp.pop %v5752
    %v5755 = vmul.f32 %v5752, %v5754
    %v5756 = vsub.f32 1.0, %v5755
    %v5757 = vmul.f32 %v5754, %v5756
    %v5758 = vadd.f32 %v5754, %v5757
    %vm5759 = vweird.f32 %v5752
    %vm5760 = vweird.f32 %v5754
    %vm5761 = vmor %vm5759, %vm5760
    %v5762 = vsel %vm5761, %v5754, %v5758
    %v5763 = vand.u32 2147483647, %v5752
    %vm5764 = vcmp.eq.f32.partialorder %v5763, 8.507059e+37
    %v5765 = vand.u32 %v5752, 2147483648
    %v5766 = vor.u32 1.1754944e-38, %v5765
    %v5767 = vsel %vm5764, %v5766, %v5762
    %v5768 = vmul.f32 1.0, %v5767
    %v5769 = vrcp.pop %v5753
    %v5770 = vmul.f32 %v5753, %v5769
    %v5771 = vsub.f32 1.0, %v5770
    %v5772 = vmul.f32 %v5769, %v5771
    %v5773 = vadd.f32 %v5769, %v5772
    %vm5774 = vweird.f32 %v5753
    %vm5775 = vweird.f32 %v5769
    %vm5776 = vmor %vm5774, %vm5775
    %v5777 = vsel %vm5776, %v5769, %v5773
    %v5778 = vand.u32 2147483647, %v5753
    %vm5779 = vcmp.eq.f32.partialorder %v5778, 8.507059e+37
    %v5780 = vand.u32 %v5753, 2147483648
    %v5781 = vor.u32 1.1754944e-38, %v5780
    %v5782 = vsel %vm5779, %v5781, %v5777
    %v5783 = vmul.f32 1.0, %v5782
    %v5784 = vxor.u32 %v5548, 2147483648
    %v5785 = vxor.u32 %v5587, 2147483648
    %v5786 = vmul.f32 %v5784, 1.442695
    %v5787 = vpow.pop %v5786
    %v5788 = vmul.f32 %v5785, 1.442695
    %v5789 = vpow.pop %v5788
    %v5790 = vadd.f32 %v5787, 1.0
    %v5791 = vadd.f32 %v5789, 1.0
    %v5792 = vrcp.pop %v5790
    %v5793 = vmul.f32 %v5790, %v5792
    %v5794 = vsub.f32 1.0, %v5793
    %v5795 = vmul.f32 %v5792, %v5794
    %v5796 = vadd.f32 %v5792, %v5795
    %vm5797 = vweird.f32 %v5790
    %vm5798 = vweird.f32 %v5792
    %vm5799 = vmor %vm5797, %vm5798
    %v5800 = vsel %vm5799, %v5792, %v5796
    %v5801 = vand.u32 2147483647, %v5790
    %vm5802 = vcmp.eq.f32.partialorder %v5801, 8.507059e+37
    %v5803 = vand.u32 %v5790, 2147483648
    %v5804 = vor.u32 1.1754944e-38, %v5803
    %v5805 = vsel %vm5802, %v5804, %v5800
    %v5806 = vmul.f32 1.0, %v5805
    %v5807 = vrcp.pop %v5791
    %v5808 = vmul.f32 %v5791, %v5807
    %v5809 = vsub.f32 1.0, %v5808
    %v5810 = vmul.f32 %v5807, %v5809
    %v5811 = vadd.f32 %v5807, %v5810
    %vm5812 = vweird.f32 %v5791
    %vm5813 = vweird.f32 %v5807
    %vm5814 = vmor %vm5812, %vm5813
    %v5815 = vsel %vm5814, %v5807, %v5811
    %v5816 = vand.u32 2147483647, %v5791
    %vm5817 = vcmp.eq.f32.partialorder %v5816, 8.507059e+37
    %v5818 = vand.u32 %v5791, 2147483648
    %v5819 = vor.u32 1.1754944e-38, %v5818
    %v5820 = vsel %vm5817, %v5819, %v5815
    %v5821 = vmul.f32 1.0, %v5820
    %v5822 = vtanh.pop %v5626
    %v5823 = vtanh.pop %v5665
    %v5824 = vxor.u32 %v5704, 2147483648
    %v5825 = vxor.u32 %v5743, 2147483648
    %v5826 = vmul.f32 %v5824, 1.442695
    %v5827 = vpow.pop %v5826
    %v5828 = vmul.f32 %v5825, 1.442695
    %v5829 = vpow.pop %v5828
    %v5830 = vadd.f32 %v5827, 1.0
    %v5831 = vadd.f32 %v5829, 1.0
    %v5832 = vrcp.pop %v5830
    %v5833 = vmul.f32 %v5830, %v5832
    %v5834 = vsub.f32 1.0, %v5833
    %v5835 = vmul.f32 %v5832, %v5834
    %v5836 = vadd.f32 %v5832, %v5835
    %vm5837 = vweird.f32 %v5830
    %vm5838 = vweird.f32 %v5832
    %vm5839 = vmor %vm5837, %vm5838
    %v5840 = vsel %vm5839, %v5832, %v5836
    %v5841 = vand.u32 2147483647, %v5830
    %vm5842 = vcmp.eq.f32.partialorder %v5841, 8.507059e+37
    %v5843 = vand.u32 %v5830, 2147483648
    %v5844 = vor.u32 1.1754944e-38, %v5843
    %v5845 = vsel %vm5842, %v5844, %v5840
    %v5846 = vmul.f32 1.0, %v5845
    %v5847 = vrcp.pop %v5831
    %v5848 = vmul.f32 %v5831, %v5847
    %v5849 = vsub.f32 1.0, %v5848
    %v5850 = vmul.f32 %v5847, %v5849
    %v5851 = vadd.f32 %v5847, %v5850
    %vm5852 = vweird.f32 %v5831
    %vm5853 = vweird.f32 %v5847
    %vm5854 = vmor %vm5852, %vm5853
    %v5855 = vsel %vm5854, %v5847, %v5851
    %v5856 = vand.u32 2147483647, %v5831
    %vm5857 = vcmp.eq.f32.partialorder %v5856, 8.507059e+37
    %v5858 = vand.u32 %v5831, 2147483648
    %v5859 = vor.u32 1.1754944e-38, %v5858
    %v5860 = vsel %vm5857, %v5859, %v5855
    %v5861 = vmul.f32 1.0, %v5860
    %v5862 = vmul.f32 %v5806, %v5360
    %v5863 = vmul.f32 %v5821, %v5361
    %v5864 = vmul.f32 %v5768, %v5822
    %v5865 = vmul.f32 %v5783, %v5823
    %v5866 = vadd.f32 %v5862, %v5864
    %v5867 = vadd.f32 %v5863, %v5865
    %v5868 = vtanh.pop %v5866
    %v5869 = vtanh.pop %v5867
    %v5870 = vmul.f32 %v5846, %v5868
    %v5871 = vmul.f32 %v5861, %v5869
    %v5872 = vpack.c.bf16 %v5871, %v5870
    %v5874 = vunpack.c.l.b16 %v5872
    %v5875 = vunpack.c.h.b16 %v5872
    %v5876 = vpack.c.b16 %v5874, %v5874
    %v5877 = vpack.c.b16 %v5875, %v5875
    %5880 = vmatpush.bf16.msra.mxu0 %v2823
    %5881 = vmatpush.bf16.msra.mxu0 %v2822
    %5882 = vmatpush.bf16.msra.mxu0 %v2821
    %5883 = vmatpush.bf16.msra.mxu0 %v2820
    %5884 = vmatpush.bf16.msra.mxu0 %v2819
    %5885 = vmatpush.bf16.msra.mxu0 %v2818
    %5886 = vmatpush.bf16.msra.mxu0 %v2817
    %5887 = vmatpush.bf16.msra.mxu0 %v2816
    %5888 = vmatmul.bf16.gmra.mxu0 %v5876
    %v5889 = vpop.f32.mrf.mxu0
    %v5890 = vadd.f32 %v2743, %v5889
    %v5891 = vpop.f32.mrf.mxu0
    %5892 = vdwg.mxu0
    %5893 = vmatpush.bf16.msra.mxu0 %v2831
    %5894 = vmatpush.bf16.msra.mxu0 %v2830
    %5895 = vmatpush.bf16.msra.mxu0 %v2829
    %5896 = vmatpush.bf16.msra.mxu0 %v2828
    %5897 = vmatpush.bf16.msra.mxu0 %v2827
    %5898 = vmatpush.bf16.msra.mxu0 %v2826
    %5899 = vmatpush.bf16.msra.mxu0 %v2825
    %5900 = vmatpush.bf16.msra.mxu0 %v2824
    %5901 = vmatmul.bf16.gmra.mxu0 %v5877
    %v5902 = vpop.f32.mrf.mxu0
    %v5903 = vadd.f32 %v5890, %v5902
    %v5904 = vpop.f32.mrf.mxu0
    %5905 = vdwg.mxu0
    %v5906 = vsel %vm2874, %v5903, -inf
    %5907 = vmax.xlane.f32.xlu0 %v5906
    %v5908 = vpop.xlane.xlu0 %5907
    %vm5909 = vcmp.eq.f32.partialorder %v5903, %v5908
    %v5910 = vsel %vm5909, %v1106, 128
    %v5911 = vsel %vm2874, %v5910, 2147483647
    %v5912 = vand.u32 %v5911, 65535
    %v5913 = vshra.s32 %v5911, 16
    %v5914 = vcvt.s32.f32 %v5912
    %v5915 = vcvt.s32.f32 %v5913
    %5916 = vmin.xlane.f32.xlu0 %v5915
    %v5917 = vpop.xlane.xlu0 %5916
    %vm5918 = vcmp.eq.f32.partialorder %v5915, %v5917
    %v5919 = vsel %vm5918, %v5914, inf
    %5920 = vmin.xlane.f32.xlu0 %v5919
    %v5921 = vpop.xlane.xlu0 %5920
    %v5922 = vcvt.f32.s32 %v5921
    %v5923 = vcvt.f32.s32 %v5917
    %v5924 = vshll.u32 %v5923, 16
    %v5925 = vadd.s32 %v5924, %v5922
    %vm5926 = vcmp.gt.s32.totalorder %v5429, 0
    %v5927 = vsel %vm5926, 2, %v5925
    %vm5928 = vcmp.eq.s32.totalorder %v1106, 6
    %v5929 = vsel %vm5928, %v5927, %v5423
    %vm5930 = vcmp.eq.s32.totalorder %v5925, 1
    %vm5931 = vmor %vm5926, %vm5930
    %v5932 = vsel %vm5931, %v5426, %v5925
    %v5933 = vsel %vm5930, 1, 0
    %vm5934 = vcmp.gt.s32.totalorder %v5429, %v5933
    %v5935 = vsel %vm5934, %v5429, %v5933
    %vm5936 = vcmp.eq.s32.totalorder %v1106, %v5932
    %v5937 = vsel %vm5936, 1, 0
    %v5938 = vcvt.s32.f32 %v5937
    %v5939 = vpack.c.bf16 %v5938, %v5938
    %5940 = vmatpush.bf16.msra.mxu0 %v1943
    %5941 = vmatpush.bf16.msra.mxu0 %v1935
    %5942 = vmatpush.bf16.msra.mxu0 %v1927
    %5943 = vmatpush.bf16.msra.mxu0 %v1919
    %5944 = vmatpush.bf16.msra.mxu0 %v1911
    %5945 = vmatpush.bf16.msra.mxu0 %v1903
    %5946 = vmatpush.bf16.msra.mxu0 %v1895
    %5947 = vmatpush.bf16.msra.mxu0 %v1887
    %5948 = vmatmul.bf16.gmra.mxu0 %v5939
    %v5949 = vpop.f32.mrf.mxu0
    %v5950 = vadd.f32 0.0, %v5949
    %v5951 = vpop.f32.mrf.mxu0
    %5952 = vdwg.mxu0
    %5953 = vmatpush.bf16.msra.mxu0 %v2007
    %5954 = vmatpush.bf16.msra.mxu0 %v1999
    %5955 = vmatpush.bf16.msra.mxu0 %v1991
    %5956 = vmatpush.bf16.msra.mxu0 %v1983
    %5957 = vmatpush.bf16.msra.mxu0 %v1975
    %5958 = vmatpush.bf16.msra.mxu0 %v1967
    %5959 = vmatpush.bf16.msra.mxu0 %v1959
    %5960 = vmatpush.bf16.msra.mxu0 %v1951
    %5961 = vmatmul.bf16.gmra.mxu0 %v5876
    %v5962 = vpop.f32.mrf.mxu0
    %v5963 = vadd.f32 %v5950, %v5962
    %v5964 = vpop.f32.mrf.mxu0
    %5965 = vdwg.mxu0
    %5966 = vmatpush.bf16.msra.mxu0 %v2071
    %5967 = vmatpush.bf16.msra.mxu0 %v2063
    %5968 = vmatpush.bf16.msra.mxu0 %v2055
    %5969 = vmatpush.bf16.msra.mxu0 %v2047
    %5970 = vmatpush.bf16.msra.mxu0 %v2039
    %5971 = vmatpush.bf16.msra.mxu0 %v2031
    %5972 = vmatpush.bf16.msra.mxu0 %v2023
    %5973 = vmatpush.bf16.msra.mxu0 %v2015
    %5974 = vmatmul.bf16.gmra.mxu0 %v5877
    %v5975 = vpop.f32.mrf.mxu0
    %v5976 = vadd.f32 %v5963, %v5975
    %v5977 = vpop.f32.mrf.mxu0
    %5978 = vdwg.mxu0
    %5979 = vmatpush.bf16.msra.mxu0 %v1944
    %5980 = vmatpush.bf16.msra.mxu0 %v1936
    %5981 = vmatpush.bf16.msra.mxu0 %v1928
    %5982 = vmatpush.bf16.msra.mxu0 %v1920
    %5983 = vmatpush.bf16.msra.mxu0 %v1912
    %5984 = vmatpush.bf16.msra.mxu0 %v1904
    %5985 = vmatpush.bf16.msra.mxu0 %v1896
    %5986 = vmatpush.bf16.msra.mxu0 %v1888
    %5987 = vmatmul.bf16.gmra.mxu0 %v5939
    %v5988 = vpop.f32.mrf.mxu0
    %v5989 = vadd.f32 0.0, %v5988
    %v5990 = vpop.f32.mrf.mxu0
    %5991 = vdwg.mxu0
    %5992 = vmatpush.bf16.msra.mxu0 %v2008
    %5993 = vmatpush.bf16.msra.mxu0 %v2000
    %5994 = vmatpush.bf16.msra.mxu0 %v1992
    %5995 = vmatpush.bf16.msra.mxu0 %v1984
    %5996 = vmatpush.bf16.msra.mxu0 %v1976
    %5997 = vmatpush.bf16.msra.mxu0 %v1968
    %5998 = vmatpush.bf16.msra.mxu0 %v1960
    %5999 = vmatpush.bf16.msra.mxu0 %v1952
    %6000 = vmatmul.bf16.gmra.mxu0 %v5876
    %v6001 = vpop.f32.mrf.mxu0
    %v6002 = vadd.f32 %v5989, %v6001
    %v6003 = vpop.f32.mrf.mxu0
    %6004 = vdwg.mxu0
    %6005 = vmatpush.bf16.msra.mxu0 %v2072
    %6006 = vmatpush.bf16.msra.mxu0 %v2064
    %6007 = vmatpush.bf16.msra.mxu0 %v2056
    %6008 = vmatpush.bf16.msra.mxu0 %v2048
    %6009 = vmatpush.bf16.msra.mxu0 %v2040
    %6010 = vmatpush.bf16.msra.mxu0 %v2032
    %6011 = vmatpush.bf16.msra.mxu0 %v2024
    %6012 = vmatpush.bf16.msra.mxu0 %v2016
    %6013 = vmatmul.bf16.gmra.mxu0 %v5877
    %v6014 = vpop.f32.mrf.mxu0
    %v6015 = vadd.f32 %v6002, %v6014
    %v6016 = vpop.f32.mrf.mxu0
    %6017 = vdwg.mxu0
    %6018 = vmatpush.bf16.msra.mxu0 %v1945
    %6019 = vmatpush.bf16.msra.mxu0 %v1937
    %6020 = vmatpush.bf16.msra.mxu0 %v1929
    %6021 = vmatpush.bf16.msra.mxu0 %v1921
    %6022 = vmatpush.bf16.msra.mxu0 %v1913
    %6023 = vmatpush.bf16.msra.mxu0 %v1905
    %6024 = vmatpush.bf16.msra.mxu0 %v1897
    %6025 = vmatpush.bf16.msra.mxu0 %v1889
    %6026 = vmatmul.bf16.gmra.mxu0 %v5939
    %v6027 = vpop.f32.mrf.mxu0
    %v6028 = vadd.f32 0.0, %v6027
    %v6029 = vpop.f32.mrf.mxu0
    %6030 = vdwg.mxu0
    %6031 = vmatpush.bf16.msra.mxu0 %v2009
    %6032 = vmatpush.bf16.msra.mxu0 %v2001
    %6033 = vmatpush.bf16.msra.mxu0 %v1993
    %6034 = vmatpush.bf16.msra.mxu0 %v1985
    %6035 = vmatpush.bf16.msra.mxu0 %v1977
    %6036 = vmatpush.bf16.msra.mxu0 %v1969
    %6037 = vmatpush.bf16.msra.mxu0 %v1961
    %6038 = vmatpush.bf16.msra.mxu0 %v1953
    %6039 = vmatmul.bf16.gmra.mxu0 %v5876
    %v6040 = vpop.f32.mrf.mxu0
    %v6041 = vadd.f32 %v6028, %v6040
    %v6042 = vpop.f32.mrf.mxu0
    %6043 = vdwg.mxu0
    %6044 = vmatpush.bf16.msra.mxu0 %v2073
    %6045 = vmatpush.bf16.msra.mxu0 %v2065
    %6046 = vmatpush.bf16.msra.mxu0 %v2057
    %6047 = vmatpush.bf16.msra.mxu0 %v2049
    %6048 = vmatpush.bf16.msra.mxu0 %v2041
    %6049 = vmatpush.bf16.msra.mxu0 %v2033
    %6050 = vmatpush.bf16.msra.mxu0 %v2025
    %6051 = vmatpush.bf16.msra.mxu0 %v2017
    %6052 = vmatmul.bf16.gmra.mxu0 %v5877
    %v6053 = vpop.f32.mrf.mxu0
    %v6054 = vadd.f32 %v6041, %v6053
    %v6055 = vpop.f32.mrf.mxu0
    %6056 = vdwg.mxu0
    %6057 = vmatpush.bf16.msra.mxu0 %v1946
    %6058 = vmatpush.bf16.msra.mxu0 %v1938
    %6059 = vmatpush.bf16.msra.mxu0 %v1930
    %6060 = vmatpush.bf16.msra.mxu0 %v1922
    %6061 = vmatpush.bf16.msra.mxu0 %v1914
    %6062 = vmatpush.bf16.msra.mxu0 %v1906
    %6063 = vmatpush.bf16.msra.mxu0 %v1898
    %6064 = vmatpush.bf16.msra.mxu0 %v1890
    %6065 = vmatmul.bf16.gmra.mxu0 %v5939
    %v6066 = vpop.f32.mrf.mxu0
    %v6067 = vadd.f32 0.0, %v6066
    %v6068 = vpop.f32.mrf.mxu0
    %6069 = vdwg.mxu0
    %6070 = vmatpush.bf16.msra.mxu0 %v2010
    %6071 = vmatpush.bf16.msra.mxu0 %v2002
    %6072 = vmatpush.bf16.msra.mxu0 %v1994
    %6073 = vmatpush.bf16.msra.mxu0 %v1986
    %6074 = vmatpush.bf16.msra.mxu0 %v1978
    %6075 = vmatpush.bf16.msra.mxu0 %v1970
    %6076 = vmatpush.bf16.msra.mxu0 %v1962
    %6077 = vmatpush.bf16.msra.mxu0 %v1954
    %6078 = vmatmul.bf16.gmra.mxu0 %v5876
    %v6079 = vpop.f32.mrf.mxu0
    %v6080 = vadd.f32 %v6067, %v6079
    %v6081 = vpop.f32.mrf.mxu0
    %6082 = vdwg.mxu0
    %6083 = vmatpush.bf16.msra.mxu0 %v2074
    %6084 = vmatpush.bf16.msra.mxu0 %v2066
    %6085 = vmatpush.bf16.msra.mxu0 %v2058
    %6086 = vmatpush.bf16.msra.mxu0 %v2050
    %6087 = vmatpush.bf16.msra.mxu0 %v2042
    %6088 = vmatpush.bf16.msra.mxu0 %v2034
    %6089 = vmatpush.bf16.msra.mxu0 %v2026
    %6090 = vmatpush.bf16.msra.mxu0 %v2018
    %6091 = vmatmul.bf16.gmra.mxu0 %v5877
    %v6092 = vpop.f32.mrf.mxu0
    %v6093 = vadd.f32 %v6080, %v6092
    %v6094 = vpop.f32.mrf.mxu0
    %6095 = vdwg.mxu0
    %6096 = vmatpush.bf16.msra.mxu0 %v1947
    %6097 = vmatpush.bf16.msra.mxu0 %v1939
    %6098 = vmatpush.bf16.msra.mxu0 %v1931
    %6099 = vmatpush.bf16.msra.mxu0 %v1923
    %6100 = vmatpush.bf16.msra.mxu0 %v1915
    %6101 = vmatpush.bf16.msra.mxu0 %v1907
    %6102 = vmatpush.bf16.msra.mxu0 %v1899
    %6103 = vmatpush.bf16.msra.mxu0 %v1891
    %6104 = vmatmul.bf16.gmra.mxu0 %v5939
    %v6105 = vpop.f32.mrf.mxu0
    %v6106 = vadd.f32 0.0, %v6105
    %v6107 = vpop.f32.mrf.mxu0
    %6108 = vdwg.mxu0
    %6109 = vmatpush.bf16.msra.mxu0 %v2011
    %6110 = vmatpush.bf16.msra.mxu0 %v2003
    %6111 = vmatpush.bf16.msra.mxu0 %v1995
    %6112 = vmatpush.bf16.msra.mxu0 %v1987
    %6113 = vmatpush.bf16.msra.mxu0 %v1979
    %6114 = vmatpush.bf16.msra.mxu0 %v1971
    %6115 = vmatpush.bf16.msra.mxu0 %v1963
    %6116 = vmatpush.bf16.msra.mxu0 %v1955
    %6117 = vmatmul.bf16.gmra.mxu0 %v5876
    %v6118 = vpop.f32.mrf.mxu0
    %v6119 = vadd.f32 %v6106, %v6118
    %v6120 = vpop.f32.mrf.mxu0
    %6121 = vdwg.mxu0
    %6122 = vmatpush.bf16.msra.mxu0 %v2075
    %6123 = vmatpush.bf16.msra.mxu0 %v2067
    %6124 = vmatpush.bf16.msra.mxu0 %v2059
    %6125 = vmatpush.bf16.msra.mxu0 %v2051
    %6126 = vmatpush.bf16.msra.mxu0 %v2043
    %6127 = vmatpush.bf16.msra.mxu0 %v2035
    %6128 = vmatpush.bf16.msra.mxu0 %v2027
    %6129 = vmatpush.bf16.msra.mxu0 %v2019
    %6130 = vmatmul.bf16.gmra.mxu0 %v5877
    %v6131 = vpop.f32.mrf.mxu0
    %v6132 = vadd.f32 %v6119, %v6131
    %v6133 = vpop.f32.mrf.mxu0
    %6134 = vdwg.mxu0
    %6135 = vmatpush.bf16.msra.mxu0 %v1948
    %6136 = vmatpush.bf16.msra.mxu0 %v1940
    %6137 = vmatpush.bf16.msra.mxu0 %v1932
    %6138 = vmatpush.bf16.msra.mxu0 %v1924
    %6139 = vmatpush.bf16.msra.mxu0 %v1916
    %6140 = vmatpush.bf16.msra.mxu0 %v1908
    %6141 = vmatpush.bf16.msra.mxu0 %v1900
    %6142 = vmatpush.bf16.msra.mxu0 %v1892
    %6143 = vmatmul.bf16.gmra.mxu0 %v5939
    %v6144 = vpop.f32.mrf.mxu0
    %v6145 = vadd.f32 0.0, %v6144
    %v6146 = vpop.f32.mrf.mxu0
    %6147 = vdwg.mxu0
    %6148 = vmatpush.bf16.msra.mxu0 %v2012
    %6149 = vmatpush.bf16.msra.mxu0 %v2004
    %6150 = vmatpush.bf16.msra.mxu0 %v1996
    %6151 = vmatpush.bf16.msra.mxu0 %v1988
    %6152 = vmatpush.bf16.msra.mxu0 %v1980
    %6153 = vmatpush.bf16.msra.mxu0 %v1972
    %6154 = vmatpush.bf16.msra.mxu0 %v1964
    %6155 = vmatpush.bf16.msra.mxu0 %v1956
    %6156 = vmatmul.bf16.gmra.mxu0 %v5876
    %v6157 = vpop.f32.mrf.mxu0
    %v6158 = vadd.f32 %v6145, %v6157
    %v6159 = vpop.f32.mrf.mxu0
    %6160 = vdwg.mxu0
    %6161 = vmatpush.bf16.msra.mxu0 %v2076
    %6162 = vmatpush.bf16.msra.mxu0 %v2068
    %6163 = vmatpush.bf16.msra.mxu0 %v2060
    %6164 = vmatpush.bf16.msra.mxu0 %v2052
    %6165 = vmatpush.bf16.msra.mxu0 %v2044
    %6166 = vmatpush.bf16.msra.mxu0 %v2036
    %6167 = vmatpush.bf16.msra.mxu0 %v2028
    %6168 = vmatpush.bf16.msra.mxu0 %v2020
    %6169 = vmatmul.bf16.gmra.mxu0 %v5877
    %v6170 = vpop.f32.mrf.mxu0
    %v6171 = vadd.f32 %v6158, %v6170
    %v6172 = vpop.f32.mrf.mxu0
    %6173 = vdwg.mxu0
    %6174 = vmatpush.bf16.msra.mxu0 %v1949
    %6175 = vmatpush.bf16.msra.mxu0 %v1941
    %6176 = vmatpush.bf16.msra.mxu0 %v1933
    %6177 = vmatpush.bf16.msra.mxu0 %v1925
    %6178 = vmatpush.bf16.msra.mxu0 %v1917
    %6179 = vmatpush.bf16.msra.mxu0 %v1909
    %6180 = vmatpush.bf16.msra.mxu0 %v1901
    %6181 = vmatpush.bf16.msra.mxu0 %v1893
    %6182 = vmatmul.bf16.gmra.mxu0 %v5939
    %v6183 = vpop.f32.mrf.mxu0
    %v6184 = vadd.f32 0.0, %v6183
    %v6185 = vpop.f32.mrf.mxu0
    %6186 = vdwg.mxu0
    %6187 = vmatpush.bf16.msra.mxu0 %v2013
    %6188 = vmatpush.bf16.msra.mxu0 %v2005
    %6189 = vmatpush.bf16.msra.mxu0 %v1997
    %6190 = vmatpush.bf16.msra.mxu0 %v1989
    %6191 = vmatpush.bf16.msra.mxu0 %v1981
    %6192 = vmatpush.bf16.msra.mxu0 %v1973
    %6193 = vmatpush.bf16.msra.mxu0 %v1965
    %6194 = vmatpush.bf16.msra.mxu0 %v1957
    %6195 = vmatmul.bf16.gmra.mxu0 %v5876
    %v6196 = vpop.f32.mrf.mxu0
    %v6197 = vadd.f32 %v6184, %v6196
    %v6198 = vpop.f32.mrf.mxu0
    %6199 = vdwg.mxu0
    %6200 = vmatpush.bf16.msra.mxu0 %v2077
    %6201 = vmatpush.bf16.msra.mxu0 %v2069
    %6202 = vmatpush.bf16.msra.mxu0 %v2061
    %6203 = vmatpush.bf16.msra.mxu0 %v2053
    %6204 = vmatpush.bf16.msra.mxu0 %v2045
    %6205 = vmatpush.bf16.msra.mxu0 %v2037
    %6206 = vmatpush.bf16.msra.mxu0 %v2029
    %6207 = vmatpush.bf16.msra.mxu0 %v2021
    %6208 = vmatmul.bf16.gmra.mxu0 %v5877
    %v6209 = vpop.f32.mrf.mxu0
    %v6210 = vadd.f32 %v6197, %v6209
    %v6211 = vpop.f32.mrf.mxu0
    %6212 = vdwg.mxu0
    %6213 = vmatpush.bf16.msra.mxu0 %v1950
    %6214 = vmatpush.bf16.msra.mxu0 %v1942
    %6215 = vmatpush.bf16.msra.mxu0 %v1934
    %6216 = vmatpush.bf16.msra.mxu0 %v1926
    %6217 = vmatpush.bf16.msra.mxu0 %v1918
    %6218 = vmatpush.bf16.msra.mxu0 %v1910
    %6219 = vmatpush.bf16.msra.mxu0 %v1902
    %6220 = vmatpush.bf16.msra.mxu0 %v1894
    %6221 = vmatmul.bf16.gmra.mxu0 %v5939
    %v6222 = vpop.f32.mrf.mxu0
    %v6223 = vadd.f32 0.0, %v6222
    %v6224 = vpop.f32.mrf.mxu0
    %6225 = vdwg.mxu0
    %6226 = vmatpush.bf16.msra.mxu0 %v2014
    %6227 = vmatpush.bf16.msra.mxu0 %v2006
    %6228 = vmatpush.bf16.msra.mxu0 %v1998
    %6229 = vmatpush.bf16.msra.mxu0 %v1990
    %6230 = vmatpush.bf16.msra.mxu0 %v1982
    %6231 = vmatpush.bf16.msra.mxu0 %v1974
    %6232 = vmatpush.bf16.msra.mxu0 %v1966
    %6233 = vmatpush.bf16.msra.mxu0 %v1958
    %6234 = vmatmul.bf16.gmra.mxu0 %v5876
    %v6235 = vpop.f32.mrf.mxu0
    %v6236 = vadd.f32 %v6223, %v6235
    %v6237 = vpop.f32.mrf.mxu0
    %6238 = vdwg.mxu0
    %6239 = vmatpush.bf16.msra.mxu0 %v2078
    %6240 = vmatpush.bf16.msra.mxu0 %v2070
    %6241 = vmatpush.bf16.msra.mxu0 %v2062
    %6242 = vmatpush.bf16.msra.mxu0 %v2054
    %6243 = vmatpush.bf16.msra.mxu0 %v2046
    %6244 = vmatpush.bf16.msra.mxu0 %v2038
    %6245 = vmatpush.bf16.msra.mxu0 %v2030
    %6246 = vmatpush.bf16.msra.mxu0 %v2022
    %6247 = vmatmul.bf16.gmra.mxu0 %v5877
    %v6248 = vpop.f32.mrf.mxu0
    %v6249 = vadd.f32 %v6236, %v6248
    %v6250 = vpop.f32.mrf.mxu0
    %6251 = vdwg.mxu0
    %v6252 = vxor.u32 %v5976, 2147483648
    %v6253 = vxor.u32 %v6015, 2147483648
    %v6254 = vmul.f32 %v6252, 1.442695
    %v6255 = vpow.pop %v6254
    %v6256 = vmul.f32 %v6253, 1.442695
    %v6257 = vpow.pop %v6256
    %v6258 = vadd.f32 %v6255, 1.0
    %v6259 = vadd.f32 %v6257, 1.0
    %v6260 = vrcp.pop %v6258
    %v6261 = vmul.f32 %v6258, %v6260
    %v6262 = vsub.f32 1.0, %v6261
    %v6263 = vmul.f32 %v6260, %v6262
    %v6264 = vadd.f32 %v6260, %v6263
    %vm6265 = vweird.f32 %v6258
    %vm6266 = vweird.f32 %v6260
    %vm6267 = vmor %vm6265, %vm6266
    %v6268 = vsel %vm6267, %v6260, %v6264
    %v6269 = vand.u32 2147483647, %v6258
    %vm6270 = vcmp.eq.f32.partialorder %v6269, 8.507059e+37
    %v6271 = vand.u32 %v6258, 2147483648
    %v6272 = vor.u32 1.1754944e-38, %v6271
    %v6273 = vsel %vm6270, %v6272, %v6268
    %v6274 = vmul.f32 1.0, %v6273
    %v6275 = vrcp.pop %v6259
    %v6276 = vmul.f32 %v6259, %v6275
    %v6277 = vsub.f32 1.0, %v6276
    %v6278 = vmul.f32 %v6275, %v6277
    %v6279 = vadd.f32 %v6275, %v6278
    %vm6280 = vweird.f32 %v6259
    %vm6281 = vweird.f32 %v6275
    %vm6282 = vmor %vm6280, %vm6281
    %v6283 = vsel %vm6282, %v6275, %v6279
    %v6284 = vand.u32 2147483647, %v6259
    %vm6285 = vcmp.eq.f32.partialorder %v6284, 8.507059e+37
    %v6286 = vand.u32 %v6259, 2147483648
    %v6287 = vor.u32 1.1754944e-38, %v6286
    %v6288 = vsel %vm6285, %v6287, %v6283
    %v6289 = vmul.f32 1.0, %v6288
    %v6290 = vxor.u32 %v6054, 2147483648
    %v6291 = vxor.u32 %v6093, 2147483648
    %v6292 = vmul.f32 %v6290, 1.442695
    %v6293 = vpow.pop %v6292
    %v6294 = vmul.f32 %v6291, 1.442695
    %v6295 = vpow.pop %v6294
    %v6296 = vadd.f32 %v6293, 1.0
    %v6297 = vadd.f32 %v6295, 1.0
    %v6298 = vrcp.pop %v6296
    %v6299 = vmul.f32 %v6296, %v6298
    %v6300 = vsub.f32 1.0, %v6299
    %v6301 = vmul.f32 %v6298, %v6300
    %v6302 = vadd.f32 %v6298, %v6301
    %vm6303 = vweird.f32 %v6296
    %vm6304 = vweird.f32 %v6298
    %vm6305 = vmor %vm6303, %vm6304
    %v6306 = vsel %vm6305, %v6298, %v6302
    %v6307 = vand.u32 2147483647, %v6296
    %vm6308 = vcmp.eq.f32.partialorder %v6307, 8.507059e+37
    %v6309 = vand.u32 %v6296, 2147483648
    %v6310 = vor.u32 1.1754944e-38, %v6309
    %v6311 = vsel %vm6308, %v6310, %v6306
    %v6312 = vmul.f32 1.0, %v6311
    %v6313 = vrcp.pop %v6297
    %v6314 = vmul.f32 %v6297, %v6313
    %v6315 = vsub.f32 1.0, %v6314
    %v6316 = vmul.f32 %v6313, %v6315
    %v6317 = vadd.f32 %v6313, %v6316
    %vm6318 = vweird.f32 %v6297
    %vm6319 = vweird.f32 %v6313
    %vm6320 = vmor %vm6318, %vm6319
    %v6321 = vsel %vm6320, %v6313, %v6317
    %v6322 = vand.u32 2147483647, %v6297
    %vm6323 = vcmp.eq.f32.partialorder %v6322, 8.507059e+37
    %v6324 = vand.u32 %v6297, 2147483648
    %v6325 = vor.u32 1.1754944e-38, %v6324
    %v6326 = vsel %vm6323, %v6325, %v6321
    %v6327 = vmul.f32 1.0, %v6326
    %v6328 = vtanh.pop %v6132
    %v6329 = vtanh.pop %v6171
    %v6330 = vxor.u32 %v6210, 2147483648
    %v6331 = vxor.u32 %v6249, 2147483648
    %v6332 = vmul.f32 %v6330, 1.442695
    %v6333 = vpow.pop %v6332
    %v6334 = vmul.f32 %v6331, 1.442695
    %v6335 = vpow.pop %v6334
    %v6336 = vadd.f32 %v6333, 1.0
    %v6337 = vadd.f32 %v6335, 1.0
    %v6338 = vrcp.pop %v6336
    %v6339 = vmul.f32 %v6336, %v6338
    %v6340 = vsub.f32 1.0, %v6339
    %v6341 = vmul.f32 %v6338, %v6340
    %v6342 = vadd.f32 %v6338, %v6341
    %vm6343 = vweird.f32 %v6336
    %vm6344 = vweird.f32 %v6338
    %vm6345 = vmor %vm6343, %vm6344
    %v6346 = vsel %vm6345, %v6338, %v6342
    %v6347 = vand.u32 2147483647, %v6336
    %vm6348 = vcmp.eq.f32.partialorder %v6347, 8.507059e+37
    %v6349 = vand.u32 %v6336, 2147483648
    %v6350 = vor.u32 1.1754944e-38, %v6349
    %v6351 = vsel %vm6348, %v6350, %v6346
    %v6352 = vmul.f32 1.0, %v6351
    %v6353 = vrcp.pop %v6337
    %v6354 = vmul.f32 %v6337, %v6353
    %v6355 = vsub.f32 1.0, %v6354
    %v6356 = vmul.f32 %v6353, %v6355
    %v6357 = vadd.f32 %v6353, %v6356
    %vm6358 = vweird.f32 %v6337
    %vm6359 = vweird.f32 %v6353
    %vm6360 = vmor %vm6358, %vm6359
    %v6361 = vsel %vm6360, %v6353, %v6357
    %v6362 = vand.u32 2147483647, %v6337
    %vm6363 = vcmp.eq.f32.partialorder %v6362, 8.507059e+37
    %v6364 = vand.u32 %v6337, 2147483648
    %v6365 = vor.u32 1.1754944e-38, %v6364
    %v6366 = vsel %vm6363, %v6365, %v6361
    %v6367 = vmul.f32 1.0, %v6366
    %v6368 = vmul.f32 %v6312, %v5866
    %v6369 = vmul.f32 %v6327, %v5867
    %v6370 = vmul.f32 %v6274, %v6328
    %v6371 = vmul.f32 %v6289, %v6329
    %v6372 = vadd.f32 %v6368, %v6370
    %v6373 = vadd.f32 %v6369, %v6371
    %v6374 = vtanh.pop %v6372
    %v6375 = vtanh.pop %v6373
    %v6376 = vmul.f32 %v6352, %v6374
    %v6377 = vmul.f32 %v6367, %v6375
    %v6378 = vpack.c.bf16 %v6376, %v6376
    %v6379 = vpack.c.bf16 %v6377, %v6377
    %6380 = vmatpush.bf16.msra.mxu0 %v2823
    %6381 = vmatpush.bf16.msra.mxu0 %v2822
    %6382 = vmatpush.bf16.msra.mxu0 %v2821
    %6383 = vmatpush.bf16.msra.mxu0 %v2820
    %6384 = vmatpush.bf16.msra.mxu0 %v2819
    %6385 = vmatpush.bf16.msra.mxu0 %v2818
    %6386 = vmatpush.bf16.msra.mxu0 %v2817
    %6387 = vmatpush.bf16.msra.mxu0 %v2816
    %6388 = vmatmul.bf16.gmra.mxu0 %v6378
    %v6389 = vpop.f32.mrf.mxu0
    %v6390 = vadd.f32 %v2743, %v6389
    %v6391 = vpop.f32.mrf.mxu0
    %6392 = vdwg.mxu0
    %6393 = vmatpush.bf16.msra.mxu0 %v2831
    %6394 = vmatpush.bf16.msra.mxu0 %v2830
    %6395 = vmatpush.bf16.msra.mxu0 %v2829
    %6396 = vmatpush.bf16.msra.mxu0 %v2828
    %6397 = vmatpush.bf16.msra.mxu0 %v2827
    %6398 = vmatpush.bf16.msra.mxu0 %v2826
    %6399 = vmatpush.bf16.msra.mxu0 %v2825
    %6400 = vmatpush.bf16.msra.mxu0 %v2824
    %6401 = vmatmul.bf16.gmra.mxu0 %v6379
    %v6402 = vpop.f32.mrf.mxu0
    %v6403 = vadd.f32 %v6390, %v6402
    %v6404 = vpop.f32.mrf.mxu0
    %6405 = vdwg.mxu0
    %v6406 = vsel %vm2874, %v6403, -inf
    %6407 = vmax.xlane.f32.xlu0 %v6406
    %v6408 = vpop.xlane.xlu0 %6407
    %vm6409 = vcmp.eq.f32.partialorder %v6403, %v6408
    %v6410 = vsel %vm6409, %v1106, 128
    %v6411 = vsel %vm2874, %v6410, 2147483647
    %v6412 = vand.u32 %v6411, 65535
    %v6413 = vshra.s32 %v6411, 16
    %v6414 = vcvt.s32.f32 %v6412
    %v6415 = vcvt.s32.f32 %v6413
    %6416 = vmin.xlane.f32.xlu0 %v6415
    %v6417 = vpop.xlane.xlu0 %6416
    %vm6418 = vcmp.eq.f32.partialorder %v6415, %v6417
    %v6419 = vsel %vm6418, %v6414, inf
    %6420 = vmin.xlane.f32.xlu0 %v6419
    %v6421 = vpop.xlane.xlu0 %6420
    %v6422 = vcvt.f32.s32 %v6421
    %v6423 = vcvt.f32.s32 %v6417
    %v6424 = vshll.u32 %v6423, 16
    %v6425 = vadd.s32 %v6424, %v6422
    %vm6426 = vcmp.gt.s32.totalorder %v5935, 0
    %v6427 = vsel %vm6426, 2, %v6425
    %vm6428 = vcmp.eq.s32.totalorder %v1106, 7
    %v6429 = vsel %vm6428, %v6427, %v5929
    %vm6430 = vcmask 58368
    %6431 = vst.msk [vmem:[#allocation13] sm:$0x3] %vm6430, %v6429
    // Predicated region
    $region42: #{tpu_custom_call.1} parent=1 // pred_check
      _
    $region43: #{tpu_custom_call.1} parent=1 // pred_check_branch
      %6433 = sbr.rel (0) target = $region45
    $region44: #{tpu_custom_call.1} parent=1 // pred_region
      %6435 = vsyncadd [#allocation7], 0
      %s6437 = sshll.u32 [#allocation13], 4
      %s6438 = int_to_ptr.vmem [resolvable:$true] %s6437
      %s6439 = sshll.u32 %s6, 4
      %s6440 = int_to_ptr.hbm [resolvable:$true] %s6439
      %6442 = dma.vmem_to_hbm [thread:$0]  %s6438, 32, %s6440, [#allocation7]
    $region45: #{tpu_custom_call.1} parent=1 // pred_fallthru
      _
    // Predicated region
    $region46: #{tpu_custom_call.1} parent=1 // pred_check
      _
    $region47: #{tpu_custom_call.1} parent=1 // pred_check_branch
      %6444 = sbr.rel (0) target = $region49
    $region48: #{tpu_custom_call.1} parent=1 // pred_region
      %6446 = dma.done [#allocation7], 32
    $region49: #{tpu_custom_call.1} parent=1 // pred_fallthru
      _
    %6447 = vsyncpa [#allocation6], 1
    %6448 = vsyncpa [#allocation9], 1
    %6449 = vsyncpa [#allocation12], 1
    %6450 = vsyncpa [#allocation7], 1
  %6451 = vsyncmov [#allocation4]
  %s6452 = vpop.sfrf %6451
  %p6453 = scmp.eq.s32.totalorder %s6452, 0
  %p6454 = pneg %p6453
  %6456 = shalt.err (%p6454)
  %s6457 = scalar_lea.sflag [#allocation4], 1
  %6458 = vsyncmov %s6457
  %s6459 = vpop.sfrf %6458
  %p6460 = scmp.eq.s32.totalorder %s6459, 0
  %p6461 = pneg %p6460
  %6463 = shalt.err (%p6461)

</llo_original>
